<compile_context>
chip_gen: v5e
topology: v5e:2x2
jax: 0.10.0
libtpu: 0.0.40
codegen_flags: <defaults>
</compile_context>

<pallas_src>
import functools

import jax
import jax.numpy as jnp
from jax import lax
from jax.experimental import pallas as pl
from jax.experimental.pallas import tpu as pltpu

_BLOCK_ELEMS = 512 * 1024            # 524,288 elems = 2 MiB f32 per input block
_MIN_PALLAS_ELEMS = 2 * _BLOCK_ELEMS  # below this, plain XLA fusion is at roofline


def _bce(x, y):
    """Numerically stable BCE-with-logits: max(x,0) - x*y + log1p(exp(-|x|))."""
    return jnp.maximum(x, 0.0) - x * y + jnp.log1p(jnp.exp(-jnp.abs(x)))


def _bce_none_kernel(x_ref, y_ref, out_ref):
    x = x_ref[...].astype(jnp.float32)
    y = y_ref[...].astype(jnp.float32)
    out_ref[...] = _bce(x, y).astype(out_ref.dtype)


def _bce_partial_sum_kernel(x_ref, y_ref, psum_ref, *, tm, m_rows):
    i = pl.program_id(0)
    x = x_ref[...].astype(jnp.float32)
    y = y_ref[...].astype(jnp.float32)
    loss = _bce(x, y)
    # Ragged last tile: Pallas only DMAs the valid rows; the rest of the VMEM
    # buffer is stale.  Zero those rows before accumulating.
    rows = lax.broadcasted_iota(jnp.int32, loss.shape, 0)
    valid_rows = m_rows - i * tm                      # >= tm for all full tiles
    loss = jnp.where(rows < valid_rows, loss, 0.0)
    # Sublane-only reduction -> lane-dense (1, L) partial per tile.
    psum_ref[...] = jnp.sum(loss, axis=0, keepdims=True)


def _pick_layout(n):
    """Largest lane width in {512,256,128} that divides n, plus rows per block."""
    for lanes in (512, 256, 128):
        if n % lanes == 0:
            return lanes, _BLOCK_ELEMS // lanes       # tm is a multiple of 8
    return None, None


def _bce_none_pallas(pred_logits, gt_score, lanes, tm, out_dtype):
    orig_shape = pred_logits.shape
    n = pred_logits.size
    m_rows = n // lanes
    x2 = pred_logits.reshape(m_rows, lanes)           # free: contiguous, full size
    y2 = gt_score.reshape(m_rows, lanes)
    grid = (pl.cdiv(m_rows, tm),)                     # ragged last block is OK

    out = pl.pallas_call(
        _bce_none_kernel,
        out_shape=jax.ShapeDtypeStruct((m_rows, lanes), out_dtype),
        grid_spec=pltpu.PrefetchScalarGridSpec(
            num_scalar_prefetch=0,
            grid=grid,
            in_specs=[
                pl.BlockSpec((tm, lanes), lambda i: (i, 0)),
                pl.BlockSpec((tm, lanes), lambda i: (i, 0)),
            ],
            out_specs=pl.BlockSpec((tm, lanes), lambda i: (i, 0)),
        ),
        compiler_params=pltpu.CompilerParams(
            dimension_semantics=("parallel",),
        ),
    )(x2, y2)

    return out.reshape(orig_shape)                    # free: same element count


def _bce_sum_pallas(pred_logits, gt_score, lanes, tm):
    n = pred_logits.size
    m_rows = n // lanes
    x2 = pred_logits.reshape(m_rows, lanes)
    y2 = gt_score.reshape(m_rows, lanes)
    num_tiles = pl.cdiv(m_rows, tm)

    kernel = functools.partial(_bce_partial_sum_kernel, tm=tm, m_rows=m_rows)
    partial = pl.pallas_call(
        kernel,
        out_shape=jax.ShapeDtypeStruct((num_tiles, lanes), jnp.float32),
        grid_spec=pltpu.PrefetchScalarGridSpec(
            num_scalar_prefetch=0,
            grid=(num_tiles,),
            in_specs=[
                pl.BlockSpec((tm, lanes), lambda i: (i, 0)),
                pl.BlockSpec((tm, lanes), lambda i: (i, 0)),
            ],
            out_specs=pl.BlockSpec((1, lanes), lambda i: (i, 0)),
        ),
        compiler_params=pltpu.CompilerParams(
            dimension_semantics=("parallel",),
        ),
    )(x2, y2)

    return jnp.sum(partial)                           # tiny (num_tiles, L) array


class ClassificationLossPallas:
    """JAX/Pallas port of models/yolov8/loss.py::ClassificationLoss."""

    def __init__(self, cfg, reduction="none", none_out_dtype=jnp.float32):
        self.cfg = cfg
        self.reduction = reduction
        self.alpha = 0.75   # parity with the PyTorch module (unused for 'bce')
        self.gamma = 2.0
        # Keep f32 by default for parity with the PyTorch .float() reference;
        # pass jnp.bfloat16 to halve the output stream if downstream tolerates.
        self.none_out_dtype = none_out_dtype

    def binary_cross_entropy(self, pred_logits, gt_score):
        n = pred_logits.size
        lanes, tm = _pick_layout(n)
        use_pallas = (lanes is not None) and (n >= _MIN_PALLAS_ELEMS)

        if not use_pallas:
            # Small or oddly-sized inputs: fixed pallas_call cost dominates and
            # XLA's fused elementwise is already at HBM roofline.
            x = pred_logits.astype(jnp.float32)
            y = gt_score.astype(jnp.float32)
            loss = _bce(x, y)
            if self.reduction == "sum":
                return jnp.sum(loss)
            if self.reduction == "mean":
                return jnp.mean(loss)
            return loss.astype(self.none_out_dtype)

        if self.reduction == "sum":
            return _bce_sum_pallas(pred_logits, gt_score, lanes, tm)
        if self.reduction == "mean":
            total = _bce_sum_pallas(pred_logits, gt_score, lanes, tm)
            return total / jnp.float32(n)
        return _bce_none_pallas(pred_logits, gt_score, lanes, tm,
                                self.none_out_dtype)

    def __call__(self, pred_logits, gt_score):
        if self.cfg["cls_loss"] == "bce":
            return self.binary_cross_entropy(pred_logits, gt_score)
        # Reference module's forward only handles 'bce' (alpha/gamma unused).
        raise NotImplementedError(
            "ClassificationLoss only implements cfg['cls_loss'] == 'bce'")


if __name__ == "__main__":
    key = jax.random.PRNGKey(0)
    k1, k2, k3, k4 = jax.random.split(key, 4)
    cfg = {"cls_loss": "bce"}

    def ref_bce(x, y):
        x = x.astype(jnp.float32)
        y = y.astype(jnp.float32)
        return jnp.maximum(x, 0.0) - x * y + jnp.log1p(jnp.exp(-jnp.abs(x)))

    # Small YOLO-style tensors (batch, anchors, classes) -> fast (fused XLA) path.
    B, A, C = 2, 64, 16
    logits_s = jax.random.normal(k1, (B, A, C), dtype=jnp.float32) * 3.0
    score_s = jax.random.uniform(k2, (B, A, C), dtype=jnp.float32)

    # Larger tensor -> Pallas path with a ragged last tile
    # (2*8400*64 = 1,075,200 elems = 2100 rows of 512; tm=1024 -> grid=(3,)).
    Bl, Al, Cl = 2, 8400, 64
    logits_l = jax.random.normal(k3, (Bl, Al, Cl), dtype=jnp.float32) * 3.0
    score_l = jax.random.uniform(k4, (Bl, Al, Cl), dtype=jnp.float32)

    for logits, score in ((logits_s, score_s), (logits_l, score_l)):
        loss_none = ClassificationLossPallas(cfg, reduction="none")(logits, score)
        loss_sum = ClassificationLossPallas(cfg, reduction="sum")(logits, score)
        loss_mean = ClassificationLossPallas(cfg, reduction="mean")(logits, score)
        jax.block_until_ready((loss_none, loss_sum, loss_mean))

        ref = ref_bce(logits, score)
        assert loss_none.shape == logits.shape
        assert jnp.allclose(loss_none, ref, atol=1e-4, rtol=1e-5)
        assert jnp.allclose(loss_sum, jnp.sum(ref), rtol=1e-3)
        assert jnp.allclose(loss_mean, jnp.mean(ref), rtol=1e-3)

    print("KERNEL_OK")
</pallas_src>

<mosaic_0001>
module attributes {stable_mosaic.version = 11 : i64} {
  func.func @_bce_none_kernel(%arg0: i32, %arg1: memref<1024x512xf32, #tpu.memory_space<vmem>>, %arg2: memref<1024x512xf32, #tpu.memory_space<vmem>>, %arg3: memref<1024x512xf32, #tpu.memory_space<vmem>>) attributes {dimension_semantics = [#tpu.dimension_semantics<parallel>], iteration_bounds = array<i64: 3>, scalar_prefetch = 0 : i64, scratch_operands = 0 : i64, tpu.core_type = #tpu.core_type<tc>, window_params = [{transform_indices = @transform_0, window_bounds = array<i64: 1024, 512>}, {transform_indices = @transform_1, window_bounds = array<i64: 1024, 512>}, {transform_indices = @transform_2, window_bounds = array<i64: 1024, 512>}]} {
    %c0 = arith.constant 0 : index
    %c0_0 = arith.constant 0 : index
    %0 = vector.load %arg1[%c0, %c0_0] : memref<1024x512xf32, #tpu.memory_space<vmem>>, vector<1024x512xf32>
    %c0_1 = arith.constant 0 : index
    %c0_2 = arith.constant 0 : index
    %1 = vector.load %arg2[%c0_1, %c0_2] : memref<1024x512xf32, #tpu.memory_space<vmem>>, vector<1024x512xf32>
    %cst = arith.constant 0.000000e+00 : f32
    %2 = vector.broadcast %cst : f32 to vector<1024x512xf32>
    %3 = arith.maximumf %0, %2 : vector<1024x512xf32>
    %4 = arith.mulf %0, %1 : vector<1024x512xf32>
    %5 = arith.subf %3, %4 : vector<1024x512xf32>
    %6 = math.absf %0 : vector<1024x512xf32>
    %cst_3 = arith.constant 0.000000e+00 : f32
    %7 = vector.broadcast %cst_3 : f32 to vector<1024x512xf32>
    %8 = arith.subf %7, %6 : vector<1024x512xf32>
    %9 = math.exp %8 : vector<1024x512xf32>
    %10 = math.log1p %9 : vector<1024x512xf32>
    %11 = arith.addf %5, %10 : vector<1024x512xf32>
    %c0_4 = arith.constant 0 : index
    %c0_5 = arith.constant 0 : index
    %12 = vector.load %arg3[%c0_4, %c0_5] : memref<1024x512xf32, #tpu.memory_space<vmem>>, vector<1024x512xf32>
    tpu.vector_store %arg3[%c0_4, %c0_5], %11 {strides = array<i32>} : memref<1024x512xf32, #tpu.memory_space<vmem>>, vector<1024x512xf32>,
    return
  }
  func.func @transform_0(%arg0: i32) -> (i32, i32) {
    %c0_i32 = arith.constant 0 : i32
    %c0_i32_0 = arith.constant 0 : i32
    return %arg0, %c0_i32 : i32, i32
  }
  func.func @transform_1(%arg0: i32) -> (i32, i32) {
    %c0_i32 = arith.constant 0 : i32
    %c0_i32_0 = arith.constant 0 : i32
    return %arg0, %c0_i32 : i32, i32
  }
  func.func @transform_2(%arg0: i32) -> (i32, i32) {
    %c0_i32 = arith.constant 0 : i32
    %c0_i32_0 = arith.constant 0 : i32
    return %arg0, %c0_i32 : i32, i32
  }
}

</mosaic_0001>

<llo_original>
// kernel: tpu_custom_call.1
$region0: #{tpu_custom_call.1}
  #allocation0 [shape = 'u32[]', space=smem, size = 0x4, offset = 0x4, fixed_abs, tag = 'smem constant byte address 0x4 - core index']
  #allocation1 [shape = 'u32[72,128]{1,0:T(1,128)}', space=vmem, size = 0x9000, scoped, tag = 'internal scratch']
  %s0 = inlined_call_operand.hbm [shape: f32[2100,512], index: 0, kind: input, shape index: {}]
  %s1 = inlined_call_operand.hbm [shape: f32[2100,512], index: 1, kind: input, shape index: {}]
  %s2 = inlined_call_operand.hbm [shape: f32[2100,512], index: 2, kind: output, shape index: {}]
  %s3 = sld [smem:[#allocation0]]
  $region49: #{tpu_custom_call.1} parent=0
    _
  %s5 = ssub.s32 1, %s3
  %s6 = scalar_select 0, %s5, %s3
  $region1: #{tpu_custom_call.1} parent=0
    #allocation2 [shape = 'u8[4194304]{0}', space=vmem, size = 0x400000, scoped, tag = 'input window, operand 0']
    #allocation3 [shape = 's32[2]{0}', space=sflag, size = 0x8, scoped, tag = 'scoped memory for tpu_custom_call.1']
    #allocation4 [shape = 's32[2]{0}', space=sflag, size = 0x8, scoped, tag = 'scoped memory for tpu_custom_call.1']
    #allocation5 [shape = 'u8[4194304]{0}', space=vmem, size = 0x400000, scoped, tag = 'input window, operand 1']
    #allocation6 [shape = 's32[2]{0}', space=sflag, size = 0x8, scoped, tag = 'scoped memory for tpu_custom_call.1']
    #allocation7 [shape = 'u8[4194304]{0}', space=vmem, size = 0x400000, scoped, tag = 'output window, operand 0']
    %7 = vsyncpa [#allocation3], 0
    %s8 = scalar_lea.sflag [#allocation3], 1
    %9 = vsyncpa %s8, 0
    %10 = vsyncpa [#allocation6], 0
    %s11 = scalar_lea.sflag [#allocation6], 1
    %12 = vsyncpa %s11, 0
    %13 = vsyncpa [#allocation4], 0
    %s14 = scalar_lea.sflag [#allocation4], 1
    %15 = vsyncpa %s14, 0
    loop: start=0, step=1, limit=5
    $region2: #{tpu_custom_call.1} parent=1 // loop_pre_header
      _
    $region3: #{tpu_custom_call.1} parent=1 // loop_header
      %s17 = sphi 0, %s21
      %p18 = scmp.ge.s32.totalorder %s17, 5
      %s27 = sphi 0, %s29
      %s30 = sphi 0, %s27
      %s31 = sphi 0, %s30
      %s47 = sphi 0, %s31
      %s53 = sphi 0, %s55
      %s56 = sphi 0, %s53
      %s57 = sphi 0, %s56
      %s73 = sphi 0, %s57
      %s79 = sphi 0, %s81
      %s82 = sphi 0, %s79
      %s83 = sphi 0, %s82
      %s99 = sphi 0, %s83
    $region4: #{tpu_custom_call.1} parent=1 // loop_header_branch
      %20 = sbr.rel (%p18) target = $region8
    $region5: #{tpu_custom_call.1} parent=1 // loop_body
      %s22 = ssub.s32 %s17, 1
      %s23 = ssub.s32 %s17, 2
      %s24 = sadd.s32 %s17, 1
      %s25 = ssub.s32 %s17, %s24
      %p26 = scmp.eq.s32.totalorder %s25, 0
      %s28 = sadd.s32 %s27, 1
      %s29 = scalar_select %p26, %s27, %s28
      %p32 = pneg %p26
      %p33 = scmp.eq.s32.totalorder %s17, 2
      %p34 = por %p32, %p33
      %p35 = scmp.ne.s32.totalorder %s27, %s30
      %p36 = scmp.eq.s32.totalorder %s17, 0
      %p37 = por %p35, %p36
      %p38 = scmp.ne.s32.totalorder %s27, %s30
      %p39 = scmp.eq.s32.totalorder %s22, 2
      %p40 = por %p38, %p39
      %p41 = scmp.ne.s32.totalorder %s30, %s31
      %p42 = scmp.eq.s32.totalorder %s22, 0
      %p43 = por %p41, %p42
      %p44 = scmp.ne.s32.totalorder %s30, %s31
      %p45 = scmp.eq.s32.totalorder %s23, 2
      %p46 = por %p44, %p45
      %p48 = scmp.ne.s32.totalorder %s31, %s47
      %p49 = scmp.eq.s32.totalorder %s23, 0
      %p50 = por %p48, %p49
      %s51 = ssub.s32 %s17, %s24
      %p52 = scmp.eq.s32.totalorder %s51, 0
      %s54 = sadd.s32 %s53, 1
      %s55 = scalar_select %p52, %s53, %s54
      %p58 = pneg %p52
      %p59 = scmp.eq.s32.totalorder %s17, 2
      %p60 = por %p58, %p59
      %p61 = scmp.ne.s32.totalorder %s53, %s56
      %p62 = scmp.eq.s32.totalorder %s17, 0
      %p63 = por %p61, %p62
      %p64 = scmp.ne.s32.totalorder %s53, %s56
      %p65 = scmp.eq.s32.totalorder %s22, 2
      %p66 = por %p64, %p65
      %p67 = scmp.ne.s32.totalorder %s56, %s57
      %p68 = scmp.eq.s32.totalorder %s22, 0
      %p69 = por %p67, %p68
      %p70 = scmp.ne.s32.totalorder %s56, %s57
      %p71 = scmp.eq.s32.totalorder %s23, 2
      %p72 = por %p70, %p71
      %p74 = scmp.ne.s32.totalorder %s57, %s73
      %p75 = scmp.eq.s32.totalorder %s23, 0
      %p76 = por %p74, %p75
      %s77 = ssub.s32 %s17, %s24
      %p78 = scmp.eq.s32.totalorder %s77, 0
      %s80 = sadd.s32 %s79, 1
      %s81 = scalar_select %p78, %s79, %s80
      %p84 = pneg %p78
      %p85 = scmp.eq.s32.totalorder %s17, 2
      %p86 = por %p84, %p85
      %p87 = scmp.ne.s32.totalorder %s79, %s82
      %p88 = scmp.eq.s32.totalorder %s17, 0
      %p89 = por %p87, %p88
      %p90 = scmp.ne.s32.totalorder %s79, %s82
      %p91 = scmp.eq.s32.totalorder %s22, 2
      %p92 = por %p90, %p91
      %p93 = scmp.ne.s32.totalorder %s82, %s83
      %p94 = scmp.eq.s32.totalorder %s22, 0
      %p95 = por %p93, %p94
      %p96 = scmp.ne.s32.totalorder %s82, %s83
      %p97 = scmp.eq.s32.totalorder %s23, 2
      %p98 = por %p96, %p97
      %p100 = scmp.ne.s32.totalorder %s83, %s99
      %p101 = scmp.eq.s32.totalorder %s23, 0
      %p102 = por %p100, %p101
      %p103 = scmp.le.s32.totalorder 1, %s17
      %p104 = scmp.lt.s32.totalorder %s17, 4
      %p105 = pnand %p103, %p104
      %p106 = pneg %p105
      // Predicated region
      $region9: #{tpu_custom_call.1} parent=5 // pred_check
        _
      $region10: #{tpu_custom_call.1} parent=5 // pred_check_branch
        %108 = sbr.rel (%p105) target = $region12
      $region11: #{tpu_custom_call.1} parent=5 // pred_region
        %s109 = ssub.s32 %s17, 1
      $region12: #{tpu_custom_call.1} parent=5 // pred_fallthru
        _
      %p110 = scmp.lt.s32.totalorder %s17, 3
      // Predicated region
      $region13: #{tpu_custom_call.1} parent=5 // pred_check
        %p111 = pneg %p110
      $region14: #{tpu_custom_call.1} parent=5 // pred_check_branch
        %113 = sbr.rel (%p111) target = $region16
      $region15: #{tpu_custom_call.1} parent=5 // pred_region
        // Predicated region
        $region17: #{tpu_custom_call.1} parent=15 // pred_check
          %p114 = pneg %p37
        $region18: #{tpu_custom_call.1} parent=15 // pred_check_branch
          %116 = sbr.rel (%p114) target = $region20
        $region19: #{tpu_custom_call.1} parent=15 // pred_region
          %s117 = sand.u32 %s27, 1
          %s118 = scalar_lea.sflag [#allocation3], %s117
          %s119 = sand.u32 %s27, 1
          %s120 = smul.addr %s119, 4096
          %s121 = scalar_lea.vmem [#allocation2], %s120
          %s122 = smul.u32 128, %s17
          %s123 = ssub.s32 263, %s122
          %p124 = scmp.lt.s32.totalorder %s123, 128
          %s125 = scalar_select %p124, %s123, 128
          %s126 = smul.u32 8, %s125
          %s127 = smul.u32 %s126, 4
          %s128 = ssub.s32 4096, %s127
          %s129 = sshll.u32 %s128, 4
          %130 = vsyncadd %s118, %s129
          %p131 = scmp.ne.s32.totalorder 0, %s127
          %s132 = smul.addr %s122, 4
          %s133 = smul.addr %s132, 8
          %s134 = scalar_lea.hbm %s0, %s133
          %s135 = smul.u32 32, %s125
          %s136 = sshll.u32 %s134, 4
          %s137 = int_to_ptr.hbm [resolvable:$true] %s136
          %s138 = sshll.u32 %s121, 4
          %s139 = int_to_ptr.vmem [resolvable:$true] %s138
          %s140 = sshll.u32 %s135, 4
          %144 = dma.hbm_to_vmem [thread:$0]  (%p131), %s137, %s140, %s139, %s118, 512, 512, 32
        $region20: #{tpu_custom_call.1} parent=15 // pred_fallthru
          _
        // Predicated region
        $region21: #{tpu_custom_call.1} parent=15 // pred_check
          %p145 = pneg %p63
        $region22: #{tpu_custom_call.1} parent=15 // pred_check_branch
          %147 = sbr.rel (%p145) target = $region24
        $region23: #{tpu_custom_call.1} parent=15 // pred_region
          %s148 = sand.u32 %s53, 1
          %s149 = scalar_lea.sflag [#allocation6], %s148
          %s150 = sand.u32 %s53, 1
          %s151 = smul.addr %s150, 4096
          %s152 = scalar_lea.vmem [#allocation5], %s151
          %s153 = smul.u32 128, %s17
          %s154 = ssub.s32 263, %s153
          %p155 = scmp.lt.s32.totalorder %s154, 128
          %s156 = scalar_select %p155, %s154, 128
          %s157 = smul.u32 8, %s156
          %s158 = smul.u32 %s157, 4
          %s159 = ssub.s32 4096, %s158
          %s160 = sshll.u32 %s159, 4
          %161 = vsyncadd %s149, %s160
          %p162 = scmp.ne.s32.totalorder 0, %s158
          %s163 = smul.addr %s153, 4
          %s164 = smul.addr %s163, 8
          %s165 = scalar_lea.hbm %s1, %s164
          %s166 = smul.u32 32, %s156
          %s167 = sshll.u32 %s165, 4
          %s168 = int_to_ptr.hbm [resolvable:$true] %s167
          %s169 = sshll.u32 %s152, 4
          %s170 = int_to_ptr.vmem [resolvable:$true] %s169
          %s171 = sshll.u32 %s166, 4
          %175 = dma.hbm_to_vmem [thread:$0]  (%p162), %s168, %s171, %s170, %s149, 512, 512, 32
        $region24: #{tpu_custom_call.1} parent=15 // pred_fallthru
          _
      $region16: #{tpu_custom_call.1} parent=5 // pred_fallthru
        _
      %p176 = scmp.le.s32.totalorder 1, %s17
      %p177 = scmp.lt.s32.totalorder %s17, 4
      %p178 = pnand %p176, %p177
      %p179 = pneg %p178
      // Predicated region
      $region25: #{tpu_custom_call.1} parent=5 // pred_check
        _
      $region26: #{tpu_custom_call.1} parent=5 // pred_check_branch
        %181 = sbr.rel (%p178) target = $region28
      $region27: #{tpu_custom_call.1} parent=5 // pred_region
        %s182 = ssub.s32 %s17, 1
        %s183 = sand.u32 %s30, 1
        %s184 = scalar_lea.sflag [#allocation3], %s183
        %s185 = sand.u32 %s30, 1
        %s186 = smul.addr %s185, 4096
        %s187 = scalar_lea.vmem [#allocation2], %s186
        // Predicated region
        $region29: #{tpu_custom_call.1} parent=27 // pred_check
          %p188 = pneg %p43
        $region30: #{tpu_custom_call.1} parent=27 // pred_check_branch
          %190 = sbr.rel (%p188) target = $region32
        $region31: #{tpu_custom_call.1} parent=27 // pred_region
          %192 = dma.done %s184, 65536
        $region32: #{tpu_custom_call.1} parent=27 // pred_fallthru
          _
        %s193 = sand.u32 %s56, 1
        %s194 = scalar_lea.sflag [#allocation6], %s193
        %s195 = sand.u32 %s56, 1
        %s196 = smul.addr %s195, 4096
        %s197 = scalar_lea.vmem [#allocation5], %s196
        // Predicated region
        $region33: #{tpu_custom_call.1} parent=27 // pred_check
          %p198 = pneg %p69
        $region34: #{tpu_custom_call.1} parent=27 // pred_check_branch
          %200 = sbr.rel (%p198) target = $region36
        $region35: #{tpu_custom_call.1} parent=27 // pred_region
          %202 = dma.done %s194, 65536
        $region36: #{tpu_custom_call.1} parent=27 // pred_fallthru
          _
        %s203 = sand.u32 %s30, 1
        %s204 = scalar_lea.sflag [#allocation3], %s203
        %s205 = sand.u32 %s30, 1
        %s206 = smul.addr %s205, 4096
        %s207 = scalar_lea.vmem [#allocation2], %s206
        %p208 = pneg %p43
        %p209 = pneg %p40
        %s210 = sand.u32 %s56, 1
        %s211 = scalar_lea.sflag [#allocation6], %s210
        %s212 = sand.u32 %s56, 1
        %s213 = smul.addr %s212, 4096
        %s214 = scalar_lea.vmem [#allocation5], %s213
        %p215 = pneg %p69
        %p216 = pneg %p66
        %p217 = pneg %p95
        %p218 = pneg %p92
        %s219 = sand.u32 %s82, 1
        %s220 = scalar_lea.sflag [#allocation4], %s219
        %s221 = sand.u32 %s82, 1
        %s222 = smul.addr %s221, 4096
        %s223 = scalar_lea.vmem [#allocation7], %s222
        %s224 = smul.u32 128, %s22
        %s225 = ssub.s32 263, %s224
        %p226 = scmp.lt.s32.totalorder %s225, 128
        %s227 = scalar_select %p226, %s225, 128
        %s228 = smul.u32 8, %s227
        %s229 = smul.u32 %s228, 4
        %s230 = smul.u32 128, %s22
        %s231 = ssub.s32 263, %s230
        %p232 = scmp.lt.s32.totalorder %s231, 128
        %s233 = scalar_select %p232, %s231, 128
        %s234 = smul.u32 8, %s233
        %s235 = smul.u32 %s234, 4
        %s236 = smul.u32 128, %s22
        %s237 = ssub.s32 263, %s236
        %p238 = scmp.lt.s32.totalorder %s237, 128
        %s239 = scalar_select %p238, %s237, 128
        %s240 = smul.u32 8, %s239
        %s241 = smul.u32 %s240, 4
        %v242 = vld [vmem:[%s187] sm:$0xff]
        %v243 = vld [vmem:[%s187 + $0x8] sm:$0xff]
        %v244 = vld [vmem:[%s187 + $0x10] sm:$0xff]
        %v245 = vld [vmem:[%s187 + $0x18] sm:$0xff]
        %v246 = vld [vmem:[%s187 + $0x20] sm:$0xff]
        %v247 = vld [vmem:[%s187 + $0x28] sm:$0xff]
        %v248 = vld [vmem:[%s187 + $0x30] sm:$0xff]
        %v249 = vld [vmem:[%s187 + $0x38] sm:$0xff]
        %v250 = vld [vmem:[%s187 + $0x40] sm:$0xff]
        %v251 = vld [vmem:[%s187 + $0x48] sm:$0xff]
        %v252 = vld [vmem:[%s187 + $0x50] sm:$0xff]
        %v253 = vld [vmem:[%s187 + $0x58] sm:$0xff]
        %v254 = vld [vmem:[%s187 + $0x60] sm:$0xff]
        %v255 = vld [vmem:[%s187 + $0x68] sm:$0xff]
        %v256 = vld [vmem:[%s187 + $0x70] sm:$0xff]
        %v257 = vld [vmem:[%s187 + $0x78] sm:$0xff]
        %v258 = vld [vmem:[%s187 + $0x80] sm:$0xff]
        %v259 = vld [vmem:[%s187 + $0x88] sm:$0xff]
        %v260 = vld [vmem:[%s187 + $0x90] sm:$0xff]
        %v261 = vld [vmem:[%s187 + $0x98] sm:$0xff]
        %v262 = vld [vmem:[%s187 + $0xa0] sm:$0xff]
        %v263 = vld [vmem:[%s187 + $0xa8] sm:$0xff]
        %v264 = vld [vmem:[%s187 + $0xb0] sm:$0xff]
        %v265 = vld [vmem:[%s187 + $0xb8] sm:$0xff]
        %v266 = vld [vmem:[%s187 + $0xc0] sm:$0xff]
        %v267 = vld [vmem:[%s187 + $0xc8] sm:$0xff]
        %v268 = vld [vmem:[%s187 + $0xd0] sm:$0xff]
        %v269 = vld [vmem:[%s187 + $0xd8] sm:$0xff]
        %v270 = vld [vmem:[%s187 + $0xe0] sm:$0xff]
        %v271 = vld [vmem:[%s187 + $0xe8] sm:$0xff]
        %v272 = vld [vmem:[%s187 + $0xf0] sm:$0xff]
        %v273 = vld [vmem:[%s187 + $0xf8] sm:$0xff]
        %v274 = vld [vmem:[%s187 + $0x100] sm:$0xff]
        %v275 = vld [vmem:[%s187 + $0x108] sm:$0xff]
        %v276 = vld [vmem:[%s187 + $0x110] sm:$0xff]
        %v277 = vld [vmem:[%s187 + $0x118] sm:$0xff]
        %v278 = vld [vmem:[%s187 + $0x120] sm:$0xff]
        %v279 = vld [vmem:[%s187 + $0x128] sm:$0xff]
        %v280 = vld [vmem:[%s187 + $0x130] sm:$0xff]
        %v281 = vld [vmem:[%s187 + $0x138] sm:$0xff]
        %v282 = vld [vmem:[%s187 + $0x140] sm:$0xff]
        %v283 = vld [vmem:[%s187 + $0x148] sm:$0xff]
        %v284 = vld [vmem:[%s187 + $0x150] sm:$0xff]
        %v285 = vld [vmem:[%s187 + $0x158] sm:$0xff]
        %v286 = vld [vmem:[%s187 + $0x160] sm:$0xff]
        %v287 = vld [vmem:[%s187 + $0x168] sm:$0xff]
        %v288 = vld [vmem:[%s187 + $0x170] sm:$0xff]
        %v289 = vld [vmem:[%s187 + $0x178] sm:$0xff]
        %v290 = vld [vmem:[%s187 + $0x180] sm:$0xff]
        %v291 = vld [vmem:[%s187 + $0x188] sm:$0xff]
        %v292 = vld [vmem:[%s187 + $0x190] sm:$0xff]
        %v293 = vld [vmem:[%s187 + $0x198] sm:$0xff]
        %v294 = vld [vmem:[%s187 + $0x1a0] sm:$0xff]
        %v295 = vld [vmem:[%s187 + $0x1a8] sm:$0xff]
        %v296 = vld [vmem:[%s187 + $0x1b0] sm:$0xff]
        %v297 = vld [vmem:[%s187 + $0x1b8] sm:$0xff]
        %v298 = vld [vmem:[%s187 + $0x1c0] sm:$0xff]
        %v299 = vld [vmem:[%s187 + $0x1c8] sm:$0xff]
        %v300 = vld [vmem:[%s187 + $0x1d0] sm:$0xff]
        %v301 = vld [vmem:[%s187 + $0x1d8] sm:$0xff]
        %v302 = vld [vmem:[%s187 + $0x1e0] sm:$0xff]
        %v303 = vld [vmem:[%s187 + $0x1e8] sm:$0xff]
        %v304 = vld [vmem:[%s187 + $0x1f0] sm:$0xff]
        %v305 = vld [vmem:[%s187 + $0x1f8] sm:$0xff]
        %v306 = vld [vmem:[%s187 + $0x200] sm:$0xff]
        %v307 = vld [vmem:[%s187 + $0x208] sm:$0xff]
        %v308 = vld [vmem:[%s187 + $0x210] sm:$0xff]
        %v309 = vld [vmem:[%s187 + $0x218] sm:$0xff]
        %v310 = vld [vmem:[%s187 + $0x220] sm:$0xff]
        %v311 = vld [vmem:[%s187 + $0x228] sm:$0xff]
        %v312 = vld [vmem:[%s187 + $0x230] sm:$0xff]
        %v313 = vld [vmem:[%s187 + $0x238] sm:$0xff]
        %v314 = vld [vmem:[%s187 + $0x240] sm:$0xff]
        %v315 = vld [vmem:[%s187 + $0x248] sm:$0xff]
        %v316 = vld [vmem:[%s187 + $0x250] sm:$0xff]
        %v317 = vld [vmem:[%s187 + $0x258] sm:$0xff]
        %v318 = vld [vmem:[%s187 + $0x260] sm:$0xff]
        %v319 = vld [vmem:[%s187 + $0x268] sm:$0xff]
        %v320 = vld [vmem:[%s187 + $0x270] sm:$0xff]
        %v321 = vld [vmem:[%s187 + $0x278] sm:$0xff]
        %v322 = vld [vmem:[%s187 + $0x280] sm:$0xff]
        %v323 = vld [vmem:[%s187 + $0x288] sm:$0xff]
        %v324 = vld [vmem:[%s187 + $0x290] sm:$0xff]
        %v325 = vld [vmem:[%s187 + $0x298] sm:$0xff]
        %v326 = vld [vmem:[%s187 + $0x2a0] sm:$0xff]
        %v327 = vld [vmem:[%s187 + $0x2a8] sm:$0xff]
        %v328 = vld [vmem:[%s187 + $0x2b0] sm:$0xff]
        %v329 = vld [vmem:[%s187 + $0x2b8] sm:$0xff]
        %v330 = vld [vmem:[%s187 + $0x2c0] sm:$0xff]
        %v331 = vld [vmem:[%s187 + $0x2c8] sm:$0xff]
        %v332 = vld [vmem:[%s187 + $0x2d0] sm:$0xff]
        %v333 = vld [vmem:[%s187 + $0x2d8] sm:$0xff]
        %v334 = vld [vmem:[%s187 + $0x2e0] sm:$0xff]
        %v335 = vld [vmem:[%s187 + $0x2e8] sm:$0xff]
        %v336 = vld [vmem:[%s187 + $0x2f0] sm:$0xff]
        %v337 = vld [vmem:[%s187 + $0x2f8] sm:$0xff]
        %v338 = vld [vmem:[%s187 + $0x300] sm:$0xff]
        %v339 = vld [vmem:[%s187 + $0x308] sm:$0xff]
        %v340 = vld [vmem:[%s187 + $0x310] sm:$0xff]
        %v341 = vld [vmem:[%s187 + $0x318] sm:$0xff]
        %v342 = vld [vmem:[%s187 + $0x320] sm:$0xff]
        %v343 = vld [vmem:[%s187 + $0x328] sm:$0xff]
        %v344 = vld [vmem:[%s187 + $0x330] sm:$0xff]
        %v345 = vld [vmem:[%s187 + $0x338] sm:$0xff]
        %v346 = vld [vmem:[%s187 + $0x340] sm:$0xff]
        %v347 = vld [vmem:[%s187 + $0x348] sm:$0xff]
        %v348 = vld [vmem:[%s187 + $0x350] sm:$0xff]
        %v349 = vld [vmem:[%s187 + $0x358] sm:$0xff]
        %v350 = vld [vmem:[%s187 + $0x360] sm:$0xff]
        %v351 = vld [vmem:[%s187 + $0x368] sm:$0xff]
        %v352 = vld [vmem:[%s187 + $0x370] sm:$0xff]
        %v353 = vld [vmem:[%s187 + $0x378] sm:$0xff]
        %v354 = vld [vmem:[%s187 + $0x380] sm:$0xff]
        %v355 = vld [vmem:[%s187 + $0x388] sm:$0xff]
        %v356 = vld [vmem:[%s187 + $0x390] sm:$0xff]
        %v357 = vld [vmem:[%s187 + $0x398] sm:$0xff]
        %v358 = vld [vmem:[%s187 + $0x3a0] sm:$0xff]
        %v359 = vld [vmem:[%s187 + $0x3a8] sm:$0xff]
        %v360 = vld [vmem:[%s187 + $0x3b0] sm:$0xff]
        %v361 = vld [vmem:[%s187 + $0x3b8] sm:$0xff]
        %v362 = vld [vmem:[%s187 + $0x3c0] sm:$0xff]
        %v363 = vld [vmem:[%s187 + $0x3c8] sm:$0xff]
        %v364 = vld [vmem:[%s187 + $0x3d0] sm:$0xff]
        %v365 = vld [vmem:[%s187 + $0x3d8] sm:$0xff]
        %v366 = vld [vmem:[%s187 + $0x3e0] sm:$0xff]
        %v367 = vld [vmem:[%s187 + $0x3e8] sm:$0xff]
        %v368 = vld [vmem:[%s187 + $0x3f0] sm:$0xff]
        %v369 = vld [vmem:[%s187 + $0x3f8] sm:$0xff]
        %v370 = vld [vmem:[%s187 + $0x400] sm:$0xff]
        %v371 = vld [vmem:[%s187 + $0x408] sm:$0xff]
        %v372 = vld [vmem:[%s187 + $0x410] sm:$0xff]
        %v373 = vld [vmem:[%s187 + $0x418] sm:$0xff]
        %v374 = vld [vmem:[%s187 + $0x420] sm:$0xff]
        %v375 = vld [vmem:[%s187 + $0x428] sm:$0xff]
        %v376 = vld [vmem:[%s187 + $0x430] sm:$0xff]
        %v377 = vld [vmem:[%s187 + $0x438] sm:$0xff]
        %v378 = vld [vmem:[%s187 + $0x440] sm:$0xff]
        %v379 = vld [vmem:[%s187 + $0x448] sm:$0xff]
        %v380 = vld [vmem:[%s187 + $0x450] sm:$0xff]
        %v381 = vld [vmem:[%s187 + $0x458] sm:$0xff]
        %v382 = vld [vmem:[%s187 + $0x460] sm:$0xff]
        %v383 = vld [vmem:[%s187 + $0x468] sm:$0xff]
        %v384 = vld [vmem:[%s187 + $0x470] sm:$0xff]
        %v385 = vld [vmem:[%s187 + $0x478] sm:$0xff]
        %v386 = vld [vmem:[%s187 + $0x480] sm:$0xff]
        %v387 = vld [vmem:[%s187 + $0x488] sm:$0xff]
        %v388 = vld [vmem:[%s187 + $0x490] sm:$0xff]
        %v389 = vld [vmem:[%s187 + $0x498] sm:$0xff]
        %v390 = vld [vmem:[%s187 + $0x4a0] sm:$0xff]
        %v391 = vld [vmem:[%s187 + $0x4a8] sm:$0xff]
        %v392 = vld [vmem:[%s187 + $0x4b0] sm:$0xff]
        %v393 = vld [vmem:[%s187 + $0x4b8] sm:$0xff]
        %v394 = vld [vmem:[%s187 + $0x4c0] sm:$0xff]
        %v395 = vld [vmem:[%s187 + $0x4c8] sm:$0xff]
        %v396 = vld [vmem:[%s187 + $0x4d0] sm:$0xff]
        %v397 = vld [vmem:[%s187 + $0x4d8] sm:$0xff]
        %v398 = vld [vmem:[%s187 + $0x4e0] sm:$0xff]
        %v399 = vld [vmem:[%s187 + $0x4e8] sm:$0xff]
        %v400 = vld [vmem:[%s187 + $0x4f0] sm:$0xff]
        %v401 = vld [vmem:[%s187 + $0x4f8] sm:$0xff]
        %v402 = vld [vmem:[%s187 + $0x500] sm:$0xff]
        %v403 = vld [vmem:[%s187 + $0x508] sm:$0xff]
        %v404 = vld [vmem:[%s187 + $0x510] sm:$0xff]
        %v405 = vld [vmem:[%s187 + $0x518] sm:$0xff]
        %v406 = vld [vmem:[%s187 + $0x520] sm:$0xff]
        %v407 = vld [vmem:[%s187 + $0x528] sm:$0xff]
        %v408 = vld [vmem:[%s187 + $0x530] sm:$0xff]
        %v409 = vld [vmem:[%s187 + $0x538] sm:$0xff]
        %v410 = vld [vmem:[%s187 + $0x540] sm:$0xff]
        %v411 = vld [vmem:[%s187 + $0x548] sm:$0xff]
        %v412 = vld [vmem:[%s187 + $0x550] sm:$0xff]
        %v413 = vld [vmem:[%s187 + $0x558] sm:$0xff]
        %v414 = vld [vmem:[%s187 + $0x560] sm:$0xff]
        %v415 = vld [vmem:[%s187 + $0x568] sm:$0xff]
        %v416 = vld [vmem:[%s187 + $0x570] sm:$0xff]
        %v417 = vld [vmem:[%s187 + $0x578] sm:$0xff]
        %v418 = vld [vmem:[%s187 + $0x580] sm:$0xff]
        %v419 = vld [vmem:[%s187 + $0x588] sm:$0xff]
        %v420 = vld [vmem:[%s187 + $0x590] sm:$0xff]
        %v421 = vld [vmem:[%s187 + $0x598] sm:$0xff]
        %v422 = vld [vmem:[%s187 + $0x5a0] sm:$0xff]
        %v423 = vld [vmem:[%s187 + $0x5a8] sm:$0xff]
        %v424 = vld [vmem:[%s187 + $0x5b0] sm:$0xff]
        %v425 = vld [vmem:[%s187 + $0x5b8] sm:$0xff]
        %v426 = vld [vmem:[%s187 + $0x5c0] sm:$0xff]
        %v427 = vld [vmem:[%s187 + $0x5c8] sm:$0xff]
        %v428 = vld [vmem:[%s187 + $0x5d0] sm:$0xff]
        %v429 = vld [vmem:[%s187 + $0x5d8] sm:$0xff]
        %v430 = vld [vmem:[%s187 + $0x5e0] sm:$0xff]
        %v431 = vld [vmem:[%s187 + $0x5e8] sm:$0xff]
        %v432 = vld [vmem:[%s187 + $0x5f0] sm:$0xff]
        %v433 = vld [vmem:[%s187 + $0x5f8] sm:$0xff]
        %v434 = vld [vmem:[%s187 + $0x600] sm:$0xff]
        %v435 = vld [vmem:[%s187 + $0x608] sm:$0xff]
        %v436 = vld [vmem:[%s187 + $0x610] sm:$0xff]
        %v437 = vld [vmem:[%s187 + $0x618] sm:$0xff]
        %v438 = vld [vmem:[%s187 + $0x620] sm:$0xff]
        %v439 = vld [vmem:[%s187 + $0x628] sm:$0xff]
        %v440 = vld [vmem:[%s187 + $0x630] sm:$0xff]
        %v441 = vld [vmem:[%s187 + $0x638] sm:$0xff]
        %v442 = vld [vmem:[%s187 + $0x640] sm:$0xff]
        %v443 = vld [vmem:[%s187 + $0x648] sm:$0xff]
        %v444 = vld [vmem:[%s187 + $0x650] sm:$0xff]
        %v445 = vld [vmem:[%s187 + $0x658] sm:$0xff]
        %v446 = vld [vmem:[%s187 + $0x660] sm:$0xff]
        %v447 = vld [vmem:[%s187 + $0x668] sm:$0xff]
        %v448 = vld [vmem:[%s187 + $0x670] sm:$0xff]
        %v449 = vld [vmem:[%s187 + $0x678] sm:$0xff]
        %v450 = vld [vmem:[%s187 + $0x680] sm:$0xff]
        %v451 = vld [vmem:[%s187 + $0x688] sm:$0xff]
        %v452 = vld [vmem:[%s187 + $0x690] sm:$0xff]
        %v453 = vld [vmem:[%s187 + $0x698] sm:$0xff]
        %v454 = vld [vmem:[%s187 + $0x6a0] sm:$0xff]
        %v455 = vld [vmem:[%s187 + $0x6a8] sm:$0xff]
        %v456 = vld [vmem:[%s187 + $0x6b0] sm:$0xff]
        %v457 = vld [vmem:[%s187 + $0x6b8] sm:$0xff]
        %v458 = vld [vmem:[%s187 + $0x6c0] sm:$0xff]
        %v459 = vld [vmem:[%s187 + $0x6c8] sm:$0xff]
        %v460 = vld [vmem:[%s187 + $0x6d0] sm:$0xff]
        %v461 = vld [vmem:[%s187 + $0x6d8] sm:$0xff]
        %v462 = vld [vmem:[%s187 + $0x6e0] sm:$0xff]
        %v463 = vld [vmem:[%s187 + $0x6e8] sm:$0xff]
        %v464 = vld [vmem:[%s187 + $0x6f0] sm:$0xff]
        %v465 = vld [vmem:[%s187 + $0x6f8] sm:$0xff]
        %v466 = vld [vmem:[%s187 + $0x700] sm:$0xff]
        %v467 = vld [vmem:[%s187 + $0x708] sm:$0xff]
        %v468 = vld [vmem:[%s187 + $0x710] sm:$0xff]
        %v469 = vld [vmem:[%s187 + $0x718] sm:$0xff]
        %v470 = vld [vmem:[%s187 + $0x720] sm:$0xff]
        %v471 = vld [vmem:[%s187 + $0x728] sm:$0xff]
        %v472 = vld [vmem:[%s187 + $0x730] sm:$0xff]
        %v473 = vld [vmem:[%s187 + $0x738] sm:$0xff]
        %v474 = vld [vmem:[%s187 + $0x740] sm:$0xff]
        %v475 = vld [vmem:[%s187 + $0x748] sm:$0xff]
        %v476 = vld [vmem:[%s187 + $0x750] sm:$0xff]
        %v477 = vld [vmem:[%s187 + $0x758] sm:$0xff]
        %v478 = vld [vmem:[%s187 + $0x760] sm:$0xff]
        %v479 = vld [vmem:[%s187 + $0x768] sm:$0xff]
        %v480 = vld [vmem:[%s187 + $0x770] sm:$0xff]
        %v481 = vld [vmem:[%s187 + $0x778] sm:$0xff]
        %v482 = vld [vmem:[%s187 + $0x780] sm:$0xff]
        %v483 = vld [vmem:[%s187 + $0x788] sm:$0xff]
        %v484 = vld [vmem:[%s187 + $0x790] sm:$0xff]
        %v485 = vld [vmem:[%s187 + $0x798] sm:$0xff]
        %v486 = vld [vmem:[%s187 + $0x7a0] sm:$0xff]
        %v487 = vld [vmem:[%s187 + $0x7a8] sm:$0xff]
        %v488 = vld [vmem:[%s187 + $0x7b0] sm:$0xff]
        %v489 = vld [vmem:[%s187 + $0x7b8] sm:$0xff]
        %v490 = vld [vmem:[%s187 + $0x7c0] sm:$0xff]
        %v491 = vld [vmem:[%s187 + $0x7c8] sm:$0xff]
        %v492 = vld [vmem:[%s187 + $0x7d0] sm:$0xff]
        %v493 = vld [vmem:[%s187 + $0x7d8] sm:$0xff]
        %v494 = vld [vmem:[%s187 + $0x7e0] sm:$0xff]
        %v495 = vld [vmem:[%s187 + $0x7e8] sm:$0xff]
        %v496 = vld [vmem:[%s187 + $0x7f0] sm:$0xff]
        %v497 = vld [vmem:[%s187 + $0x7f8] sm:$0xff]
        %v498 = vld [vmem:[%s187 + $0x800] sm:$0xff]
        %v499 = vld [vmem:[%s187 + $0x808] sm:$0xff]
        %v500 = vld [vmem:[%s187 + $0x810] sm:$0xff]
        %v501 = vld [vmem:[%s187 + $0x818] sm:$0xff]
        %v502 = vld [vmem:[%s187 + $0x820] sm:$0xff]
        %v503 = vld [vmem:[%s187 + $0x828] sm:$0xff]
        %v504 = vld [vmem:[%s187 + $0x830] sm:$0xff]
        %v505 = vld [vmem:[%s187 + $0x838] sm:$0xff]
        %v506 = vld [vmem:[%s187 + $0x840] sm:$0xff]
        %v507 = vld [vmem:[%s187 + $0x848] sm:$0xff]
        %v508 = vld [vmem:[%s187 + $0x850] sm:$0xff]
        %v509 = vld [vmem:[%s187 + $0x858] sm:$0xff]
        %v510 = vld [vmem:[%s187 + $0x860] sm:$0xff]
        %v511 = vld [vmem:[%s187 + $0x868] sm:$0xff]
        %v512 = vld [vmem:[%s187 + $0x870] sm:$0xff]
        %v513 = vld [vmem:[%s187 + $0x878] sm:$0xff]
        %v514 = vld [vmem:[%s187 + $0x880] sm:$0xff]
        %v515 = vld [vmem:[%s187 + $0x888] sm:$0xff]
        %v516 = vld [vmem:[%s187 + $0x890] sm:$0xff]
        %v517 = vld [vmem:[%s187 + $0x898] sm:$0xff]
        %v518 = vld [vmem:[%s187 + $0x8a0] sm:$0xff]
        %v519 = vld [vmem:[%s187 + $0x8a8] sm:$0xff]
        %v520 = vld [vmem:[%s187 + $0x8b0] sm:$0xff]
        %v521 = vld [vmem:[%s187 + $0x8b8] sm:$0xff]
        %v522 = vld [vmem:[%s187 + $0x8c0] sm:$0xff]
        %v523 = vld [vmem:[%s187 + $0x8c8] sm:$0xff]
        %v524 = vld [vmem:[%s187 + $0x8d0] sm:$0xff]
        %v525 = vld [vmem:[%s187 + $0x8d8] sm:$0xff]
        %v526 = vld [vmem:[%s187 + $0x8e0] sm:$0xff]
        %v527 = vld [vmem:[%s187 + $0x8e8] sm:$0xff]
        %v528 = vld [vmem:[%s187 + $0x8f0] sm:$0xff]
        %v529 = vld [vmem:[%s187 + $0x8f8] sm:$0xff]
        %v530 = vld [vmem:[%s187 + $0x900] sm:$0xff]
        %v531 = vld [vmem:[%s187 + $0x908] sm:$0xff]
        %v532 = vld [vmem:[%s187 + $0x910] sm:$0xff]
        %v533 = vld [vmem:[%s187 + $0x918] sm:$0xff]
        %v534 = vld [vmem:[%s187 + $0x920] sm:$0xff]
        %v535 = vld [vmem:[%s187 + $0x928] sm:$0xff]
        %v536 = vld [vmem:[%s187 + $0x930] sm:$0xff]
        %v537 = vld [vmem:[%s187 + $0x938] sm:$0xff]
        %v538 = vld [vmem:[%s187 + $0x940] sm:$0xff]
        %v539 = vld [vmem:[%s187 + $0x948] sm:$0xff]
        %v540 = vld [vmem:[%s187 + $0x950] sm:$0xff]
        %v541 = vld [vmem:[%s187 + $0x958] sm:$0xff]
        %v542 = vld [vmem:[%s187 + $0x960] sm:$0xff]
        %v543 = vld [vmem:[%s187 + $0x968] sm:$0xff]
        %v544 = vld [vmem:[%s187 + $0x970] sm:$0xff]
        %v545 = vld [vmem:[%s187 + $0x978] sm:$0xff]
        %v546 = vld [vmem:[%s187 + $0x980] sm:$0xff]
        %v547 = vld [vmem:[%s187 + $0x988] sm:$0xff]
        %v548 = vld [vmem:[%s187 + $0x990] sm:$0xff]
        %v549 = vld [vmem:[%s187 + $0x998] sm:$0xff]
        %v550 = vld [vmem:[%s187 + $0x9a0] sm:$0xff]
        %v551 = vld [vmem:[%s187 + $0x9a8] sm:$0xff]
        %v552 = vld [vmem:[%s187 + $0x9b0] sm:$0xff]
        %v553 = vld [vmem:[%s187 + $0x9b8] sm:$0xff]
        %v554 = vld [vmem:[%s187 + $0x9c0] sm:$0xff]
        %v555 = vld [vmem:[%s187 + $0x9c8] sm:$0xff]
        %v556 = vld [vmem:[%s187 + $0x9d0] sm:$0xff]
        %v557 = vld [vmem:[%s187 + $0x9d8] sm:$0xff]
        %v558 = vld [vmem:[%s187 + $0x9e0] sm:$0xff]
        %v559 = vld [vmem:[%s187 + $0x9e8] sm:$0xff]
        %v560 = vld [vmem:[%s187 + $0x9f0] sm:$0xff]
        %v561 = vld [vmem:[%s187 + $0x9f8] sm:$0xff]
        %v562 = vld [vmem:[%s187 + $0xa00] sm:$0xff]
        %v563 = vld [vmem:[%s187 + $0xa08] sm:$0xff]
        %v564 = vld [vmem:[%s187 + $0xa10] sm:$0xff]
        %v565 = vld [vmem:[%s187 + $0xa18] sm:$0xff]
        %v566 = vld [vmem:[%s187 + $0xa20] sm:$0xff]
        %v567 = vld [vmem:[%s187 + $0xa28] sm:$0xff]
        %v568 = vld [vmem:[%s187 + $0xa30] sm:$0xff]
        %v569 = vld [vmem:[%s187 + $0xa38] sm:$0xff]
        %v570 = vld [vmem:[%s187 + $0xa40] sm:$0xff]
        %v571 = vld [vmem:[%s187 + $0xa48] sm:$0xff]
        %v572 = vld [vmem:[%s187 + $0xa50] sm:$0xff]
        %v573 = vld [vmem:[%s187 + $0xa58] sm:$0xff]
        %v574 = vld [vmem:[%s187 + $0xa60] sm:$0xff]
        %v575 = vld [vmem:[%s187 + $0xa68] sm:$0xff]
        %v576 = vld [vmem:[%s187 + $0xa70] sm:$0xff]
        %v577 = vld [vmem:[%s187 + $0xa78] sm:$0xff]
        %v578 = vld [vmem:[%s187 + $0xa80] sm:$0xff]
        %v579 = vld [vmem:[%s187 + $0xa88] sm:$0xff]
        %v580 = vld [vmem:[%s187 + $0xa90] sm:$0xff]
        %v581 = vld [vmem:[%s187 + $0xa98] sm:$0xff]
        %v582 = vld [vmem:[%s187 + $0xaa0] sm:$0xff]
        %v583 = vld [vmem:[%s187 + $0xaa8] sm:$0xff]
        %v584 = vld [vmem:[%s187 + $0xab0] sm:$0xff]
        %v585 = vld [vmem:[%s187 + $0xab8] sm:$0xff]
        %v586 = vld [vmem:[%s187 + $0xac0] sm:$0xff]
        %v587 = vld [vmem:[%s187 + $0xac8] sm:$0xff]
        %v588 = vld [vmem:[%s187 + $0xad0] sm:$0xff]
        %v589 = vld [vmem:[%s187 + $0xad8] sm:$0xff]
        %v590 = vld [vmem:[%s187 + $0xae0] sm:$0xff]
        %v591 = vld [vmem:[%s187 + $0xae8] sm:$0xff]
        %v592 = vld [vmem:[%s187 + $0xaf0] sm:$0xff]
        %v593 = vld [vmem:[%s187 + $0xaf8] sm:$0xff]
        %v594 = vld [vmem:[%s187 + $0xb00] sm:$0xff]
        %v595 = vld [vmem:[%s187 + $0xb08] sm:$0xff]
        %v596 = vld [vmem:[%s187 + $0xb10] sm:$0xff]
        %v597 = vld [vmem:[%s187 + $0xb18] sm:$0xff]
        %v598 = vld [vmem:[%s187 + $0xb20] sm:$0xff]
        %v599 = vld [vmem:[%s187 + $0xb28] sm:$0xff]
        %v600 = vld [vmem:[%s187 + $0xb30] sm:$0xff]
        %v601 = vld [vmem:[%s187 + $0xb38] sm:$0xff]
        %v602 = vld [vmem:[%s187 + $0xb40] sm:$0xff]
        %v603 = vld [vmem:[%s187 + $0xb48] sm:$0xff]
        %v604 = vld [vmem:[%s187 + $0xb50] sm:$0xff]
        %v605 = vld [vmem:[%s187 + $0xb58] sm:$0xff]
        %v606 = vld [vmem:[%s187 + $0xb60] sm:$0xff]
        %v607 = vld [vmem:[%s187 + $0xb68] sm:$0xff]
        %v608 = vld [vmem:[%s187 + $0xb70] sm:$0xff]
        %v609 = vld [vmem:[%s187 + $0xb78] sm:$0xff]
        %v610 = vld [vmem:[%s187 + $0xb80] sm:$0xff]
        %v611 = vld [vmem:[%s187 + $0xb88] sm:$0xff]
        %v612 = vld [vmem:[%s187 + $0xb90] sm:$0xff]
        %v613 = vld [vmem:[%s187 + $0xb98] sm:$0xff]
        %v614 = vld [vmem:[%s187 + $0xba0] sm:$0xff]
        %v615 = vld [vmem:[%s187 + $0xba8] sm:$0xff]
        %v616 = vld [vmem:[%s187 + $0xbb0] sm:$0xff]
        %v617 = vld [vmem:[%s187 + $0xbb8] sm:$0xff]
        %v618 = vld [vmem:[%s187 + $0xbc0] sm:$0xff]
        %v619 = vld [vmem:[%s187 + $0xbc8] sm:$0xff]
        %v620 = vld [vmem:[%s187 + $0xbd0] sm:$0xff]
        %v621 = vld [vmem:[%s187 + $0xbd8] sm:$0xff]
        %v622 = vld [vmem:[%s187 + $0xbe0] sm:$0xff]
        %v623 = vld [vmem:[%s187 + $0xbe8] sm:$0xff]
        %v624 = vld [vmem:[%s187 + $0xbf0] sm:$0xff]
        %v625 = vld [vmem:[%s187 + $0xbf8] sm:$0xff]
        %v626 = vld [vmem:[%s187 + $0xc00] sm:$0xff]
        %v627 = vld [vmem:[%s187 + $0xc08] sm:$0xff]
        %v628 = vld [vmem:[%s187 + $0xc10] sm:$0xff]
        %v629 = vld [vmem:[%s187 + $0xc18] sm:$0xff]
        %v630 = vld [vmem:[%s187 + $0xc20] sm:$0xff]
        %v631 = vld [vmem:[%s187 + $0xc28] sm:$0xff]
        %v632 = vld [vmem:[%s187 + $0xc30] sm:$0xff]
        %v633 = vld [vmem:[%s187 + $0xc38] sm:$0xff]
        %v634 = vld [vmem:[%s187 + $0xc40] sm:$0xff]
        %v635 = vld [vmem:[%s187 + $0xc48] sm:$0xff]
        %v636 = vld [vmem:[%s187 + $0xc50] sm:$0xff]
        %v637 = vld [vmem:[%s187 + $0xc58] sm:$0xff]
        %v638 = vld [vmem:[%s187 + $0xc60] sm:$0xff]
        %v639 = vld [vmem:[%s187 + $0xc68] sm:$0xff]
        %v640 = vld [vmem:[%s187 + $0xc70] sm:$0xff]
        %v641 = vld [vmem:[%s187 + $0xc78] sm:$0xff]
        %v642 = vld [vmem:[%s187 + $0xc80] sm:$0xff]
        %v643 = vld [vmem:[%s187 + $0xc88] sm:$0xff]
        %v644 = vld [vmem:[%s187 + $0xc90] sm:$0xff]
        %v645 = vld [vmem:[%s187 + $0xc98] sm:$0xff]
        %v646 = vld [vmem:[%s187 + $0xca0] sm:$0xff]
        %v647 = vld [vmem:[%s187 + $0xca8] sm:$0xff]
        %v648 = vld [vmem:[%s187 + $0xcb0] sm:$0xff]
        %v649 = vld [vmem:[%s187 + $0xcb8] sm:$0xff]
        %v650 = vld [vmem:[%s187 + $0xcc0] sm:$0xff]
        %v651 = vld [vmem:[%s187 + $0xcc8] sm:$0xff]
        %v652 = vld [vmem:[%s187 + $0xcd0] sm:$0xff]
        %v653 = vld [vmem:[%s187 + $0xcd8] sm:$0xff]
        %v654 = vld [vmem:[%s187 + $0xce0] sm:$0xff]
        %v655 = vld [vmem:[%s187 + $0xce8] sm:$0xff]
        %v656 = vld [vmem:[%s187 + $0xcf0] sm:$0xff]
        %v657 = vld [vmem:[%s187 + $0xcf8] sm:$0xff]
        %v658 = vld [vmem:[%s187 + $0xd00] sm:$0xff]
        %v659 = vld [vmem:[%s187 + $0xd08] sm:$0xff]
        %v660 = vld [vmem:[%s187 + $0xd10] sm:$0xff]
        %v661 = vld [vmem:[%s187 + $0xd18] sm:$0xff]
        %v662 = vld [vmem:[%s187 + $0xd20] sm:$0xff]
        %v663 = vld [vmem:[%s187 + $0xd28] sm:$0xff]
        %v664 = vld [vmem:[%s187 + $0xd30] sm:$0xff]
        %v665 = vld [vmem:[%s187 + $0xd38] sm:$0xff]
        %v666 = vld [vmem:[%s187 + $0xd40] sm:$0xff]
        %v667 = vld [vmem:[%s187 + $0xd48] sm:$0xff]
        %v668 = vld [vmem:[%s187 + $0xd50] sm:$0xff]
        %v669 = vld [vmem:[%s187 + $0xd58] sm:$0xff]
        %v670 = vld [vmem:[%s187 + $0xd60] sm:$0xff]
        %v671 = vld [vmem:[%s187 + $0xd68] sm:$0xff]
        %v672 = vld [vmem:[%s187 + $0xd70] sm:$0xff]
        %v673 = vld [vmem:[%s187 + $0xd78] sm:$0xff]
        %v674 = vld [vmem:[%s187 + $0xd80] sm:$0xff]
        %v675 = vld [vmem:[%s187 + $0xd88] sm:$0xff]
        %v676 = vld [vmem:[%s187 + $0xd90] sm:$0xff]
        %v677 = vld [vmem:[%s187 + $0xd98] sm:$0xff]
        %v678 = vld [vmem:[%s187 + $0xda0] sm:$0xff]
        %v679 = vld [vmem:[%s187 + $0xda8] sm:$0xff]
        %v680 = vld [vmem:[%s187 + $0xdb0] sm:$0xff]
        %v681 = vld [vmem:[%s187 + $0xdb8] sm:$0xff]
        %v682 = vld [vmem:[%s187 + $0xdc0] sm:$0xff]
        %v683 = vld [vmem:[%s187 + $0xdc8] sm:$0xff]
        %v684 = vld [vmem:[%s187 + $0xdd0] sm:$0xff]
        %v685 = vld [vmem:[%s187 + $0xdd8] sm:$0xff]
        %v686 = vld [vmem:[%s187 + $0xde0] sm:$0xff]
        %v687 = vld [vmem:[%s187 + $0xde8] sm:$0xff]
        %v688 = vld [vmem:[%s187 + $0xdf0] sm:$0xff]
        %v689 = vld [vmem:[%s187 + $0xdf8] sm:$0xff]
        %v690 = vld [vmem:[%s187 + $0xe00] sm:$0xff]
        %v691 = vld [vmem:[%s187 + $0xe08] sm:$0xff]
        %v692 = vld [vmem:[%s187 + $0xe10] sm:$0xff]
        %v693 = vld [vmem:[%s187 + $0xe18] sm:$0xff]
        %v694 = vld [vmem:[%s187 + $0xe20] sm:$0xff]
        %v695 = vld [vmem:[%s187 + $0xe28] sm:$0xff]
        %v696 = vld [vmem:[%s187 + $0xe30] sm:$0xff]
        %v697 = vld [vmem:[%s187 + $0xe38] sm:$0xff]
        %v698 = vld [vmem:[%s187 + $0xe40] sm:$0xff]
        %v699 = vld [vmem:[%s187 + $0xe48] sm:$0xff]
        %v700 = vld [vmem:[%s187 + $0xe50] sm:$0xff]
        %v701 = vld [vmem:[%s187 + $0xe58] sm:$0xff]
        %v702 = vld [vmem:[%s187 + $0xe60] sm:$0xff]
        %v703 = vld [vmem:[%s187 + $0xe68] sm:$0xff]
        %v704 = vld [vmem:[%s187 + $0xe70] sm:$0xff]
        %v705 = vld [vmem:[%s187 + $0xe78] sm:$0xff]
        %v706 = vld [vmem:[%s187 + $0xe80] sm:$0xff]
        %v707 = vld [vmem:[%s187 + $0xe88] sm:$0xff]
        %v708 = vld [vmem:[%s187 + $0xe90] sm:$0xff]
        %v709 = vld [vmem:[%s187 + $0xe98] sm:$0xff]
        %v710 = vld [vmem:[%s187 + $0xea0] sm:$0xff]
        %v711 = vld [vmem:[%s187 + $0xea8] sm:$0xff]
        %v712 = vld [vmem:[%s187 + $0xeb0] sm:$0xff]
        %v713 = vld [vmem:[%s187 + $0xeb8] sm:$0xff]
        %v714 = vld [vmem:[%s187 + $0xec0] sm:$0xff]
        %v715 = vld [vmem:[%s187 + $0xec8] sm:$0xff]
        %v716 = vld [vmem:[%s187 + $0xed0] sm:$0xff]
        %v717 = vld [vmem:[%s187 + $0xed8] sm:$0xff]
        %v718 = vld [vmem:[%s187 + $0xee0] sm:$0xff]
        %v719 = vld [vmem:[%s187 + $0xee8] sm:$0xff]
        %v720 = vld [vmem:[%s187 + $0xef0] sm:$0xff]
        %v721 = vld [vmem:[%s187 + $0xef8] sm:$0xff]
        %v722 = vld [vmem:[%s187 + $0xf00] sm:$0xff]
        %v723 = vld [vmem:[%s187 + $0xf08] sm:$0xff]
        %v724 = vld [vmem:[%s187 + $0xf10] sm:$0xff]
        %v725 = vld [vmem:[%s187 + $0xf18] sm:$0xff]
        %v726 = vld [vmem:[%s187 + $0xf20] sm:$0xff]
        %v727 = vld [vmem:[%s187 + $0xf28] sm:$0xff]
        %v728 = vld [vmem:[%s187 + $0xf30] sm:$0xff]
        %v729 = vld [vmem:[%s187 + $0xf38] sm:$0xff]
        %v730 = vld [vmem:[%s187 + $0xf40] sm:$0xff]
        %v731 = vld [vmem:[%s187 + $0xf48] sm:$0xff]
        %v732 = vld [vmem:[%s187 + $0xf50] sm:$0xff]
        %v733 = vld [vmem:[%s187 + $0xf58] sm:$0xff]
        %v734 = vld [vmem:[%s187 + $0xf60] sm:$0xff]
        %v735 = vld [vmem:[%s187 + $0xf68] sm:$0xff]
        %v736 = vld [vmem:[%s187 + $0xf70] sm:$0xff]
        %v737 = vld [vmem:[%s187 + $0xf78] sm:$0xff]
        %v738 = vld [vmem:[%s187 + $0xf80] sm:$0xff]
        %v739 = vld [vmem:[%s187 + $0xf88] sm:$0xff]
        %v740 = vld [vmem:[%s187 + $0xf90] sm:$0xff]
        %v741 = vld [vmem:[%s187 + $0xf98] sm:$0xff]
        %v742 = vld [vmem:[%s187 + $0xfa0] sm:$0xff]
        %v743 = vld [vmem:[%s187 + $0xfa8] sm:$0xff]
        %v744 = vld [vmem:[%s187 + $0xfb0] sm:$0xff]
        %v745 = vld [vmem:[%s187 + $0xfb8] sm:$0xff]
        %v746 = vld [vmem:[%s187 + $0xfc0] sm:$0xff]
        %v747 = vld [vmem:[%s187 + $0xfc8] sm:$0xff]
        %v748 = vld [vmem:[%s187 + $0xfd0] sm:$0xff]
        %v749 = vld [vmem:[%s187 + $0xfd8] sm:$0xff]
        %v750 = vld [vmem:[%s187 + $0xfe0] sm:$0xff]
        %v751 = vld [vmem:[%s187 + $0xfe8] sm:$0xff]
        %v752 = vld [vmem:[%s187 + $0xff0] sm:$0xff]
        %v753 = vld [vmem:[%s187 + $0xff8] sm:$0xff]
        %v754 = vld [vmem:[%s197] sm:$0xff]
        %v755 = vld [vmem:[%s197 + $0x8] sm:$0xff]
        %v756 = vld [vmem:[%s197 + $0x10] sm:$0xff]
        %v757 = vld [vmem:[%s197 + $0x18] sm:$0xff]
        %v758 = vld [vmem:[%s197 + $0x20] sm:$0xff]
        %v759 = vld [vmem:[%s197 + $0x28] sm:$0xff]
        %v760 = vld [vmem:[%s197 + $0x30] sm:$0xff]
        %v761 = vld [vmem:[%s197 + $0x38] sm:$0xff]
        %v762 = vld [vmem:[%s197 + $0x40] sm:$0xff]
        %v763 = vld [vmem:[%s197 + $0x48] sm:$0xff]
        %v764 = vld [vmem:[%s197 + $0x50] sm:$0xff]
        %v765 = vld [vmem:[%s197 + $0x58] sm:$0xff]
        %v766 = vld [vmem:[%s197 + $0x60] sm:$0xff]
        %v767 = vld [vmem:[%s197 + $0x68] sm:$0xff]
        %v768 = vld [vmem:[%s197 + $0x70] sm:$0xff]
        %v769 = vld [vmem:[%s197 + $0x78] sm:$0xff]
        %v770 = vld [vmem:[%s197 + $0x80] sm:$0xff]
        %v771 = vld [vmem:[%s197 + $0x88] sm:$0xff]
        %v772 = vld [vmem:[%s197 + $0x90] sm:$0xff]
        %v773 = vld [vmem:[%s197 + $0x98] sm:$0xff]
        %v774 = vld [vmem:[%s197 + $0xa0] sm:$0xff]
        %v775 = vld [vmem:[%s197 + $0xa8] sm:$0xff]
        %v776 = vld [vmem:[%s197 + $0xb0] sm:$0xff]
        %v777 = vld [vmem:[%s197 + $0xb8] sm:$0xff]
        %v778 = vld [vmem:[%s197 + $0xc0] sm:$0xff]
        %v779 = vld [vmem:[%s197 + $0xc8] sm:$0xff]
        %v780 = vld [vmem:[%s197 + $0xd0] sm:$0xff]
        %v781 = vld [vmem:[%s197 + $0xd8] sm:$0xff]
        %v782 = vld [vmem:[%s197 + $0xe0] sm:$0xff]
        %v783 = vld [vmem:[%s197 + $0xe8] sm:$0xff]
        %v784 = vld [vmem:[%s197 + $0xf0] sm:$0xff]
        %v785 = vld [vmem:[%s197 + $0xf8] sm:$0xff]
        %v786 = vld [vmem:[%s197 + $0x100] sm:$0xff]
        %v787 = vld [vmem:[%s197 + $0x108] sm:$0xff]
        %v788 = vld [vmem:[%s197 + $0x110] sm:$0xff]
        %v789 = vld [vmem:[%s197 + $0x118] sm:$0xff]
        %v790 = vld [vmem:[%s197 + $0x120] sm:$0xff]
        %v791 = vld [vmem:[%s197 + $0x128] sm:$0xff]
        %v792 = vld [vmem:[%s197 + $0x130] sm:$0xff]
        %v793 = vld [vmem:[%s197 + $0x138] sm:$0xff]
        %v794 = vld [vmem:[%s197 + $0x140] sm:$0xff]
        %v795 = vld [vmem:[%s197 + $0x148] sm:$0xff]
        %v796 = vld [vmem:[%s197 + $0x150] sm:$0xff]
        %v797 = vld [vmem:[%s197 + $0x158] sm:$0xff]
        %v798 = vld [vmem:[%s197 + $0x160] sm:$0xff]
        %v799 = vld [vmem:[%s197 + $0x168] sm:$0xff]
        %v800 = vld [vmem:[%s197 + $0x170] sm:$0xff]
        %v801 = vld [vmem:[%s197 + $0x178] sm:$0xff]
        %v802 = vld [vmem:[%s197 + $0x180] sm:$0xff]
        %v803 = vld [vmem:[%s197 + $0x188] sm:$0xff]
        %v804 = vld [vmem:[%s197 + $0x190] sm:$0xff]
        %v805 = vld [vmem:[%s197 + $0x198] sm:$0xff]
        %v806 = vld [vmem:[%s197 + $0x1a0] sm:$0xff]
        %v807 = vld [vmem:[%s197 + $0x1a8] sm:$0xff]
        %v808 = vld [vmem:[%s197 + $0x1b0] sm:$0xff]
        %v809 = vld [vmem:[%s197 + $0x1b8] sm:$0xff]
        %v810 = vld [vmem:[%s197 + $0x1c0] sm:$0xff]
        %v811 = vld [vmem:[%s197 + $0x1c8] sm:$0xff]
        %v812 = vld [vmem:[%s197 + $0x1d0] sm:$0xff]
        %v813 = vld [vmem:[%s197 + $0x1d8] sm:$0xff]
        %v814 = vld [vmem:[%s197 + $0x1e0] sm:$0xff]
        %v815 = vld [vmem:[%s197 + $0x1e8] sm:$0xff]
        %v816 = vld [vmem:[%s197 + $0x1f0] sm:$0xff]
        %v817 = vld [vmem:[%s197 + $0x1f8] sm:$0xff]
        %v818 = vld [vmem:[%s197 + $0x200] sm:$0xff]
        %v819 = vld [vmem:[%s197 + $0x208] sm:$0xff]
        %v820 = vld [vmem:[%s197 + $0x210] sm:$0xff]
        %v821 = vld [vmem:[%s197 + $0x218] sm:$0xff]
        %v822 = vld [vmem:[%s197 + $0x220] sm:$0xff]
        %v823 = vld [vmem:[%s197 + $0x228] sm:$0xff]
        %v824 = vld [vmem:[%s197 + $0x230] sm:$0xff]
        %v825 = vld [vmem:[%s197 + $0x238] sm:$0xff]
        %v826 = vld [vmem:[%s197 + $0x240] sm:$0xff]
        %v827 = vld [vmem:[%s197 + $0x248] sm:$0xff]
        %v828 = vld [vmem:[%s197 + $0x250] sm:$0xff]
        %v829 = vld [vmem:[%s197 + $0x258] sm:$0xff]
        %v830 = vld [vmem:[%s197 + $0x260] sm:$0xff]
        %v831 = vld [vmem:[%s197 + $0x268] sm:$0xff]
        %v832 = vld [vmem:[%s197 + $0x270] sm:$0xff]
        %v833 = vld [vmem:[%s197 + $0x278] sm:$0xff]
        %v834 = vld [vmem:[%s197 + $0x280] sm:$0xff]
        %v835 = vld [vmem:[%s197 + $0x288] sm:$0xff]
        %v836 = vld [vmem:[%s197 + $0x290] sm:$0xff]
        %v837 = vld [vmem:[%s197 + $0x298] sm:$0xff]
        %v838 = vld [vmem:[%s197 + $0x2a0] sm:$0xff]
        %v839 = vld [vmem:[%s197 + $0x2a8] sm:$0xff]
        %v840 = vld [vmem:[%s197 + $0x2b0] sm:$0xff]
        %v841 = vld [vmem:[%s197 + $0x2b8] sm:$0xff]
        %v842 = vld [vmem:[%s197 + $0x2c0] sm:$0xff]
        %v843 = vld [vmem:[%s197 + $0x2c8] sm:$0xff]
        %v844 = vld [vmem:[%s197 + $0x2d0] sm:$0xff]
        %v845 = vld [vmem:[%s197 + $0x2d8] sm:$0xff]
        %v846 = vld [vmem:[%s197 + $0x2e0] sm:$0xff]
        %v847 = vld [vmem:[%s197 + $0x2e8] sm:$0xff]
        %v848 = vld [vmem:[%s197 + $0x2f0] sm:$0xff]
        %v849 = vld [vmem:[%s197 + $0x2f8] sm:$0xff]
        %v850 = vld [vmem:[%s197 + $0x300] sm:$0xff]
        %v851 = vld [vmem:[%s197 + $0x308] sm:$0xff]
        %v852 = vld [vmem:[%s197 + $0x310] sm:$0xff]
        %v853 = vld [vmem:[%s197 + $0x318] sm:$0xff]
        %v854 = vld [vmem:[%s197 + $0x320] sm:$0xff]
        %v855 = vld [vmem:[%s197 + $0x328] sm:$0xff]
        %v856 = vld [vmem:[%s197 + $0x330] sm:$0xff]
        %v857 = vld [vmem:[%s197 + $0x338] sm:$0xff]
        %v858 = vld [vmem:[%s197 + $0x340] sm:$0xff]
        %v859 = vld [vmem:[%s197 + $0x348] sm:$0xff]
        %v860 = vld [vmem:[%s197 + $0x350] sm:$0xff]
        %v861 = vld [vmem:[%s197 + $0x358] sm:$0xff]
        %v862 = vld [vmem:[%s197 + $0x360] sm:$0xff]
        %v863 = vld [vmem:[%s197 + $0x368] sm:$0xff]
        %v864 = vld [vmem:[%s197 + $0x370] sm:$0xff]
        %v865 = vld [vmem:[%s197 + $0x378] sm:$0xff]
        %v866 = vld [vmem:[%s197 + $0x380] sm:$0xff]
        %v867 = vld [vmem:[%s197 + $0x388] sm:$0xff]
        %v868 = vld [vmem:[%s197 + $0x390] sm:$0xff]
        %v869 = vld [vmem:[%s197 + $0x398] sm:$0xff]
        %v870 = vld [vmem:[%s197 + $0x3a0] sm:$0xff]
        %v871 = vld [vmem:[%s197 + $0x3a8] sm:$0xff]
        %v872 = vld [vmem:[%s197 + $0x3b0] sm:$0xff]
        %v873 = vld [vmem:[%s197 + $0x3b8] sm:$0xff]
        %v874 = vld [vmem:[%s197 + $0x3c0] sm:$0xff]
        %v875 = vld [vmem:[%s197 + $0x3c8] sm:$0xff]
        %v876 = vld [vmem:[%s197 + $0x3d0] sm:$0xff]
        %v877 = vld [vmem:[%s197 + $0x3d8] sm:$0xff]
        %v878 = vld [vmem:[%s197 + $0x3e0] sm:$0xff]
        %v879 = vld [vmem:[%s197 + $0x3e8] sm:$0xff]
        %v880 = vld [vmem:[%s197 + $0x3f0] sm:$0xff]
        %v881 = vld [vmem:[%s197 + $0x3f8] sm:$0xff]
        %v882 = vld [vmem:[%s197 + $0x400] sm:$0xff]
        %v883 = vld [vmem:[%s197 + $0x408] sm:$0xff]
        %v884 = vld [vmem:[%s197 + $0x410] sm:$0xff]
        %v885 = vld [vmem:[%s197 + $0x418] sm:$0xff]
        %v886 = vld [vmem:[%s197 + $0x420] sm:$0xff]
        %v887 = vld [vmem:[%s197 + $0x428] sm:$0xff]
        %v888 = vld [vmem:[%s197 + $0x430] sm:$0xff]
        %v889 = vld [vmem:[%s197 + $0x438] sm:$0xff]
        %v890 = vld [vmem:[%s197 + $0x440] sm:$0xff]
        %v891 = vld [vmem:[%s197 + $0x448] sm:$0xff]
        %v892 = vld [vmem:[%s197 + $0x450] sm:$0xff]
        %v893 = vld [vmem:[%s197 + $0x458] sm:$0xff]
        %v894 = vld [vmem:[%s197 + $0x460] sm:$0xff]
        %v895 = vld [vmem:[%s197 + $0x468] sm:$0xff]
        %v896 = vld [vmem:[%s197 + $0x470] sm:$0xff]
        %v897 = vld [vmem:[%s197 + $0x478] sm:$0xff]
        %v898 = vld [vmem:[%s197 + $0x480] sm:$0xff]
        %v899 = vld [vmem:[%s197 + $0x488] sm:$0xff]
        %v900 = vld [vmem:[%s197 + $0x490] sm:$0xff]
        %v901 = vld [vmem:[%s197 + $0x498] sm:$0xff]
        %v902 = vld [vmem:[%s197 + $0x4a0] sm:$0xff]
        %v903 = vld [vmem:[%s197 + $0x4a8] sm:$0xff]
        %v904 = vld [vmem:[%s197 + $0x4b0] sm:$0xff]
        %v905 = vld [vmem:[%s197 + $0x4b8] sm:$0xff]
        %v906 = vld [vmem:[%s197 + $0x4c0] sm:$0xff]
        %v907 = vld [vmem:[%s197 + $0x4c8] sm:$0xff]
        %v908 = vld [vmem:[%s197 + $0x4d0] sm:$0xff]
        %v909 = vld [vmem:[%s197 + $0x4d8] sm:$0xff]
        %v910 = vld [vmem:[%s197 + $0x4e0] sm:$0xff]
        %v911 = vld [vmem:[%s197 + $0x4e8] sm:$0xff]
        %v912 = vld [vmem:[%s197 + $0x4f0] sm:$0xff]
        %v913 = vld [vmem:[%s197 + $0x4f8] sm:$0xff]
        %v914 = vld [vmem:[%s197 + $0x500] sm:$0xff]
        %v915 = vld [vmem:[%s197 + $0x508] sm:$0xff]
        %v916 = vld [vmem:[%s197 + $0x510] sm:$0xff]
        %v917 = vld [vmem:[%s197 + $0x518] sm:$0xff]
        %v918 = vld [vmem:[%s197 + $0x520] sm:$0xff]
        %v919 = vld [vmem:[%s197 + $0x528] sm:$0xff]
        %v920 = vld [vmem:[%s197 + $0x530] sm:$0xff]
        %v921 = vld [vmem:[%s197 + $0x538] sm:$0xff]
        %v922 = vld [vmem:[%s197 + $0x540] sm:$0xff]
        %v923 = vld [vmem:[%s197 + $0x548] sm:$0xff]
        %v924 = vld [vmem:[%s197 + $0x550] sm:$0xff]
        %v925 = vld [vmem:[%s197 + $0x558] sm:$0xff]
        %v926 = vld [vmem:[%s197 + $0x560] sm:$0xff]
        %v927 = vld [vmem:[%s197 + $0x568] sm:$0xff]
        %v928 = vld [vmem:[%s197 + $0x570] sm:$0xff]
        %v929 = vld [vmem:[%s197 + $0x578] sm:$0xff]
        %v930 = vld [vmem:[%s197 + $0x580] sm:$0xff]
        %v931 = vld [vmem:[%s197 + $0x588] sm:$0xff]
        %v932 = vld [vmem:[%s197 + $0x590] sm:$0xff]
        %v933 = vld [vmem:[%s197 + $0x598] sm:$0xff]
        %v934 = vld [vmem:[%s197 + $0x5a0] sm:$0xff]
        %v935 = vld [vmem:[%s197 + $0x5a8] sm:$0xff]
        %v936 = vld [vmem:[%s197 + $0x5b0] sm:$0xff]
        %v937 = vld [vmem:[%s197 + $0x5b8] sm:$0xff]
        %v938 = vld [vmem:[%s197 + $0x5c0] sm:$0xff]
        %v939 = vld [vmem:[%s197 + $0x5c8] sm:$0xff]
        %v940 = vld [vmem:[%s197 + $0x5d0] sm:$0xff]
        %v941 = vld [vmem:[%s197 + $0x5d8] sm:$0xff]
        %v942 = vld [vmem:[%s197 + $0x5e0] sm:$0xff]
        %v943 = vld [vmem:[%s197 + $0x5e8] sm:$0xff]
        %v944 = vld [vmem:[%s197 + $0x5f0] sm:$0xff]
        %v945 = vld [vmem:[%s197 + $0x5f8] sm:$0xff]
        %v946 = vld [vmem:[%s197 + $0x600] sm:$0xff]
        %v947 = vld [vmem:[%s197 + $0x608] sm:$0xff]
        %v948 = vld [vmem:[%s197 + $0x610] sm:$0xff]
        %v949 = vld [vmem:[%s197 + $0x618] sm:$0xff]
        %v950 = vld [vmem:[%s197 + $0x620] sm:$0xff]
        %v951 = vld [vmem:[%s197 + $0x628] sm:$0xff]
        %v952 = vld [vmem:[%s197 + $0x630] sm:$0xff]
        %v953 = vld [vmem:[%s197 + $0x638] sm:$0xff]
        %v954 = vld [vmem:[%s197 + $0x640] sm:$0xff]
        %v955 = vld [vmem:[%s197 + $0x648] sm:$0xff]
        %v956 = vld [vmem:[%s197 + $0x650] sm:$0xff]
        %v957 = vld [vmem:[%s197 + $0x658] sm:$0xff]
        %v958 = vld [vmem:[%s197 + $0x660] sm:$0xff]
        %v959 = vld [vmem:[%s197 + $0x668] sm:$0xff]
        %v960 = vld [vmem:[%s197 + $0x670] sm:$0xff]
        %v961 = vld [vmem:[%s197 + $0x678] sm:$0xff]
        %v962 = vld [vmem:[%s197 + $0x680] sm:$0xff]
        %v963 = vld [vmem:[%s197 + $0x688] sm:$0xff]
        %v964 = vld [vmem:[%s197 + $0x690] sm:$0xff]
        %v965 = vld [vmem:[%s197 + $0x698] sm:$0xff]
        %v966 = vld [vmem:[%s197 + $0x6a0] sm:$0xff]
        %v967 = vld [vmem:[%s197 + $0x6a8] sm:$0xff]
        %v968 = vld [vmem:[%s197 + $0x6b0] sm:$0xff]
        %v969 = vld [vmem:[%s197 + $0x6b8] sm:$0xff]
        %v970 = vld [vmem:[%s197 + $0x6c0] sm:$0xff]
        %v971 = vld [vmem:[%s197 + $0x6c8] sm:$0xff]
        %v972 = vld [vmem:[%s197 + $0x6d0] sm:$0xff]
        %v973 = vld [vmem:[%s197 + $0x6d8] sm:$0xff]
        %v974 = vld [vmem:[%s197 + $0x6e0] sm:$0xff]
        %v975 = vld [vmem:[%s197 + $0x6e8] sm:$0xff]
        %v976 = vld [vmem:[%s197 + $0x6f0] sm:$0xff]
        %v977 = vld [vmem:[%s197 + $0x6f8] sm:$0xff]
        %v978 = vld [vmem:[%s197 + $0x700] sm:$0xff]
        %v979 = vld [vmem:[%s197 + $0x708] sm:$0xff]
        %v980 = vld [vmem:[%s197 + $0x710] sm:$0xff]
        %v981 = vld [vmem:[%s197 + $0x718] sm:$0xff]
        %v982 = vld [vmem:[%s197 + $0x720] sm:$0xff]
        %v983 = vld [vmem:[%s197 + $0x728] sm:$0xff]
        %v984 = vld [vmem:[%s197 + $0x730] sm:$0xff]
        %v985 = vld [vmem:[%s197 + $0x738] sm:$0xff]
        %v986 = vld [vmem:[%s197 + $0x740] sm:$0xff]
        %v987 = vld [vmem:[%s197 + $0x748] sm:$0xff]
        %v988 = vld [vmem:[%s197 + $0x750] sm:$0xff]
        %v989 = vld [vmem:[%s197 + $0x758] sm:$0xff]
        %v990 = vld [vmem:[%s197 + $0x760] sm:$0xff]
        %v991 = vld [vmem:[%s197 + $0x768] sm:$0xff]
        %v992 = vld [vmem:[%s197 + $0x770] sm:$0xff]
        %v993 = vld [vmem:[%s197 + $0x778] sm:$0xff]
        %v994 = vld [vmem:[%s197 + $0x780] sm:$0xff]
        %v995 = vld [vmem:[%s197 + $0x788] sm:$0xff]
        %v996 = vld [vmem:[%s197 + $0x790] sm:$0xff]
        %v997 = vld [vmem:[%s197 + $0x798] sm:$0xff]
        %v998 = vld [vmem:[%s197 + $0x7a0] sm:$0xff]
        %v999 = vld [vmem:[%s197 + $0x7a8] sm:$0xff]
        %v1000 = vld [vmem:[%s197 + $0x7b0] sm:$0xff]
        %v1001 = vld [vmem:[%s197 + $0x7b8] sm:$0xff]
        %v1002 = vld [vmem:[%s197 + $0x7c0] sm:$0xff]
        %v1003 = vld [vmem:[%s197 + $0x7c8] sm:$0xff]
        %v1004 = vld [vmem:[%s197 + $0x7d0] sm:$0xff]
        %v1005 = vld [vmem:[%s197 + $0x7d8] sm:$0xff]
        %v1006 = vld [vmem:[%s197 + $0x7e0] sm:$0xff]
        %v1007 = vld [vmem:[%s197 + $0x7e8] sm:$0xff]
        %v1008 = vld [vmem:[%s197 + $0x7f0] sm:$0xff]
        %v1009 = vld [vmem:[%s197 + $0x7f8] sm:$0xff]
        %v1010 = vld [vmem:[%s197 + $0x800] sm:$0xff]
        %v1011 = vld [vmem:[%s197 + $0x808] sm:$0xff]
        %v1012 = vld [vmem:[%s197 + $0x810] sm:$0xff]
        %v1013 = vld [vmem:[%s197 + $0x818] sm:$0xff]
        %v1014 = vld [vmem:[%s197 + $0x820] sm:$0xff]
        %v1015 = vld [vmem:[%s197 + $0x828] sm:$0xff]
        %v1016 = vld [vmem:[%s197 + $0x830] sm:$0xff]
        %v1017 = vld [vmem:[%s197 + $0x838] sm:$0xff]
        %v1018 = vld [vmem:[%s197 + $0x840] sm:$0xff]
        %v1019 = vld [vmem:[%s197 + $0x848] sm:$0xff]
        %v1020 = vld [vmem:[%s197 + $0x850] sm:$0xff]
        %v1021 = vld [vmem:[%s197 + $0x858] sm:$0xff]
        %v1022 = vld [vmem:[%s197 + $0x860] sm:$0xff]
        %v1023 = vld [vmem:[%s197 + $0x868] sm:$0xff]
        %v1024 = vld [vmem:[%s197 + $0x870] sm:$0xff]
        %v1025 = vld [vmem:[%s197 + $0x878] sm:$0xff]
        %v1026 = vld [vmem:[%s197 + $0x880] sm:$0xff]
        %v1027 = vld [vmem:[%s197 + $0x888] sm:$0xff]
        %v1028 = vld [vmem:[%s197 + $0x890] sm:$0xff]
        %v1029 = vld [vmem:[%s197 + $0x898] sm:$0xff]
        %v1030 = vld [vmem:[%s197 + $0x8a0] sm:$0xff]
        %v1031 = vld [vmem:[%s197 + $0x8a8] sm:$0xff]
        %v1032 = vld [vmem:[%s197 + $0x8b0] sm:$0xff]
        %v1033 = vld [vmem:[%s197 + $0x8b8] sm:$0xff]
        %v1034 = vld [vmem:[%s197 + $0x8c0] sm:$0xff]
        %v1035 = vld [vmem:[%s197 + $0x8c8] sm:$0xff]
        %v1036 = vld [vmem:[%s197 + $0x8d0] sm:$0xff]
        %v1037 = vld [vmem:[%s197 + $0x8d8] sm:$0xff]
        %v1038 = vld [vmem:[%s197 + $0x8e0] sm:$0xff]
        %v1039 = vld [vmem:[%s197 + $0x8e8] sm:$0xff]
        %v1040 = vld [vmem:[%s197 + $0x8f0] sm:$0xff]
        %v1041 = vld [vmem:[%s197 + $0x8f8] sm:$0xff]
        %v1042 = vld [vmem:[%s197 + $0x900] sm:$0xff]
        %v1043 = vld [vmem:[%s197 + $0x908] sm:$0xff]
        %v1044 = vld [vmem:[%s197 + $0x910] sm:$0xff]
        %v1045 = vld [vmem:[%s197 + $0x918] sm:$0xff]
        %v1046 = vld [vmem:[%s197 + $0x920] sm:$0xff]
        %v1047 = vld [vmem:[%s197 + $0x928] sm:$0xff]
        %v1048 = vld [vmem:[%s197 + $0x930] sm:$0xff]
        %v1049 = vld [vmem:[%s197 + $0x938] sm:$0xff]
        %v1050 = vld [vmem:[%s197 + $0x940] sm:$0xff]
        %v1051 = vld [vmem:[%s197 + $0x948] sm:$0xff]
        %v1052 = vld [vmem:[%s197 + $0x950] sm:$0xff]
        %v1053 = vld [vmem:[%s197 + $0x958] sm:$0xff]
        %v1054 = vld [vmem:[%s197 + $0x960] sm:$0xff]
        %v1055 = vld [vmem:[%s197 + $0x968] sm:$0xff]
        %v1056 = vld [vmem:[%s197 + $0x970] sm:$0xff]
        %v1057 = vld [vmem:[%s197 + $0x978] sm:$0xff]
        %v1058 = vld [vmem:[%s197 + $0x980] sm:$0xff]
        %v1059 = vld [vmem:[%s197 + $0x988] sm:$0xff]
        %v1060 = vld [vmem:[%s197 + $0x990] sm:$0xff]
        %v1061 = vld [vmem:[%s197 + $0x998] sm:$0xff]
        %v1062 = vld [vmem:[%s197 + $0x9a0] sm:$0xff]
        %v1063 = vld [vmem:[%s197 + $0x9a8] sm:$0xff]
        %v1064 = vld [vmem:[%s197 + $0x9b0] sm:$0xff]
        %v1065 = vld [vmem:[%s197 + $0x9b8] sm:$0xff]
        %v1066 = vld [vmem:[%s197 + $0x9c0] sm:$0xff]
        %v1067 = vld [vmem:[%s197 + $0x9c8] sm:$0xff]
        %v1068 = vld [vmem:[%s197 + $0x9d0] sm:$0xff]
        %v1069 = vld [vmem:[%s197 + $0x9d8] sm:$0xff]
        %v1070 = vld [vmem:[%s197 + $0x9e0] sm:$0xff]
        %v1071 = vld [vmem:[%s197 + $0x9e8] sm:$0xff]
        %v1072 = vld [vmem:[%s197 + $0x9f0] sm:$0xff]
        %v1073 = vld [vmem:[%s197 + $0x9f8] sm:$0xff]
        %v1074 = vld [vmem:[%s197 + $0xa00] sm:$0xff]
        %v1075 = vld [vmem:[%s197 + $0xa08] sm:$0xff]
        %v1076 = vld [vmem:[%s197 + $0xa10] sm:$0xff]
        %v1077 = vld [vmem:[%s197 + $0xa18] sm:$0xff]
        %v1078 = vld [vmem:[%s197 + $0xa20] sm:$0xff]
        %v1079 = vld [vmem:[%s197 + $0xa28] sm:$0xff]
        %v1080 = vld [vmem:[%s197 + $0xa30] sm:$0xff]
        %v1081 = vld [vmem:[%s197 + $0xa38] sm:$0xff]
        %v1082 = vld [vmem:[%s197 + $0xa40] sm:$0xff]
        %v1083 = vld [vmem:[%s197 + $0xa48] sm:$0xff]
        %v1084 = vld [vmem:[%s197 + $0xa50] sm:$0xff]
        %v1085 = vld [vmem:[%s197 + $0xa58] sm:$0xff]
        %v1086 = vld [vmem:[%s197 + $0xa60] sm:$0xff]
        %v1087 = vld [vmem:[%s197 + $0xa68] sm:$0xff]
        %v1088 = vld [vmem:[%s197 + $0xa70] sm:$0xff]
        %v1089 = vld [vmem:[%s197 + $0xa78] sm:$0xff]
        %v1090 = vld [vmem:[%s197 + $0xa80] sm:$0xff]
        %v1091 = vld [vmem:[%s197 + $0xa88] sm:$0xff]
        %v1092 = vld [vmem:[%s197 + $0xa90] sm:$0xff]
        %v1093 = vld [vmem:[%s197 + $0xa98] sm:$0xff]
        %v1094 = vld [vmem:[%s197 + $0xaa0] sm:$0xff]
        %v1095 = vld [vmem:[%s197 + $0xaa8] sm:$0xff]
        %v1096 = vld [vmem:[%s197 + $0xab0] sm:$0xff]
        %v1097 = vld [vmem:[%s197 + $0xab8] sm:$0xff]
        %v1098 = vld [vmem:[%s197 + $0xac0] sm:$0xff]
        %v1099 = vld [vmem:[%s197 + $0xac8] sm:$0xff]
        %v1100 = vld [vmem:[%s197 + $0xad0] sm:$0xff]
        %v1101 = vld [vmem:[%s197 + $0xad8] sm:$0xff]
        %v1102 = vld [vmem:[%s197 + $0xae0] sm:$0xff]
        %v1103 = vld [vmem:[%s197 + $0xae8] sm:$0xff]
        %v1104 = vld [vmem:[%s197 + $0xaf0] sm:$0xff]
        %v1105 = vld [vmem:[%s197 + $0xaf8] sm:$0xff]
        %v1106 = vld [vmem:[%s197 + $0xb00] sm:$0xff]
        %v1107 = vld [vmem:[%s197 + $0xb08] sm:$0xff]
        %v1108 = vld [vmem:[%s197 + $0xb10] sm:$0xff]
        %v1109 = vld [vmem:[%s197 + $0xb18] sm:$0xff]
        %v1110 = vld [vmem:[%s197 + $0xb20] sm:$0xff]
        %v1111 = vld [vmem:[%s197 + $0xb28] sm:$0xff]
        %v1112 = vld [vmem:[%s197 + $0xb30] sm:$0xff]
        %v1113 = vld [vmem:[%s197 + $0xb38] sm:$0xff]
        %v1114 = vld [vmem:[%s197 + $0xb40] sm:$0xff]
        %v1115 = vld [vmem:[%s197 + $0xb48] sm:$0xff]
        %v1116 = vld [vmem:[%s197 + $0xb50] sm:$0xff]
        %v1117 = vld [vmem:[%s197 + $0xb58] sm:$0xff]
        %v1118 = vld [vmem:[%s197 + $0xb60] sm:$0xff]
        %v1119 = vld [vmem:[%s197 + $0xb68] sm:$0xff]
        %v1120 = vld [vmem:[%s197 + $0xb70] sm:$0xff]
        %v1121 = vld [vmem:[%s197 + $0xb78] sm:$0xff]
        %v1122 = vld [vmem:[%s197 + $0xb80] sm:$0xff]
        %v1123 = vld [vmem:[%s197 + $0xb88] sm:$0xff]
        %v1124 = vld [vmem:[%s197 + $0xb90] sm:$0xff]
        %v1125 = vld [vmem:[%s197 + $0xb98] sm:$0xff]
        %v1126 = vld [vmem:[%s197 + $0xba0] sm:$0xff]
        %v1127 = vld [vmem:[%s197 + $0xba8] sm:$0xff]
        %v1128 = vld [vmem:[%s197 + $0xbb0] sm:$0xff]
        %v1129 = vld [vmem:[%s197 + $0xbb8] sm:$0xff]
        %v1130 = vld [vmem:[%s197 + $0xbc0] sm:$0xff]
        %v1131 = vld [vmem:[%s197 + $0xbc8] sm:$0xff]
        %v1132 = vld [vmem:[%s197 + $0xbd0] sm:$0xff]
        %v1133 = vld [vmem:[%s197 + $0xbd8] sm:$0xff]
        %v1134 = vld [vmem:[%s197 + $0xbe0] sm:$0xff]
        %v1135 = vld [vmem:[%s197 + $0xbe8] sm:$0xff]
        %v1136 = vld [vmem:[%s197 + $0xbf0] sm:$0xff]
        %v1137 = vld [vmem:[%s197 + $0xbf8] sm:$0xff]
        %v1138 = vld [vmem:[%s197 + $0xc00] sm:$0xff]
        %v1139 = vld [vmem:[%s197 + $0xc08] sm:$0xff]
        %v1140 = vld [vmem:[%s197 + $0xc10] sm:$0xff]
        %v1141 = vld [vmem:[%s197 + $0xc18] sm:$0xff]
        %v1142 = vld [vmem:[%s197 + $0xc20] sm:$0xff]
        %v1143 = vld [vmem:[%s197 + $0xc28] sm:$0xff]
        %v1144 = vld [vmem:[%s197 + $0xc30] sm:$0xff]
        %v1145 = vld [vmem:[%s197 + $0xc38] sm:$0xff]
        %v1146 = vld [vmem:[%s197 + $0xc40] sm:$0xff]
        %v1147 = vld [vmem:[%s197 + $0xc48] sm:$0xff]
        %v1148 = vld [vmem:[%s197 + $0xc50] sm:$0xff]
        %v1149 = vld [vmem:[%s197 + $0xc58] sm:$0xff]
        %v1150 = vld [vmem:[%s197 + $0xc60] sm:$0xff]
        %v1151 = vld [vmem:[%s197 + $0xc68] sm:$0xff]
        %v1152 = vld [vmem:[%s197 + $0xc70] sm:$0xff]
        %v1153 = vld [vmem:[%s197 + $0xc78] sm:$0xff]
        %v1154 = vld [vmem:[%s197 + $0xc80] sm:$0xff]
        %v1155 = vld [vmem:[%s197 + $0xc88] sm:$0xff]
        %v1156 = vld [vmem:[%s197 + $0xc90] sm:$0xff]
        %v1157 = vld [vmem:[%s197 + $0xc98] sm:$0xff]
        %v1158 = vld [vmem:[%s197 + $0xca0] sm:$0xff]
        %v1159 = vld [vmem:[%s197 + $0xca8] sm:$0xff]
        %v1160 = vld [vmem:[%s197 + $0xcb0] sm:$0xff]
        %v1161 = vld [vmem:[%s197 + $0xcb8] sm:$0xff]
        %v1162 = vld [vmem:[%s197 + $0xcc0] sm:$0xff]
        %v1163 = vld [vmem:[%s197 + $0xcc8] sm:$0xff]
        %v1164 = vld [vmem:[%s197 + $0xcd0] sm:$0xff]
        %v1165 = vld [vmem:[%s197 + $0xcd8] sm:$0xff]
        %v1166 = vld [vmem:[%s197 + $0xce0] sm:$0xff]
        %v1167 = vld [vmem:[%s197 + $0xce8] sm:$0xff]
        %v1168 = vld [vmem:[%s197 + $0xcf0] sm:$0xff]
        %v1169 = vld [vmem:[%s197 + $0xcf8] sm:$0xff]
        %v1170 = vld [vmem:[%s197 + $0xd00] sm:$0xff]
        %v1171 = vld [vmem:[%s197 + $0xd08] sm:$0xff]
        %v1172 = vld [vmem:[%s197 + $0xd10] sm:$0xff]
        %v1173 = vld [vmem:[%s197 + $0xd18] sm:$0xff]
        %v1174 = vld [vmem:[%s197 + $0xd20] sm:$0xff]
        %v1175 = vld [vmem:[%s197 + $0xd28] sm:$0xff]
        %v1176 = vld [vmem:[%s197 + $0xd30] sm:$0xff]
        %v1177 = vld [vmem:[%s197 + $0xd38] sm:$0xff]
        %v1178 = vld [vmem:[%s197 + $0xd40] sm:$0xff]
        %v1179 = vld [vmem:[%s197 + $0xd48] sm:$0xff]
        %v1180 = vld [vmem:[%s197 + $0xd50] sm:$0xff]
        %v1181 = vld [vmem:[%s197 + $0xd58] sm:$0xff]
        %v1182 = vld [vmem:[%s197 + $0xd60] sm:$0xff]
        %v1183 = vld [vmem:[%s197 + $0xd68] sm:$0xff]
        %v1184 = vld [vmem:[%s197 + $0xd70] sm:$0xff]
        %v1185 = vld [vmem:[%s197 + $0xd78] sm:$0xff]
        %v1186 = vld [vmem:[%s197 + $0xd80] sm:$0xff]
        %v1187 = vld [vmem:[%s197 + $0xd88] sm:$0xff]
        %v1188 = vld [vmem:[%s197 + $0xd90] sm:$0xff]
        %v1189 = vld [vmem:[%s197 + $0xd98] sm:$0xff]
        %v1190 = vld [vmem:[%s197 + $0xda0] sm:$0xff]
        %v1191 = vld [vmem:[%s197 + $0xda8] sm:$0xff]
        %v1192 = vld [vmem:[%s197 + $0xdb0] sm:$0xff]
        %v1193 = vld [vmem:[%s197 + $0xdb8] sm:$0xff]
        %v1194 = vld [vmem:[%s197 + $0xdc0] sm:$0xff]
        %v1195 = vld [vmem:[%s197 + $0xdc8] sm:$0xff]
        %v1196 = vld [vmem:[%s197 + $0xdd0] sm:$0xff]
        %v1197 = vld [vmem:[%s197 + $0xdd8] sm:$0xff]
        %v1198 = vld [vmem:[%s197 + $0xde0] sm:$0xff]
        %v1199 = vld [vmem:[%s197 + $0xde8] sm:$0xff]
        %v1200 = vld [vmem:[%s197 + $0xdf0] sm:$0xff]
        %v1201 = vld [vmem:[%s197 + $0xdf8] sm:$0xff]
        %v1202 = vld [vmem:[%s197 + $0xe00] sm:$0xff]
        %v1203 = vld [vmem:[%s197 + $0xe08] sm:$0xff]
        %v1204 = vld [vmem:[%s197 + $0xe10] sm:$0xff]
        %v1205 = vld [vmem:[%s197 + $0xe18] sm:$0xff]
        %v1206 = vld [vmem:[%s197 + $0xe20] sm:$0xff]
        %v1207 = vld [vmem:[%s197 + $0xe28] sm:$0xff]
        %v1208 = vld [vmem:[%s197 + $0xe30] sm:$0xff]
        %v1209 = vld [vmem:[%s197 + $0xe38] sm:$0xff]
        %v1210 = vld [vmem:[%s197 + $0xe40] sm:$0xff]
        %v1211 = vld [vmem:[%s197 + $0xe48] sm:$0xff]
        %v1212 = vld [vmem:[%s197 + $0xe50] sm:$0xff]
        %v1213 = vld [vmem:[%s197 + $0xe58] sm:$0xff]
        %v1214 = vld [vmem:[%s197 + $0xe60] sm:$0xff]
        %v1215 = vld [vmem:[%s197 + $0xe68] sm:$0xff]
        %v1216 = vld [vmem:[%s197 + $0xe70] sm:$0xff]
        %v1217 = vld [vmem:[%s197 + $0xe78] sm:$0xff]
        %v1218 = vld [vmem:[%s197 + $0xe80] sm:$0xff]
        %v1219 = vld [vmem:[%s197 + $0xe88] sm:$0xff]
        %v1220 = vld [vmem:[%s197 + $0xe90] sm:$0xff]
        %v1221 = vld [vmem:[%s197 + $0xe98] sm:$0xff]
        %v1222 = vld [vmem:[%s197 + $0xea0] sm:$0xff]
        %v1223 = vld [vmem:[%s197 + $0xea8] sm:$0xff]
        %v1224 = vld [vmem:[%s197 + $0xeb0] sm:$0xff]
        %v1225 = vld [vmem:[%s197 + $0xeb8] sm:$0xff]
        %v1226 = vld [vmem:[%s197 + $0xec0] sm:$0xff]
        %v1227 = vld [vmem:[%s197 + $0xec8] sm:$0xff]
        %v1228 = vld [vmem:[%s197 + $0xed0] sm:$0xff]
        %v1229 = vld [vmem:[%s197 + $0xed8] sm:$0xff]
        %v1230 = vld [vmem:[%s197 + $0xee0] sm:$0xff]
        %v1231 = vld [vmem:[%s197 + $0xee8] sm:$0xff]
        %v1232 = vld [vmem:[%s197 + $0xef0] sm:$0xff]
        %v1233 = vld [vmem:[%s197 + $0xef8] sm:$0xff]
        %v1234 = vld [vmem:[%s197 + $0xf00] sm:$0xff]
        %v1235 = vld [vmem:[%s197 + $0xf08] sm:$0xff]
        %v1236 = vld [vmem:[%s197 + $0xf10] sm:$0xff]
        %v1237 = vld [vmem:[%s197 + $0xf18] sm:$0xff]
        %v1238 = vld [vmem:[%s197 + $0xf20] sm:$0xff]
        %v1239 = vld [vmem:[%s197 + $0xf28] sm:$0xff]
        %v1240 = vld [vmem:[%s197 + $0xf30] sm:$0xff]
        %v1241 = vld [vmem:[%s197 + $0xf38] sm:$0xff]
        %v1242 = vld [vmem:[%s197 + $0xf40] sm:$0xff]
        %v1243 = vld [vmem:[%s197 + $0xf48] sm:$0xff]
        %v1244 = vld [vmem:[%s197 + $0xf50] sm:$0xff]
        %v1245 = vld [vmem:[%s197 + $0xf58] sm:$0xff]
        %v1246 = vld [vmem:[%s197 + $0xf60] sm:$0xff]
        %v1247 = vld [vmem:[%s197 + $0xf68] sm:$0xff]
        %v1248 = vld [vmem:[%s197 + $0xf70] sm:$0xff]
        %v1249 = vld [vmem:[%s197 + $0xf78] sm:$0xff]
        %v1250 = vld [vmem:[%s197 + $0xf80] sm:$0xff]
        %v1251 = vld [vmem:[%s197 + $0xf88] sm:$0xff]
        %v1252 = vld [vmem:[%s197 + $0xf90] sm:$0xff]
        %v1253 = vld [vmem:[%s197 + $0xf98] sm:$0xff]
        %v1254 = vld [vmem:[%s197 + $0xfa0] sm:$0xff]
        %v1255 = vld [vmem:[%s197 + $0xfa8] sm:$0xff]
        %v1256 = vld [vmem:[%s197 + $0xfb0] sm:$0xff]
        %v1257 = vld [vmem:[%s197 + $0xfb8] sm:$0xff]
        %v1258 = vld [vmem:[%s197 + $0xfc0] sm:$0xff]
        %v1259 = vld [vmem:[%s197 + $0xfc8] sm:$0xff]
        %v1260 = vld [vmem:[%s197 + $0xfd0] sm:$0xff]
        %v1261 = vld [vmem:[%s197 + $0xfd8] sm:$0xff]
        %v1262 = vld [vmem:[%s197 + $0xfe0] sm:$0xff]
        %v1263 = vld [vmem:[%s197 + $0xfe8] sm:$0xff]
        %v1264 = vld [vmem:[%s197 + $0xff0] sm:$0xff]
        %v1265 = vld [vmem:[%s197 + $0xff8] sm:$0xff]
        %v1266 = vmax.f32 %v242, 0.0
        %v1267 = vmax.f32 %v243, 0.0
        %v1268 = vmax.f32 %v244, 0.0
        %v1269 = vmax.f32 %v245, 0.0
        %v1270 = vmax.f32 %v246, 0.0
        %v1271 = vmax.f32 %v247, 0.0
        %v1272 = vmax.f32 %v248, 0.0
        %v1273 = vmax.f32 %v249, 0.0
        %v1274 = vmax.f32 %v250, 0.0
        %v1275 = vmax.f32 %v251, 0.0
        %v1276 = vmax.f32 %v252, 0.0
        %v1277 = vmax.f32 %v253, 0.0
        %v1278 = vmax.f32 %v254, 0.0
        %v1279 = vmax.f32 %v255, 0.0
        %v1280 = vmax.f32 %v256, 0.0
        %v1281 = vmax.f32 %v257, 0.0
        %v1282 = vmax.f32 %v258, 0.0
        %v1283 = vmax.f32 %v259, 0.0
        %v1284 = vmax.f32 %v260, 0.0
        %v1285 = vmax.f32 %v261, 0.0
        %v1286 = vmax.f32 %v262, 0.0
        %v1287 = vmax.f32 %v263, 0.0
        %v1288 = vmax.f32 %v264, 0.0
        %v1289 = vmax.f32 %v265, 0.0
        %v1290 = vmax.f32 %v266, 0.0
        %v1291 = vmax.f32 %v267, 0.0
        %v1292 = vmax.f32 %v268, 0.0
        %v1293 = vmax.f32 %v269, 0.0
        %v1294 = vmax.f32 %v270, 0.0
        %v1295 = vmax.f32 %v271, 0.0
        %v1296 = vmax.f32 %v272, 0.0
        %v1297 = vmax.f32 %v273, 0.0
        %v1298 = vmax.f32 %v274, 0.0
        %v1299 = vmax.f32 %v275, 0.0
        %v1300 = vmax.f32 %v276, 0.0
        %v1301 = vmax.f32 %v277, 0.0
        %v1302 = vmax.f32 %v278, 0.0
        %v1303 = vmax.f32 %v279, 0.0
        %v1304 = vmax.f32 %v280, 0.0
        %v1305 = vmax.f32 %v281, 0.0
        %v1306 = vmax.f32 %v282, 0.0
        %v1307 = vmax.f32 %v283, 0.0
        %v1308 = vmax.f32 %v284, 0.0
        %v1309 = vmax.f32 %v285, 0.0
        %v1310 = vmax.f32 %v286, 0.0
        %v1311 = vmax.f32 %v287, 0.0
        %v1312 = vmax.f32 %v288, 0.0
        %v1313 = vmax.f32 %v289, 0.0
        %v1314 = vmax.f32 %v290, 0.0
        %v1315 = vmax.f32 %v291, 0.0
        %v1316 = vmax.f32 %v292, 0.0
        %v1317 = vmax.f32 %v293, 0.0
        %v1318 = vmax.f32 %v294, 0.0
        %v1319 = vmax.f32 %v295, 0.0
        %v1320 = vmax.f32 %v296, 0.0
        %v1321 = vmax.f32 %v297, 0.0
        %v1322 = vmax.f32 %v298, 0.0
        %v1323 = vmax.f32 %v299, 0.0
        %v1324 = vmax.f32 %v300, 0.0
        %v1325 = vmax.f32 %v301, 0.0
        %v1326 = vmax.f32 %v302, 0.0
        %v1327 = vmax.f32 %v303, 0.0
        %v1328 = vmax.f32 %v304, 0.0
        %v1329 = vmax.f32 %v305, 0.0
        %v1330 = vmax.f32 %v306, 0.0
        %v1331 = vmax.f32 %v307, 0.0
        %v1332 = vmax.f32 %v308, 0.0
        %v1333 = vmax.f32 %v309, 0.0
        %v1334 = vmax.f32 %v310, 0.0
        %v1335 = vmax.f32 %v311, 0.0
        %v1336 = vmax.f32 %v312, 0.0
        %v1337 = vmax.f32 %v313, 0.0
        %v1338 = vmax.f32 %v314, 0.0
        %v1339 = vmax.f32 %v315, 0.0
        %v1340 = vmax.f32 %v316, 0.0
        %v1341 = vmax.f32 %v317, 0.0
        %v1342 = vmax.f32 %v318, 0.0
        %v1343 = vmax.f32 %v319, 0.0
        %v1344 = vmax.f32 %v320, 0.0
        %v1345 = vmax.f32 %v321, 0.0
        %v1346 = vmax.f32 %v322, 0.0
        %v1347 = vmax.f32 %v323, 0.0
        %v1348 = vmax.f32 %v324, 0.0
        %v1349 = vmax.f32 %v325, 0.0
        %v1350 = vmax.f32 %v326, 0.0
        %v1351 = vmax.f32 %v327, 0.0
        %v1352 = vmax.f32 %v328, 0.0
        %v1353 = vmax.f32 %v329, 0.0
        %v1354 = vmax.f32 %v330, 0.0
        %v1355 = vmax.f32 %v331, 0.0
        %v1356 = vmax.f32 %v332, 0.0
        %v1357 = vmax.f32 %v333, 0.0
        %v1358 = vmax.f32 %v334, 0.0
        %v1359 = vmax.f32 %v335, 0.0
        %v1360 = vmax.f32 %v336, 0.0
        %v1361 = vmax.f32 %v337, 0.0
        %v1362 = vmax.f32 %v338, 0.0
        %v1363 = vmax.f32 %v339, 0.0
        %v1364 = vmax.f32 %v340, 0.0
        %v1365 = vmax.f32 %v341, 0.0
        %v1366 = vmax.f32 %v342, 0.0
        %v1367 = vmax.f32 %v343, 0.0
        %v1368 = vmax.f32 %v344, 0.0
        %v1369 = vmax.f32 %v345, 0.0
        %v1370 = vmax.f32 %v346, 0.0
        %v1371 = vmax.f32 %v347, 0.0
        %v1372 = vmax.f32 %v348, 0.0
        %v1373 = vmax.f32 %v349, 0.0
        %v1374 = vmax.f32 %v350, 0.0
        %v1375 = vmax.f32 %v351, 0.0
        %v1376 = vmax.f32 %v352, 0.0
        %v1377 = vmax.f32 %v353, 0.0
        %v1378 = vmax.f32 %v354, 0.0
        %v1379 = vmax.f32 %v355, 0.0
        %v1380 = vmax.f32 %v356, 0.0
        %v1381 = vmax.f32 %v357, 0.0
        %v1382 = vmax.f32 %v358, 0.0
        %v1383 = vmax.f32 %v359, 0.0
        %v1384 = vmax.f32 %v360, 0.0
        %v1385 = vmax.f32 %v361, 0.0
        %v1386 = vmax.f32 %v362, 0.0
        %v1387 = vmax.f32 %v363, 0.0
        %v1388 = vmax.f32 %v364, 0.0
        %v1389 = vmax.f32 %v365, 0.0
        %v1390 = vmax.f32 %v366, 0.0
        %v1391 = vmax.f32 %v367, 0.0
        %v1392 = vmax.f32 %v368, 0.0
        %v1393 = vmax.f32 %v369, 0.0
        %v1394 = vmax.f32 %v370, 0.0
        %v1395 = vmax.f32 %v371, 0.0
        %v1396 = vmax.f32 %v372, 0.0
        %v1397 = vmax.f32 %v373, 0.0
        %v1398 = vmax.f32 %v374, 0.0
        %v1399 = vmax.f32 %v375, 0.0
        %v1400 = vmax.f32 %v376, 0.0
        %v1401 = vmax.f32 %v377, 0.0
        %v1402 = vmax.f32 %v378, 0.0
        %v1403 = vmax.f32 %v379, 0.0
        %v1404 = vmax.f32 %v380, 0.0
        %v1405 = vmax.f32 %v381, 0.0
        %v1406 = vmax.f32 %v382, 0.0
        %v1407 = vmax.f32 %v383, 0.0
        %v1408 = vmax.f32 %v384, 0.0
        %v1409 = vmax.f32 %v385, 0.0
        %v1410 = vmax.f32 %v386, 0.0
        %v1411 = vmax.f32 %v387, 0.0
        %v1412 = vmax.f32 %v388, 0.0
        %v1413 = vmax.f32 %v389, 0.0
        %v1414 = vmax.f32 %v390, 0.0
        %v1415 = vmax.f32 %v391, 0.0
        %v1416 = vmax.f32 %v392, 0.0
        %v1417 = vmax.f32 %v393, 0.0
        %v1418 = vmax.f32 %v394, 0.0
        %v1419 = vmax.f32 %v395, 0.0
        %v1420 = vmax.f32 %v396, 0.0
        %v1421 = vmax.f32 %v397, 0.0
        %v1422 = vmax.f32 %v398, 0.0
        %v1423 = vmax.f32 %v399, 0.0
        %v1424 = vmax.f32 %v400, 0.0
        %v1425 = vmax.f32 %v401, 0.0
        %v1426 = vmax.f32 %v402, 0.0
        %v1427 = vmax.f32 %v403, 0.0
        %v1428 = vmax.f32 %v404, 0.0
        %v1429 = vmax.f32 %v405, 0.0
        %v1430 = vmax.f32 %v406, 0.0
        %v1431 = vmax.f32 %v407, 0.0
        %v1432 = vmax.f32 %v408, 0.0
        %v1433 = vmax.f32 %v409, 0.0
        %v1434 = vmax.f32 %v410, 0.0
        %v1435 = vmax.f32 %v411, 0.0
        %v1436 = vmax.f32 %v412, 0.0
        %v1437 = vmax.f32 %v413, 0.0
        %v1438 = vmax.f32 %v414, 0.0
        %v1439 = vmax.f32 %v415, 0.0
        %v1440 = vmax.f32 %v416, 0.0
        %v1441 = vmax.f32 %v417, 0.0
        %v1442 = vmax.f32 %v418, 0.0
        %v1443 = vmax.f32 %v419, 0.0
        %v1444 = vmax.f32 %v420, 0.0
        %v1445 = vmax.f32 %v421, 0.0
        %v1446 = vmax.f32 %v422, 0.0
        %v1447 = vmax.f32 %v423, 0.0
        %v1448 = vmax.f32 %v424, 0.0
        %v1449 = vmax.f32 %v425, 0.0
        %v1450 = vmax.f32 %v426, 0.0
        %v1451 = vmax.f32 %v427, 0.0
        %v1452 = vmax.f32 %v428, 0.0
        %v1453 = vmax.f32 %v429, 0.0
        %v1454 = vmax.f32 %v430, 0.0
        %v1455 = vmax.f32 %v431, 0.0
        %v1456 = vmax.f32 %v432, 0.0
        %v1457 = vmax.f32 %v433, 0.0
        %v1458 = vmax.f32 %v434, 0.0
        %v1459 = vmax.f32 %v435, 0.0
        %v1460 = vmax.f32 %v436, 0.0
        %v1461 = vmax.f32 %v437, 0.0
        %v1462 = vmax.f32 %v438, 0.0
        %v1463 = vmax.f32 %v439, 0.0
        %v1464 = vmax.f32 %v440, 0.0
        %v1465 = vmax.f32 %v441, 0.0
        %v1466 = vmax.f32 %v442, 0.0
        %v1467 = vmax.f32 %v443, 0.0
        %v1468 = vmax.f32 %v444, 0.0
        %v1469 = vmax.f32 %v445, 0.0
        %v1470 = vmax.f32 %v446, 0.0
        %v1471 = vmax.f32 %v447, 0.0
        %v1472 = vmax.f32 %v448, 0.0
        %v1473 = vmax.f32 %v449, 0.0
        %v1474 = vmax.f32 %v450, 0.0
        %v1475 = vmax.f32 %v451, 0.0
        %v1476 = vmax.f32 %v452, 0.0
        %v1477 = vmax.f32 %v453, 0.0
        %v1478 = vmax.f32 %v454, 0.0
        %v1479 = vmax.f32 %v455, 0.0
        %v1480 = vmax.f32 %v456, 0.0
        %v1481 = vmax.f32 %v457, 0.0
        %v1482 = vmax.f32 %v458, 0.0
        %v1483 = vmax.f32 %v459, 0.0
        %v1484 = vmax.f32 %v460, 0.0
        %v1485 = vmax.f32 %v461, 0.0
        %v1486 = vmax.f32 %v462, 0.0
        %v1487 = vmax.f32 %v463, 0.0
        %v1488 = vmax.f32 %v464, 0.0
        %v1489 = vmax.f32 %v465, 0.0
        %v1490 = vmax.f32 %v466, 0.0
        %v1491 = vmax.f32 %v467, 0.0
        %v1492 = vmax.f32 %v468, 0.0
        %v1493 = vmax.f32 %v469, 0.0
        %v1494 = vmax.f32 %v470, 0.0
        %v1495 = vmax.f32 %v471, 0.0
        %v1496 = vmax.f32 %v472, 0.0
        %v1497 = vmax.f32 %v473, 0.0
        %v1498 = vmax.f32 %v474, 0.0
        %v1499 = vmax.f32 %v475, 0.0
        %v1500 = vmax.f32 %v476, 0.0
        %v1501 = vmax.f32 %v477, 0.0
        %v1502 = vmax.f32 %v478, 0.0
        %v1503 = vmax.f32 %v479, 0.0
        %v1504 = vmax.f32 %v480, 0.0
        %v1505 = vmax.f32 %v481, 0.0
        %v1506 = vmax.f32 %v482, 0.0
        %v1507 = vmax.f32 %v483, 0.0
        %v1508 = vmax.f32 %v484, 0.0
        %v1509 = vmax.f32 %v485, 0.0
        %v1510 = vmax.f32 %v486, 0.0
        %v1511 = vmax.f32 %v487, 0.0
        %v1512 = vmax.f32 %v488, 0.0
        %v1513 = vmax.f32 %v489, 0.0
        %v1514 = vmax.f32 %v490, 0.0
        %v1515 = vmax.f32 %v491, 0.0
        %v1516 = vmax.f32 %v492, 0.0
        %v1517 = vmax.f32 %v493, 0.0
        %v1518 = vmax.f32 %v494, 0.0
        %v1519 = vmax.f32 %v495, 0.0
        %v1520 = vmax.f32 %v496, 0.0
        %v1521 = vmax.f32 %v497, 0.0
        %v1522 = vmax.f32 %v498, 0.0
        %v1523 = vmax.f32 %v499, 0.0
        %v1524 = vmax.f32 %v500, 0.0
        %v1525 = vmax.f32 %v501, 0.0
        %v1526 = vmax.f32 %v502, 0.0
        %v1527 = vmax.f32 %v503, 0.0
        %v1528 = vmax.f32 %v504, 0.0
        %v1529 = vmax.f32 %v505, 0.0
        %v1530 = vmax.f32 %v506, 0.0
        %v1531 = vmax.f32 %v507, 0.0
        %v1532 = vmax.f32 %v508, 0.0
        %v1533 = vmax.f32 %v509, 0.0
        %v1534 = vmax.f32 %v510, 0.0
        %v1535 = vmax.f32 %v511, 0.0
        %v1536 = vmax.f32 %v512, 0.0
        %v1537 = vmax.f32 %v513, 0.0
        %v1538 = vmax.f32 %v514, 0.0
        %v1539 = vmax.f32 %v515, 0.0
        %v1540 = vmax.f32 %v516, 0.0
        %v1541 = vmax.f32 %v517, 0.0
        %v1542 = vmax.f32 %v518, 0.0
        %v1543 = vmax.f32 %v519, 0.0
        %v1544 = vmax.f32 %v520, 0.0
        %v1545 = vmax.f32 %v521, 0.0
        %v1546 = vmax.f32 %v522, 0.0
        %v1547 = vmax.f32 %v523, 0.0
        %v1548 = vmax.f32 %v524, 0.0
        %v1549 = vmax.f32 %v525, 0.0
        %v1550 = vmax.f32 %v526, 0.0
        %v1551 = vmax.f32 %v527, 0.0
        %v1552 = vmax.f32 %v528, 0.0
        %v1553 = vmax.f32 %v529, 0.0
        %v1554 = vmax.f32 %v530, 0.0
        %v1555 = vmax.f32 %v531, 0.0
        %v1556 = vmax.f32 %v532, 0.0
        %v1557 = vmax.f32 %v533, 0.0
        %v1558 = vmax.f32 %v534, 0.0
        %v1559 = vmax.f32 %v535, 0.0
        %v1560 = vmax.f32 %v536, 0.0
        %v1561 = vmax.f32 %v537, 0.0
        %v1562 = vmax.f32 %v538, 0.0
        %v1563 = vmax.f32 %v539, 0.0
        %v1564 = vmax.f32 %v540, 0.0
        %v1565 = vmax.f32 %v541, 0.0
        %v1566 = vmax.f32 %v542, 0.0
        %v1567 = vmax.f32 %v543, 0.0
        %v1568 = vmax.f32 %v544, 0.0
        %v1569 = vmax.f32 %v545, 0.0
        %v1570 = vmax.f32 %v546, 0.0
        %v1571 = vmax.f32 %v547, 0.0
        %v1572 = vmax.f32 %v548, 0.0
        %v1573 = vmax.f32 %v549, 0.0
        %v1574 = vmax.f32 %v550, 0.0
        %v1575 = vmax.f32 %v551, 0.0
        %v1576 = vmax.f32 %v552, 0.0
        %v1577 = vmax.f32 %v553, 0.0
        %v1578 = vmax.f32 %v554, 0.0
        %v1579 = vmax.f32 %v555, 0.0
        %v1580 = vmax.f32 %v556, 0.0
        %v1581 = vmax.f32 %v557, 0.0
        %v1582 = vmax.f32 %v558, 0.0
        %v1583 = vmax.f32 %v559, 0.0
        %v1584 = vmax.f32 %v560, 0.0
        %v1585 = vmax.f32 %v561, 0.0
        %v1586 = vmax.f32 %v562, 0.0
        %v1587 = vmax.f32 %v563, 0.0
        %v1588 = vmax.f32 %v564, 0.0
        %v1589 = vmax.f32 %v565, 0.0
        %v1590 = vmax.f32 %v566, 0.0
        %v1591 = vmax.f32 %v567, 0.0
        %v1592 = vmax.f32 %v568, 0.0
        %v1593 = vmax.f32 %v569, 0.0
        %v1594 = vmax.f32 %v570, 0.0
        %v1595 = vmax.f32 %v571, 0.0
        %v1596 = vmax.f32 %v572, 0.0
        %v1597 = vmax.f32 %v573, 0.0
        %v1598 = vmax.f32 %v574, 0.0
        %v1599 = vmax.f32 %v575, 0.0
        %v1600 = vmax.f32 %v576, 0.0
        %v1601 = vmax.f32 %v577, 0.0
        %v1602 = vmax.f32 %v578, 0.0
        %v1603 = vmax.f32 %v579, 0.0
        %v1604 = vmax.f32 %v580, 0.0
        %v1605 = vmax.f32 %v581, 0.0
        %v1606 = vmax.f32 %v582, 0.0
        %v1607 = vmax.f32 %v583, 0.0
        %v1608 = vmax.f32 %v584, 0.0
        %v1609 = vmax.f32 %v585, 0.0
        %v1610 = vmax.f32 %v586, 0.0
        %v1611 = vmax.f32 %v587, 0.0
        %v1612 = vmax.f32 %v588, 0.0
        %v1613 = vmax.f32 %v589, 0.0
        %v1614 = vmax.f32 %v590, 0.0
        %v1615 = vmax.f32 %v591, 0.0
        %v1616 = vmax.f32 %v592, 0.0
        %v1617 = vmax.f32 %v593, 0.0
        %v1618 = vmax.f32 %v594, 0.0
        %v1619 = vmax.f32 %v595, 0.0
        %v1620 = vmax.f32 %v596, 0.0
        %v1621 = vmax.f32 %v597, 0.0
        %v1622 = vmax.f32 %v598, 0.0
        %v1623 = vmax.f32 %v599, 0.0
        %v1624 = vmax.f32 %v600, 0.0
        %v1625 = vmax.f32 %v601, 0.0
        %v1626 = vmax.f32 %v602, 0.0
        %v1627 = vmax.f32 %v603, 0.0
        %v1628 = vmax.f32 %v604, 0.0
        %v1629 = vmax.f32 %v605, 0.0
        %v1630 = vmax.f32 %v606, 0.0
        %v1631 = vmax.f32 %v607, 0.0
        %v1632 = vmax.f32 %v608, 0.0
        %v1633 = vmax.f32 %v609, 0.0
        %v1634 = vmax.f32 %v610, 0.0
        %v1635 = vmax.f32 %v611, 0.0
        %v1636 = vmax.f32 %v612, 0.0
        %v1637 = vmax.f32 %v613, 0.0
        %v1638 = vmax.f32 %v614, 0.0
        %v1639 = vmax.f32 %v615, 0.0
        %v1640 = vmax.f32 %v616, 0.0
        %v1641 = vmax.f32 %v617, 0.0
        %v1642 = vmax.f32 %v618, 0.0
        %v1643 = vmax.f32 %v619, 0.0
        %v1644 = vmax.f32 %v620, 0.0
        %v1645 = vmax.f32 %v621, 0.0
        %v1646 = vmax.f32 %v622, 0.0
        %v1647 = vmax.f32 %v623, 0.0
        %v1648 = vmax.f32 %v624, 0.0
        %v1649 = vmax.f32 %v625, 0.0
        %v1650 = vmax.f32 %v626, 0.0
        %v1651 = vmax.f32 %v627, 0.0
        %v1652 = vmax.f32 %v628, 0.0
        %v1653 = vmax.f32 %v629, 0.0
        %v1654 = vmax.f32 %v630, 0.0
        %v1655 = vmax.f32 %v631, 0.0
        %v1656 = vmax.f32 %v632, 0.0
        %v1657 = vmax.f32 %v633, 0.0
        %v1658 = vmax.f32 %v634, 0.0
        %v1659 = vmax.f32 %v635, 0.0
        %v1660 = vmax.f32 %v636, 0.0
        %v1661 = vmax.f32 %v637, 0.0
        %v1662 = vmax.f32 %v638, 0.0
        %v1663 = vmax.f32 %v639, 0.0
        %v1664 = vmax.f32 %v640, 0.0
        %v1665 = vmax.f32 %v641, 0.0
        %v1666 = vmax.f32 %v642, 0.0
        %v1667 = vmax.f32 %v643, 0.0
        %v1668 = vmax.f32 %v644, 0.0
        %v1669 = vmax.f32 %v645, 0.0
        %v1670 = vmax.f32 %v646, 0.0
        %v1671 = vmax.f32 %v647, 0.0
        %v1672 = vmax.f32 %v648, 0.0
        %v1673 = vmax.f32 %v649, 0.0
        %v1674 = vmax.f32 %v650, 0.0
        %v1675 = vmax.f32 %v651, 0.0
        %v1676 = vmax.f32 %v652, 0.0
        %v1677 = vmax.f32 %v653, 0.0
        %v1678 = vmax.f32 %v654, 0.0
        %v1679 = vmax.f32 %v655, 0.0
        %v1680 = vmax.f32 %v656, 0.0
        %v1681 = vmax.f32 %v657, 0.0
        %v1682 = vmax.f32 %v658, 0.0
        %v1683 = vmax.f32 %v659, 0.0
        %v1684 = vmax.f32 %v660, 0.0
        %v1685 = vmax.f32 %v661, 0.0
        %v1686 = vmax.f32 %v662, 0.0
        %v1687 = vmax.f32 %v663, 0.0
        %v1688 = vmax.f32 %v664, 0.0
        %v1689 = vmax.f32 %v665, 0.0
        %v1690 = vmax.f32 %v666, 0.0
        %v1691 = vmax.f32 %v667, 0.0
        %v1692 = vmax.f32 %v668, 0.0
        %v1693 = vmax.f32 %v669, 0.0
        %v1694 = vmax.f32 %v670, 0.0
        %v1695 = vmax.f32 %v671, 0.0
        %v1696 = vmax.f32 %v672, 0.0
        %v1697 = vmax.f32 %v673, 0.0
        %v1698 = vmax.f32 %v674, 0.0
        %v1699 = vmax.f32 %v675, 0.0
        %v1700 = vmax.f32 %v676, 0.0
        %v1701 = vmax.f32 %v677, 0.0
        %v1702 = vmax.f32 %v678, 0.0
        %v1703 = vmax.f32 %v679, 0.0
        %v1704 = vmax.f32 %v680, 0.0
        %v1705 = vmax.f32 %v681, 0.0
        %v1706 = vmax.f32 %v682, 0.0
        %v1707 = vmax.f32 %v683, 0.0
        %v1708 = vmax.f32 %v684, 0.0
        %v1709 = vmax.f32 %v685, 0.0
        %v1710 = vmax.f32 %v686, 0.0
        %v1711 = vmax.f32 %v687, 0.0
        %v1712 = vmax.f32 %v688, 0.0
        %v1713 = vmax.f32 %v689, 0.0
        %v1714 = vmax.f32 %v690, 0.0
        %v1715 = vmax.f32 %v691, 0.0
        %v1716 = vmax.f32 %v692, 0.0
        %v1717 = vmax.f32 %v693, 0.0
        %v1718 = vmax.f32 %v694, 0.0
        %v1719 = vmax.f32 %v695, 0.0
        %v1720 = vmax.f32 %v696, 0.0
        %v1721 = vmax.f32 %v697, 0.0
        %v1722 = vmax.f32 %v698, 0.0
        %v1723 = vmax.f32 %v699, 0.0
        %v1724 = vmax.f32 %v700, 0.0
        %v1725 = vmax.f32 %v701, 0.0
        %v1726 = vmax.f32 %v702, 0.0
        %v1727 = vmax.f32 %v703, 0.0
        %v1728 = vmax.f32 %v704, 0.0
        %v1729 = vmax.f32 %v705, 0.0
        %v1730 = vmax.f32 %v706, 0.0
        %v1731 = vmax.f32 %v707, 0.0
        %v1732 = vmax.f32 %v708, 0.0
        %v1733 = vmax.f32 %v709, 0.0
        %v1734 = vmax.f32 %v710, 0.0
        %v1735 = vmax.f32 %v711, 0.0
        %v1736 = vmax.f32 %v712, 0.0
        %v1737 = vmax.f32 %v713, 0.0
        %v1738 = vmax.f32 %v714, 0.0
        %v1739 = vmax.f32 %v715, 0.0
        %v1740 = vmax.f32 %v716, 0.0
        %v1741 = vmax.f32 %v717, 0.0
        %v1742 = vmax.f32 %v718, 0.0
        %v1743 = vmax.f32 %v719, 0.0
        %v1744 = vmax.f32 %v720, 0.0
        %v1745 = vmax.f32 %v721, 0.0
        %v1746 = vmax.f32 %v722, 0.0
        %v1747 = vmax.f32 %v723, 0.0
        %v1748 = vmax.f32 %v724, 0.0
        %v1749 = vmax.f32 %v725, 0.0
        %v1750 = vmax.f32 %v726, 0.0
        %v1751 = vmax.f32 %v727, 0.0
        %v1752 = vmax.f32 %v728, 0.0
        %v1753 = vmax.f32 %v729, 0.0
        %v1754 = vmax.f32 %v730, 0.0
        %v1755 = vmax.f32 %v731, 0.0
        %v1756 = vmax.f32 %v732, 0.0
        %v1757 = vmax.f32 %v733, 0.0
        %v1758 = vmax.f32 %v734, 0.0
        %v1759 = vmax.f32 %v735, 0.0
        %v1760 = vmax.f32 %v736, 0.0
        %v1761 = vmax.f32 %v737, 0.0
        %v1762 = vmax.f32 %v738, 0.0
        %v1763 = vmax.f32 %v739, 0.0
        %v1764 = vmax.f32 %v740, 0.0
        %v1765 = vmax.f32 %v741, 0.0
        %v1766 = vmax.f32 %v742, 0.0
        %v1767 = vmax.f32 %v743, 0.0
        %v1768 = vmax.f32 %v744, 0.0
        %v1769 = vmax.f32 %v745, 0.0
        %v1770 = vmax.f32 %v746, 0.0
        %v1771 = vmax.f32 %v747, 0.0
        %v1772 = vmax.f32 %v748, 0.0
        %v1773 = vmax.f32 %v749, 0.0
        %v1774 = vmax.f32 %v750, 0.0
        %v1775 = vmax.f32 %v751, 0.0
        %v1776 = vmax.f32 %v752, 0.0
        %v1777 = vmax.f32 %v753, 0.0
        %v1778 = vmul.f32 %v242, %v754
        %v1779 = vmul.f32 %v243, %v755
        %v1780 = vmul.f32 %v244, %v756
        %v1781 = vmul.f32 %v245, %v757
        %v1782 = vmul.f32 %v246, %v758
        %v1783 = vmul.f32 %v247, %v759
        %v1784 = vmul.f32 %v248, %v760
        %v1785 = vmul.f32 %v249, %v761
        %v1786 = vmul.f32 %v250, %v762
        %v1787 = vmul.f32 %v251, %v763
        %v1788 = vmul.f32 %v252, %v764
        %v1789 = vmul.f32 %v253, %v765
        %v1790 = vmul.f32 %v254, %v766
        %v1791 = vmul.f32 %v255, %v767
        %v1792 = vmul.f32 %v256, %v768
        %v1793 = vmul.f32 %v257, %v769
        %v1794 = vmul.f32 %v258, %v770
        %v1795 = vmul.f32 %v259, %v771
        %v1796 = vmul.f32 %v260, %v772
        %v1797 = vmul.f32 %v261, %v773
        %v1798 = vmul.f32 %v262, %v774
        %v1799 = vmul.f32 %v263, %v775
        %v1800 = vmul.f32 %v264, %v776
        %v1801 = vmul.f32 %v265, %v777
        %v1802 = vmul.f32 %v266, %v778
        %v1803 = vmul.f32 %v267, %v779
        %v1804 = vmul.f32 %v268, %v780
        %v1805 = vmul.f32 %v269, %v781
        %v1806 = vmul.f32 %v270, %v782
        %v1807 = vmul.f32 %v271, %v783
        %v1808 = vmul.f32 %v272, %v784
        %v1809 = vmul.f32 %v273, %v785
        %v1810 = vmul.f32 %v274, %v786
        %v1811 = vmul.f32 %v275, %v787
        %v1812 = vmul.f32 %v276, %v788
        %v1813 = vmul.f32 %v277, %v789
        %v1814 = vmul.f32 %v278, %v790
        %v1815 = vmul.f32 %v279, %v791
        %v1816 = vmul.f32 %v280, %v792
        %v1817 = vmul.f32 %v281, %v793
        %v1818 = vmul.f32 %v282, %v794
        %v1819 = vmul.f32 %v283, %v795
        %v1820 = vmul.f32 %v284, %v796
        %v1821 = vmul.f32 %v285, %v797
        %v1822 = vmul.f32 %v286, %v798
        %v1823 = vmul.f32 %v287, %v799
        %v1824 = vmul.f32 %v288, %v800
        %v1825 = vmul.f32 %v289, %v801
        %v1826 = vmul.f32 %v290, %v802
        %v1827 = vmul.f32 %v291, %v803
        %v1828 = vmul.f32 %v292, %v804
        %v1829 = vmul.f32 %v293, %v805
        %v1830 = vmul.f32 %v294, %v806
        %v1831 = vmul.f32 %v295, %v807
        %v1832 = vmul.f32 %v296, %v808
        %v1833 = vmul.f32 %v297, %v809
        %v1834 = vmul.f32 %v298, %v810
        %v1835 = vmul.f32 %v299, %v811
        %v1836 = vmul.f32 %v300, %v812
        %v1837 = vmul.f32 %v301, %v813
        %v1838 = vmul.f32 %v302, %v814
        %v1839 = vmul.f32 %v303, %v815
        %v1840 = vmul.f32 %v304, %v816
        %v1841 = vmul.f32 %v305, %v817
        %v1842 = vmul.f32 %v306, %v818
        %v1843 = vmul.f32 %v307, %v819
        %v1844 = vmul.f32 %v308, %v820
        %v1845 = vmul.f32 %v309, %v821
        %v1846 = vmul.f32 %v310, %v822
        %v1847 = vmul.f32 %v311, %v823
        %v1848 = vmul.f32 %v312, %v824
        %v1849 = vmul.f32 %v313, %v825
        %v1850 = vmul.f32 %v314, %v826
        %v1851 = vmul.f32 %v315, %v827
        %v1852 = vmul.f32 %v316, %v828
        %v1853 = vmul.f32 %v317, %v829
        %v1854 = vmul.f32 %v318, %v830
        %v1855 = vmul.f32 %v319, %v831
        %v1856 = vmul.f32 %v320, %v832
        %v1857 = vmul.f32 %v321, %v833
        %v1858 = vmul.f32 %v322, %v834
        %v1859 = vmul.f32 %v323, %v835
        %v1860 = vmul.f32 %v324, %v836
        %v1861 = vmul.f32 %v325, %v837
        %v1862 = vmul.f32 %v326, %v838
        %v1863 = vmul.f32 %v327, %v839
        %v1864 = vmul.f32 %v328, %v840
        %v1865 = vmul.f32 %v329, %v841
        %v1866 = vmul.f32 %v330, %v842
        %v1867 = vmul.f32 %v331, %v843
        %v1868 = vmul.f32 %v332, %v844
        %v1869 = vmul.f32 %v333, %v845
        %v1870 = vmul.f32 %v334, %v846
        %v1871 = vmul.f32 %v335, %v847
        %v1872 = vmul.f32 %v336, %v848
        %v1873 = vmul.f32 %v337, %v849
        %v1874 = vmul.f32 %v338, %v850
        %v1875 = vmul.f32 %v339, %v851
        %v1876 = vmul.f32 %v340, %v852
        %v1877 = vmul.f32 %v341, %v853
        %v1878 = vmul.f32 %v342, %v854
        %v1879 = vmul.f32 %v343, %v855
        %v1880 = vmul.f32 %v344, %v856
        %v1881 = vmul.f32 %v345, %v857
        %v1882 = vmul.f32 %v346, %v858
        %v1883 = vmul.f32 %v347, %v859
        %v1884 = vmul.f32 %v348, %v860
        %v1885 = vmul.f32 %v349, %v861
        %v1886 = vmul.f32 %v350, %v862
        %v1887 = vmul.f32 %v351, %v863
        %v1888 = vmul.f32 %v352, %v864
        %v1889 = vmul.f32 %v353, %v865
        %v1890 = vmul.f32 %v354, %v866
        %v1891 = vmul.f32 %v355, %v867
        %v1892 = vmul.f32 %v356, %v868
        %v1893 = vmul.f32 %v357, %v869
        %v1894 = vmul.f32 %v358, %v870
        %v1895 = vmul.f32 %v359, %v871
        %v1896 = vmul.f32 %v360, %v872
        %v1897 = vmul.f32 %v361, %v873
        %v1898 = vmul.f32 %v362, %v874
        %v1899 = vmul.f32 %v363, %v875
        %v1900 = vmul.f32 %v364, %v876
        %v1901 = vmul.f32 %v365, %v877
        %v1902 = vmul.f32 %v366, %v878
        %v1903 = vmul.f32 %v367, %v879
        %v1904 = vmul.f32 %v368, %v880
        %v1905 = vmul.f32 %v369, %v881
        %v1906 = vmul.f32 %v370, %v882
        %v1907 = vmul.f32 %v371, %v883
        %v1908 = vmul.f32 %v372, %v884
        %v1909 = vmul.f32 %v373, %v885
        %v1910 = vmul.f32 %v374, %v886
        %v1911 = vmul.f32 %v375, %v887
        %v1912 = vmul.f32 %v376, %v888
        %v1913 = vmul.f32 %v377, %v889
        %v1914 = vmul.f32 %v378, %v890
        %v1915 = vmul.f32 %v379, %v891
        %v1916 = vmul.f32 %v380, %v892
        %v1917 = vmul.f32 %v381, %v893
        %v1918 = vmul.f32 %v382, %v894
        %v1919 = vmul.f32 %v383, %v895
        %v1920 = vmul.f32 %v384, %v896
        %v1921 = vmul.f32 %v385, %v897
        %v1922 = vmul.f32 %v386, %v898
        %v1923 = vmul.f32 %v387, %v899
        %v1924 = vmul.f32 %v388, %v900
        %v1925 = vmul.f32 %v389, %v901
        %v1926 = vmul.f32 %v390, %v902
        %v1927 = vmul.f32 %v391, %v903
        %v1928 = vmul.f32 %v392, %v904
        %v1929 = vmul.f32 %v393, %v905
        %v1930 = vmul.f32 %v394, %v906
        %v1931 = vmul.f32 %v395, %v907
        %v1932 = vmul.f32 %v396, %v908
        %v1933 = vmul.f32 %v397, %v909
        %v1934 = vmul.f32 %v398, %v910
        %v1935 = vmul.f32 %v399, %v911
        %v1936 = vmul.f32 %v400, %v912
        %v1937 = vmul.f32 %v401, %v913
        %v1938 = vmul.f32 %v402, %v914
        %v1939 = vmul.f32 %v403, %v915
        %v1940 = vmul.f32 %v404, %v916
        %v1941 = vmul.f32 %v405, %v917
        %v1942 = vmul.f32 %v406, %v918
        %v1943 = vmul.f32 %v407, %v919
        %v1944 = vmul.f32 %v408, %v920
        %v1945 = vmul.f32 %v409, %v921
        %v1946 = vmul.f32 %v410, %v922
        %v1947 = vmul.f32 %v411, %v923
        %v1948 = vmul.f32 %v412, %v924
        %v1949 = vmul.f32 %v413, %v925
        %v1950 = vmul.f32 %v414, %v926
        %v1951 = vmul.f32 %v415, %v927
        %v1952 = vmul.f32 %v416, %v928
        %v1953 = vmul.f32 %v417, %v929
        %v1954 = vmul.f32 %v418, %v930
        %v1955 = vmul.f32 %v419, %v931
        %v1956 = vmul.f32 %v420, %v932
        %v1957 = vmul.f32 %v421, %v933
        %v1958 = vmul.f32 %v422, %v934
        %v1959 = vmul.f32 %v423, %v935
        %v1960 = vmul.f32 %v424, %v936
        %v1961 = vmul.f32 %v425, %v937
        %v1962 = vmul.f32 %v426, %v938
        %v1963 = vmul.f32 %v427, %v939
        %v1964 = vmul.f32 %v428, %v940
        %v1965 = vmul.f32 %v429, %v941
        %v1966 = vmul.f32 %v430, %v942
        %v1967 = vmul.f32 %v431, %v943
        %v1968 = vmul.f32 %v432, %v944
        %v1969 = vmul.f32 %v433, %v945
        %v1970 = vmul.f32 %v434, %v946
        %v1971 = vmul.f32 %v435, %v947
        %v1972 = vmul.f32 %v436, %v948
        %v1973 = vmul.f32 %v437, %v949
        %v1974 = vmul.f32 %v438, %v950
        %v1975 = vmul.f32 %v439, %v951
        %v1976 = vmul.f32 %v440, %v952
        %v1977 = vmul.f32 %v441, %v953
        %v1978 = vmul.f32 %v442, %v954
        %v1979 = vmul.f32 %v443, %v955
        %v1980 = vmul.f32 %v444, %v956
        %v1981 = vmul.f32 %v445, %v957
        %v1982 = vmul.f32 %v446, %v958
        %v1983 = vmul.f32 %v447, %v959
        %v1984 = vmul.f32 %v448, %v960
        %v1985 = vmul.f32 %v449, %v961
        %v1986 = vmul.f32 %v450, %v962
        %v1987 = vmul.f32 %v451, %v963
        %v1988 = vmul.f32 %v452, %v964
        %v1989 = vmul.f32 %v453, %v965
        %v1990 = vmul.f32 %v454, %v966
        %v1991 = vmul.f32 %v455, %v967
        %v1992 = vmul.f32 %v456, %v968
        %v1993 = vmul.f32 %v457, %v969
        %v1994 = vmul.f32 %v458, %v970
        %v1995 = vmul.f32 %v459, %v971
        %v1996 = vmul.f32 %v460, %v972
        %v1997 = vmul.f32 %v461, %v973
        %v1998 = vmul.f32 %v462, %v974
        %v1999 = vmul.f32 %v463, %v975
        %v2000 = vmul.f32 %v464, %v976
        %v2001 = vmul.f32 %v465, %v977
        %v2002 = vmul.f32 %v466, %v978
        %v2003 = vmul.f32 %v467, %v979
        %v2004 = vmul.f32 %v468, %v980
        %v2005 = vmul.f32 %v469, %v981
        %v2006 = vmul.f32 %v470, %v982
        %v2007 = vmul.f32 %v471, %v983
        %v2008 = vmul.f32 %v472, %v984
        %v2009 = vmul.f32 %v473, %v985
        %v2010 = vmul.f32 %v474, %v986
        %v2011 = vmul.f32 %v475, %v987
        %v2012 = vmul.f32 %v476, %v988
        %v2013 = vmul.f32 %v477, %v989
        %v2014 = vmul.f32 %v478, %v990
        %v2015 = vmul.f32 %v479, %v991
        %v2016 = vmul.f32 %v480, %v992
        %v2017 = vmul.f32 %v481, %v993
        %v2018 = vmul.f32 %v482, %v994
        %v2019 = vmul.f32 %v483, %v995
        %v2020 = vmul.f32 %v484, %v996
        %v2021 = vmul.f32 %v485, %v997
        %v2022 = vmul.f32 %v486, %v998
        %v2023 = vmul.f32 %v487, %v999
        %v2024 = vmul.f32 %v488, %v1000
        %v2025 = vmul.f32 %v489, %v1001
        %v2026 = vmul.f32 %v490, %v1002
        %v2027 = vmul.f32 %v491, %v1003
        %v2028 = vmul.f32 %v492, %v1004
        %v2029 = vmul.f32 %v493, %v1005
        %v2030 = vmul.f32 %v494, %v1006
        %v2031 = vmul.f32 %v495, %v1007
        %v2032 = vmul.f32 %v496, %v1008
        %v2033 = vmul.f32 %v497, %v1009
        %v2034 = vmul.f32 %v498, %v1010
        %v2035 = vmul.f32 %v499, %v1011
        %v2036 = vmul.f32 %v500, %v1012
        %v2037 = vmul.f32 %v501, %v1013
        %v2038 = vmul.f32 %v502, %v1014
        %v2039 = vmul.f32 %v503, %v1015
        %v2040 = vmul.f32 %v504, %v1016
        %v2041 = vmul.f32 %v505, %v1017
        %v2042 = vmul.f32 %v506, %v1018
        %v2043 = vmul.f32 %v507, %v1019
        %v2044 = vmul.f32 %v508, %v1020
        %v2045 = vmul.f32 %v509, %v1021
        %v2046 = vmul.f32 %v510, %v1022
        %v2047 = vmul.f32 %v511, %v1023
        %v2048 = vmul.f32 %v512, %v1024
        %v2049 = vmul.f32 %v513, %v1025
        %v2050 = vmul.f32 %v514, %v1026
        %v2051 = vmul.f32 %v515, %v1027
        %v2052 = vmul.f32 %v516, %v1028
        %v2053 = vmul.f32 %v517, %v1029
        %v2054 = vmul.f32 %v518, %v1030
        %v2055 = vmul.f32 %v519, %v1031
        %v2056 = vmul.f32 %v520, %v1032
        %v2057 = vmul.f32 %v521, %v1033
        %v2058 = vmul.f32 %v522, %v1034
        %v2059 = vmul.f32 %v523, %v1035
        %v2060 = vmul.f32 %v524, %v1036
        %v2061 = vmul.f32 %v525, %v1037
        %v2062 = vmul.f32 %v526, %v1038
        %v2063 = vmul.f32 %v527, %v1039
        %v2064 = vmul.f32 %v528, %v1040
        %v2065 = vmul.f32 %v529, %v1041
        %v2066 = vmul.f32 %v530, %v1042
        %v2067 = vmul.f32 %v531, %v1043
        %v2068 = vmul.f32 %v532, %v1044
        %v2069 = vmul.f32 %v533, %v1045
        %v2070 = vmul.f32 %v534, %v1046
        %v2071 = vmul.f32 %v535, %v1047
        %v2072 = vmul.f32 %v536, %v1048
        %v2073 = vmul.f32 %v537, %v1049
        %v2074 = vmul.f32 %v538, %v1050
        %v2075 = vmul.f32 %v539, %v1051
        %v2076 = vmul.f32 %v540, %v1052
        %v2077 = vmul.f32 %v541, %v1053
        %v2078 = vmul.f32 %v542, %v1054
        %v2079 = vmul.f32 %v543, %v1055
        %v2080 = vmul.f32 %v544, %v1056
        %v2081 = vmul.f32 %v545, %v1057
        %v2082 = vmul.f32 %v546, %v1058
        %v2083 = vmul.f32 %v547, %v1059
        %v2084 = vmul.f32 %v548, %v1060
        %v2085 = vmul.f32 %v549, %v1061
        %v2086 = vmul.f32 %v550, %v1062
        %v2087 = vmul.f32 %v551, %v1063
        %v2088 = vmul.f32 %v552, %v1064
        %v2089 = vmul.f32 %v553, %v1065
        %v2090 = vmul.f32 %v554, %v1066
        %v2091 = vmul.f32 %v555, %v1067
        %v2092 = vmul.f32 %v556, %v1068
        %v2093 = vmul.f32 %v557, %v1069
        %v2094 = vmul.f32 %v558, %v1070
        %v2095 = vmul.f32 %v559, %v1071
        %v2096 = vmul.f32 %v560, %v1072
        %v2097 = vmul.f32 %v561, %v1073
        %v2098 = vmul.f32 %v562, %v1074
        %v2099 = vmul.f32 %v563, %v1075
        %v2100 = vmul.f32 %v564, %v1076
        %v2101 = vmul.f32 %v565, %v1077
        %v2102 = vmul.f32 %v566, %v1078
        %v2103 = vmul.f32 %v567, %v1079
        %v2104 = vmul.f32 %v568, %v1080
        %v2105 = vmul.f32 %v569, %v1081
        %v2106 = vmul.f32 %v570, %v1082
        %v2107 = vmul.f32 %v571, %v1083
        %v2108 = vmul.f32 %v572, %v1084
        %v2109 = vmul.f32 %v573, %v1085
        %v2110 = vmul.f32 %v574, %v1086
        %v2111 = vmul.f32 %v575, %v1087
        %v2112 = vmul.f32 %v576, %v1088
        %v2113 = vmul.f32 %v577, %v1089
        %v2114 = vmul.f32 %v578, %v1090
        %v2115 = vmul.f32 %v579, %v1091
        %v2116 = vmul.f32 %v580, %v1092
        %v2117 = vmul.f32 %v581, %v1093
        %v2118 = vmul.f32 %v582, %v1094
        %v2119 = vmul.f32 %v583, %v1095
        %v2120 = vmul.f32 %v584, %v1096
        %v2121 = vmul.f32 %v585, %v1097
        %v2122 = vmul.f32 %v586, %v1098
        %v2123 = vmul.f32 %v587, %v1099
        %v2124 = vmul.f32 %v588, %v1100
        %v2125 = vmul.f32 %v589, %v1101
        %v2126 = vmul.f32 %v590, %v1102
        %v2127 = vmul.f32 %v591, %v1103
        %v2128 = vmul.f32 %v592, %v1104
        %v2129 = vmul.f32 %v593, %v1105
        %v2130 = vmul.f32 %v594, %v1106
        %v2131 = vmul.f32 %v595, %v1107
        %v2132 = vmul.f32 %v596, %v1108
        %v2133 = vmul.f32 %v597, %v1109
        %v2134 = vmul.f32 %v598, %v1110
        %v2135 = vmul.f32 %v599, %v1111
        %v2136 = vmul.f32 %v600, %v1112
        %v2137 = vmul.f32 %v601, %v1113
        %v2138 = vmul.f32 %v602, %v1114
        %v2139 = vmul.f32 %v603, %v1115
        %v2140 = vmul.f32 %v604, %v1116
        %v2141 = vmul.f32 %v605, %v1117
        %v2142 = vmul.f32 %v606, %v1118
        %v2143 = vmul.f32 %v607, %v1119
        %v2144 = vmul.f32 %v608, %v1120
        %v2145 = vmul.f32 %v609, %v1121
        %v2146 = vmul.f32 %v610, %v1122
        %v2147 = vmul.f32 %v611, %v1123
        %v2148 = vmul.f32 %v612, %v1124
        %v2149 = vmul.f32 %v613, %v1125
        %v2150 = vmul.f32 %v614, %v1126
        %v2151 = vmul.f32 %v615, %v1127
        %v2152 = vmul.f32 %v616, %v1128
        %v2153 = vmul.f32 %v617, %v1129
        %v2154 = vmul.f32 %v618, %v1130
        %v2155 = vmul.f32 %v619, %v1131
        %v2156 = vmul.f32 %v620, %v1132
        %v2157 = vmul.f32 %v621, %v1133
        %v2158 = vmul.f32 %v622, %v1134
        %v2159 = vmul.f32 %v623, %v1135
        %v2160 = vmul.f32 %v624, %v1136
        %v2161 = vmul.f32 %v625, %v1137
        %v2162 = vmul.f32 %v626, %v1138
        %v2163 = vmul.f32 %v627, %v1139
        %v2164 = vmul.f32 %v628, %v1140
        %v2165 = vmul.f32 %v629, %v1141
        %v2166 = vmul.f32 %v630, %v1142
        %v2167 = vmul.f32 %v631, %v1143
        %v2168 = vmul.f32 %v632, %v1144
        %v2169 = vmul.f32 %v633, %v1145
        %v2170 = vmul.f32 %v634, %v1146
        %v2171 = vmul.f32 %v635, %v1147
        %v2172 = vmul.f32 %v636, %v1148
        %v2173 = vmul.f32 %v637, %v1149
        %v2174 = vmul.f32 %v638, %v1150
        %v2175 = vmul.f32 %v639, %v1151
        %v2176 = vmul.f32 %v640, %v1152
        %v2177 = vmul.f32 %v641, %v1153
        %v2178 = vmul.f32 %v642, %v1154
        %v2179 = vmul.f32 %v643, %v1155
        %v2180 = vmul.f32 %v644, %v1156
        %v2181 = vmul.f32 %v645, %v1157
        %v2182 = vmul.f32 %v646, %v1158
        %v2183 = vmul.f32 %v647, %v1159
        %v2184 = vmul.f32 %v648, %v1160
        %v2185 = vmul.f32 %v649, %v1161
        %v2186 = vmul.f32 %v650, %v1162
        %v2187 = vmul.f32 %v651, %v1163
        %v2188 = vmul.f32 %v652, %v1164
        %v2189 = vmul.f32 %v653, %v1165
        %v2190 = vmul.f32 %v654, %v1166
        %v2191 = vmul.f32 %v655, %v1167
        %v2192 = vmul.f32 %v656, %v1168
        %v2193 = vmul.f32 %v657, %v1169
        %v2194 = vmul.f32 %v658, %v1170
        %v2195 = vmul.f32 %v659, %v1171
        %v2196 = vmul.f32 %v660, %v1172
        %v2197 = vmul.f32 %v661, %v1173
        %v2198 = vmul.f32 %v662, %v1174
        %v2199 = vmul.f32 %v663, %v1175
        %v2200 = vmul.f32 %v664, %v1176
        %v2201 = vmul.f32 %v665, %v1177
        %v2202 = vmul.f32 %v666, %v1178
        %v2203 = vmul.f32 %v667, %v1179
        %v2204 = vmul.f32 %v668, %v1180
        %v2205 = vmul.f32 %v669, %v1181
        %v2206 = vmul.f32 %v670, %v1182
        %v2207 = vmul.f32 %v671, %v1183
        %v2208 = vmul.f32 %v672, %v1184
        %v2209 = vmul.f32 %v673, %v1185
        %v2210 = vmul.f32 %v674, %v1186
        %v2211 = vmul.f32 %v675, %v1187
        %v2212 = vmul.f32 %v676, %v1188
        %v2213 = vmul.f32 %v677, %v1189
        %v2214 = vmul.f32 %v678, %v1190
        %v2215 = vmul.f32 %v679, %v1191
        %v2216 = vmul.f32 %v680, %v1192
        %v2217 = vmul.f32 %v681, %v1193
        %v2218 = vmul.f32 %v682, %v1194
        %v2219 = vmul.f32 %v683, %v1195
        %v2220 = vmul.f32 %v684, %v1196
        %v2221 = vmul.f32 %v685, %v1197
        %v2222 = vmul.f32 %v686, %v1198
        %v2223 = vmul.f32 %v687, %v1199
        %v2224 = vmul.f32 %v688, %v1200
        %v2225 = vmul.f32 %v689, %v1201
        %v2226 = vmul.f32 %v690, %v1202
        %v2227 = vmul.f32 %v691, %v1203
        %v2228 = vmul.f32 %v692, %v1204
        %v2229 = vmul.f32 %v693, %v1205
        %v2230 = vmul.f32 %v694, %v1206
        %v2231 = vmul.f32 %v695, %v1207
        %v2232 = vmul.f32 %v696, %v1208
        %v2233 = vmul.f32 %v697, %v1209
        %v2234 = vmul.f32 %v698, %v1210
        %v2235 = vmul.f32 %v699, %v1211
        %v2236 = vmul.f32 %v700, %v1212
        %v2237 = vmul.f32 %v701, %v1213
        %v2238 = vmul.f32 %v702, %v1214
        %v2239 = vmul.f32 %v703, %v1215
        %v2240 = vmul.f32 %v704, %v1216
        %v2241 = vmul.f32 %v705, %v1217
        %v2242 = vmul.f32 %v706, %v1218
        %v2243 = vmul.f32 %v707, %v1219
        %v2244 = vmul.f32 %v708, %v1220
        %v2245 = vmul.f32 %v709, %v1221
        %v2246 = vmul.f32 %v710, %v1222
        %v2247 = vmul.f32 %v711, %v1223
        %v2248 = vmul.f32 %v712, %v1224
        %v2249 = vmul.f32 %v713, %v1225
        %v2250 = vmul.f32 %v714, %v1226
        %v2251 = vmul.f32 %v715, %v1227
        %v2252 = vmul.f32 %v716, %v1228
        %v2253 = vmul.f32 %v717, %v1229
        %v2254 = vmul.f32 %v718, %v1230
        %v2255 = vmul.f32 %v719, %v1231
        %v2256 = vmul.f32 %v720, %v1232
        %v2257 = vmul.f32 %v721, %v1233
        %v2258 = vmul.f32 %v722, %v1234
        %v2259 = vmul.f32 %v723, %v1235
        %v2260 = vmul.f32 %v724, %v1236
        %v2261 = vmul.f32 %v725, %v1237
        %v2262 = vmul.f32 %v726, %v1238
        %v2263 = vmul.f32 %v727, %v1239
        %v2264 = vmul.f32 %v728, %v1240
        %v2265 = vmul.f32 %v729, %v1241
        %v2266 = vmul.f32 %v730, %v1242
        %v2267 = vmul.f32 %v731, %v1243
        %v2268 = vmul.f32 %v732, %v1244
        %v2269 = vmul.f32 %v733, %v1245
        %v2270 = vmul.f32 %v734, %v1246
        %v2271 = vmul.f32 %v735, %v1247
        %v2272 = vmul.f32 %v736, %v1248
        %v2273 = vmul.f32 %v737, %v1249
        %v2274 = vmul.f32 %v738, %v1250
        %v2275 = vmul.f32 %v739, %v1251
        %v2276 = vmul.f32 %v740, %v1252
        %v2277 = vmul.f32 %v741, %v1253
        %v2278 = vmul.f32 %v742, %v1254
        %v2279 = vmul.f32 %v743, %v1255
        %v2280 = vmul.f32 %v744, %v1256
        %v2281 = vmul.f32 %v745, %v1257
        %v2282 = vmul.f32 %v746, %v1258
        %v2283 = vmul.f32 %v747, %v1259
        %v2284 = vmul.f32 %v748, %v1260
        %v2285 = vmul.f32 %v749, %v1261
        %v2286 = vmul.f32 %v750, %v1262
        %v2287 = vmul.f32 %v751, %v1263
        %v2288 = vmul.f32 %v752, %v1264
        %v2289 = vmul.f32 %v753, %v1265
        %v2290 = vsub.f32 %v1266, %v1778
        %v2291 = vsub.f32 %v1267, %v1779
        %v2292 = vsub.f32 %v1268, %v1780
        %v2293 = vsub.f32 %v1269, %v1781
        %v2294 = vsub.f32 %v1270, %v1782
        %v2295 = vsub.f32 %v1271, %v1783
        %v2296 = vsub.f32 %v1272, %v1784
        %v2297 = vsub.f32 %v1273, %v1785
        %v2298 = vsub.f32 %v1274, %v1786
        %v2299 = vsub.f32 %v1275, %v1787
        %v2300 = vsub.f32 %v1276, %v1788
        %v2301 = vsub.f32 %v1277, %v1789
        %v2302 = vsub.f32 %v1278, %v1790
        %v2303 = vsub.f32 %v1279, %v1791
        %v2304 = vsub.f32 %v1280, %v1792
        %v2305 = vsub.f32 %v1281, %v1793
        %v2306 = vsub.f32 %v1282, %v1794
        %v2307 = vsub.f32 %v1283, %v1795
        %v2308 = vsub.f32 %v1284, %v1796
        %v2309 = vsub.f32 %v1285, %v1797
        %v2310 = vsub.f32 %v1286, %v1798
        %v2311 = vsub.f32 %v1287, %v1799
        %v2312 = vsub.f32 %v1288, %v1800
        %v2313 = vsub.f32 %v1289, %v1801
        %v2314 = vsub.f32 %v1290, %v1802
        %v2315 = vsub.f32 %v1291, %v1803
        %v2316 = vsub.f32 %v1292, %v1804
        %v2317 = vsub.f32 %v1293, %v1805
        %v2318 = vsub.f32 %v1294, %v1806
        %v2319 = vsub.f32 %v1295, %v1807
        %v2320 = vsub.f32 %v1296, %v1808
        %v2321 = vsub.f32 %v1297, %v1809
        %v2322 = vsub.f32 %v1298, %v1810
        %v2323 = vsub.f32 %v1299, %v1811
        %v2324 = vsub.f32 %v1300, %v1812
        %v2325 = vsub.f32 %v1301, %v1813
        %v2326 = vsub.f32 %v1302, %v1814
        %v2327 = vsub.f32 %v1303, %v1815
        %v2328 = vsub.f32 %v1304, %v1816
        %v2329 = vsub.f32 %v1305, %v1817
        %v2330 = vsub.f32 %v1306, %v1818
        %v2331 = vsub.f32 %v1307, %v1819
        %v2332 = vsub.f32 %v1308, %v1820
        %v2333 = vsub.f32 %v1309, %v1821
        %v2334 = vsub.f32 %v1310, %v1822
        %v2335 = vsub.f32 %v1311, %v1823
        %v2336 = vsub.f32 %v1312, %v1824
        %v2337 = vsub.f32 %v1313, %v1825
        %v2338 = vsub.f32 %v1314, %v1826
        %v2339 = vsub.f32 %v1315, %v1827
        %v2340 = vsub.f32 %v1316, %v1828
        %v2341 = vsub.f32 %v1317, %v1829
        %v2342 = vsub.f32 %v1318, %v1830
        %v2343 = vsub.f32 %v1319, %v1831
        %v2344 = vsub.f32 %v1320, %v1832
        %v2345 = vsub.f32 %v1321, %v1833
        %v2346 = vsub.f32 %v1322, %v1834
        %v2347 = vsub.f32 %v1323, %v1835
        %v2348 = vsub.f32 %v1324, %v1836
        %v2349 = vsub.f32 %v1325, %v1837
        %v2350 = vsub.f32 %v1326, %v1838
        %v2351 = vsub.f32 %v1327, %v1839
        %v2352 = vsub.f32 %v1328, %v1840
        %v2353 = vsub.f32 %v1329, %v1841
        %v2354 = vsub.f32 %v1330, %v1842
        %v2355 = vsub.f32 %v1331, %v1843
        %v2356 = vsub.f32 %v1332, %v1844
        %v2357 = vsub.f32 %v1333, %v1845
        %v2358 = vsub.f32 %v1334, %v1846
        %v2359 = vsub.f32 %v1335, %v1847
        %v2360 = vsub.f32 %v1336, %v1848
        %v2361 = vsub.f32 %v1337, %v1849
        %v2362 = vsub.f32 %v1338, %v1850
        %v2363 = vsub.f32 %v1339, %v1851
        %v2364 = vsub.f32 %v1340, %v1852
        %v2365 = vsub.f32 %v1341, %v1853
        %v2366 = vsub.f32 %v1342, %v1854
        %v2367 = vsub.f32 %v1343, %v1855
        %v2368 = vsub.f32 %v1344, %v1856
        %v2369 = vsub.f32 %v1345, %v1857
        %v2370 = vsub.f32 %v1346, %v1858
        %v2371 = vsub.f32 %v1347, %v1859
        %v2372 = vsub.f32 %v1348, %v1860
        %v2373 = vsub.f32 %v1349, %v1861
        %v2374 = vsub.f32 %v1350, %v1862
        %v2375 = vsub.f32 %v1351, %v1863
        %v2376 = vsub.f32 %v1352, %v1864
        %v2377 = vsub.f32 %v1353, %v1865
        %v2378 = vsub.f32 %v1354, %v1866
        %v2379 = vsub.f32 %v1355, %v1867
        %v2380 = vsub.f32 %v1356, %v1868
        %v2381 = vsub.f32 %v1357, %v1869
        %v2382 = vsub.f32 %v1358, %v1870
        %v2383 = vsub.f32 %v1359, %v1871
        %v2384 = vsub.f32 %v1360, %v1872
        %v2385 = vsub.f32 %v1361, %v1873
        %v2386 = vsub.f32 %v1362, %v1874
        %v2387 = vsub.f32 %v1363, %v1875
        %v2388 = vsub.f32 %v1364, %v1876
        %v2389 = vsub.f32 %v1365, %v1877
        %v2390 = vsub.f32 %v1366, %v1878
        %v2391 = vsub.f32 %v1367, %v1879
        %v2392 = vsub.f32 %v1368, %v1880
        %v2393 = vsub.f32 %v1369, %v1881
        %v2394 = vsub.f32 %v1370, %v1882
        %v2395 = vsub.f32 %v1371, %v1883
        %v2396 = vsub.f32 %v1372, %v1884
        %v2397 = vsub.f32 %v1373, %v1885
        %v2398 = vsub.f32 %v1374, %v1886
        %v2399 = vsub.f32 %v1375, %v1887
        %v2400 = vsub.f32 %v1376, %v1888
        %v2401 = vsub.f32 %v1377, %v1889
        %v2402 = vsub.f32 %v1378, %v1890
        %v2403 = vsub.f32 %v1379, %v1891
        %v2404 = vsub.f32 %v1380, %v1892
        %v2405 = vsub.f32 %v1381, %v1893
        %v2406 = vsub.f32 %v1382, %v1894
        %v2407 = vsub.f32 %v1383, %v1895
        %v2408 = vsub.f32 %v1384, %v1896
        %v2409 = vsub.f32 %v1385, %v1897
        %v2410 = vsub.f32 %v1386, %v1898
        %v2411 = vsub.f32 %v1387, %v1899
        %v2412 = vsub.f32 %v1388, %v1900
        %v2413 = vsub.f32 %v1389, %v1901
        %v2414 = vsub.f32 %v1390, %v1902
        %v2415 = vsub.f32 %v1391, %v1903
        %v2416 = vsub.f32 %v1392, %v1904
        %v2417 = vsub.f32 %v1393, %v1905
        %v2418 = vsub.f32 %v1394, %v1906
        %v2419 = vsub.f32 %v1395, %v1907
        %v2420 = vsub.f32 %v1396, %v1908
        %v2421 = vsub.f32 %v1397, %v1909
        %v2422 = vsub.f32 %v1398, %v1910
        %v2423 = vsub.f32 %v1399, %v1911
        %v2424 = vsub.f32 %v1400, %v1912
        %v2425 = vsub.f32 %v1401, %v1913
        %v2426 = vsub.f32 %v1402, %v1914
        %v2427 = vsub.f32 %v1403, %v1915
        %v2428 = vsub.f32 %v1404, %v1916
        %v2429 = vsub.f32 %v1405, %v1917
        %v2430 = vsub.f32 %v1406, %v1918
        %v2431 = vsub.f32 %v1407, %v1919
        %v2432 = vsub.f32 %v1408, %v1920
        %v2433 = vsub.f32 %v1409, %v1921
        %v2434 = vsub.f32 %v1410, %v1922
        %v2435 = vsub.f32 %v1411, %v1923
        %v2436 = vsub.f32 %v1412, %v1924
        %v2437 = vsub.f32 %v1413, %v1925
        %v2438 = vsub.f32 %v1414, %v1926
        %v2439 = vsub.f32 %v1415, %v1927
        %v2440 = vsub.f32 %v1416, %v1928
        %v2441 = vsub.f32 %v1417, %v1929
        %v2442 = vsub.f32 %v1418, %v1930
        %v2443 = vsub.f32 %v1419, %v1931
        %v2444 = vsub.f32 %v1420, %v1932
        %v2445 = vsub.f32 %v1421, %v1933
        %v2446 = vsub.f32 %v1422, %v1934
        %v2447 = vsub.f32 %v1423, %v1935
        %v2448 = vsub.f32 %v1424, %v1936
        %v2449 = vsub.f32 %v1425, %v1937
        %v2450 = vsub.f32 %v1426, %v1938
        %v2451 = vsub.f32 %v1427, %v1939
        %v2452 = vsub.f32 %v1428, %v1940
        %v2453 = vsub.f32 %v1429, %v1941
        %v2454 = vsub.f32 %v1430, %v1942
        %v2455 = vsub.f32 %v1431, %v1943
        %v2456 = vsub.f32 %v1432, %v1944
        %v2457 = vsub.f32 %v1433, %v1945
        %v2458 = vsub.f32 %v1434, %v1946
        %v2459 = vsub.f32 %v1435, %v1947
        %v2460 = vsub.f32 %v1436, %v1948
        %v2461 = vsub.f32 %v1437, %v1949
        %v2462 = vsub.f32 %v1438, %v1950
        %v2463 = vsub.f32 %v1439, %v1951
        %v2464 = vsub.f32 %v1440, %v1952
        %v2465 = vsub.f32 %v1441, %v1953
        %v2466 = vsub.f32 %v1442, %v1954
        %v2467 = vsub.f32 %v1443, %v1955
        %v2468 = vsub.f32 %v1444, %v1956
        %v2469 = vsub.f32 %v1445, %v1957
        %v2470 = vsub.f32 %v1446, %v1958
        %v2471 = vsub.f32 %v1447, %v1959
        %v2472 = vsub.f32 %v1448, %v1960
        %v2473 = vsub.f32 %v1449, %v1961
        %v2474 = vsub.f32 %v1450, %v1962
        %v2475 = vsub.f32 %v1451, %v1963
        %v2476 = vsub.f32 %v1452, %v1964
        %v2477 = vsub.f32 %v1453, %v1965
        %v2478 = vsub.f32 %v1454, %v1966
        %v2479 = vsub.f32 %v1455, %v1967
        %v2480 = vsub.f32 %v1456, %v1968
        %v2481 = vsub.f32 %v1457, %v1969
        %v2482 = vsub.f32 %v1458, %v1970
        %v2483 = vsub.f32 %v1459, %v1971
        %v2484 = vsub.f32 %v1460, %v1972
        %v2485 = vsub.f32 %v1461, %v1973
        %v2486 = vsub.f32 %v1462, %v1974
        %v2487 = vsub.f32 %v1463, %v1975
        %v2488 = vsub.f32 %v1464, %v1976
        %v2489 = vsub.f32 %v1465, %v1977
        %v2490 = vsub.f32 %v1466, %v1978
        %v2491 = vsub.f32 %v1467, %v1979
        %v2492 = vsub.f32 %v1468, %v1980
        %v2493 = vsub.f32 %v1469, %v1981
        %v2494 = vsub.f32 %v1470, %v1982
        %v2495 = vsub.f32 %v1471, %v1983
        %v2496 = vsub.f32 %v1472, %v1984
        %v2497 = vsub.f32 %v1473, %v1985
        %v2498 = vsub.f32 %v1474, %v1986
        %v2499 = vsub.f32 %v1475, %v1987
        %v2500 = vsub.f32 %v1476, %v1988
        %v2501 = vsub.f32 %v1477, %v1989
        %v2502 = vsub.f32 %v1478, %v1990
        %v2503 = vsub.f32 %v1479, %v1991
        %v2504 = vsub.f32 %v1480, %v1992
        %v2505 = vsub.f32 %v1481, %v1993
        %v2506 = vsub.f32 %v1482, %v1994
        %v2507 = vsub.f32 %v1483, %v1995
        %v2508 = vsub.f32 %v1484, %v1996
        %v2509 = vsub.f32 %v1485, %v1997
        %v2510 = vsub.f32 %v1486, %v1998
        %v2511 = vsub.f32 %v1487, %v1999
        %v2512 = vsub.f32 %v1488, %v2000
        %v2513 = vsub.f32 %v1489, %v2001
        %v2514 = vsub.f32 %v1490, %v2002
        %v2515 = vsub.f32 %v1491, %v2003
        %v2516 = vsub.f32 %v1492, %v2004
        %v2517 = vsub.f32 %v1493, %v2005
        %v2518 = vsub.f32 %v1494, %v2006
        %v2519 = vsub.f32 %v1495, %v2007
        %v2520 = vsub.f32 %v1496, %v2008
        %v2521 = vsub.f32 %v1497, %v2009
        %v2522 = vsub.f32 %v1498, %v2010
        %v2523 = vsub.f32 %v1499, %v2011
        %v2524 = vsub.f32 %v1500, %v2012
        %v2525 = vsub.f32 %v1501, %v2013
        %v2526 = vsub.f32 %v1502, %v2014
        %v2527 = vsub.f32 %v1503, %v2015
        %v2528 = vsub.f32 %v1504, %v2016
        %v2529 = vsub.f32 %v1505, %v2017
        %v2530 = vsub.f32 %v1506, %v2018
        %v2531 = vsub.f32 %v1507, %v2019
        %v2532 = vsub.f32 %v1508, %v2020
        %v2533 = vsub.f32 %v1509, %v2021
        %v2534 = vsub.f32 %v1510, %v2022
        %v2535 = vsub.f32 %v1511, %v2023
        %v2536 = vsub.f32 %v1512, %v2024
        %v2537 = vsub.f32 %v1513, %v2025
        %v2538 = vsub.f32 %v1514, %v2026
        %v2539 = vsub.f32 %v1515, %v2027
        %v2540 = vsub.f32 %v1516, %v2028
        %v2541 = vsub.f32 %v1517, %v2029
        %v2542 = vsub.f32 %v1518, %v2030
        %v2543 = vsub.f32 %v1519, %v2031
        %v2544 = vsub.f32 %v1520, %v2032
        %v2545 = vsub.f32 %v1521, %v2033
        %v2546 = vsub.f32 %v1522, %v2034
        %v2547 = vsub.f32 %v1523, %v2035
        %v2548 = vsub.f32 %v1524, %v2036
        %v2549 = vsub.f32 %v1525, %v2037
        %v2550 = vsub.f32 %v1526, %v2038
        %v2551 = vsub.f32 %v1527, %v2039
        %v2552 = vsub.f32 %v1528, %v2040
        %v2553 = vsub.f32 %v1529, %v2041
        %v2554 = vsub.f32 %v1530, %v2042
        %v2555 = vsub.f32 %v1531, %v2043
        %v2556 = vsub.f32 %v1532, %v2044
        %v2557 = vsub.f32 %v1533, %v2045
        %v2558 = vsub.f32 %v1534, %v2046
        %v2559 = vsub.f32 %v1535, %v2047
        %v2560 = vsub.f32 %v1536, %v2048
        %v2561 = vsub.f32 %v1537, %v2049
        %v2562 = vsub.f32 %v1538, %v2050
        %v2563 = vsub.f32 %v1539, %v2051
        %v2564 = vsub.f32 %v1540, %v2052
        %v2565 = vsub.f32 %v1541, %v2053
        %v2566 = vsub.f32 %v1542, %v2054
        %v2567 = vsub.f32 %v1543, %v2055
        %v2568 = vsub.f32 %v1544, %v2056
        %v2569 = vsub.f32 %v1545, %v2057
        %v2570 = vsub.f32 %v1546, %v2058
        %v2571 = vsub.f32 %v1547, %v2059
        %v2572 = vsub.f32 %v1548, %v2060
        %v2573 = vsub.f32 %v1549, %v2061
        %v2574 = vsub.f32 %v1550, %v2062
        %v2575 = vsub.f32 %v1551, %v2063
        %v2576 = vsub.f32 %v1552, %v2064
        %v2577 = vsub.f32 %v1553, %v2065
        %v2578 = vsub.f32 %v1554, %v2066
        %v2579 = vsub.f32 %v1555, %v2067
        %v2580 = vsub.f32 %v1556, %v2068
        %v2581 = vsub.f32 %v1557, %v2069
        %v2582 = vsub.f32 %v1558, %v2070
        %v2583 = vsub.f32 %v1559, %v2071
        %v2584 = vsub.f32 %v1560, %v2072
        %v2585 = vsub.f32 %v1561, %v2073
        %v2586 = vsub.f32 %v1562, %v2074
        %v2587 = vsub.f32 %v1563, %v2075
        %v2588 = vsub.f32 %v1564, %v2076
        %v2589 = vsub.f32 %v1565, %v2077
        %v2590 = vsub.f32 %v1566, %v2078
        %v2591 = vsub.f32 %v1567, %v2079
        %v2592 = vsub.f32 %v1568, %v2080
        %v2593 = vsub.f32 %v1569, %v2081
        %v2594 = vsub.f32 %v1570, %v2082
        %v2595 = vsub.f32 %v1571, %v2083
        %v2596 = vsub.f32 %v1572, %v2084
        %v2597 = vsub.f32 %v1573, %v2085
        %v2598 = vsub.f32 %v1574, %v2086
        %v2599 = vsub.f32 %v1575, %v2087
        %v2600 = vsub.f32 %v1576, %v2088
        %v2601 = vsub.f32 %v1577, %v2089
        %v2602 = vsub.f32 %v1578, %v2090
        %v2603 = vsub.f32 %v1579, %v2091
        %v2604 = vsub.f32 %v1580, %v2092
        %v2605 = vsub.f32 %v1581, %v2093
        %v2606 = vsub.f32 %v1582, %v2094
        %v2607 = vsub.f32 %v1583, %v2095
        %v2608 = vsub.f32 %v1584, %v2096
        %v2609 = vsub.f32 %v1585, %v2097
        %v2610 = vsub.f32 %v1586, %v2098
        %v2611 = vsub.f32 %v1587, %v2099
        %v2612 = vsub.f32 %v1588, %v2100
        %v2613 = vsub.f32 %v1589, %v2101
        %v2614 = vsub.f32 %v1590, %v2102
        %v2615 = vsub.f32 %v1591, %v2103
        %v2616 = vsub.f32 %v1592, %v2104
        %v2617 = vsub.f32 %v1593, %v2105
        %v2618 = vsub.f32 %v1594, %v2106
        %v2619 = vsub.f32 %v1595, %v2107
        %v2620 = vsub.f32 %v1596, %v2108
        %v2621 = vsub.f32 %v1597, %v2109
        %v2622 = vsub.f32 %v1598, %v2110
        %v2623 = vsub.f32 %v1599, %v2111
        %v2624 = vsub.f32 %v1600, %v2112
        %v2625 = vsub.f32 %v1601, %v2113
        %v2626 = vsub.f32 %v1602, %v2114
        %v2627 = vsub.f32 %v1603, %v2115
        %v2628 = vsub.f32 %v1604, %v2116
        %v2629 = vsub.f32 %v1605, %v2117
        %v2630 = vsub.f32 %v1606, %v2118
        %v2631 = vsub.f32 %v1607, %v2119
        %v2632 = vsub.f32 %v1608, %v2120
        %v2633 = vsub.f32 %v1609, %v2121
        %v2634 = vsub.f32 %v1610, %v2122
        %v2635 = vsub.f32 %v1611, %v2123
        %v2636 = vsub.f32 %v1612, %v2124
        %v2637 = vsub.f32 %v1613, %v2125
        %v2638 = vsub.f32 %v1614, %v2126
        %v2639 = vsub.f32 %v1615, %v2127
        %v2640 = vsub.f32 %v1616, %v2128
        %v2641 = vsub.f32 %v1617, %v2129
        %v2642 = vsub.f32 %v1618, %v2130
        %v2643 = vsub.f32 %v1619, %v2131
        %v2644 = vsub.f32 %v1620, %v2132
        %v2645 = vsub.f32 %v1621, %v2133
        %v2646 = vsub.f32 %v1622, %v2134
        %v2647 = vsub.f32 %v1623, %v2135
        %v2648 = vsub.f32 %v1624, %v2136
        %v2649 = vsub.f32 %v1625, %v2137
        %v2650 = vsub.f32 %v1626, %v2138
        %v2651 = vsub.f32 %v1627, %v2139
        %v2652 = vsub.f32 %v1628, %v2140
        %v2653 = vsub.f32 %v1629, %v2141
        %v2654 = vsub.f32 %v1630, %v2142
        %v2655 = vsub.f32 %v1631, %v2143
        %v2656 = vsub.f32 %v1632, %v2144
        %v2657 = vsub.f32 %v1633, %v2145
        %v2658 = vsub.f32 %v1634, %v2146
        %v2659 = vsub.f32 %v1635, %v2147
        %v2660 = vsub.f32 %v1636, %v2148
        %v2661 = vsub.f32 %v1637, %v2149
        %v2662 = vsub.f32 %v1638, %v2150
        %v2663 = vsub.f32 %v1639, %v2151
        %v2664 = vsub.f32 %v1640, %v2152
        %v2665 = vsub.f32 %v1641, %v2153
        %v2666 = vsub.f32 %v1642, %v2154
        %v2667 = vsub.f32 %v1643, %v2155
        %v2668 = vsub.f32 %v1644, %v2156
        %v2669 = vsub.f32 %v1645, %v2157
        %v2670 = vsub.f32 %v1646, %v2158
        %v2671 = vsub.f32 %v1647, %v2159
        %v2672 = vsub.f32 %v1648, %v2160
        %v2673 = vsub.f32 %v1649, %v2161
        %v2674 = vsub.f32 %v1650, %v2162
        %v2675 = vsub.f32 %v1651, %v2163
        %v2676 = vsub.f32 %v1652, %v2164
        %v2677 = vsub.f32 %v1653, %v2165
        %v2678 = vsub.f32 %v1654, %v2166
        %v2679 = vsub.f32 %v1655, %v2167
        %v2680 = vsub.f32 %v1656, %v2168
        %v2681 = vsub.f32 %v1657, %v2169
        %v2682 = vsub.f32 %v1658, %v2170
        %v2683 = vsub.f32 %v1659, %v2171
        %v2684 = vsub.f32 %v1660, %v2172
        %v2685 = vsub.f32 %v1661, %v2173
        %v2686 = vsub.f32 %v1662, %v2174
        %v2687 = vsub.f32 %v1663, %v2175
        %v2688 = vsub.f32 %v1664, %v2176
        %v2689 = vsub.f32 %v1665, %v2177
        %v2690 = vsub.f32 %v1666, %v2178
        %v2691 = vsub.f32 %v1667, %v2179
        %v2692 = vsub.f32 %v1668, %v2180
        %v2693 = vsub.f32 %v1669, %v2181
        %v2694 = vsub.f32 %v1670, %v2182
        %v2695 = vsub.f32 %v1671, %v2183
        %v2696 = vsub.f32 %v1672, %v2184
        %v2697 = vsub.f32 %v1673, %v2185
        %v2698 = vsub.f32 %v1674, %v2186
        %v2699 = vsub.f32 %v1675, %v2187
        %v2700 = vsub.f32 %v1676, %v2188
        %v2701 = vsub.f32 %v1677, %v2189
        %v2702 = vsub.f32 %v1678, %v2190
        %v2703 = vsub.f32 %v1679, %v2191
        %v2704 = vsub.f32 %v1680, %v2192
        %v2705 = vsub.f32 %v1681, %v2193
        %v2706 = vsub.f32 %v1682, %v2194
        %v2707 = vsub.f32 %v1683, %v2195
        %v2708 = vsub.f32 %v1684, %v2196
        %v2709 = vsub.f32 %v1685, %v2197
        %v2710 = vsub.f32 %v1686, %v2198
        %v2711 = vsub.f32 %v1687, %v2199
        %v2712 = vsub.f32 %v1688, %v2200
        %v2713 = vsub.f32 %v1689, %v2201
        %v2714 = vsub.f32 %v1690, %v2202
        %v2715 = vsub.f32 %v1691, %v2203
        %v2716 = vsub.f32 %v1692, %v2204
        %v2717 = vsub.f32 %v1693, %v2205
        %v2718 = vsub.f32 %v1694, %v2206
        %v2719 = vsub.f32 %v1695, %v2207
        %v2720 = vsub.f32 %v1696, %v2208
        %v2721 = vsub.f32 %v1697, %v2209
        %v2722 = vsub.f32 %v1698, %v2210
        %v2723 = vsub.f32 %v1699, %v2211
        %v2724 = vsub.f32 %v1700, %v2212
        %v2725 = vsub.f32 %v1701, %v2213
        %v2726 = vsub.f32 %v1702, %v2214
        %v2727 = vsub.f32 %v1703, %v2215
        %v2728 = vsub.f32 %v1704, %v2216
        %v2729 = vsub.f32 %v1705, %v2217
        %v2730 = vsub.f32 %v1706, %v2218
        %v2731 = vsub.f32 %v1707, %v2219
        %v2732 = vsub.f32 %v1708, %v2220
        %v2733 = vsub.f32 %v1709, %v2221
        %v2734 = vsub.f32 %v1710, %v2222
        %v2735 = vsub.f32 %v1711, %v2223
        %v2736 = vsub.f32 %v1712, %v2224
        %v2737 = vsub.f32 %v1713, %v2225
        %v2738 = vsub.f32 %v1714, %v2226
        %v2739 = vsub.f32 %v1715, %v2227
        %v2740 = vsub.f32 %v1716, %v2228
        %v2741 = vsub.f32 %v1717, %v2229
        %v2742 = vsub.f32 %v1718, %v2230
        %v2743 = vsub.f32 %v1719, %v2231
        %v2744 = vsub.f32 %v1720, %v2232
        %v2745 = vsub.f32 %v1721, %v2233
        %v2746 = vsub.f32 %v1722, %v2234
        %v2747 = vsub.f32 %v1723, %v2235
        %v2748 = vsub.f32 %v1724, %v2236
        %v2749 = vsub.f32 %v1725, %v2237
        %v2750 = vsub.f32 %v1726, %v2238
        %v2751 = vsub.f32 %v1727, %v2239
        %v2752 = vsub.f32 %v1728, %v2240
        %v2753 = vsub.f32 %v1729, %v2241
        %v2754 = vsub.f32 %v1730, %v2242
        %v2755 = vsub.f32 %v1731, %v2243
        %v2756 = vsub.f32 %v1732, %v2244
        %v2757 = vsub.f32 %v1733, %v2245
        %v2758 = vsub.f32 %v1734, %v2246
        %v2759 = vsub.f32 %v1735, %v2247
        %v2760 = vsub.f32 %v1736, %v2248
        %v2761 = vsub.f32 %v1737, %v2249
        %v2762 = vsub.f32 %v1738, %v2250
        %v2763 = vsub.f32 %v1739, %v2251
        %v2764 = vsub.f32 %v1740, %v2252
        %v2765 = vsub.f32 %v1741, %v2253
        %v2766 = vsub.f32 %v1742, %v2254
        %v2767 = vsub.f32 %v1743, %v2255
        %v2768 = vsub.f32 %v1744, %v2256
        %v2769 = vsub.f32 %v1745, %v2257
        %v2770 = vsub.f32 %v1746, %v2258
        %v2771 = vsub.f32 %v1747, %v2259
        %v2772 = vsub.f32 %v1748, %v2260
        %v2773 = vsub.f32 %v1749, %v2261
        %v2774 = vsub.f32 %v1750, %v2262
        %v2775 = vsub.f32 %v1751, %v2263
        %v2776 = vsub.f32 %v1752, %v2264
        %v2777 = vsub.f32 %v1753, %v2265
        %v2778 = vsub.f32 %v1754, %v2266
        %v2779 = vsub.f32 %v1755, %v2267
        %v2780 = vsub.f32 %v1756, %v2268
        %v2781 = vsub.f32 %v1757, %v2269
        %v2782 = vsub.f32 %v1758, %v2270
        %v2783 = vsub.f32 %v1759, %v2271
        %v2784 = vsub.f32 %v1760, %v2272
        %v2785 = vsub.f32 %v1761, %v2273
        %v2786 = vsub.f32 %v1762, %v2274
        %v2787 = vsub.f32 %v1763, %v2275
        %v2788 = vsub.f32 %v1764, %v2276
        %v2789 = vsub.f32 %v1765, %v2277
        %v2790 = vsub.f32 %v1766, %v2278
        %v2791 = vsub.f32 %v1767, %v2279
        %v2792 = vsub.f32 %v1768, %v2280
        %v2793 = vsub.f32 %v1769, %v2281
        %v2794 = vsub.f32 %v1770, %v2282
        %v2795 = vsub.f32 %v1771, %v2283
        %v2796 = vsub.f32 %v1772, %v2284
        %v2797 = vsub.f32 %v1773, %v2285
        %v2798 = vsub.f32 %v1774, %v2286
        %v2799 = vsub.f32 %v1775, %v2287
        %v2800 = vsub.f32 %v1776, %v2288
        %v2801 = vsub.f32 %v1777, %v2289
        %v2802 = vand.u32 2147483647, %v242
        %v2803 = vand.u32 2147483647, %v243
        %v2804 = vand.u32 2147483647, %v244
        %v2805 = vand.u32 2147483647, %v245
        %v2806 = vand.u32 2147483647, %v246
        %v2807 = vand.u32 2147483647, %v247
        %v2808 = vand.u32 2147483647, %v248
        %v2809 = vand.u32 2147483647, %v249
        %v2810 = vand.u32 2147483647, %v250
        %v2811 = vand.u32 2147483647, %v251
        %v2812 = vand.u32 2147483647, %v252
        %v2813 = vand.u32 2147483647, %v253
        %v2814 = vand.u32 2147483647, %v254
        %v2815 = vand.u32 2147483647, %v255
        %v2816 = vand.u32 2147483647, %v256
        %v2817 = vand.u32 2147483647, %v257
        %v2818 = vand.u32 2147483647, %v258
        %v2819 = vand.u32 2147483647, %v259
        %v2820 = vand.u32 2147483647, %v260
        %v2821 = vand.u32 2147483647, %v261
        %v2822 = vand.u32 2147483647, %v262
        %v2823 = vand.u32 2147483647, %v263
        %v2824 = vand.u32 2147483647, %v264
        %v2825 = vand.u32 2147483647, %v265
        %v2826 = vand.u32 2147483647, %v266
        %v2827 = vand.u32 2147483647, %v267
        %v2828 = vand.u32 2147483647, %v268
        %v2829 = vand.u32 2147483647, %v269
        %v2830 = vand.u32 2147483647, %v270
        %v2831 = vand.u32 2147483647, %v271
        %v2832 = vand.u32 2147483647, %v272
        %v2833 = vand.u32 2147483647, %v273
        %v2834 = vand.u32 2147483647, %v274
        %v2835 = vand.u32 2147483647, %v275
        %v2836 = vand.u32 2147483647, %v276
        %v2837 = vand.u32 2147483647, %v277
        %v2838 = vand.u32 2147483647, %v278
        %v2839 = vand.u32 2147483647, %v279
        %v2840 = vand.u32 2147483647, %v280
        %v2841 = vand.u32 2147483647, %v281
        %v2842 = vand.u32 2147483647, %v282
        %v2843 = vand.u32 2147483647, %v283
        %v2844 = vand.u32 2147483647, %v284
        %v2845 = vand.u32 2147483647, %v285
        %v2846 = vand.u32 2147483647, %v286
        %v2847 = vand.u32 2147483647, %v287
        %v2848 = vand.u32 2147483647, %v288
        %v2849 = vand.u32 2147483647, %v289
        %v2850 = vand.u32 2147483647, %v290
        %v2851 = vand.u32 2147483647, %v291
        %v2852 = vand.u32 2147483647, %v292
        %v2853 = vand.u32 2147483647, %v293
        %v2854 = vand.u32 2147483647, %v294
        %v2855 = vand.u32 2147483647, %v295
        %v2856 = vand.u32 2147483647, %v296
        %v2857 = vand.u32 2147483647, %v297
        %v2858 = vand.u32 2147483647, %v298
        %v2859 = vand.u32 2147483647, %v299
        %v2860 = vand.u32 2147483647, %v300
        %v2861 = vand.u32 2147483647, %v301
        %v2862 = vand.u32 2147483647, %v302
        %v2863 = vand.u32 2147483647, %v303
        %v2864 = vand.u32 2147483647, %v304
        %v2865 = vand.u32 2147483647, %v305
        %v2866 = vand.u32 2147483647, %v306
        %v2867 = vand.u32 2147483647, %v307
        %v2868 = vand.u32 2147483647, %v308
        %v2869 = vand.u32 2147483647, %v309
        %v2870 = vand.u32 2147483647, %v310
        %v2871 = vand.u32 2147483647, %v311
        %v2872 = vand.u32 2147483647, %v312
        %v2873 = vand.u32 2147483647, %v313
        %v2874 = vand.u32 2147483647, %v314
        %v2875 = vand.u32 2147483647, %v315
        %v2876 = vand.u32 2147483647, %v316
        %v2877 = vand.u32 2147483647, %v317
        %v2878 = vand.u32 2147483647, %v318
        %v2879 = vand.u32 2147483647, %v319
        %v2880 = vand.u32 2147483647, %v320
        %v2881 = vand.u32 2147483647, %v321
        %v2882 = vand.u32 2147483647, %v322
        %v2883 = vand.u32 2147483647, %v323
        %v2884 = vand.u32 2147483647, %v324
        %v2885 = vand.u32 2147483647, %v325
        %v2886 = vand.u32 2147483647, %v326
        %v2887 = vand.u32 2147483647, %v327
        %v2888 = vand.u32 2147483647, %v328
        %v2889 = vand.u32 2147483647, %v329
        %v2890 = vand.u32 2147483647, %v330
        %v2891 = vand.u32 2147483647, %v331
        %v2892 = vand.u32 2147483647, %v332
        %v2893 = vand.u32 2147483647, %v333
        %v2894 = vand.u32 2147483647, %v334
        %v2895 = vand.u32 2147483647, %v335
        %v2896 = vand.u32 2147483647, %v336
        %v2897 = vand.u32 2147483647, %v337
        %v2898 = vand.u32 2147483647, %v338
        %v2899 = vand.u32 2147483647, %v339
        %v2900 = vand.u32 2147483647, %v340
        %v2901 = vand.u32 2147483647, %v341
        %v2902 = vand.u32 2147483647, %v342
        %v2903 = vand.u32 2147483647, %v343
        %v2904 = vand.u32 2147483647, %v344
        %v2905 = vand.u32 2147483647, %v345
        %v2906 = vand.u32 2147483647, %v346
        %v2907 = vand.u32 2147483647, %v347
        %v2908 = vand.u32 2147483647, %v348
        %v2909 = vand.u32 2147483647, %v349
        %v2910 = vand.u32 2147483647, %v350
        %v2911 = vand.u32 2147483647, %v351
        %v2912 = vand.u32 2147483647, %v352
        %v2913 = vand.u32 2147483647, %v353
        %v2914 = vand.u32 2147483647, %v354
        %v2915 = vand.u32 2147483647, %v355
        %v2916 = vand.u32 2147483647, %v356
        %v2917 = vand.u32 2147483647, %v357
        %v2918 = vand.u32 2147483647, %v358
        %v2919 = vand.u32 2147483647, %v359
        %v2920 = vand.u32 2147483647, %v360
        %v2921 = vand.u32 2147483647, %v361
        %v2922 = vand.u32 2147483647, %v362
        %v2923 = vand.u32 2147483647, %v363
        %v2924 = vand.u32 2147483647, %v364
        %v2925 = vand.u32 2147483647, %v365
        %v2926 = vand.u32 2147483647, %v366
        %v2927 = vand.u32 2147483647, %v367
        %v2928 = vand.u32 2147483647, %v368
        %v2929 = vand.u32 2147483647, %v369
        %v2930 = vand.u32 2147483647, %v370
        %v2931 = vand.u32 2147483647, %v371
        %v2932 = vand.u32 2147483647, %v372
        %v2933 = vand.u32 2147483647, %v373
        %v2934 = vand.u32 2147483647, %v374
        %v2935 = vand.u32 2147483647, %v375
        %v2936 = vand.u32 2147483647, %v376
        %v2937 = vand.u32 2147483647, %v377
        %v2938 = vand.u32 2147483647, %v378
        %v2939 = vand.u32 2147483647, %v379
        %v2940 = vand.u32 2147483647, %v380
        %v2941 = vand.u32 2147483647, %v381
        %v2942 = vand.u32 2147483647, %v382
        %v2943 = vand.u32 2147483647, %v383
        %v2944 = vand.u32 2147483647, %v384
        %v2945 = vand.u32 2147483647, %v385
        %v2946 = vand.u32 2147483647, %v386
        %v2947 = vand.u32 2147483647, %v387
        %v2948 = vand.u32 2147483647, %v388
        %v2949 = vand.u32 2147483647, %v389
        %v2950 = vand.u32 2147483647, %v390
        %v2951 = vand.u32 2147483647, %v391
        %v2952 = vand.u32 2147483647, %v392
        %v2953 = vand.u32 2147483647, %v393
        %v2954 = vand.u32 2147483647, %v394
        %v2955 = vand.u32 2147483647, %v395
        %v2956 = vand.u32 2147483647, %v396
        %v2957 = vand.u32 2147483647, %v397
        %v2958 = vand.u32 2147483647, %v398
        %v2959 = vand.u32 2147483647, %v399
        %v2960 = vand.u32 2147483647, %v400
        %v2961 = vand.u32 2147483647, %v401
        %v2962 = vand.u32 2147483647, %v402
        %v2963 = vand.u32 2147483647, %v403
        %v2964 = vand.u32 2147483647, %v404
        %v2965 = vand.u32 2147483647, %v405
        %v2966 = vand.u32 2147483647, %v406
        %v2967 = vand.u32 2147483647, %v407
        %v2968 = vand.u32 2147483647, %v408
        %v2969 = vand.u32 2147483647, %v409
        %v2970 = vand.u32 2147483647, %v410
        %v2971 = vand.u32 2147483647, %v411
        %v2972 = vand.u32 2147483647, %v412
        %v2973 = vand.u32 2147483647, %v413
        %v2974 = vand.u32 2147483647, %v414
        %v2975 = vand.u32 2147483647, %v415
        %v2976 = vand.u32 2147483647, %v416
        %v2977 = vand.u32 2147483647, %v417
        %v2978 = vand.u32 2147483647, %v418
        %v2979 = vand.u32 2147483647, %v419
        %v2980 = vand.u32 2147483647, %v420
        %v2981 = vand.u32 2147483647, %v421
        %v2982 = vand.u32 2147483647, %v422
        %v2983 = vand.u32 2147483647, %v423
        %v2984 = vand.u32 2147483647, %v424
        %v2985 = vand.u32 2147483647, %v425
        %v2986 = vand.u32 2147483647, %v426
        %v2987 = vand.u32 2147483647, %v427
        %v2988 = vand.u32 2147483647, %v428
        %v2989 = vand.u32 2147483647, %v429
        %v2990 = vand.u32 2147483647, %v430
        %v2991 = vand.u32 2147483647, %v431
        %v2992 = vand.u32 2147483647, %v432
        %v2993 = vand.u32 2147483647, %v433
        %v2994 = vand.u32 2147483647, %v434
        %v2995 = vand.u32 2147483647, %v435
        %v2996 = vand.u32 2147483647, %v436
        %v2997 = vand.u32 2147483647, %v437
        %v2998 = vand.u32 2147483647, %v438
        %v2999 = vand.u32 2147483647, %v439
        %v3000 = vand.u32 2147483647, %v440
        %v3001 = vand.u32 2147483647, %v441
        %v3002 = vand.u32 2147483647, %v442
        %v3003 = vand.u32 2147483647, %v443
        %v3004 = vand.u32 2147483647, %v444
        %v3005 = vand.u32 2147483647, %v445
        %v3006 = vand.u32 2147483647, %v446
        %v3007 = vand.u32 2147483647, %v447
        %v3008 = vand.u32 2147483647, %v448
        %v3009 = vand.u32 2147483647, %v449
        %v3010 = vand.u32 2147483647, %v450
        %v3011 = vand.u32 2147483647, %v451
        %v3012 = vand.u32 2147483647, %v452
        %v3013 = vand.u32 2147483647, %v453
        %v3014 = vand.u32 2147483647, %v454
        %v3015 = vand.u32 2147483647, %v455
        %v3016 = vand.u32 2147483647, %v456
        %v3017 = vand.u32 2147483647, %v457
        %v3018 = vand.u32 2147483647, %v458
        %v3019 = vand.u32 2147483647, %v459
        %v3020 = vand.u32 2147483647, %v460
        %v3021 = vand.u32 2147483647, %v461
        %v3022 = vand.u32 2147483647, %v462
        %v3023 = vand.u32 2147483647, %v463
        %v3024 = vand.u32 2147483647, %v464
        %v3025 = vand.u32 2147483647, %v465
        %v3026 = vand.u32 2147483647, %v466
        %v3027 = vand.u32 2147483647, %v467
        %v3028 = vand.u32 2147483647, %v468
        %v3029 = vand.u32 2147483647, %v469
        %v3030 = vand.u32 2147483647, %v470
        %v3031 = vand.u32 2147483647, %v471
        %v3032 = vand.u32 2147483647, %v472
        %v3033 = vand.u32 2147483647, %v473
        %v3034 = vand.u32 2147483647, %v474
        %v3035 = vand.u32 2147483647, %v475
        %v3036 = vand.u32 2147483647, %v476
        %v3037 = vand.u32 2147483647, %v477
        %v3038 = vand.u32 2147483647, %v478
        %v3039 = vand.u32 2147483647, %v479
        %v3040 = vand.u32 2147483647, %v480
        %v3041 = vand.u32 2147483647, %v481
        %v3042 = vand.u32 2147483647, %v482
        %v3043 = vand.u32 2147483647, %v483
        %v3044 = vand.u32 2147483647, %v484
        %v3045 = vand.u32 2147483647, %v485
        %v3046 = vand.u32 2147483647, %v486
        %v3047 = vand.u32 2147483647, %v487
        %v3048 = vand.u32 2147483647, %v488
        %v3049 = vand.u32 2147483647, %v489
        %v3050 = vand.u32 2147483647, %v490
        %v3051 = vand.u32 2147483647, %v491
        %v3052 = vand.u32 2147483647, %v492
        %v3053 = vand.u32 2147483647, %v493
        %v3054 = vand.u32 2147483647, %v494
        %v3055 = vand.u32 2147483647, %v495
        %v3056 = vand.u32 2147483647, %v496
        %v3057 = vand.u32 2147483647, %v497
        %v3058 = vand.u32 2147483647, %v498
        %v3059 = vand.u32 2147483647, %v499
        %v3060 = vand.u32 2147483647, %v500
        %v3061 = vand.u32 2147483647, %v501
        %v3062 = vand.u32 2147483647, %v502
        %v3063 = vand.u32 2147483647, %v503
        %v3064 = vand.u32 2147483647, %v504
        %v3065 = vand.u32 2147483647, %v505
        %v3066 = vand.u32 2147483647, %v506
        %v3067 = vand.u32 2147483647, %v507
        %v3068 = vand.u32 2147483647, %v508
        %v3069 = vand.u32 2147483647, %v509
        %v3070 = vand.u32 2147483647, %v510
        %v3071 = vand.u32 2147483647, %v511
        %v3072 = vand.u32 2147483647, %v512
        %v3073 = vand.u32 2147483647, %v513
        %v3074 = vand.u32 2147483647, %v514
        %v3075 = vand.u32 2147483647, %v515
        %v3076 = vand.u32 2147483647, %v516
        %v3077 = vand.u32 2147483647, %v517
        %v3078 = vand.u32 2147483647, %v518
        %v3079 = vand.u32 2147483647, %v519
        %v3080 = vand.u32 2147483647, %v520
        %v3081 = vand.u32 2147483647, %v521
        %v3082 = vand.u32 2147483647, %v522
        %v3083 = vand.u32 2147483647, %v523
        %v3084 = vand.u32 2147483647, %v524
        %v3085 = vand.u32 2147483647, %v525
        %v3086 = vand.u32 2147483647, %v526
        %v3087 = vand.u32 2147483647, %v527
        %v3088 = vand.u32 2147483647, %v528
        %v3089 = vand.u32 2147483647, %v529
        %v3090 = vand.u32 2147483647, %v530
        %v3091 = vand.u32 2147483647, %v531
        %v3092 = vand.u32 2147483647, %v532
        %v3093 = vand.u32 2147483647, %v533
        %v3094 = vand.u32 2147483647, %v534
        %v3095 = vand.u32 2147483647, %v535
        %v3096 = vand.u32 2147483647, %v536
        %v3097 = vand.u32 2147483647, %v537
        %v3098 = vand.u32 2147483647, %v538
        %v3099 = vand.u32 2147483647, %v539
        %v3100 = vand.u32 2147483647, %v540
        %v3101 = vand.u32 2147483647, %v541
        %v3102 = vand.u32 2147483647, %v542
        %v3103 = vand.u32 2147483647, %v543
        %v3104 = vand.u32 2147483647, %v544
        %v3105 = vand.u32 2147483647, %v545
        %v3106 = vand.u32 2147483647, %v546
        %v3107 = vand.u32 2147483647, %v547
        %v3108 = vand.u32 2147483647, %v548
        %v3109 = vand.u32 2147483647, %v549
        %v3110 = vand.u32 2147483647, %v550
        %v3111 = vand.u32 2147483647, %v551
        %v3112 = vand.u32 2147483647, %v552
        %v3113 = vand.u32 2147483647, %v553
        %v3114 = vand.u32 2147483647, %v554
        %v3115 = vand.u32 2147483647, %v555
        %v3116 = vand.u32 2147483647, %v556
        %v3117 = vand.u32 2147483647, %v557
        %v3118 = vand.u32 2147483647, %v558
        %v3119 = vand.u32 2147483647, %v559
        %v3120 = vand.u32 2147483647, %v560
        %v3121 = vand.u32 2147483647, %v561
        %v3122 = vand.u32 2147483647, %v562
        %v3123 = vand.u32 2147483647, %v563
        %v3124 = vand.u32 2147483647, %v564
        %v3125 = vand.u32 2147483647, %v565
        %v3126 = vand.u32 2147483647, %v566
        %v3127 = vand.u32 2147483647, %v567
        %v3128 = vand.u32 2147483647, %v568
        %v3129 = vand.u32 2147483647, %v569
        %v3130 = vand.u32 2147483647, %v570
        %v3131 = vand.u32 2147483647, %v571
        %v3132 = vand.u32 2147483647, %v572
        %v3133 = vand.u32 2147483647, %v573
        %v3134 = vand.u32 2147483647, %v574
        %v3135 = vand.u32 2147483647, %v575
        %v3136 = vand.u32 2147483647, %v576
        %v3137 = vand.u32 2147483647, %v577
        %v3138 = vand.u32 2147483647, %v578
        %v3139 = vand.u32 2147483647, %v579
        %v3140 = vand.u32 2147483647, %v580
        %v3141 = vand.u32 2147483647, %v581
        %v3142 = vand.u32 2147483647, %v582
        %v3143 = vand.u32 2147483647, %v583
        %v3144 = vand.u32 2147483647, %v584
        %v3145 = vand.u32 2147483647, %v585
        %v3146 = vand.u32 2147483647, %v586
        %v3147 = vand.u32 2147483647, %v587
        %v3148 = vand.u32 2147483647, %v588
        %v3149 = vand.u32 2147483647, %v589
        %v3150 = vand.u32 2147483647, %v590
        %v3151 = vand.u32 2147483647, %v591
        %v3152 = vand.u32 2147483647, %v592
        %v3153 = vand.u32 2147483647, %v593
        %v3154 = vand.u32 2147483647, %v594
        %v3155 = vand.u32 2147483647, %v595
        %v3156 = vand.u32 2147483647, %v596
        %v3157 = vand.u32 2147483647, %v597
        %v3158 = vand.u32 2147483647, %v598
        %v3159 = vand.u32 2147483647, %v599
        %v3160 = vand.u32 2147483647, %v600
        %v3161 = vand.u32 2147483647, %v601
        %v3162 = vand.u32 2147483647, %v602
        %v3163 = vand.u32 2147483647, %v603
        %v3164 = vand.u32 2147483647, %v604
        %v3165 = vand.u32 2147483647, %v605
        %v3166 = vand.u32 2147483647, %v606
        %v3167 = vand.u32 2147483647, %v607
        %v3168 = vand.u32 2147483647, %v608
        %v3169 = vand.u32 2147483647, %v609
        %v3170 = vand.u32 2147483647, %v610
        %v3171 = vand.u32 2147483647, %v611
        %v3172 = vand.u32 2147483647, %v612
        %v3173 = vand.u32 2147483647, %v613
        %v3174 = vand.u32 2147483647, %v614
        %v3175 = vand.u32 2147483647, %v615
        %v3176 = vand.u32 2147483647, %v616
        %v3177 = vand.u32 2147483647, %v617
        %v3178 = vand.u32 2147483647, %v618
        %v3179 = vand.u32 2147483647, %v619
        %v3180 = vand.u32 2147483647, %v620
        %v3181 = vand.u32 2147483647, %v621
        %v3182 = vand.u32 2147483647, %v622
        %v3183 = vand.u32 2147483647, %v623
        %v3184 = vand.u32 2147483647, %v624
        %v3185 = vand.u32 2147483647, %v625
        %v3186 = vand.u32 2147483647, %v626
        %v3187 = vand.u32 2147483647, %v627
        %v3188 = vand.u32 2147483647, %v628
        %v3189 = vand.u32 2147483647, %v629
        %v3190 = vand.u32 2147483647, %v630
        %v3191 = vand.u32 2147483647, %v631
        %v3192 = vand.u32 2147483647, %v632
        %v3193 = vand.u32 2147483647, %v633
        %v3194 = vand.u32 2147483647, %v634
        %v3195 = vand.u32 2147483647, %v635
        %v3196 = vand.u32 2147483647, %v636
        %v3197 = vand.u32 2147483647, %v637
        %v3198 = vand.u32 2147483647, %v638
        %v3199 = vand.u32 2147483647, %v639
        %v3200 = vand.u32 2147483647, %v640
        %v3201 = vand.u32 2147483647, %v641
        %v3202 = vand.u32 2147483647, %v642
        %v3203 = vand.u32 2147483647, %v643
        %v3204 = vand.u32 2147483647, %v644
        %v3205 = vand.u32 2147483647, %v645
        %v3206 = vand.u32 2147483647, %v646
        %v3207 = vand.u32 2147483647, %v647
        %v3208 = vand.u32 2147483647, %v648
        %v3209 = vand.u32 2147483647, %v649
        %v3210 = vand.u32 2147483647, %v650
        %v3211 = vand.u32 2147483647, %v651
        %v3212 = vand.u32 2147483647, %v652
        %v3213 = vand.u32 2147483647, %v653
        %v3214 = vand.u32 2147483647, %v654
        %v3215 = vand.u32 2147483647, %v655
        %v3216 = vand.u32 2147483647, %v656
        %v3217 = vand.u32 2147483647, %v657
        %v3218 = vand.u32 2147483647, %v658
        %v3219 = vand.u32 2147483647, %v659
        %v3220 = vand.u32 2147483647, %v660
        %v3221 = vand.u32 2147483647, %v661
        %v3222 = vand.u32 2147483647, %v662
        %v3223 = vand.u32 2147483647, %v663
        %v3224 = vand.u32 2147483647, %v664
        %v3225 = vand.u32 2147483647, %v665
        %v3226 = vand.u32 2147483647, %v666
        %v3227 = vand.u32 2147483647, %v667
        %v3228 = vand.u32 2147483647, %v668
        %v3229 = vand.u32 2147483647, %v669
        %v3230 = vand.u32 2147483647, %v670
        %v3231 = vand.u32 2147483647, %v671
        %v3232 = vand.u32 2147483647, %v672
        %v3233 = vand.u32 2147483647, %v673
        %v3234 = vand.u32 2147483647, %v674
        %v3235 = vand.u32 2147483647, %v675
        %v3236 = vand.u32 2147483647, %v676
        %v3237 = vand.u32 2147483647, %v677
        %v3238 = vand.u32 2147483647, %v678
        %v3239 = vand.u32 2147483647, %v679
        %v3240 = vand.u32 2147483647, %v680
        %v3241 = vand.u32 2147483647, %v681
        %v3242 = vand.u32 2147483647, %v682
        %v3243 = vand.u32 2147483647, %v683
        %v3244 = vand.u32 2147483647, %v684
        %v3245 = vand.u32 2147483647, %v685
        %v3246 = vand.u32 2147483647, %v686
        %v3247 = vand.u32 2147483647, %v687
        %v3248 = vand.u32 2147483647, %v688
        %v3249 = vand.u32 2147483647, %v689
        %v3250 = vand.u32 2147483647, %v690
        %v3251 = vand.u32 2147483647, %v691
        %v3252 = vand.u32 2147483647, %v692
        %v3253 = vand.u32 2147483647, %v693
        %v3254 = vand.u32 2147483647, %v694
        %v3255 = vand.u32 2147483647, %v695
        %v3256 = vand.u32 2147483647, %v696
        %v3257 = vand.u32 2147483647, %v697
        %v3258 = vand.u32 2147483647, %v698
        %v3259 = vand.u32 2147483647, %v699
        %v3260 = vand.u32 2147483647, %v700
        %v3261 = vand.u32 2147483647, %v701
        %v3262 = vand.u32 2147483647, %v702
        %v3263 = vand.u32 2147483647, %v703
        %v3264 = vand.u32 2147483647, %v704
        %v3265 = vand.u32 2147483647, %v705
        %v3266 = vand.u32 2147483647, %v706
        %v3267 = vand.u32 2147483647, %v707
        %v3268 = vand.u32 2147483647, %v708
        %v3269 = vand.u32 2147483647, %v709
        %v3270 = vand.u32 2147483647, %v710
        %v3271 = vand.u32 2147483647, %v711
        %v3272 = vand.u32 2147483647, %v712
        %v3273 = vand.u32 2147483647, %v713
        %v3274 = vand.u32 2147483647, %v714
        %v3275 = vand.u32 2147483647, %v715
        %v3276 = vand.u32 2147483647, %v716
        %v3277 = vand.u32 2147483647, %v717
        %v3278 = vand.u32 2147483647, %v718
        %v3279 = vand.u32 2147483647, %v719
        %v3280 = vand.u32 2147483647, %v720
        %v3281 = vand.u32 2147483647, %v721
        %v3282 = vand.u32 2147483647, %v722
        %v3283 = vand.u32 2147483647, %v723
        %v3284 = vand.u32 2147483647, %v724
        %v3285 = vand.u32 2147483647, %v725
        %v3286 = vand.u32 2147483647, %v726
        %v3287 = vand.u32 2147483647, %v727
        %v3288 = vand.u32 2147483647, %v728
        %v3289 = vand.u32 2147483647, %v729
        %v3290 = vand.u32 2147483647, %v730
        %v3291 = vand.u32 2147483647, %v731
        %v3292 = vand.u32 2147483647, %v732
        %v3293 = vand.u32 2147483647, %v733
        %v3294 = vand.u32 2147483647, %v734
        %v3295 = vand.u32 2147483647, %v735
        %v3296 = vand.u32 2147483647, %v736
        %v3297 = vand.u32 2147483647, %v737
        %v3298 = vand.u32 2147483647, %v738
        %v3299 = vand.u32 2147483647, %v739
        %v3300 = vand.u32 2147483647, %v740
        %v3301 = vand.u32 2147483647, %v741
        %v3302 = vand.u32 2147483647, %v742
        %v3303 = vand.u32 2147483647, %v743
        %v3304 = vand.u32 2147483647, %v744
        %v3305 = vand.u32 2147483647, %v745
        %v3306 = vand.u32 2147483647, %v746
        %v3307 = vand.u32 2147483647, %v747
        %v3308 = vand.u32 2147483647, %v748
        %v3309 = vand.u32 2147483647, %v749
        %v3310 = vand.u32 2147483647, %v750
        %v3311 = vand.u32 2147483647, %v751
        %v3312 = vand.u32 2147483647, %v752
        %v3313 = vand.u32 2147483647, %v753
        %v3314 = vsub.f32 0.0, %v2802
        %v3315 = vsub.f32 0.0, %v2803
        %v3316 = vsub.f32 0.0, %v2804
        %v3317 = vsub.f32 0.0, %v2805
        %v3318 = vsub.f32 0.0, %v2806
        %v3319 = vsub.f32 0.0, %v2807
        %v3320 = vsub.f32 0.0, %v2808
        %v3321 = vsub.f32 0.0, %v2809
        %v3322 = vsub.f32 0.0, %v2810
        %v3323 = vsub.f32 0.0, %v2811
        %v3324 = vsub.f32 0.0, %v2812
        %v3325 = vsub.f32 0.0, %v2813
        %v3326 = vsub.f32 0.0, %v2814
        %v3327 = vsub.f32 0.0, %v2815
        %v3328 = vsub.f32 0.0, %v2816
        %v3329 = vsub.f32 0.0, %v2817
        %v3330 = vsub.f32 0.0, %v2818
        %v3331 = vsub.f32 0.0, %v2819
        %v3332 = vsub.f32 0.0, %v2820
        %v3333 = vsub.f32 0.0, %v2821
        %v3334 = vsub.f32 0.0, %v2822
        %v3335 = vsub.f32 0.0, %v2823
        %v3336 = vsub.f32 0.0, %v2824
        %v3337 = vsub.f32 0.0, %v2825
        %v3338 = vsub.f32 0.0, %v2826
        %v3339 = vsub.f32 0.0, %v2827
        %v3340 = vsub.f32 0.0, %v2828
        %v3341 = vsub.f32 0.0, %v2829
        %v3342 = vsub.f32 0.0, %v2830
        %v3343 = vsub.f32 0.0, %v2831
        %v3344 = vsub.f32 0.0, %v2832
        %v3345 = vsub.f32 0.0, %v2833
        %v3346 = vsub.f32 0.0, %v2834
        %v3347 = vsub.f32 0.0, %v2835
        %v3348 = vsub.f32 0.0, %v2836
        %v3349 = vsub.f32 0.0, %v2837
        %v3350 = vsub.f32 0.0, %v2838
        %v3351 = vsub.f32 0.0, %v2839
        %v3352 = vsub.f32 0.0, %v2840
        %v3353 = vsub.f32 0.0, %v2841
        %v3354 = vsub.f32 0.0, %v2842
        %v3355 = vsub.f32 0.0, %v2843
        %v3356 = vsub.f32 0.0, %v2844
        %v3357 = vsub.f32 0.0, %v2845
        %v3358 = vsub.f32 0.0, %v2846
        %v3359 = vsub.f32 0.0, %v2847
        %v3360 = vsub.f32 0.0, %v2848
        %v3361 = vsub.f32 0.0, %v2849
        %v3362 = vsub.f32 0.0, %v2850
        %v3363 = vsub.f32 0.0, %v2851
        %v3364 = vsub.f32 0.0, %v2852
        %v3365 = vsub.f32 0.0, %v2853
        %v3366 = vsub.f32 0.0, %v2854
        %v3367 = vsub.f32 0.0, %v2855
        %v3368 = vsub.f32 0.0, %v2856
        %v3369 = vsub.f32 0.0, %v2857
        %v3370 = vsub.f32 0.0, %v2858
        %v3371 = vsub.f32 0.0, %v2859
        %v3372 = vsub.f32 0.0, %v2860
        %v3373 = vsub.f32 0.0, %v2861
        %v3374 = vsub.f32 0.0, %v2862
        %v3375 = vsub.f32 0.0, %v2863
        %v3376 = vsub.f32 0.0, %v2864
        %v3377 = vsub.f32 0.0, %v2865
        %v3378 = vsub.f32 0.0, %v2866
        %v3379 = vsub.f32 0.0, %v2867
        %v3380 = vsub.f32 0.0, %v2868
        %v3381 = vsub.f32 0.0, %v2869
        %v3382 = vsub.f32 0.0, %v2870
        %v3383 = vsub.f32 0.0, %v2871
        %v3384 = vsub.f32 0.0, %v2872
        %v3385 = vsub.f32 0.0, %v2873
        %v3386 = vsub.f32 0.0, %v2874
        %v3387 = vsub.f32 0.0, %v2875
        %v3388 = vsub.f32 0.0, %v2876
        %v3389 = vsub.f32 0.0, %v2877
        %v3390 = vsub.f32 0.0, %v2878
        %v3391 = vsub.f32 0.0, %v2879
        %v3392 = vsub.f32 0.0, %v2880
        %v3393 = vsub.f32 0.0, %v2881
        %v3394 = vsub.f32 0.0, %v2882
        %v3395 = vsub.f32 0.0, %v2883
        %v3396 = vsub.f32 0.0, %v2884
        %v3397 = vsub.f32 0.0, %v2885
        %v3398 = vsub.f32 0.0, %v2886
        %v3399 = vsub.f32 0.0, %v2887
        %v3400 = vsub.f32 0.0, %v2888
        %v3401 = vsub.f32 0.0, %v2889
        %v3402 = vsub.f32 0.0, %v2890
        %v3403 = vsub.f32 0.0, %v2891
        %v3404 = vsub.f32 0.0, %v2892
        %v3405 = vsub.f32 0.0, %v2893
        %v3406 = vsub.f32 0.0, %v2894
        %v3407 = vsub.f32 0.0, %v2895
        %v3408 = vsub.f32 0.0, %v2896
        %v3409 = vsub.f32 0.0, %v2897
        %v3410 = vsub.f32 0.0, %v2898
        %v3411 = vsub.f32 0.0, %v2899
        %v3412 = vsub.f32 0.0, %v2900
        %v3413 = vsub.f32 0.0, %v2901
        %v3414 = vsub.f32 0.0, %v2902
        %v3415 = vsub.f32 0.0, %v2903
        %v3416 = vsub.f32 0.0, %v2904
        %v3417 = vsub.f32 0.0, %v2905
        %v3418 = vsub.f32 0.0, %v2906
        %v3419 = vsub.f32 0.0, %v2907
        %v3420 = vsub.f32 0.0, %v2908
        %v3421 = vsub.f32 0.0, %v2909
        %v3422 = vsub.f32 0.0, %v2910
        %v3423 = vsub.f32 0.0, %v2911
        %v3424 = vsub.f32 0.0, %v2912
        %v3425 = vsub.f32 0.0, %v2913
        %v3426 = vsub.f32 0.0, %v2914
        %v3427 = vsub.f32 0.0, %v2915
        %v3428 = vsub.f32 0.0, %v2916
        %v3429 = vsub.f32 0.0, %v2917
        %v3430 = vsub.f32 0.0, %v2918
        %v3431 = vsub.f32 0.0, %v2919
        %v3432 = vsub.f32 0.0, %v2920
        %v3433 = vsub.f32 0.0, %v2921
        %v3434 = vsub.f32 0.0, %v2922
        %v3435 = vsub.f32 0.0, %v2923
        %v3436 = vsub.f32 0.0, %v2924
        %v3437 = vsub.f32 0.0, %v2925
        %v3438 = vsub.f32 0.0, %v2926
        %v3439 = vsub.f32 0.0, %v2927
        %v3440 = vsub.f32 0.0, %v2928
        %v3441 = vsub.f32 0.0, %v2929
        %v3442 = vsub.f32 0.0, %v2930
        %v3443 = vsub.f32 0.0, %v2931
        %v3444 = vsub.f32 0.0, %v2932
        %v3445 = vsub.f32 0.0, %v2933
        %v3446 = vsub.f32 0.0, %v2934
        %v3447 = vsub.f32 0.0, %v2935
        %v3448 = vsub.f32 0.0, %v2936
        %v3449 = vsub.f32 0.0, %v2937
        %v3450 = vsub.f32 0.0, %v2938
        %v3451 = vsub.f32 0.0, %v2939
        %v3452 = vsub.f32 0.0, %v2940
        %v3453 = vsub.f32 0.0, %v2941
        %v3454 = vsub.f32 0.0, %v2942
        %v3455 = vsub.f32 0.0, %v2943
        %v3456 = vsub.f32 0.0, %v2944
        %v3457 = vsub.f32 0.0, %v2945
        %v3458 = vsub.f32 0.0, %v2946
        %v3459 = vsub.f32 0.0, %v2947
        %v3460 = vsub.f32 0.0, %v2948
        %v3461 = vsub.f32 0.0, %v2949
        %v3462 = vsub.f32 0.0, %v2950
        %v3463 = vsub.f32 0.0, %v2951
        %v3464 = vsub.f32 0.0, %v2952
        %v3465 = vsub.f32 0.0, %v2953
        %v3466 = vsub.f32 0.0, %v2954
        %v3467 = vsub.f32 0.0, %v2955
        %v3468 = vsub.f32 0.0, %v2956
        %v3469 = vsub.f32 0.0, %v2957
        %v3470 = vsub.f32 0.0, %v2958
        %v3471 = vsub.f32 0.0, %v2959
        %v3472 = vsub.f32 0.0, %v2960
        %v3473 = vsub.f32 0.0, %v2961
        %v3474 = vsub.f32 0.0, %v2962
        %v3475 = vsub.f32 0.0, %v2963
        %v3476 = vsub.f32 0.0, %v2964
        %v3477 = vsub.f32 0.0, %v2965
        %v3478 = vsub.f32 0.0, %v2966
        %v3479 = vsub.f32 0.0, %v2967
        %v3480 = vsub.f32 0.0, %v2968
        %v3481 = vsub.f32 0.0, %v2969
        %v3482 = vsub.f32 0.0, %v2970
        %v3483 = vsub.f32 0.0, %v2971
        %v3484 = vsub.f32 0.0, %v2972
        %v3485 = vsub.f32 0.0, %v2973
        %v3486 = vsub.f32 0.0, %v2974
        %v3487 = vsub.f32 0.0, %v2975
        %v3488 = vsub.f32 0.0, %v2976
        %v3489 = vsub.f32 0.0, %v2977
        %v3490 = vsub.f32 0.0, %v2978
        %v3491 = vsub.f32 0.0, %v2979
        %v3492 = vsub.f32 0.0, %v2980
        %v3493 = vsub.f32 0.0, %v2981
        %v3494 = vsub.f32 0.0, %v2982
        %v3495 = vsub.f32 0.0, %v2983
        %v3496 = vsub.f32 0.0, %v2984
        %v3497 = vsub.f32 0.0, %v2985
        %v3498 = vsub.f32 0.0, %v2986
        %v3499 = vsub.f32 0.0, %v2987
        %v3500 = vsub.f32 0.0, %v2988
        %v3501 = vsub.f32 0.0, %v2989
        %v3502 = vsub.f32 0.0, %v2990
        %v3503 = vsub.f32 0.0, %v2991
        %v3504 = vsub.f32 0.0, %v2992
        %v3505 = vsub.f32 0.0, %v2993
        %v3506 = vsub.f32 0.0, %v2994
        %v3507 = vsub.f32 0.0, %v2995
        %v3508 = vsub.f32 0.0, %v2996
        %v3509 = vsub.f32 0.0, %v2997
        %v3510 = vsub.f32 0.0, %v2998
        %v3511 = vsub.f32 0.0, %v2999
        %v3512 = vsub.f32 0.0, %v3000
        %v3513 = vsub.f32 0.0, %v3001
        %v3514 = vsub.f32 0.0, %v3002
        %v3515 = vsub.f32 0.0, %v3003
        %v3516 = vsub.f32 0.0, %v3004
        %v3517 = vsub.f32 0.0, %v3005
        %v3518 = vsub.f32 0.0, %v3006
        %v3519 = vsub.f32 0.0, %v3007
        %v3520 = vsub.f32 0.0, %v3008
        %v3521 = vsub.f32 0.0, %v3009
        %v3522 = vsub.f32 0.0, %v3010
        %v3523 = vsub.f32 0.0, %v3011
        %v3524 = vsub.f32 0.0, %v3012
        %v3525 = vsub.f32 0.0, %v3013
        %v3526 = vsub.f32 0.0, %v3014
        %v3527 = vsub.f32 0.0, %v3015
        %v3528 = vsub.f32 0.0, %v3016
        %v3529 = vsub.f32 0.0, %v3017
        %v3530 = vsub.f32 0.0, %v3018
        %v3531 = vsub.f32 0.0, %v3019
        %v3532 = vsub.f32 0.0, %v3020
        %v3533 = vsub.f32 0.0, %v3021
        %v3534 = vsub.f32 0.0, %v3022
        %v3535 = vsub.f32 0.0, %v3023
        %v3536 = vsub.f32 0.0, %v3024
        %v3537 = vsub.f32 0.0, %v3025
        %v3538 = vsub.f32 0.0, %v3026
        %v3539 = vsub.f32 0.0, %v3027
        %v3540 = vsub.f32 0.0, %v3028
        %v3541 = vsub.f32 0.0, %v3029
        %v3542 = vsub.f32 0.0, %v3030
        %v3543 = vsub.f32 0.0, %v3031
        %v3544 = vsub.f32 0.0, %v3032
        %v3545 = vsub.f32 0.0, %v3033
        %v3546 = vsub.f32 0.0, %v3034
        %v3547 = vsub.f32 0.0, %v3035
        %v3548 = vsub.f32 0.0, %v3036
        %v3549 = vsub.f32 0.0, %v3037
        %v3550 = vsub.f32 0.0, %v3038
        %v3551 = vsub.f32 0.0, %v3039
        %v3552 = vsub.f32 0.0, %v3040
        %v3553 = vsub.f32 0.0, %v3041
        %v3554 = vsub.f32 0.0, %v3042
        %v3555 = vsub.f32 0.0, %v3043
        %v3556 = vsub.f32 0.0, %v3044
        %v3557 = vsub.f32 0.0, %v3045
        %v3558 = vsub.f32 0.0, %v3046
        %v3559 = vsub.f32 0.0, %v3047
        %v3560 = vsub.f32 0.0, %v3048
        %v3561 = vsub.f32 0.0, %v3049
        %v3562 = vsub.f32 0.0, %v3050
        %v3563 = vsub.f32 0.0, %v3051
        %v3564 = vsub.f32 0.0, %v3052
        %v3565 = vsub.f32 0.0, %v3053
        %v3566 = vsub.f32 0.0, %v3054
        %v3567 = vsub.f32 0.0, %v3055
        %v3568 = vsub.f32 0.0, %v3056
        %v3569 = vsub.f32 0.0, %v3057
        %v3570 = vsub.f32 0.0, %v3058
        %v3571 = vsub.f32 0.0, %v3059
        %v3572 = vsub.f32 0.0, %v3060
        %v3573 = vsub.f32 0.0, %v3061
        %v3574 = vsub.f32 0.0, %v3062
        %v3575 = vsub.f32 0.0, %v3063
        %v3576 = vsub.f32 0.0, %v3064
        %v3577 = vsub.f32 0.0, %v3065
        %v3578 = vsub.f32 0.0, %v3066
        %v3579 = vsub.f32 0.0, %v3067
        %v3580 = vsub.f32 0.0, %v3068
        %v3581 = vsub.f32 0.0, %v3069
        %v3582 = vsub.f32 0.0, %v3070
        %v3583 = vsub.f32 0.0, %v3071
        %v3584 = vsub.f32 0.0, %v3072
        %v3585 = vsub.f32 0.0, %v3073
        %v3586 = vsub.f32 0.0, %v3074
        %v3587 = vsub.f32 0.0, %v3075
        %v3588 = vsub.f32 0.0, %v3076
        %v3589 = vsub.f32 0.0, %v3077
        %v3590 = vsub.f32 0.0, %v3078
        %v3591 = vsub.f32 0.0, %v3079
        %v3592 = vsub.f32 0.0, %v3080
        %v3593 = vsub.f32 0.0, %v3081
        %v3594 = vsub.f32 0.0, %v3082
        %v3595 = vsub.f32 0.0, %v3083
        %v3596 = vsub.f32 0.0, %v3084
        %v3597 = vsub.f32 0.0, %v3085
        %v3598 = vsub.f32 0.0, %v3086
        %v3599 = vsub.f32 0.0, %v3087
        %v3600 = vsub.f32 0.0, %v3088
        %v3601 = vsub.f32 0.0, %v3089
        %v3602 = vsub.f32 0.0, %v3090
        %v3603 = vsub.f32 0.0, %v3091
        %v3604 = vsub.f32 0.0, %v3092
        %v3605 = vsub.f32 0.0, %v3093
        %v3606 = vsub.f32 0.0, %v3094
        %v3607 = vsub.f32 0.0, %v3095
        %v3608 = vsub.f32 0.0, %v3096
        %v3609 = vsub.f32 0.0, %v3097
        %v3610 = vsub.f32 0.0, %v3098
        %v3611 = vsub.f32 0.0, %v3099
        %v3612 = vsub.f32 0.0, %v3100
        %v3613 = vsub.f32 0.0, %v3101
        %v3614 = vsub.f32 0.0, %v3102
        %v3615 = vsub.f32 0.0, %v3103
        %v3616 = vsub.f32 0.0, %v3104
        %v3617 = vsub.f32 0.0, %v3105
        %v3618 = vsub.f32 0.0, %v3106
        %v3619 = vsub.f32 0.0, %v3107
        %v3620 = vsub.f32 0.0, %v3108
        %v3621 = vsub.f32 0.0, %v3109
        %v3622 = vsub.f32 0.0, %v3110
        %v3623 = vsub.f32 0.0, %v3111
        %v3624 = vsub.f32 0.0, %v3112
        %v3625 = vsub.f32 0.0, %v3113
        %v3626 = vsub.f32 0.0, %v3114
        %v3627 = vsub.f32 0.0, %v3115
        %v3628 = vsub.f32 0.0, %v3116
        %v3629 = vsub.f32 0.0, %v3117
        %v3630 = vsub.f32 0.0, %v3118
        %v3631 = vsub.f32 0.0, %v3119
        %v3632 = vsub.f32 0.0, %v3120
        %v3633 = vsub.f32 0.0, %v3121
        %v3634 = vsub.f32 0.0, %v3122
        %v3635 = vsub.f32 0.0, %v3123
        %v3636 = vsub.f32 0.0, %v3124
        %v3637 = vsub.f32 0.0, %v3125
        %v3638 = vsub.f32 0.0, %v3126
        %v3639 = vsub.f32 0.0, %v3127
        %v3640 = vsub.f32 0.0, %v3128
        %v3641 = vsub.f32 0.0, %v3129
        %v3642 = vsub.f32 0.0, %v3130
        %v3643 = vsub.f32 0.0, %v3131
        %v3644 = vsub.f32 0.0, %v3132
        %v3645 = vsub.f32 0.0, %v3133
        %v3646 = vsub.f32 0.0, %v3134
        %v3647 = vsub.f32 0.0, %v3135
        %v3648 = vsub.f32 0.0, %v3136
        %v3649 = vsub.f32 0.0, %v3137
        %v3650 = vsub.f32 0.0, %v3138
        %v3651 = vsub.f32 0.0, %v3139
        %v3652 = vsub.f32 0.0, %v3140
        %v3653 = vsub.f32 0.0, %v3141
        %v3654 = vsub.f32 0.0, %v3142
        %v3655 = vsub.f32 0.0, %v3143
        %v3656 = vsub.f32 0.0, %v3144
        %v3657 = vsub.f32 0.0, %v3145
        %v3658 = vsub.f32 0.0, %v3146
        %v3659 = vsub.f32 0.0, %v3147
        %v3660 = vsub.f32 0.0, %v3148
        %v3661 = vsub.f32 0.0, %v3149
        %v3662 = vsub.f32 0.0, %v3150
        %v3663 = vsub.f32 0.0, %v3151
        %v3664 = vsub.f32 0.0, %v3152
        %v3665 = vsub.f32 0.0, %v3153
        %v3666 = vsub.f32 0.0, %v3154
        %v3667 = vsub.f32 0.0, %v3155
        %v3668 = vsub.f32 0.0, %v3156
        %v3669 = vsub.f32 0.0, %v3157
        %v3670 = vsub.f32 0.0, %v3158
        %v3671 = vsub.f32 0.0, %v3159
        %v3672 = vsub.f32 0.0, %v3160
        %v3673 = vsub.f32 0.0, %v3161
        %v3674 = vsub.f32 0.0, %v3162
        %v3675 = vsub.f32 0.0, %v3163
        %v3676 = vsub.f32 0.0, %v3164
        %v3677 = vsub.f32 0.0, %v3165
        %v3678 = vsub.f32 0.0, %v3166
        %v3679 = vsub.f32 0.0, %v3167
        %v3680 = vsub.f32 0.0, %v3168
        %v3681 = vsub.f32 0.0, %v3169
        %v3682 = vsub.f32 0.0, %v3170
        %v3683 = vsub.f32 0.0, %v3171
        %v3684 = vsub.f32 0.0, %v3172
        %v3685 = vsub.f32 0.0, %v3173
        %v3686 = vsub.f32 0.0, %v3174
        %v3687 = vsub.f32 0.0, %v3175
        %v3688 = vsub.f32 0.0, %v3176
        %v3689 = vsub.f32 0.0, %v3177
        %v3690 = vsub.f32 0.0, %v3178
        %v3691 = vsub.f32 0.0, %v3179
        %v3692 = vsub.f32 0.0, %v3180
        %v3693 = vsub.f32 0.0, %v3181
        %v3694 = vsub.f32 0.0, %v3182
        %v3695 = vsub.f32 0.0, %v3183
        %v3696 = vsub.f32 0.0, %v3184
        %v3697 = vsub.f32 0.0, %v3185
        %v3698 = vsub.f32 0.0, %v3186
        %v3699 = vsub.f32 0.0, %v3187
        %v3700 = vsub.f32 0.0, %v3188
        %v3701 = vsub.f32 0.0, %v3189
        %v3702 = vsub.f32 0.0, %v3190
        %v3703 = vsub.f32 0.0, %v3191
        %v3704 = vsub.f32 0.0, %v3192
        %v3705 = vsub.f32 0.0, %v3193
        %v3706 = vsub.f32 0.0, %v3194
        %v3707 = vsub.f32 0.0, %v3195
        %v3708 = vsub.f32 0.0, %v3196
        %v3709 = vsub.f32 0.0, %v3197
        %v3710 = vsub.f32 0.0, %v3198
        %v3711 = vsub.f32 0.0, %v3199
        %v3712 = vsub.f32 0.0, %v3200
        %v3713 = vsub.f32 0.0, %v3201
        %v3714 = vsub.f32 0.0, %v3202
        %v3715 = vsub.f32 0.0, %v3203
        %v3716 = vsub.f32 0.0, %v3204
        %v3717 = vsub.f32 0.0, %v3205
        %v3718 = vsub.f32 0.0, %v3206
        %v3719 = vsub.f32 0.0, %v3207
        %v3720 = vsub.f32 0.0, %v3208
        %v3721 = vsub.f32 0.0, %v3209
        %v3722 = vsub.f32 0.0, %v3210
        %v3723 = vsub.f32 0.0, %v3211
        %v3724 = vsub.f32 0.0, %v3212
        %v3725 = vsub.f32 0.0, %v3213
        %v3726 = vsub.f32 0.0, %v3214
        %v3727 = vsub.f32 0.0, %v3215
        %v3728 = vsub.f32 0.0, %v3216
        %v3729 = vsub.f32 0.0, %v3217
        %v3730 = vsub.f32 0.0, %v3218
        %v3731 = vsub.f32 0.0, %v3219
        %v3732 = vsub.f32 0.0, %v3220
        %v3733 = vsub.f32 0.0, %v3221
        %v3734 = vsub.f32 0.0, %v3222
        %v3735 = vsub.f32 0.0, %v3223
        %v3736 = vsub.f32 0.0, %v3224
        %v3737 = vsub.f32 0.0, %v3225
        %v3738 = vsub.f32 0.0, %v3226
        %v3739 = vsub.f32 0.0, %v3227
        %v3740 = vsub.f32 0.0, %v3228
        %v3741 = vsub.f32 0.0, %v3229
        %v3742 = vsub.f32 0.0, %v3230
        %v3743 = vsub.f32 0.0, %v3231
        %v3744 = vsub.f32 0.0, %v3232
        %v3745 = vsub.f32 0.0, %v3233
        %v3746 = vsub.f32 0.0, %v3234
        %v3747 = vsub.f32 0.0, %v3235
        %v3748 = vsub.f32 0.0, %v3236
        %v3749 = vsub.f32 0.0, %v3237
        %v3750 = vsub.f32 0.0, %v3238
        %v3751 = vsub.f32 0.0, %v3239
        %v3752 = vsub.f32 0.0, %v3240
        %v3753 = vsub.f32 0.0, %v3241
        %v3754 = vsub.f32 0.0, %v3242
        %v3755 = vsub.f32 0.0, %v3243
        %v3756 = vsub.f32 0.0, %v3244
        %v3757 = vsub.f32 0.0, %v3245
        %v3758 = vsub.f32 0.0, %v3246
        %v3759 = vsub.f32 0.0, %v3247
        %v3760 = vsub.f32 0.0, %v3248
        %v3761 = vsub.f32 0.0, %v3249
        %v3762 = vsub.f32 0.0, %v3250
        %v3763 = vsub.f32 0.0, %v3251
        %v3764 = vsub.f32 0.0, %v3252
        %v3765 = vsub.f32 0.0, %v3253
        %v3766 = vsub.f32 0.0, %v3254
        %v3767 = vsub.f32 0.0, %v3255
        %v3768 = vsub.f32 0.0, %v3256
        %v3769 = vsub.f32 0.0, %v3257
        %v3770 = vsub.f32 0.0, %v3258
        %v3771 = vsub.f32 0.0, %v3259
        %v3772 = vsub.f32 0.0, %v3260
        %v3773 = vsub.f32 0.0, %v3261
        %v3774 = vsub.f32 0.0, %v3262
        %v3775 = vsub.f32 0.0, %v3263
        %v3776 = vsub.f32 0.0, %v3264
        %v3777 = vsub.f32 0.0, %v3265
        %v3778 = vsub.f32 0.0, %v3266
        %v3779 = vsub.f32 0.0, %v3267
        %v3780 = vsub.f32 0.0, %v3268
        %v3781 = vsub.f32 0.0, %v3269
        %v3782 = vsub.f32 0.0, %v3270
        %v3783 = vsub.f32 0.0, %v3271
        %v3784 = vsub.f32 0.0, %v3272
        %v3785 = vsub.f32 0.0, %v3273
        %v3786 = vsub.f32 0.0, %v3274
        %v3787 = vsub.f32 0.0, %v3275
        %v3788 = vsub.f32 0.0, %v3276
        %v3789 = vsub.f32 0.0, %v3277
        %v3790 = vsub.f32 0.0, %v3278
        %v3791 = vsub.f32 0.0, %v3279
        %v3792 = vsub.f32 0.0, %v3280
        %v3793 = vsub.f32 0.0, %v3281
        %v3794 = vsub.f32 0.0, %v3282
        %v3795 = vsub.f32 0.0, %v3283
        %v3796 = vsub.f32 0.0, %v3284
        %v3797 = vsub.f32 0.0, %v3285
        %v3798 = vsub.f32 0.0, %v3286
        %v3799 = vsub.f32 0.0, %v3287
        %v3800 = vsub.f32 0.0, %v3288
        %v3801 = vsub.f32 0.0, %v3289
        %v3802 = vsub.f32 0.0, %v3290
        %v3803 = vsub.f32 0.0, %v3291
        %v3804 = vsub.f32 0.0, %v3292
        %v3805 = vsub.f32 0.0, %v3293
        %v3806 = vsub.f32 0.0, %v3294
        %v3807 = vsub.f32 0.0, %v3295
        %v3808 = vsub.f32 0.0, %v3296
        %v3809 = vsub.f32 0.0, %v3297
        %v3810 = vsub.f32 0.0, %v3298
        %v3811 = vsub.f32 0.0, %v3299
        %v3812 = vsub.f32 0.0, %v3300
        %v3813 = vsub.f32 0.0, %v3301
        %v3814 = vsub.f32 0.0, %v3302
        %v3815 = vsub.f32 0.0, %v3303
        %v3816 = vsub.f32 0.0, %v3304
        %v3817 = vsub.f32 0.0, %v3305
        %v3818 = vsub.f32 0.0, %v3306
        %v3819 = vsub.f32 0.0, %v3307
        %v3820 = vsub.f32 0.0, %v3308
        %v3821 = vsub.f32 0.0, %v3309
        %v3822 = vsub.f32 0.0, %v3310
        %v3823 = vsub.f32 0.0, %v3311
        %v3824 = vsub.f32 0.0, %v3312
        %v3825 = vsub.f32 0.0, %v3313
        %v3826 = vmul.f32 %v3314, 1.442695
        %v3827 = vpow.pop %v3826
        %v3828 = vmul.f32 %v3315, 1.442695
        %v3829 = vpow.pop %v3828
        %v3830 = vmul.f32 %v3316, 1.442695
        %v3831 = vpow.pop %v3830
        %v3832 = vmul.f32 %v3317, 1.442695
        %v3833 = vpow.pop %v3832
        %v3834 = vmul.f32 %v3318, 1.442695
        %v3835 = vpow.pop %v3834
        %v3836 = vmul.f32 %v3319, 1.442695
        %v3837 = vpow.pop %v3836
        %v3838 = vmul.f32 %v3320, 1.442695
        %v3839 = vpow.pop %v3838
        %v3840 = vmul.f32 %v3321, 1.442695
        %v3841 = vpow.pop %v3840
        %v3842 = vmul.f32 %v3322, 1.442695
        %v3843 = vpow.pop %v3842
        %v3844 = vmul.f32 %v3323, 1.442695
        %v3845 = vpow.pop %v3844
        %v3846 = vmul.f32 %v3324, 1.442695
        %v3847 = vpow.pop %v3846
        %v3848 = vmul.f32 %v3325, 1.442695
        %v3849 = vpow.pop %v3848
        %v3850 = vmul.f32 %v3326, 1.442695
        %v3851 = vpow.pop %v3850
        %v3852 = vmul.f32 %v3327, 1.442695
        %v3853 = vpow.pop %v3852
        %v3854 = vmul.f32 %v3328, 1.442695
        %v3855 = vpow.pop %v3854
        %v3856 = vmul.f32 %v3329, 1.442695
        %v3857 = vpow.pop %v3856
        %v3858 = vmul.f32 %v3330, 1.442695
        %v3859 = vpow.pop %v3858
        %v3860 = vmul.f32 %v3331, 1.442695
        %v3861 = vpow.pop %v3860
        %v3862 = vmul.f32 %v3332, 1.442695
        %v3863 = vpow.pop %v3862
        %v3864 = vmul.f32 %v3333, 1.442695
        %v3865 = vpow.pop %v3864
        %v3866 = vmul.f32 %v3334, 1.442695
        %v3867 = vpow.pop %v3866
        %v3868 = vmul.f32 %v3335, 1.442695
        %v3869 = vpow.pop %v3868
        %v3870 = vmul.f32 %v3336, 1.442695
        %v3871 = vpow.pop %v3870
        %v3872 = vmul.f32 %v3337, 1.442695
        %v3873 = vpow.pop %v3872
        %v3874 = vmul.f32 %v3338, 1.442695
        %v3875 = vpow.pop %v3874
        %v3876 = vmul.f32 %v3339, 1.442695
        %v3877 = vpow.pop %v3876
        %v3878 = vmul.f32 %v3340, 1.442695
        %v3879 = vpow.pop %v3878
        %v3880 = vmul.f32 %v3341, 1.442695
        %v3881 = vpow.pop %v3880
        %v3882 = vmul.f32 %v3342, 1.442695
        %v3883 = vpow.pop %v3882
        %v3884 = vmul.f32 %v3343, 1.442695
        %v3885 = vpow.pop %v3884
        %v3886 = vmul.f32 %v3344, 1.442695
        %v3887 = vpow.pop %v3886
        %v3888 = vmul.f32 %v3345, 1.442695
        %v3889 = vpow.pop %v3888
        %v3890 = vmul.f32 %v3346, 1.442695
        %v3891 = vpow.pop %v3890
        %v3892 = vmul.f32 %v3347, 1.442695
        %v3893 = vpow.pop %v3892
        %v3894 = vmul.f32 %v3348, 1.442695
        %v3895 = vpow.pop %v3894
        %v3896 = vmul.f32 %v3349, 1.442695
        %v3897 = vpow.pop %v3896
        %v3898 = vmul.f32 %v3350, 1.442695
        %v3899 = vpow.pop %v3898
        %v3900 = vmul.f32 %v3351, 1.442695
        %v3901 = vpow.pop %v3900
        %v3902 = vmul.f32 %v3352, 1.442695
        %v3903 = vpow.pop %v3902
        %v3904 = vmul.f32 %v3353, 1.442695
        %v3905 = vpow.pop %v3904
        %v3906 = vmul.f32 %v3354, 1.442695
        %v3907 = vpow.pop %v3906
        %v3908 = vmul.f32 %v3355, 1.442695
        %v3909 = vpow.pop %v3908
        %v3910 = vmul.f32 %v3356, 1.442695
        %v3911 = vpow.pop %v3910
        %v3912 = vmul.f32 %v3357, 1.442695
        %v3913 = vpow.pop %v3912
        %v3914 = vmul.f32 %v3358, 1.442695
        %v3915 = vpow.pop %v3914
        %v3916 = vmul.f32 %v3359, 1.442695
        %v3917 = vpow.pop %v3916
        %v3918 = vmul.f32 %v3360, 1.442695
        %v3919 = vpow.pop %v3918
        %v3920 = vmul.f32 %v3361, 1.442695
        %v3921 = vpow.pop %v3920
        %v3922 = vmul.f32 %v3362, 1.442695
        %v3923 = vpow.pop %v3922
        %v3924 = vmul.f32 %v3363, 1.442695
        %v3925 = vpow.pop %v3924
        %v3926 = vmul.f32 %v3364, 1.442695
        %v3927 = vpow.pop %v3926
        %v3928 = vmul.f32 %v3365, 1.442695
        %v3929 = vpow.pop %v3928
        %v3930 = vmul.f32 %v3366, 1.442695
        %v3931 = vpow.pop %v3930
        %v3932 = vmul.f32 %v3367, 1.442695
        %v3933 = vpow.pop %v3932
        %v3934 = vmul.f32 %v3368, 1.442695
        %v3935 = vpow.pop %v3934
        %v3936 = vmul.f32 %v3369, 1.442695
        %v3937 = vpow.pop %v3936
        %v3938 = vmul.f32 %v3370, 1.442695
        %v3939 = vpow.pop %v3938
        %v3940 = vmul.f32 %v3371, 1.442695
        %v3941 = vpow.pop %v3940
        %v3942 = vmul.f32 %v3372, 1.442695
        %v3943 = vpow.pop %v3942
        %v3944 = vmul.f32 %v3373, 1.442695
        %v3945 = vpow.pop %v3944
        %v3946 = vmul.f32 %v3374, 1.442695
        %v3947 = vpow.pop %v3946
        %v3948 = vmul.f32 %v3375, 1.442695
        %v3949 = vpow.pop %v3948
        %v3950 = vmul.f32 %v3376, 1.442695
        %v3951 = vpow.pop %v3950
        %v3952 = vmul.f32 %v3377, 1.442695
        %v3953 = vpow.pop %v3952
        %v3954 = vmul.f32 %v3378, 1.442695
        %v3955 = vpow.pop %v3954
        %v3956 = vmul.f32 %v3379, 1.442695
        %v3957 = vpow.pop %v3956
        %v3958 = vmul.f32 %v3380, 1.442695
        %v3959 = vpow.pop %v3958
        %v3960 = vmul.f32 %v3381, 1.442695
        %v3961 = vpow.pop %v3960
        %v3962 = vmul.f32 %v3382, 1.442695
        %v3963 = vpow.pop %v3962
        %v3964 = vmul.f32 %v3383, 1.442695
        %v3965 = vpow.pop %v3964
        %v3966 = vmul.f32 %v3384, 1.442695
        %v3967 = vpow.pop %v3966
        %v3968 = vmul.f32 %v3385, 1.442695
        %v3969 = vpow.pop %v3968
        %v3970 = vmul.f32 %v3386, 1.442695
        %v3971 = vpow.pop %v3970
        %v3972 = vmul.f32 %v3387, 1.442695
        %v3973 = vpow.pop %v3972
        %v3974 = vmul.f32 %v3388, 1.442695
        %v3975 = vpow.pop %v3974
        %v3976 = vmul.f32 %v3389, 1.442695
        %v3977 = vpow.pop %v3976
        %v3978 = vmul.f32 %v3390, 1.442695
        %v3979 = vpow.pop %v3978
        %v3980 = vmul.f32 %v3391, 1.442695
        %v3981 = vpow.pop %v3980
        %v3982 = vmul.f32 %v3392, 1.442695
        %v3983 = vpow.pop %v3982
        %v3984 = vmul.f32 %v3393, 1.442695
        %v3985 = vpow.pop %v3984
        %v3986 = vmul.f32 %v3394, 1.442695
        %v3987 = vpow.pop %v3986
        %v3988 = vmul.f32 %v3395, 1.442695
        %v3989 = vpow.pop %v3988
        %v3990 = vmul.f32 %v3396, 1.442695
        %v3991 = vpow.pop %v3990
        %v3992 = vmul.f32 %v3397, 1.442695
        %v3993 = vpow.pop %v3992
        %v3994 = vmul.f32 %v3398, 1.442695
        %v3995 = vpow.pop %v3994
        %v3996 = vmul.f32 %v3399, 1.442695
        %v3997 = vpow.pop %v3996
        %v3998 = vmul.f32 %v3400, 1.442695
        %v3999 = vpow.pop %v3998
        %v4000 = vmul.f32 %v3401, 1.442695
        %v4001 = vpow.pop %v4000
        %v4002 = vmul.f32 %v3402, 1.442695
        %v4003 = vpow.pop %v4002
        %v4004 = vmul.f32 %v3403, 1.442695
        %v4005 = vpow.pop %v4004
        %v4006 = vmul.f32 %v3404, 1.442695
        %v4007 = vpow.pop %v4006
        %v4008 = vmul.f32 %v3405, 1.442695
        %v4009 = vpow.pop %v4008
        %v4010 = vmul.f32 %v3406, 1.442695
        %v4011 = vpow.pop %v4010
        %v4012 = vmul.f32 %v3407, 1.442695
        %v4013 = vpow.pop %v4012
        %v4014 = vmul.f32 %v3408, 1.442695
        %v4015 = vpow.pop %v4014
        %v4016 = vmul.f32 %v3409, 1.442695
        %v4017 = vpow.pop %v4016
        %v4018 = vmul.f32 %v3410, 1.442695
        %v4019 = vpow.pop %v4018
        %v4020 = vmul.f32 %v3411, 1.442695
        %v4021 = vpow.pop %v4020
        %v4022 = vmul.f32 %v3412, 1.442695
        %v4023 = vpow.pop %v4022
        %v4024 = vmul.f32 %v3413, 1.442695
        %v4025 = vpow.pop %v4024
        %v4026 = vmul.f32 %v3414, 1.442695
        %v4027 = vpow.pop %v4026
        %v4028 = vmul.f32 %v3415, 1.442695
        %v4029 = vpow.pop %v4028
        %v4030 = vmul.f32 %v3416, 1.442695
        %v4031 = vpow.pop %v4030
        %v4032 = vmul.f32 %v3417, 1.442695
        %v4033 = vpow.pop %v4032
        %v4034 = vmul.f32 %v3418, 1.442695
        %v4035 = vpow.pop %v4034
        %v4036 = vmul.f32 %v3419, 1.442695
        %v4037 = vpow.pop %v4036
        %v4038 = vmul.f32 %v3420, 1.442695
        %v4039 = vpow.pop %v4038
        %v4040 = vmul.f32 %v3421, 1.442695
        %v4041 = vpow.pop %v4040
        %v4042 = vmul.f32 %v3422, 1.442695
        %v4043 = vpow.pop %v4042
        %v4044 = vmul.f32 %v3423, 1.442695
        %v4045 = vpow.pop %v4044
        %v4046 = vmul.f32 %v3424, 1.442695
        %v4047 = vpow.pop %v4046
        %v4048 = vmul.f32 %v3425, 1.442695
        %v4049 = vpow.pop %v4048
        %v4050 = vmul.f32 %v3426, 1.442695
        %v4051 = vpow.pop %v4050
        %v4052 = vmul.f32 %v3427, 1.442695
        %v4053 = vpow.pop %v4052
        %v4054 = vmul.f32 %v3428, 1.442695
        %v4055 = vpow.pop %v4054
        %v4056 = vmul.f32 %v3429, 1.442695
        %v4057 = vpow.pop %v4056
        %v4058 = vmul.f32 %v3430, 1.442695
        %v4059 = vpow.pop %v4058
        %v4060 = vmul.f32 %v3431, 1.442695
        %v4061 = vpow.pop %v4060
        %v4062 = vmul.f32 %v3432, 1.442695
        %v4063 = vpow.pop %v4062
        %v4064 = vmul.f32 %v3433, 1.442695
        %v4065 = vpow.pop %v4064
        %v4066 = vmul.f32 %v3434, 1.442695
        %v4067 = vpow.pop %v4066
        %v4068 = vmul.f32 %v3435, 1.442695
        %v4069 = vpow.pop %v4068
        %v4070 = vmul.f32 %v3436, 1.442695
        %v4071 = vpow.pop %v4070
        %v4072 = vmul.f32 %v3437, 1.442695
        %v4073 = vpow.pop %v4072
        %v4074 = vmul.f32 %v3438, 1.442695
        %v4075 = vpow.pop %v4074
        %v4076 = vmul.f32 %v3439, 1.442695
        %v4077 = vpow.pop %v4076
        %v4078 = vmul.f32 %v3440, 1.442695
        %v4079 = vpow.pop %v4078
        %v4080 = vmul.f32 %v3441, 1.442695
        %v4081 = vpow.pop %v4080
        %v4082 = vmul.f32 %v3442, 1.442695
        %v4083 = vpow.pop %v4082
        %v4084 = vmul.f32 %v3443, 1.442695
        %v4085 = vpow.pop %v4084
        %v4086 = vmul.f32 %v3444, 1.442695
        %v4087 = vpow.pop %v4086
        %v4088 = vmul.f32 %v3445, 1.442695
        %v4089 = vpow.pop %v4088
        %v4090 = vmul.f32 %v3446, 1.442695
        %v4091 = vpow.pop %v4090
        %v4092 = vmul.f32 %v3447, 1.442695
        %v4093 = vpow.pop %v4092
        %v4094 = vmul.f32 %v3448, 1.442695
        %v4095 = vpow.pop %v4094
        %v4096 = vmul.f32 %v3449, 1.442695
        %v4097 = vpow.pop %v4096
        %v4098 = vmul.f32 %v3450, 1.442695
        %v4099 = vpow.pop %v4098
        %v4100 = vmul.f32 %v3451, 1.442695
        %v4101 = vpow.pop %v4100
        %v4102 = vmul.f32 %v3452, 1.442695
        %v4103 = vpow.pop %v4102
        %v4104 = vmul.f32 %v3453, 1.442695
        %v4105 = vpow.pop %v4104
        %v4106 = vmul.f32 %v3454, 1.442695
        %v4107 = vpow.pop %v4106
        %v4108 = vmul.f32 %v3455, 1.442695
        %v4109 = vpow.pop %v4108
        %v4110 = vmul.f32 %v3456, 1.442695
        %v4111 = vpow.pop %v4110
        %v4112 = vmul.f32 %v3457, 1.442695
        %v4113 = vpow.pop %v4112
        %v4114 = vmul.f32 %v3458, 1.442695
        %v4115 = vpow.pop %v4114
        %v4116 = vmul.f32 %v3459, 1.442695
        %v4117 = vpow.pop %v4116
        %v4118 = vmul.f32 %v3460, 1.442695
        %v4119 = vpow.pop %v4118
        %v4120 = vmul.f32 %v3461, 1.442695
        %v4121 = vpow.pop %v4120
        %v4122 = vmul.f32 %v3462, 1.442695
        %v4123 = vpow.pop %v4122
        %v4124 = vmul.f32 %v3463, 1.442695
        %v4125 = vpow.pop %v4124
        %v4126 = vmul.f32 %v3464, 1.442695
        %v4127 = vpow.pop %v4126
        %v4128 = vmul.f32 %v3465, 1.442695
        %v4129 = vpow.pop %v4128
        %v4130 = vmul.f32 %v3466, 1.442695
        %v4131 = vpow.pop %v4130
        %v4132 = vmul.f32 %v3467, 1.442695
        %v4133 = vpow.pop %v4132
        %v4134 = vmul.f32 %v3468, 1.442695
        %v4135 = vpow.pop %v4134
        %v4136 = vmul.f32 %v3469, 1.442695
        %v4137 = vpow.pop %v4136
        %v4138 = vmul.f32 %v3470, 1.442695
        %v4139 = vpow.pop %v4138
        %v4140 = vmul.f32 %v3471, 1.442695
        %v4141 = vpow.pop %v4140
        %v4142 = vmul.f32 %v3472, 1.442695
        %v4143 = vpow.pop %v4142
        %v4144 = vmul.f32 %v3473, 1.442695
        %v4145 = vpow.pop %v4144
        %v4146 = vmul.f32 %v3474, 1.442695
        %v4147 = vpow.pop %v4146
        %v4148 = vmul.f32 %v3475, 1.442695
        %v4149 = vpow.pop %v4148
        %v4150 = vmul.f32 %v3476, 1.442695
        %v4151 = vpow.pop %v4150
        %v4152 = vmul.f32 %v3477, 1.442695
        %v4153 = vpow.pop %v4152
        %v4154 = vmul.f32 %v3478, 1.442695
        %v4155 = vpow.pop %v4154
        %v4156 = vmul.f32 %v3479, 1.442695
        %v4157 = vpow.pop %v4156
        %v4158 = vmul.f32 %v3480, 1.442695
        %v4159 = vpow.pop %v4158
        %v4160 = vmul.f32 %v3481, 1.442695
        %v4161 = vpow.pop %v4160
        %v4162 = vmul.f32 %v3482, 1.442695
        %v4163 = vpow.pop %v4162
        %v4164 = vmul.f32 %v3483, 1.442695
        %v4165 = vpow.pop %v4164
        %v4166 = vmul.f32 %v3484, 1.442695
        %v4167 = vpow.pop %v4166
        %v4168 = vmul.f32 %v3485, 1.442695
        %v4169 = vpow.pop %v4168
        %v4170 = vmul.f32 %v3486, 1.442695
        %v4171 = vpow.pop %v4170
        %v4172 = vmul.f32 %v3487, 1.442695
        %v4173 = vpow.pop %v4172
        %v4174 = vmul.f32 %v3488, 1.442695
        %v4175 = vpow.pop %v4174
        %v4176 = vmul.f32 %v3489, 1.442695
        %v4177 = vpow.pop %v4176
        %v4178 = vmul.f32 %v3490, 1.442695
        %v4179 = vpow.pop %v4178
        %v4180 = vmul.f32 %v3491, 1.442695
        %v4181 = vpow.pop %v4180
        %v4182 = vmul.f32 %v3492, 1.442695
        %v4183 = vpow.pop %v4182
        %v4184 = vmul.f32 %v3493, 1.442695
        %v4185 = vpow.pop %v4184
        %v4186 = vmul.f32 %v3494, 1.442695
        %v4187 = vpow.pop %v4186
        %v4188 = vmul.f32 %v3495, 1.442695
        %v4189 = vpow.pop %v4188
        %v4190 = vmul.f32 %v3496, 1.442695
        %v4191 = vpow.pop %v4190
        %v4192 = vmul.f32 %v3497, 1.442695
        %v4193 = vpow.pop %v4192
        %v4194 = vmul.f32 %v3498, 1.442695
        %v4195 = vpow.pop %v4194
        %v4196 = vmul.f32 %v3499, 1.442695
        %v4197 = vpow.pop %v4196
        %v4198 = vmul.f32 %v3500, 1.442695
        %v4199 = vpow.pop %v4198
        %v4200 = vmul.f32 %v3501, 1.442695
        %v4201 = vpow.pop %v4200
        %v4202 = vmul.f32 %v3502, 1.442695
        %v4203 = vpow.pop %v4202
        %v4204 = vmul.f32 %v3503, 1.442695
        %v4205 = vpow.pop %v4204
        %v4206 = vmul.f32 %v3504, 1.442695
        %v4207 = vpow.pop %v4206
        %v4208 = vmul.f32 %v3505, 1.442695
        %v4209 = vpow.pop %v4208
        %v4210 = vmul.f32 %v3506, 1.442695
        %v4211 = vpow.pop %v4210
        %v4212 = vmul.f32 %v3507, 1.442695
        %v4213 = vpow.pop %v4212
        %v4214 = vmul.f32 %v3508, 1.442695
        %v4215 = vpow.pop %v4214
        %v4216 = vmul.f32 %v3509, 1.442695
        %v4217 = vpow.pop %v4216
        %v4218 = vmul.f32 %v3510, 1.442695
        %v4219 = vpow.pop %v4218
        %v4220 = vmul.f32 %v3511, 1.442695
        %v4221 = vpow.pop %v4220
        %v4222 = vmul.f32 %v3512, 1.442695
        %v4223 = vpow.pop %v4222
        %v4224 = vmul.f32 %v3513, 1.442695
        %v4225 = vpow.pop %v4224
        %v4226 = vmul.f32 %v3514, 1.442695
        %v4227 = vpow.pop %v4226
        %v4228 = vmul.f32 %v3515, 1.442695
        %v4229 = vpow.pop %v4228
        %v4230 = vmul.f32 %v3516, 1.442695
        %v4231 = vpow.pop %v4230
        %v4232 = vmul.f32 %v3517, 1.442695
        %v4233 = vpow.pop %v4232
        %v4234 = vmul.f32 %v3518, 1.442695
        %v4235 = vpow.pop %v4234
        %v4236 = vmul.f32 %v3519, 1.442695
        %v4237 = vpow.pop %v4236
        %v4238 = vmul.f32 %v3520, 1.442695
        %v4239 = vpow.pop %v4238
        %v4240 = vmul.f32 %v3521, 1.442695
        %v4241 = vpow.pop %v4240
        %v4242 = vmul.f32 %v3522, 1.442695
        %v4243 = vpow.pop %v4242
        %v4244 = vmul.f32 %v3523, 1.442695
        %v4245 = vpow.pop %v4244
        %v4246 = vmul.f32 %v3524, 1.442695
        %v4247 = vpow.pop %v4246
        %v4248 = vmul.f32 %v3525, 1.442695
        %v4249 = vpow.pop %v4248
        %v4250 = vmul.f32 %v3526, 1.442695
        %v4251 = vpow.pop %v4250
        %v4252 = vmul.f32 %v3527, 1.442695
        %v4253 = vpow.pop %v4252
        %v4254 = vmul.f32 %v3528, 1.442695
        %v4255 = vpow.pop %v4254
        %v4256 = vmul.f32 %v3529, 1.442695
        %v4257 = vpow.pop %v4256
        %v4258 = vmul.f32 %v3530, 1.442695
        %v4259 = vpow.pop %v4258
        %v4260 = vmul.f32 %v3531, 1.442695
        %v4261 = vpow.pop %v4260
        %v4262 = vmul.f32 %v3532, 1.442695
        %v4263 = vpow.pop %v4262
        %v4264 = vmul.f32 %v3533, 1.442695
        %v4265 = vpow.pop %v4264
        %v4266 = vmul.f32 %v3534, 1.442695
        %v4267 = vpow.pop %v4266
        %v4268 = vmul.f32 %v3535, 1.442695
        %v4269 = vpow.pop %v4268
        %v4270 = vmul.f32 %v3536, 1.442695
        %v4271 = vpow.pop %v4270
        %v4272 = vmul.f32 %v3537, 1.442695
        %v4273 = vpow.pop %v4272
        %v4274 = vmul.f32 %v3538, 1.442695
        %v4275 = vpow.pop %v4274
        %v4276 = vmul.f32 %v3539, 1.442695
        %v4277 = vpow.pop %v4276
        %v4278 = vmul.f32 %v3540, 1.442695
        %v4279 = vpow.pop %v4278
        %v4280 = vmul.f32 %v3541, 1.442695
        %v4281 = vpow.pop %v4280
        %v4282 = vmul.f32 %v3542, 1.442695
        %v4283 = vpow.pop %v4282
        %v4284 = vmul.f32 %v3543, 1.442695
        %v4285 = vpow.pop %v4284
        %v4286 = vmul.f32 %v3544, 1.442695
        %v4287 = vpow.pop %v4286
        %v4288 = vmul.f32 %v3545, 1.442695
        %v4289 = vpow.pop %v4288
        %v4290 = vmul.f32 %v3546, 1.442695
        %v4291 = vpow.pop %v4290
        %v4292 = vmul.f32 %v3547, 1.442695
        %v4293 = vpow.pop %v4292
        %v4294 = vmul.f32 %v3548, 1.442695
        %v4295 = vpow.pop %v4294
        %v4296 = vmul.f32 %v3549, 1.442695
        %v4297 = vpow.pop %v4296
        %v4298 = vmul.f32 %v3550, 1.442695
        %v4299 = vpow.pop %v4298
        %v4300 = vmul.f32 %v3551, 1.442695
        %v4301 = vpow.pop %v4300
        %v4302 = vmul.f32 %v3552, 1.442695
        %v4303 = vpow.pop %v4302
        %v4304 = vmul.f32 %v3553, 1.442695
        %v4305 = vpow.pop %v4304
        %v4306 = vmul.f32 %v3554, 1.442695
        %v4307 = vpow.pop %v4306
        %v4308 = vmul.f32 %v3555, 1.442695
        %v4309 = vpow.pop %v4308
        %v4310 = vmul.f32 %v3556, 1.442695
        %v4311 = vpow.pop %v4310
        %v4312 = vmul.f32 %v3557, 1.442695
        %v4313 = vpow.pop %v4312
        %v4314 = vmul.f32 %v3558, 1.442695
        %v4315 = vpow.pop %v4314
        %v4316 = vmul.f32 %v3559, 1.442695
        %v4317 = vpow.pop %v4316
        %v4318 = vmul.f32 %v3560, 1.442695
        %v4319 = vpow.pop %v4318
        %v4320 = vmul.f32 %v3561, 1.442695
        %v4321 = vpow.pop %v4320
        %v4322 = vmul.f32 %v3562, 1.442695
        %v4323 = vpow.pop %v4322
        %v4324 = vmul.f32 %v3563, 1.442695
        %v4325 = vpow.pop %v4324
        %v4326 = vmul.f32 %v3564, 1.442695
        %v4327 = vpow.pop %v4326
        %v4328 = vmul.f32 %v3565, 1.442695
        %v4329 = vpow.pop %v4328
        %v4330 = vmul.f32 %v3566, 1.442695
        %v4331 = vpow.pop %v4330
        %v4332 = vmul.f32 %v3567, 1.442695
        %v4333 = vpow.pop %v4332
        %v4334 = vmul.f32 %v3568, 1.442695
        %v4335 = vpow.pop %v4334
        %v4336 = vmul.f32 %v3569, 1.442695
        %v4337 = vpow.pop %v4336
        %v4338 = vmul.f32 %v3570, 1.442695
        %v4339 = vpow.pop %v4338
        %v4340 = vmul.f32 %v3571, 1.442695
        %v4341 = vpow.pop %v4340
        %v4342 = vmul.f32 %v3572, 1.442695
        %v4343 = vpow.pop %v4342
        %v4344 = vmul.f32 %v3573, 1.442695
        %v4345 = vpow.pop %v4344
        %v4346 = vmul.f32 %v3574, 1.442695
        %v4347 = vpow.pop %v4346
        %v4348 = vmul.f32 %v3575, 1.442695
        %v4349 = vpow.pop %v4348
        %v4350 = vmul.f32 %v3576, 1.442695
        %v4351 = vpow.pop %v4350
        %v4352 = vmul.f32 %v3577, 1.442695
        %v4353 = vpow.pop %v4352
        %v4354 = vmul.f32 %v3578, 1.442695
        %v4355 = vpow.pop %v4354
        %v4356 = vmul.f32 %v3579, 1.442695
        %v4357 = vpow.pop %v4356
        %v4358 = vmul.f32 %v3580, 1.442695
        %v4359 = vpow.pop %v4358
        %v4360 = vmul.f32 %v3581, 1.442695
        %v4361 = vpow.pop %v4360
        %v4362 = vmul.f32 %v3582, 1.442695
        %v4363 = vpow.pop %v4362
        %v4364 = vmul.f32 %v3583, 1.442695
        %v4365 = vpow.pop %v4364
        %v4366 = vmul.f32 %v3584, 1.442695
        %v4367 = vpow.pop %v4366
        %v4368 = vmul.f32 %v3585, 1.442695
        %v4369 = vpow.pop %v4368
        %v4370 = vmul.f32 %v3586, 1.442695
        %v4371 = vpow.pop %v4370
        %v4372 = vmul.f32 %v3587, 1.442695
        %v4373 = vpow.pop %v4372
        %v4374 = vmul.f32 %v3588, 1.442695
        %v4375 = vpow.pop %v4374
        %v4376 = vmul.f32 %v3589, 1.442695
        %v4377 = vpow.pop %v4376
        %v4378 = vmul.f32 %v3590, 1.442695
        %v4379 = vpow.pop %v4378
        %v4380 = vmul.f32 %v3591, 1.442695
        %v4381 = vpow.pop %v4380
        %v4382 = vmul.f32 %v3592, 1.442695
        %v4383 = vpow.pop %v4382
        %v4384 = vmul.f32 %v3593, 1.442695
        %v4385 = vpow.pop %v4384
        %v4386 = vmul.f32 %v3594, 1.442695
        %v4387 = vpow.pop %v4386
        %v4388 = vmul.f32 %v3595, 1.442695
        %v4389 = vpow.pop %v4388
        %v4390 = vmul.f32 %v3596, 1.442695
        %v4391 = vpow.pop %v4390
        %v4392 = vmul.f32 %v3597, 1.442695
        %v4393 = vpow.pop %v4392
        %v4394 = vmul.f32 %v3598, 1.442695
        %v4395 = vpow.pop %v4394
        %v4396 = vmul.f32 %v3599, 1.442695
        %v4397 = vpow.pop %v4396
        %v4398 = vmul.f32 %v3600, 1.442695
        %v4399 = vpow.pop %v4398
        %v4400 = vmul.f32 %v3601, 1.442695
        %v4401 = vpow.pop %v4400
        %v4402 = vmul.f32 %v3602, 1.442695
        %v4403 = vpow.pop %v4402
        %v4404 = vmul.f32 %v3603, 1.442695
        %v4405 = vpow.pop %v4404
        %v4406 = vmul.f32 %v3604, 1.442695
        %v4407 = vpow.pop %v4406
        %v4408 = vmul.f32 %v3605, 1.442695
        %v4409 = vpow.pop %v4408
        %v4410 = vmul.f32 %v3606, 1.442695
        %v4411 = vpow.pop %v4410
        %v4412 = vmul.f32 %v3607, 1.442695
        %v4413 = vpow.pop %v4412
        %v4414 = vmul.f32 %v3608, 1.442695
        %v4415 = vpow.pop %v4414
        %v4416 = vmul.f32 %v3609, 1.442695
        %v4417 = vpow.pop %v4416
        %v4418 = vmul.f32 %v3610, 1.442695
        %v4419 = vpow.pop %v4418
        %v4420 = vmul.f32 %v3611, 1.442695
        %v4421 = vpow.pop %v4420
        %v4422 = vmul.f32 %v3612, 1.442695
        %v4423 = vpow.pop %v4422
        %v4424 = vmul.f32 %v3613, 1.442695
        %v4425 = vpow.pop %v4424
        %v4426 = vmul.f32 %v3614, 1.442695
        %v4427 = vpow.pop %v4426
        %v4428 = vmul.f32 %v3615, 1.442695
        %v4429 = vpow.pop %v4428
        %v4430 = vmul.f32 %v3616, 1.442695
        %v4431 = vpow.pop %v4430
        %v4432 = vmul.f32 %v3617, 1.442695
        %v4433 = vpow.pop %v4432
        %v4434 = vmul.f32 %v3618, 1.442695
        %v4435 = vpow.pop %v4434
        %v4436 = vmul.f32 %v3619, 1.442695
        %v4437 = vpow.pop %v4436
        %v4438 = vmul.f32 %v3620, 1.442695
        %v4439 = vpow.pop %v4438
        %v4440 = vmul.f32 %v3621, 1.442695
        %v4441 = vpow.pop %v4440
        %v4442 = vmul.f32 %v3622, 1.442695
        %v4443 = vpow.pop %v4442
        %v4444 = vmul.f32 %v3623, 1.442695
        %v4445 = vpow.pop %v4444
        %v4446 = vmul.f32 %v3624, 1.442695
        %v4447 = vpow.pop %v4446
        %v4448 = vmul.f32 %v3625, 1.442695
        %v4449 = vpow.pop %v4448
        %v4450 = vmul.f32 %v3626, 1.442695
        %v4451 = vpow.pop %v4450
        %v4452 = vmul.f32 %v3627, 1.442695
        %v4453 = vpow.pop %v4452
        %v4454 = vmul.f32 %v3628, 1.442695
        %v4455 = vpow.pop %v4454
        %v4456 = vmul.f32 %v3629, 1.442695
        %v4457 = vpow.pop %v4456
        %v4458 = vmul.f32 %v3630, 1.442695
        %v4459 = vpow.pop %v4458
        %v4460 = vmul.f32 %v3631, 1.442695
        %v4461 = vpow.pop %v4460
        %v4462 = vmul.f32 %v3632, 1.442695
        %v4463 = vpow.pop %v4462
        %v4464 = vmul.f32 %v3633, 1.442695
        %v4465 = vpow.pop %v4464
        %v4466 = vmul.f32 %v3634, 1.442695
        %v4467 = vpow.pop %v4466
        %v4468 = vmul.f32 %v3635, 1.442695
        %v4469 = vpow.pop %v4468
        %v4470 = vmul.f32 %v3636, 1.442695
        %v4471 = vpow.pop %v4470
        %v4472 = vmul.f32 %v3637, 1.442695
        %v4473 = vpow.pop %v4472
        %v4474 = vmul.f32 %v3638, 1.442695
        %v4475 = vpow.pop %v4474
        %v4476 = vmul.f32 %v3639, 1.442695
        %v4477 = vpow.pop %v4476
        %v4478 = vmul.f32 %v3640, 1.442695
        %v4479 = vpow.pop %v4478
        %v4480 = vmul.f32 %v3641, 1.442695
        %v4481 = vpow.pop %v4480
        %v4482 = vmul.f32 %v3642, 1.442695
        %v4483 = vpow.pop %v4482
        %v4484 = vmul.f32 %v3643, 1.442695
        %v4485 = vpow.pop %v4484
        %v4486 = vmul.f32 %v3644, 1.442695
        %v4487 = vpow.pop %v4486
        %v4488 = vmul.f32 %v3645, 1.442695
        %v4489 = vpow.pop %v4488
        %v4490 = vmul.f32 %v3646, 1.442695
        %v4491 = vpow.pop %v4490
        %v4492 = vmul.f32 %v3647, 1.442695
        %v4493 = vpow.pop %v4492
        %v4494 = vmul.f32 %v3648, 1.442695
        %v4495 = vpow.pop %v4494
        %v4496 = vmul.f32 %v3649, 1.442695
        %v4497 = vpow.pop %v4496
        %v4498 = vmul.f32 %v3650, 1.442695
        %v4499 = vpow.pop %v4498
        %v4500 = vmul.f32 %v3651, 1.442695
        %v4501 = vpow.pop %v4500
        %v4502 = vmul.f32 %v3652, 1.442695
        %v4503 = vpow.pop %v4502
        %v4504 = vmul.f32 %v3653, 1.442695
        %v4505 = vpow.pop %v4504
        %v4506 = vmul.f32 %v3654, 1.442695
        %v4507 = vpow.pop %v4506
        %v4508 = vmul.f32 %v3655, 1.442695
        %v4509 = vpow.pop %v4508
        %v4510 = vmul.f32 %v3656, 1.442695
        %v4511 = vpow.pop %v4510
        %v4512 = vmul.f32 %v3657, 1.442695
        %v4513 = vpow.pop %v4512
        %v4514 = vmul.f32 %v3658, 1.442695
        %v4515 = vpow.pop %v4514
        %v4516 = vmul.f32 %v3659, 1.442695
        %v4517 = vpow.pop %v4516
        %v4518 = vmul.f32 %v3660, 1.442695
        %v4519 = vpow.pop %v4518
        %v4520 = vmul.f32 %v3661, 1.442695
        %v4521 = vpow.pop %v4520
        %v4522 = vmul.f32 %v3662, 1.442695
        %v4523 = vpow.pop %v4522
        %v4524 = vmul.f32 %v3663, 1.442695
        %v4525 = vpow.pop %v4524
        %v4526 = vmul.f32 %v3664, 1.442695
        %v4527 = vpow.pop %v4526
        %v4528 = vmul.f32 %v3665, 1.442695
        %v4529 = vpow.pop %v4528
        %v4530 = vmul.f32 %v3666, 1.442695
        %v4531 = vpow.pop %v4530
        %v4532 = vmul.f32 %v3667, 1.442695
        %v4533 = vpow.pop %v4532
        %v4534 = vmul.f32 %v3668, 1.442695
        %v4535 = vpow.pop %v4534
        %v4536 = vmul.f32 %v3669, 1.442695
        %v4537 = vpow.pop %v4536
        %v4538 = vmul.f32 %v3670, 1.442695
        %v4539 = vpow.pop %v4538
        %v4540 = vmul.f32 %v3671, 1.442695
        %v4541 = vpow.pop %v4540
        %v4542 = vmul.f32 %v3672, 1.442695
        %v4543 = vpow.pop %v4542
        %v4544 = vmul.f32 %v3673, 1.442695
        %v4545 = vpow.pop %v4544
        %v4546 = vmul.f32 %v3674, 1.442695
        %v4547 = vpow.pop %v4546
        %v4548 = vmul.f32 %v3675, 1.442695
        %v4549 = vpow.pop %v4548
        %v4550 = vmul.f32 %v3676, 1.442695
        %v4551 = vpow.pop %v4550
        %v4552 = vmul.f32 %v3677, 1.442695
        %v4553 = vpow.pop %v4552
        %v4554 = vmul.f32 %v3678, 1.442695
        %v4555 = vpow.pop %v4554
        %v4556 = vmul.f32 %v3679, 1.442695
        %v4557 = vpow.pop %v4556
        %v4558 = vmul.f32 %v3680, 1.442695
        %v4559 = vpow.pop %v4558
        %v4560 = vmul.f32 %v3681, 1.442695
        %v4561 = vpow.pop %v4560
        %v4562 = vmul.f32 %v3682, 1.442695
        %v4563 = vpow.pop %v4562
        %v4564 = vmul.f32 %v3683, 1.442695
        %v4565 = vpow.pop %v4564
        %v4566 = vmul.f32 %v3684, 1.442695
        %v4567 = vpow.pop %v4566
        %v4568 = vmul.f32 %v3685, 1.442695
        %v4569 = vpow.pop %v4568
        %v4570 = vmul.f32 %v3686, 1.442695
        %v4571 = vpow.pop %v4570
        %v4572 = vmul.f32 %v3687, 1.442695
        %v4573 = vpow.pop %v4572
        %v4574 = vmul.f32 %v3688, 1.442695
        %v4575 = vpow.pop %v4574
        %v4576 = vmul.f32 %v3689, 1.442695
        %v4577 = vpow.pop %v4576
        %v4578 = vmul.f32 %v3690, 1.442695
        %v4579 = vpow.pop %v4578
        %v4580 = vmul.f32 %v3691, 1.442695
        %v4581 = vpow.pop %v4580
        %v4582 = vmul.f32 %v3692, 1.442695
        %v4583 = vpow.pop %v4582
        %v4584 = vmul.f32 %v3693, 1.442695
        %v4585 = vpow.pop %v4584
        %v4586 = vmul.f32 %v3694, 1.442695
        %v4587 = vpow.pop %v4586
        %v4588 = vmul.f32 %v3695, 1.442695
        %v4589 = vpow.pop %v4588
        %v4590 = vmul.f32 %v3696, 1.442695
        %v4591 = vpow.pop %v4590
        %v4592 = vmul.f32 %v3697, 1.442695
        %v4593 = vpow.pop %v4592
        %v4594 = vmul.f32 %v3698, 1.442695
        %v4595 = vpow.pop %v4594
        %v4596 = vmul.f32 %v3699, 1.442695
        %v4597 = vpow.pop %v4596
        %v4598 = vmul.f32 %v3700, 1.442695
        %v4599 = vpow.pop %v4598
        %v4600 = vmul.f32 %v3701, 1.442695
        %v4601 = vpow.pop %v4600
        %v4602 = vmul.f32 %v3702, 1.442695
        %v4603 = vpow.pop %v4602
        %v4604 = vmul.f32 %v3703, 1.442695
        %v4605 = vpow.pop %v4604
        %v4606 = vmul.f32 %v3704, 1.442695
        %v4607 = vpow.pop %v4606
        %v4608 = vmul.f32 %v3705, 1.442695
        %v4609 = vpow.pop %v4608
        %v4610 = vmul.f32 %v3706, 1.442695
        %v4611 = vpow.pop %v4610
        %v4612 = vmul.f32 %v3707, 1.442695
        %v4613 = vpow.pop %v4612
        %v4614 = vmul.f32 %v3708, 1.442695
        %v4615 = vpow.pop %v4614
        %v4616 = vmul.f32 %v3709, 1.442695
        %v4617 = vpow.pop %v4616
        %v4618 = vmul.f32 %v3710, 1.442695
        %v4619 = vpow.pop %v4618
        %v4620 = vmul.f32 %v3711, 1.442695
        %v4621 = vpow.pop %v4620
        %v4622 = vmul.f32 %v3712, 1.442695
        %v4623 = vpow.pop %v4622
        %v4624 = vmul.f32 %v3713, 1.442695
        %v4625 = vpow.pop %v4624
        %v4626 = vmul.f32 %v3714, 1.442695
        %v4627 = vpow.pop %v4626
        %v4628 = vmul.f32 %v3715, 1.442695
        %v4629 = vpow.pop %v4628
        %v4630 = vmul.f32 %v3716, 1.442695
        %v4631 = vpow.pop %v4630
        %v4632 = vmul.f32 %v3717, 1.442695
        %v4633 = vpow.pop %v4632
        %v4634 = vmul.f32 %v3718, 1.442695
        %v4635 = vpow.pop %v4634
        %v4636 = vmul.f32 %v3719, 1.442695
        %v4637 = vpow.pop %v4636
        %v4638 = vmul.f32 %v3720, 1.442695
        %v4639 = vpow.pop %v4638
        %v4640 = vmul.f32 %v3721, 1.442695
        %v4641 = vpow.pop %v4640
        %v4642 = vmul.f32 %v3722, 1.442695
        %v4643 = vpow.pop %v4642
        %v4644 = vmul.f32 %v3723, 1.442695
        %v4645 = vpow.pop %v4644
        %v4646 = vmul.f32 %v3724, 1.442695
        %v4647 = vpow.pop %v4646
        %v4648 = vmul.f32 %v3725, 1.442695
        %v4649 = vpow.pop %v4648
        %v4650 = vmul.f32 %v3726, 1.442695
        %v4651 = vpow.pop %v4650
        %v4652 = vmul.f32 %v3727, 1.442695
        %v4653 = vpow.pop %v4652
        %v4654 = vmul.f32 %v3728, 1.442695
        %v4655 = vpow.pop %v4654
        %v4656 = vmul.f32 %v3729, 1.442695
        %v4657 = vpow.pop %v4656
        %v4658 = vmul.f32 %v3730, 1.442695
        %v4659 = vpow.pop %v4658
        %v4660 = vmul.f32 %v3731, 1.442695
        %v4661 = vpow.pop %v4660
        %v4662 = vmul.f32 %v3732, 1.442695
        %v4663 = vpow.pop %v4662
        %v4664 = vmul.f32 %v3733, 1.442695
        %v4665 = vpow.pop %v4664
        %v4666 = vmul.f32 %v3734, 1.442695
        %v4667 = vpow.pop %v4666
        %v4668 = vmul.f32 %v3735, 1.442695
        %v4669 = vpow.pop %v4668
        %v4670 = vmul.f32 %v3736, 1.442695
        %v4671 = vpow.pop %v4670
        %v4672 = vmul.f32 %v3737, 1.442695
        %v4673 = vpow.pop %v4672
        %v4674 = vmul.f32 %v3738, 1.442695
        %v4675 = vpow.pop %v4674
        %v4676 = vmul.f32 %v3739, 1.442695
        %v4677 = vpow.pop %v4676
        %v4678 = vmul.f32 %v3740, 1.442695
        %v4679 = vpow.pop %v4678
        %v4680 = vmul.f32 %v3741, 1.442695
        %v4681 = vpow.pop %v4680
        %v4682 = vmul.f32 %v3742, 1.442695
        %v4683 = vpow.pop %v4682
        %v4684 = vmul.f32 %v3743, 1.442695
        %v4685 = vpow.pop %v4684
        %v4686 = vmul.f32 %v3744, 1.442695
        %v4687 = vpow.pop %v4686
        %v4688 = vmul.f32 %v3745, 1.442695
        %v4689 = vpow.pop %v4688
        %v4690 = vmul.f32 %v3746, 1.442695
        %v4691 = vpow.pop %v4690
        %v4692 = vmul.f32 %v3747, 1.442695
        %v4693 = vpow.pop %v4692
        %v4694 = vmul.f32 %v3748, 1.442695
        %v4695 = vpow.pop %v4694
        %v4696 = vmul.f32 %v3749, 1.442695
        %v4697 = vpow.pop %v4696
        %v4698 = vmul.f32 %v3750, 1.442695
        %v4699 = vpow.pop %v4698
        %v4700 = vmul.f32 %v3751, 1.442695
        %v4701 = vpow.pop %v4700
        %v4702 = vmul.f32 %v3752, 1.442695
        %v4703 = vpow.pop %v4702
        %v4704 = vmul.f32 %v3753, 1.442695
        %v4705 = vpow.pop %v4704
        %v4706 = vmul.f32 %v3754, 1.442695
        %v4707 = vpow.pop %v4706
        %v4708 = vmul.f32 %v3755, 1.442695
        %v4709 = vpow.pop %v4708
        %v4710 = vmul.f32 %v3756, 1.442695
        %v4711 = vpow.pop %v4710
        %v4712 = vmul.f32 %v3757, 1.442695
        %v4713 = vpow.pop %v4712
        %v4714 = vmul.f32 %v3758, 1.442695
        %v4715 = vpow.pop %v4714
        %v4716 = vmul.f32 %v3759, 1.442695
        %v4717 = vpow.pop %v4716
        %v4718 = vmul.f32 %v3760, 1.442695
        %v4719 = vpow.pop %v4718
        %v4720 = vmul.f32 %v3761, 1.442695
        %v4721 = vpow.pop %v4720
        %v4722 = vmul.f32 %v3762, 1.442695
        %v4723 = vpow.pop %v4722
        %v4724 = vmul.f32 %v3763, 1.442695
        %v4725 = vpow.pop %v4724
        %v4726 = vmul.f32 %v3764, 1.442695
        %v4727 = vpow.pop %v4726
        %v4728 = vmul.f32 %v3765, 1.442695
        %v4729 = vpow.pop %v4728
        %v4730 = vmul.f32 %v3766, 1.442695
        %v4731 = vpow.pop %v4730
        %v4732 = vmul.f32 %v3767, 1.442695
        %v4733 = vpow.pop %v4732
        %v4734 = vmul.f32 %v3768, 1.442695
        %v4735 = vpow.pop %v4734
        %v4736 = vmul.f32 %v3769, 1.442695
        %v4737 = vpow.pop %v4736
        %v4738 = vmul.f32 %v3770, 1.442695
        %v4739 = vpow.pop %v4738
        %v4740 = vmul.f32 %v3771, 1.442695
        %v4741 = vpow.pop %v4740
        %v4742 = vmul.f32 %v3772, 1.442695
        %v4743 = vpow.pop %v4742
        %v4744 = vmul.f32 %v3773, 1.442695
        %v4745 = vpow.pop %v4744
        %v4746 = vmul.f32 %v3774, 1.442695
        %v4747 = vpow.pop %v4746
        %v4748 = vmul.f32 %v3775, 1.442695
        %v4749 = vpow.pop %v4748
        %v4750 = vmul.f32 %v3776, 1.442695
        %v4751 = vpow.pop %v4750
        %v4752 = vmul.f32 %v3777, 1.442695
        %v4753 = vpow.pop %v4752
        %v4754 = vmul.f32 %v3778, 1.442695
        %v4755 = vpow.pop %v4754
        %v4756 = vmul.f32 %v3779, 1.442695
        %v4757 = vpow.pop %v4756
        %v4758 = vmul.f32 %v3780, 1.442695
        %v4759 = vpow.pop %v4758
        %v4760 = vmul.f32 %v3781, 1.442695
        %v4761 = vpow.pop %v4760
        %v4762 = vmul.f32 %v3782, 1.442695
        %v4763 = vpow.pop %v4762
        %v4764 = vmul.f32 %v3783, 1.442695
        %v4765 = vpow.pop %v4764
        %v4766 = vmul.f32 %v3784, 1.442695
        %v4767 = vpow.pop %v4766
        %v4768 = vmul.f32 %v3785, 1.442695
        %v4769 = vpow.pop %v4768
        %v4770 = vmul.f32 %v3786, 1.442695
        %v4771 = vpow.pop %v4770
        %v4772 = vmul.f32 %v3787, 1.442695
        %v4773 = vpow.pop %v4772
        %v4774 = vmul.f32 %v3788, 1.442695
        %v4775 = vpow.pop %v4774
        %v4776 = vmul.f32 %v3789, 1.442695
        %v4777 = vpow.pop %v4776
        %v4778 = vmul.f32 %v3790, 1.442695
        %v4779 = vpow.pop %v4778
        %v4780 = vmul.f32 %v3791, 1.442695
        %v4781 = vpow.pop %v4780
        %v4782 = vmul.f32 %v3792, 1.442695
        %v4783 = vpow.pop %v4782
        %v4784 = vmul.f32 %v3793, 1.442695
        %v4785 = vpow.pop %v4784
        %v4786 = vmul.f32 %v3794, 1.442695
        %v4787 = vpow.pop %v4786
        %v4788 = vmul.f32 %v3795, 1.442695
        %v4789 = vpow.pop %v4788
        %v4790 = vmul.f32 %v3796, 1.442695
        %v4791 = vpow.pop %v4790
        %v4792 = vmul.f32 %v3797, 1.442695
        %v4793 = vpow.pop %v4792
        %v4794 = vmul.f32 %v3798, 1.442695
        %v4795 = vpow.pop %v4794
        %v4796 = vmul.f32 %v3799, 1.442695
        %v4797 = vpow.pop %v4796
        %v4798 = vmul.f32 %v3800, 1.442695
        %v4799 = vpow.pop %v4798
        %v4800 = vmul.f32 %v3801, 1.442695
        %v4801 = vpow.pop %v4800
        %v4802 = vmul.f32 %v3802, 1.442695
        %v4803 = vpow.pop %v4802
        %v4804 = vmul.f32 %v3803, 1.442695
        %v4805 = vpow.pop %v4804
        %v4806 = vmul.f32 %v3804, 1.442695
        %v4807 = vpow.pop %v4806
        %v4808 = vmul.f32 %v3805, 1.442695
        %v4809 = vpow.pop %v4808
        %v4810 = vmul.f32 %v3806, 1.442695
        %v4811 = vpow.pop %v4810
        %v4812 = vmul.f32 %v3807, 1.442695
        %v4813 = vpow.pop %v4812
        %v4814 = vmul.f32 %v3808, 1.442695
        %v4815 = vpow.pop %v4814
        %v4816 = vmul.f32 %v3809, 1.442695
        %v4817 = vpow.pop %v4816
        %v4818 = vmul.f32 %v3810, 1.442695
        %v4819 = vpow.pop %v4818
        %v4820 = vmul.f32 %v3811, 1.442695
        %v4821 = vpow.pop %v4820
        %v4822 = vmul.f32 %v3812, 1.442695
        %v4823 = vpow.pop %v4822
        %v4824 = vmul.f32 %v3813, 1.442695
        %v4825 = vpow.pop %v4824
        %v4826 = vmul.f32 %v3814, 1.442695
        %v4827 = vpow.pop %v4826
        %v4828 = vmul.f32 %v3815, 1.442695
        %v4829 = vpow.pop %v4828
        %v4830 = vmul.f32 %v3816, 1.442695
        %v4831 = vpow.pop %v4830
        %v4832 = vmul.f32 %v3817, 1.442695
        %v4833 = vpow.pop %v4832
        %v4834 = vmul.f32 %v3818, 1.442695
        %v4835 = vpow.pop %v4834
        %v4836 = vmul.f32 %v3819, 1.442695
        %v4837 = vpow.pop %v4836
        %v4838 = vmul.f32 %v3820, 1.442695
        %v4839 = vpow.pop %v4838
        %v4840 = vmul.f32 %v3821, 1.442695
        %v4841 = vpow.pop %v4840
        %v4842 = vmul.f32 %v3822, 1.442695
        %v4843 = vpow.pop %v4842
        %v4844 = vmul.f32 %v3823, 1.442695
        %v4845 = vpow.pop %v4844
        %v4846 = vmul.f32 %v3824, 1.442695
        %v4847 = vpow.pop %v4846
        %v4848 = vmul.f32 %v3825, 1.442695
        %v4849 = vpow.pop %v4848
        %v4850 = vadd.f32 %v3827, 1.0
        %v4851 = vlog2.pop %v4850
        %v4852 = vmul.f32 %v4851, 0.6931472
        %v4853 = vmul.f32 -0.5, %v3827
        %v4854 = vadd.f32 %v4853, 1.0
        %v4855 = vmul.f32 %v4854, %v3827
        %v4856 = vand.u32 2147483647, %v3827
        %vm4857 = vcmp.lt.f32.partialorder %v4856, 0.0004427343
        %v4858 = vsel %vm4857, %v4855, %v4852
        %v4859 = vadd.f32 %v3829, 1.0
        %v4860 = vlog2.pop %v4859
        %v4861 = vmul.f32 %v4860, 0.6931472
        %v4862 = vmul.f32 -0.5, %v3829
        %v4863 = vadd.f32 %v4862, 1.0
        %v4864 = vmul.f32 %v4863, %v3829
        %v4865 = vand.u32 2147483647, %v3829
        %vm4866 = vcmp.lt.f32.partialorder %v4865, 0.0004427343
        %v4867 = vsel %vm4866, %v4864, %v4861
        %v4868 = vadd.f32 %v3831, 1.0
        %v4869 = vlog2.pop %v4868
        %v4870 = vmul.f32 %v4869, 0.6931472
        %v4871 = vmul.f32 -0.5, %v3831
        %v4872 = vadd.f32 %v4871, 1.0
        %v4873 = vmul.f32 %v4872, %v3831
        %v4874 = vand.u32 2147483647, %v3831
        %vm4875 = vcmp.lt.f32.partialorder %v4874, 0.0004427343
        %v4876 = vsel %vm4875, %v4873, %v4870
        %v4877 = vadd.f32 %v3833, 1.0
        %v4878 = vlog2.pop %v4877
        %v4879 = vmul.f32 %v4878, 0.6931472
        %v4880 = vmul.f32 -0.5, %v3833
        %v4881 = vadd.f32 %v4880, 1.0
        %v4882 = vmul.f32 %v4881, %v3833
        %v4883 = vand.u32 2147483647, %v3833
        %vm4884 = vcmp.lt.f32.partialorder %v4883, 0.0004427343
        %v4885 = vsel %vm4884, %v4882, %v4879
        %v4886 = vadd.f32 %v3835, 1.0
        %v4887 = vlog2.pop %v4886
        %v4888 = vmul.f32 %v4887, 0.6931472
        %v4889 = vmul.f32 -0.5, %v3835
        %v4890 = vadd.f32 %v4889, 1.0
        %v4891 = vmul.f32 %v4890, %v3835
        %v4892 = vand.u32 2147483647, %v3835
        %vm4893 = vcmp.lt.f32.partialorder %v4892, 0.0004427343
        %v4894 = vsel %vm4893, %v4891, %v4888
        %v4895 = vadd.f32 %v3837, 1.0
        %v4896 = vlog2.pop %v4895
        %v4897 = vmul.f32 %v4896, 0.6931472
        %v4898 = vmul.f32 -0.5, %v3837
        %v4899 = vadd.f32 %v4898, 1.0
        %v4900 = vmul.f32 %v4899, %v3837
        %v4901 = vand.u32 2147483647, %v3837
        %vm4902 = vcmp.lt.f32.partialorder %v4901, 0.0004427343
        %v4903 = vsel %vm4902, %v4900, %v4897
        %v4904 = vadd.f32 %v3839, 1.0
        %v4905 = vlog2.pop %v4904
        %v4906 = vmul.f32 %v4905, 0.6931472
        %v4907 = vmul.f32 -0.5, %v3839
        %v4908 = vadd.f32 %v4907, 1.0
        %v4909 = vmul.f32 %v4908, %v3839
        %v4910 = vand.u32 2147483647, %v3839
        %vm4911 = vcmp.lt.f32.partialorder %v4910, 0.0004427343
        %v4912 = vsel %vm4911, %v4909, %v4906
        %v4913 = vadd.f32 %v3841, 1.0
        %v4914 = vlog2.pop %v4913
        %v4915 = vmul.f32 %v4914, 0.6931472
        %v4916 = vmul.f32 -0.5, %v3841
        %v4917 = vadd.f32 %v4916, 1.0
        %v4918 = vmul.f32 %v4917, %v3841
        %v4919 = vand.u32 2147483647, %v3841
        %vm4920 = vcmp.lt.f32.partialorder %v4919, 0.0004427343
        %v4921 = vsel %vm4920, %v4918, %v4915
        %v4922 = vadd.f32 %v3843, 1.0
        %v4923 = vlog2.pop %v4922
        %v4924 = vmul.f32 %v4923, 0.6931472
        %v4925 = vmul.f32 -0.5, %v3843
        %v4926 = vadd.f32 %v4925, 1.0
        %v4927 = vmul.f32 %v4926, %v3843
        %v4928 = vand.u32 2147483647, %v3843
        %vm4929 = vcmp.lt.f32.partialorder %v4928, 0.0004427343
        %v4930 = vsel %vm4929, %v4927, %v4924
        %v4931 = vadd.f32 %v3845, 1.0
        %v4932 = vlog2.pop %v4931
        %v4933 = vmul.f32 %v4932, 0.6931472
        %v4934 = vmul.f32 -0.5, %v3845
        %v4935 = vadd.f32 %v4934, 1.0
        %v4936 = vmul.f32 %v4935, %v3845
        %v4937 = vand.u32 2147483647, %v3845
        %vm4938 = vcmp.lt.f32.partialorder %v4937, 0.0004427343
        %v4939 = vsel %vm4938, %v4936, %v4933
        %v4940 = vadd.f32 %v3847, 1.0
        %v4941 = vlog2.pop %v4940
        %v4942 = vmul.f32 %v4941, 0.6931472
        %v4943 = vmul.f32 -0.5, %v3847
        %v4944 = vadd.f32 %v4943, 1.0
        %v4945 = vmul.f32 %v4944, %v3847
        %v4946 = vand.u32 2147483647, %v3847
        %vm4947 = vcmp.lt.f32.partialorder %v4946, 0.0004427343
        %v4948 = vsel %vm4947, %v4945, %v4942
        %v4949 = vadd.f32 %v3849, 1.0
        %v4950 = vlog2.pop %v4949
        %v4951 = vmul.f32 %v4950, 0.6931472
        %v4952 = vmul.f32 -0.5, %v3849
        %v4953 = vadd.f32 %v4952, 1.0
        %v4954 = vmul.f32 %v4953, %v3849
        %v4955 = vand.u32 2147483647, %v3849
        %vm4956 = vcmp.lt.f32.partialorder %v4955, 0.0004427343
        %v4957 = vsel %vm4956, %v4954, %v4951
        %v4958 = vadd.f32 %v3851, 1.0
        %v4959 = vlog2.pop %v4958
        %v4960 = vmul.f32 %v4959, 0.6931472
        %v4961 = vmul.f32 -0.5, %v3851
        %v4962 = vadd.f32 %v4961, 1.0
        %v4963 = vmul.f32 %v4962, %v3851
        %v4964 = vand.u32 2147483647, %v3851
        %vm4965 = vcmp.lt.f32.partialorder %v4964, 0.0004427343
        %v4966 = vsel %vm4965, %v4963, %v4960
        %v4967 = vadd.f32 %v3853, 1.0
        %v4968 = vlog2.pop %v4967
        %v4969 = vmul.f32 %v4968, 0.6931472
        %v4970 = vmul.f32 -0.5, %v3853
        %v4971 = vadd.f32 %v4970, 1.0
        %v4972 = vmul.f32 %v4971, %v3853
        %v4973 = vand.u32 2147483647, %v3853
        %vm4974 = vcmp.lt.f32.partialorder %v4973, 0.0004427343
        %v4975 = vsel %vm4974, %v4972, %v4969
        %v4976 = vadd.f32 %v3855, 1.0
        %v4977 = vlog2.pop %v4976
        %v4978 = vmul.f32 %v4977, 0.6931472
        %v4979 = vmul.f32 -0.5, %v3855
        %v4980 = vadd.f32 %v4979, 1.0
        %v4981 = vmul.f32 %v4980, %v3855
        %v4982 = vand.u32 2147483647, %v3855
        %vm4983 = vcmp.lt.f32.partialorder %v4982, 0.0004427343
        %v4984 = vsel %vm4983, %v4981, %v4978
        %v4985 = vadd.f32 %v3857, 1.0
        %v4986 = vlog2.pop %v4985
        %v4987 = vmul.f32 %v4986, 0.6931472
        %v4988 = vmul.f32 -0.5, %v3857
        %v4989 = vadd.f32 %v4988, 1.0
        %v4990 = vmul.f32 %v4989, %v3857
        %v4991 = vand.u32 2147483647, %v3857
        %vm4992 = vcmp.lt.f32.partialorder %v4991, 0.0004427343
        %v4993 = vsel %vm4992, %v4990, %v4987
        %v4994 = vadd.f32 %v3859, 1.0
        %v4995 = vlog2.pop %v4994
        %v4996 = vmul.f32 %v4995, 0.6931472
        %v4997 = vmul.f32 -0.5, %v3859
        %v4998 = vadd.f32 %v4997, 1.0
        %v4999 = vmul.f32 %v4998, %v3859
        %v5000 = vand.u32 2147483647, %v3859
        %vm5001 = vcmp.lt.f32.partialorder %v5000, 0.0004427343
        %v5002 = vsel %vm5001, %v4999, %v4996
        %v5003 = vadd.f32 %v3861, 1.0
        %v5004 = vlog2.pop %v5003
        %v5005 = vmul.f32 %v5004, 0.6931472
        %v5006 = vmul.f32 -0.5, %v3861
        %v5007 = vadd.f32 %v5006, 1.0
        %v5008 = vmul.f32 %v5007, %v3861
        %v5009 = vand.u32 2147483647, %v3861
        %vm5010 = vcmp.lt.f32.partialorder %v5009, 0.0004427343
        %v5011 = vsel %vm5010, %v5008, %v5005
        %v5012 = vadd.f32 %v3863, 1.0
        %v5013 = vlog2.pop %v5012
        %v5014 = vmul.f32 %v5013, 0.6931472
        %v5015 = vmul.f32 -0.5, %v3863
        %v5016 = vadd.f32 %v5015, 1.0
        %v5017 = vmul.f32 %v5016, %v3863
        %v5018 = vand.u32 2147483647, %v3863
        %vm5019 = vcmp.lt.f32.partialorder %v5018, 0.0004427343
        %v5020 = vsel %vm5019, %v5017, %v5014
        %v5021 = vadd.f32 %v3865, 1.0
        %v5022 = vlog2.pop %v5021
        %v5023 = vmul.f32 %v5022, 0.6931472
        %v5024 = vmul.f32 -0.5, %v3865
        %v5025 = vadd.f32 %v5024, 1.0
        %v5026 = vmul.f32 %v5025, %v3865
        %v5027 = vand.u32 2147483647, %v3865
        %vm5028 = vcmp.lt.f32.partialorder %v5027, 0.0004427343
        %v5029 = vsel %vm5028, %v5026, %v5023
        %v5030 = vadd.f32 %v3867, 1.0
        %v5031 = vlog2.pop %v5030
        %v5032 = vmul.f32 %v5031, 0.6931472
        %v5033 = vmul.f32 -0.5, %v3867
        %v5034 = vadd.f32 %v5033, 1.0
        %v5035 = vmul.f32 %v5034, %v3867
        %v5036 = vand.u32 2147483647, %v3867
        %vm5037 = vcmp.lt.f32.partialorder %v5036, 0.0004427343
        %v5038 = vsel %vm5037, %v5035, %v5032
        %v5039 = vadd.f32 %v3869, 1.0
        %v5040 = vlog2.pop %v5039
        %v5041 = vmul.f32 %v5040, 0.6931472
        %v5042 = vmul.f32 -0.5, %v3869
        %v5043 = vadd.f32 %v5042, 1.0
        %v5044 = vmul.f32 %v5043, %v3869
        %v5045 = vand.u32 2147483647, %v3869
        %vm5046 = vcmp.lt.f32.partialorder %v5045, 0.0004427343
        %v5047 = vsel %vm5046, %v5044, %v5041
        %v5048 = vadd.f32 %v3871, 1.0
        %v5049 = vlog2.pop %v5048
        %v5050 = vmul.f32 %v5049, 0.6931472
        %v5051 = vmul.f32 -0.5, %v3871
        %v5052 = vadd.f32 %v5051, 1.0
        %v5053 = vmul.f32 %v5052, %v3871
        %v5054 = vand.u32 2147483647, %v3871
        %vm5055 = vcmp.lt.f32.partialorder %v5054, 0.0004427343
        %v5056 = vsel %vm5055, %v5053, %v5050
        %v5057 = vadd.f32 %v3873, 1.0
        %v5058 = vlog2.pop %v5057
        %v5059 = vmul.f32 %v5058, 0.6931472
        %v5060 = vmul.f32 -0.5, %v3873
        %v5061 = vadd.f32 %v5060, 1.0
        %v5062 = vmul.f32 %v5061, %v3873
        %v5063 = vand.u32 2147483647, %v3873
        %vm5064 = vcmp.lt.f32.partialorder %v5063, 0.0004427343
        %v5065 = vsel %vm5064, %v5062, %v5059
        %v5066 = vadd.f32 %v3875, 1.0
        %v5067 = vlog2.pop %v5066
        %v5068 = vmul.f32 %v5067, 0.6931472
        %v5069 = vmul.f32 -0.5, %v3875
        %v5070 = vadd.f32 %v5069, 1.0
        %v5071 = vmul.f32 %v5070, %v3875
        %v5072 = vand.u32 2147483647, %v3875
        %vm5073 = vcmp.lt.f32.partialorder %v5072, 0.0004427343
        %v5074 = vsel %vm5073, %v5071, %v5068
        %v5075 = vadd.f32 %v3877, 1.0
        %v5076 = vlog2.pop %v5075
        %v5077 = vmul.f32 %v5076, 0.6931472
        %v5078 = vmul.f32 -0.5, %v3877
        %v5079 = vadd.f32 %v5078, 1.0
        %v5080 = vmul.f32 %v5079, %v3877
        %v5081 = vand.u32 2147483647, %v3877
        %vm5082 = vcmp.lt.f32.partialorder %v5081, 0.0004427343
        %v5083 = vsel %vm5082, %v5080, %v5077
        %v5084 = vadd.f32 %v3879, 1.0
        %v5085 = vlog2.pop %v5084
        %v5086 = vmul.f32 %v5085, 0.6931472
        %v5087 = vmul.f32 -0.5, %v3879
        %v5088 = vadd.f32 %v5087, 1.0
        %v5089 = vmul.f32 %v5088, %v3879
        %v5090 = vand.u32 2147483647, %v3879
        %vm5091 = vcmp.lt.f32.partialorder %v5090, 0.0004427343
        %v5092 = vsel %vm5091, %v5089, %v5086
        %v5093 = vadd.f32 %v3881, 1.0
        %v5094 = vlog2.pop %v5093
        %v5095 = vmul.f32 %v5094, 0.6931472
        %v5096 = vmul.f32 -0.5, %v3881
        %v5097 = vadd.f32 %v5096, 1.0
        %v5098 = vmul.f32 %v5097, %v3881
        %v5099 = vand.u32 2147483647, %v3881
        %vm5100 = vcmp.lt.f32.partialorder %v5099, 0.0004427343
        %v5101 = vsel %vm5100, %v5098, %v5095
        %v5102 = vadd.f32 %v3883, 1.0
        %v5103 = vlog2.pop %v5102
        %v5104 = vmul.f32 %v5103, 0.6931472
        %v5105 = vmul.f32 -0.5, %v3883
        %v5106 = vadd.f32 %v5105, 1.0
        %v5107 = vmul.f32 %v5106, %v3883
        %v5108 = vand.u32 2147483647, %v3883
        %vm5109 = vcmp.lt.f32.partialorder %v5108, 0.0004427343
        %v5110 = vsel %vm5109, %v5107, %v5104
        %v5111 = vadd.f32 %v3885, 1.0
        %v5112 = vlog2.pop %v5111
        %v5113 = vmul.f32 %v5112, 0.6931472
        %v5114 = vmul.f32 -0.5, %v3885
        %v5115 = vadd.f32 %v5114, 1.0
        %v5116 = vmul.f32 %v5115, %v3885
        %v5117 = vand.u32 2147483647, %v3885
        %vm5118 = vcmp.lt.f32.partialorder %v5117, 0.0004427343
        %v5119 = vsel %vm5118, %v5116, %v5113
        %v5120 = vadd.f32 %v3887, 1.0
        %v5121 = vlog2.pop %v5120
        %v5122 = vmul.f32 %v5121, 0.6931472
        %v5123 = vmul.f32 -0.5, %v3887
        %v5124 = vadd.f32 %v5123, 1.0
        %v5125 = vmul.f32 %v5124, %v3887
        %v5126 = vand.u32 2147483647, %v3887
        %vm5127 = vcmp.lt.f32.partialorder %v5126, 0.0004427343
        %v5128 = vsel %vm5127, %v5125, %v5122
        %v5129 = vadd.f32 %v3889, 1.0
        %v5130 = vlog2.pop %v5129
        %v5131 = vmul.f32 %v5130, 0.6931472
        %v5132 = vmul.f32 -0.5, %v3889
        %v5133 = vadd.f32 %v5132, 1.0
        %v5134 = vmul.f32 %v5133, %v3889
        %v5135 = vand.u32 2147483647, %v3889
        %vm5136 = vcmp.lt.f32.partialorder %v5135, 0.0004427343
        %v5137 = vsel %vm5136, %v5134, %v5131
        %v5138 = vadd.f32 %v3891, 1.0
        %v5139 = vlog2.pop %v5138
        %v5140 = vmul.f32 %v5139, 0.6931472
        %v5141 = vmul.f32 -0.5, %v3891
        %v5142 = vadd.f32 %v5141, 1.0
        %v5143 = vmul.f32 %v5142, %v3891
        %v5144 = vand.u32 2147483647, %v3891
        %vm5145 = vcmp.lt.f32.partialorder %v5144, 0.0004427343
        %v5146 = vsel %vm5145, %v5143, %v5140
        %v5147 = vadd.f32 %v3893, 1.0
        %v5148 = vlog2.pop %v5147
        %v5149 = vmul.f32 %v5148, 0.6931472
        %v5150 = vmul.f32 -0.5, %v3893
        %v5151 = vadd.f32 %v5150, 1.0
        %v5152 = vmul.f32 %v5151, %v3893
        %v5153 = vand.u32 2147483647, %v3893
        %vm5154 = vcmp.lt.f32.partialorder %v5153, 0.0004427343
        %v5155 = vsel %vm5154, %v5152, %v5149
        %v5156 = vadd.f32 %v3895, 1.0
        %v5157 = vlog2.pop %v5156
        %v5158 = vmul.f32 %v5157, 0.6931472
        %v5159 = vmul.f32 -0.5, %v3895
        %v5160 = vadd.f32 %v5159, 1.0
        %v5161 = vmul.f32 %v5160, %v3895
        %v5162 = vand.u32 2147483647, %v3895
        %vm5163 = vcmp.lt.f32.partialorder %v5162, 0.0004427343
        %v5164 = vsel %vm5163, %v5161, %v5158
        %v5165 = vadd.f32 %v3897, 1.0
        %v5166 = vlog2.pop %v5165
        %v5167 = vmul.f32 %v5166, 0.6931472
        %v5168 = vmul.f32 -0.5, %v3897
        %v5169 = vadd.f32 %v5168, 1.0
        %v5170 = vmul.f32 %v5169, %v3897
        %v5171 = vand.u32 2147483647, %v3897
        %vm5172 = vcmp.lt.f32.partialorder %v5171, 0.0004427343
        %v5173 = vsel %vm5172, %v5170, %v5167
        %v5174 = vadd.f32 %v3899, 1.0
        %v5175 = vlog2.pop %v5174
        %v5176 = vmul.f32 %v5175, 0.6931472
        %v5177 = vmul.f32 -0.5, %v3899
        %v5178 = vadd.f32 %v5177, 1.0
        %v5179 = vmul.f32 %v5178, %v3899
        %v5180 = vand.u32 2147483647, %v3899
        %vm5181 = vcmp.lt.f32.partialorder %v5180, 0.0004427343
        %v5182 = vsel %vm5181, %v5179, %v5176
        %v5183 = vadd.f32 %v3901, 1.0
        %v5184 = vlog2.pop %v5183
        %v5185 = vmul.f32 %v5184, 0.6931472
        %v5186 = vmul.f32 -0.5, %v3901
        %v5187 = vadd.f32 %v5186, 1.0
        %v5188 = vmul.f32 %v5187, %v3901
        %v5189 = vand.u32 2147483647, %v3901
        %vm5190 = vcmp.lt.f32.partialorder %v5189, 0.0004427343
        %v5191 = vsel %vm5190, %v5188, %v5185
        %v5192 = vadd.f32 %v3903, 1.0
        %v5193 = vlog2.pop %v5192
        %v5194 = vmul.f32 %v5193, 0.6931472
        %v5195 = vmul.f32 -0.5, %v3903
        %v5196 = vadd.f32 %v5195, 1.0
        %v5197 = vmul.f32 %v5196, %v3903
        %v5198 = vand.u32 2147483647, %v3903
        %vm5199 = vcmp.lt.f32.partialorder %v5198, 0.0004427343
        %v5200 = vsel %vm5199, %v5197, %v5194
        %v5201 = vadd.f32 %v3905, 1.0
        %v5202 = vlog2.pop %v5201
        %v5203 = vmul.f32 %v5202, 0.6931472
        %v5204 = vmul.f32 -0.5, %v3905
        %v5205 = vadd.f32 %v5204, 1.0
        %v5206 = vmul.f32 %v5205, %v3905
        %v5207 = vand.u32 2147483647, %v3905
        %vm5208 = vcmp.lt.f32.partialorder %v5207, 0.0004427343
        %v5209 = vsel %vm5208, %v5206, %v5203
        %v5210 = vadd.f32 %v3907, 1.0
        %v5211 = vlog2.pop %v5210
        %v5212 = vmul.f32 %v5211, 0.6931472
        %v5213 = vmul.f32 -0.5, %v3907
        %v5214 = vadd.f32 %v5213, 1.0
        %v5215 = vmul.f32 %v5214, %v3907
        %v5216 = vand.u32 2147483647, %v3907
        %vm5217 = vcmp.lt.f32.partialorder %v5216, 0.0004427343
        %v5218 = vsel %vm5217, %v5215, %v5212
        %v5219 = vadd.f32 %v3909, 1.0
        %v5220 = vlog2.pop %v5219
        %v5221 = vmul.f32 %v5220, 0.6931472
        %v5222 = vmul.f32 -0.5, %v3909
        %v5223 = vadd.f32 %v5222, 1.0
        %v5224 = vmul.f32 %v5223, %v3909
        %v5225 = vand.u32 2147483647, %v3909
        %vm5226 = vcmp.lt.f32.partialorder %v5225, 0.0004427343
        %v5227 = vsel %vm5226, %v5224, %v5221
        %v5228 = vadd.f32 %v3911, 1.0
        %v5229 = vlog2.pop %v5228
        %v5230 = vmul.f32 %v5229, 0.6931472
        %v5231 = vmul.f32 -0.5, %v3911
        %v5232 = vadd.f32 %v5231, 1.0
        %v5233 = vmul.f32 %v5232, %v3911
        %v5234 = vand.u32 2147483647, %v3911
        %vm5235 = vcmp.lt.f32.partialorder %v5234, 0.0004427343
        %v5236 = vsel %vm5235, %v5233, %v5230
        %v5237 = vadd.f32 %v3913, 1.0
        %v5238 = vlog2.pop %v5237
        %v5239 = vmul.f32 %v5238, 0.6931472
        %v5240 = vmul.f32 -0.5, %v3913
        %v5241 = vadd.f32 %v5240, 1.0
        %v5242 = vmul.f32 %v5241, %v3913
        %v5243 = vand.u32 2147483647, %v3913
        %vm5244 = vcmp.lt.f32.partialorder %v5243, 0.0004427343
        %v5245 = vsel %vm5244, %v5242, %v5239
        %v5246 = vadd.f32 %v3915, 1.0
        %v5247 = vlog2.pop %v5246
        %v5248 = vmul.f32 %v5247, 0.6931472
        %v5249 = vmul.f32 -0.5, %v3915
        %v5250 = vadd.f32 %v5249, 1.0
        %v5251 = vmul.f32 %v5250, %v3915
        %v5252 = vand.u32 2147483647, %v3915
        %vm5253 = vcmp.lt.f32.partialorder %v5252, 0.0004427343
        %v5254 = vsel %vm5253, %v5251, %v5248
        %v5255 = vadd.f32 %v3917, 1.0
        %v5256 = vlog2.pop %v5255
        %v5257 = vmul.f32 %v5256, 0.6931472
        %v5258 = vmul.f32 -0.5, %v3917
        %v5259 = vadd.f32 %v5258, 1.0
        %v5260 = vmul.f32 %v5259, %v3917
        %v5261 = vand.u32 2147483647, %v3917
        %vm5262 = vcmp.lt.f32.partialorder %v5261, 0.0004427343
        %v5263 = vsel %vm5262, %v5260, %v5257
        %v5264 = vadd.f32 %v3919, 1.0
        %v5265 = vlog2.pop %v5264
        %v5266 = vmul.f32 %v5265, 0.6931472
        %v5267 = vmul.f32 -0.5, %v3919
        %v5268 = vadd.f32 %v5267, 1.0
        %v5269 = vmul.f32 %v5268, %v3919
        %v5270 = vand.u32 2147483647, %v3919
        %vm5271 = vcmp.lt.f32.partialorder %v5270, 0.0004427343
        %v5272 = vsel %vm5271, %v5269, %v5266
        %v5273 = vadd.f32 %v3921, 1.0
        %v5274 = vlog2.pop %v5273
        %v5275 = vmul.f32 %v5274, 0.6931472
        %v5276 = vmul.f32 -0.5, %v3921
        %v5277 = vadd.f32 %v5276, 1.0
        %v5278 = vmul.f32 %v5277, %v3921
        %v5279 = vand.u32 2147483647, %v3921
        %vm5280 = vcmp.lt.f32.partialorder %v5279, 0.0004427343
        %v5281 = vsel %vm5280, %v5278, %v5275
        %v5282 = vadd.f32 %v3923, 1.0
        %v5283 = vlog2.pop %v5282
        %v5284 = vmul.f32 %v5283, 0.6931472
        %v5285 = vmul.f32 -0.5, %v3923
        %v5286 = vadd.f32 %v5285, 1.0
        %v5287 = vmul.f32 %v5286, %v3923
        %v5288 = vand.u32 2147483647, %v3923
        %vm5289 = vcmp.lt.f32.partialorder %v5288, 0.0004427343
        %v5290 = vsel %vm5289, %v5287, %v5284
        %v5291 = vadd.f32 %v3925, 1.0
        %v5292 = vlog2.pop %v5291
        %v5293 = vmul.f32 %v5292, 0.6931472
        %v5294 = vmul.f32 -0.5, %v3925
        %v5295 = vadd.f32 %v5294, 1.0
        %v5296 = vmul.f32 %v5295, %v3925
        %v5297 = vand.u32 2147483647, %v3925
        %vm5298 = vcmp.lt.f32.partialorder %v5297, 0.0004427343
        %v5299 = vsel %vm5298, %v5296, %v5293
        %v5300 = vadd.f32 %v3927, 1.0
        %v5301 = vlog2.pop %v5300
        %v5302 = vmul.f32 %v5301, 0.6931472
        %v5303 = vmul.f32 -0.5, %v3927
        %v5304 = vadd.f32 %v5303, 1.0
        %v5305 = vmul.f32 %v5304, %v3927
        %v5306 = vand.u32 2147483647, %v3927
        %vm5307 = vcmp.lt.f32.partialorder %v5306, 0.0004427343
        %v5308 = vsel %vm5307, %v5305, %v5302
        %v5309 = vadd.f32 %v3929, 1.0
        %v5310 = vlog2.pop %v5309
        %v5311 = vmul.f32 %v5310, 0.6931472
        %v5312 = vmul.f32 -0.5, %v3929
        %v5313 = vadd.f32 %v5312, 1.0
        %v5314 = vmul.f32 %v5313, %v3929
        %v5315 = vand.u32 2147483647, %v3929
        %vm5316 = vcmp.lt.f32.partialorder %v5315, 0.0004427343
        %v5317 = vsel %vm5316, %v5314, %v5311
        %v5318 = vadd.f32 %v3931, 1.0
        %v5319 = vlog2.pop %v5318
        %v5320 = vmul.f32 %v5319, 0.6931472
        %v5321 = vmul.f32 -0.5, %v3931
        %v5322 = vadd.f32 %v5321, 1.0
        %v5323 = vmul.f32 %v5322, %v3931
        %v5324 = vand.u32 2147483647, %v3931
        %vm5325 = vcmp.lt.f32.partialorder %v5324, 0.0004427343
        %v5326 = vsel %vm5325, %v5323, %v5320
        %v5327 = vadd.f32 %v3933, 1.0
        %v5328 = vlog2.pop %v5327
        %v5329 = vmul.f32 %v5328, 0.6931472
        %v5330 = vmul.f32 -0.5, %v3933
        %v5331 = vadd.f32 %v5330, 1.0
        %v5332 = vmul.f32 %v5331, %v3933
        %v5333 = vand.u32 2147483647, %v3933
        %vm5334 = vcmp.lt.f32.partialorder %v5333, 0.0004427343
        %v5335 = vsel %vm5334, %v5332, %v5329
        %v5336 = vadd.f32 %v3935, 1.0
        %v5337 = vlog2.pop %v5336
        %v5338 = vmul.f32 %v5337, 0.6931472
        %v5339 = vmul.f32 -0.5, %v3935
        %v5340 = vadd.f32 %v5339, 1.0
        %v5341 = vmul.f32 %v5340, %v3935
        %v5342 = vand.u32 2147483647, %v3935
        %vm5343 = vcmp.lt.f32.partialorder %v5342, 0.0004427343
        %v5344 = vsel %vm5343, %v5341, %v5338
        %v5345 = vadd.f32 %v3937, 1.0
        %v5346 = vlog2.pop %v5345
        %v5347 = vmul.f32 %v5346, 0.6931472
        %v5348 = vmul.f32 -0.5, %v3937
        %v5349 = vadd.f32 %v5348, 1.0
        %v5350 = vmul.f32 %v5349, %v3937
        %v5351 = vand.u32 2147483647, %v3937
        %vm5352 = vcmp.lt.f32.partialorder %v5351, 0.0004427343
        %v5353 = vsel %vm5352, %v5350, %v5347
        %v5354 = vadd.f32 %v3939, 1.0
        %v5355 = vlog2.pop %v5354
        %v5356 = vmul.f32 %v5355, 0.6931472
        %v5357 = vmul.f32 -0.5, %v3939
        %v5358 = vadd.f32 %v5357, 1.0
        %v5359 = vmul.f32 %v5358, %v3939
        %v5360 = vand.u32 2147483647, %v3939
        %vm5361 = vcmp.lt.f32.partialorder %v5360, 0.0004427343
        %v5362 = vsel %vm5361, %v5359, %v5356
        %v5363 = vadd.f32 %v3941, 1.0
        %v5364 = vlog2.pop %v5363
        %v5365 = vmul.f32 %v5364, 0.6931472
        %v5366 = vmul.f32 -0.5, %v3941
        %v5367 = vadd.f32 %v5366, 1.0
        %v5368 = vmul.f32 %v5367, %v3941
        %v5369 = vand.u32 2147483647, %v3941
        %vm5370 = vcmp.lt.f32.partialorder %v5369, 0.0004427343
        %v5371 = vsel %vm5370, %v5368, %v5365
        %v5372 = vadd.f32 %v3943, 1.0
        %v5373 = vlog2.pop %v5372
        %v5374 = vmul.f32 %v5373, 0.6931472
        %v5375 = vmul.f32 -0.5, %v3943
        %v5376 = vadd.f32 %v5375, 1.0
        %v5377 = vmul.f32 %v5376, %v3943
        %v5378 = vand.u32 2147483647, %v3943
        %vm5379 = vcmp.lt.f32.partialorder %v5378, 0.0004427343
        %v5380 = vsel %vm5379, %v5377, %v5374
        %v5381 = vadd.f32 %v3945, 1.0
        %v5382 = vlog2.pop %v5381
        %v5383 = vmul.f32 %v5382, 0.6931472
        %v5384 = vmul.f32 -0.5, %v3945
        %v5385 = vadd.f32 %v5384, 1.0
        %v5386 = vmul.f32 %v5385, %v3945
        %v5387 = vand.u32 2147483647, %v3945
        %vm5388 = vcmp.lt.f32.partialorder %v5387, 0.0004427343
        %v5389 = vsel %vm5388, %v5386, %v5383
        %v5390 = vadd.f32 %v3947, 1.0
        %v5391 = vlog2.pop %v5390
        %v5392 = vmul.f32 %v5391, 0.6931472
        %v5393 = vmul.f32 -0.5, %v3947
        %v5394 = vadd.f32 %v5393, 1.0
        %v5395 = vmul.f32 %v5394, %v3947
        %v5396 = vand.u32 2147483647, %v3947
        %vm5397 = vcmp.lt.f32.partialorder %v5396, 0.0004427343
        %v5398 = vsel %vm5397, %v5395, %v5392
        %v5399 = vadd.f32 %v3949, 1.0
        %v5400 = vlog2.pop %v5399
        %v5401 = vmul.f32 %v5400, 0.6931472
        %v5402 = vmul.f32 -0.5, %v3949
        %v5403 = vadd.f32 %v5402, 1.0
        %v5404 = vmul.f32 %v5403, %v3949
        %v5405 = vand.u32 2147483647, %v3949
        %vm5406 = vcmp.lt.f32.partialorder %v5405, 0.0004427343
        %v5407 = vsel %vm5406, %v5404, %v5401
        %v5408 = vadd.f32 %v3951, 1.0
        %v5409 = vlog2.pop %v5408
        %v5410 = vmul.f32 %v5409, 0.6931472
        %v5411 = vmul.f32 -0.5, %v3951
        %v5412 = vadd.f32 %v5411, 1.0
        %v5413 = vmul.f32 %v5412, %v3951
        %v5414 = vand.u32 2147483647, %v3951
        %vm5415 = vcmp.lt.f32.partialorder %v5414, 0.0004427343
        %v5416 = vsel %vm5415, %v5413, %v5410
        %v5417 = vadd.f32 %v3953, 1.0
        %v5418 = vlog2.pop %v5417
        %v5419 = vmul.f32 %v5418, 0.6931472
        %v5420 = vmul.f32 -0.5, %v3953
        %v5421 = vadd.f32 %v5420, 1.0
        %v5422 = vmul.f32 %v5421, %v3953
        %v5423 = vand.u32 2147483647, %v3953
        %vm5424 = vcmp.lt.f32.partialorder %v5423, 0.0004427343
        %v5425 = vsel %vm5424, %v5422, %v5419
        %v5426 = vadd.f32 %v3955, 1.0
        %v5427 = vlog2.pop %v5426
        %v5428 = vmul.f32 %v5427, 0.6931472
        %v5429 = vmul.f32 -0.5, %v3955
        %v5430 = vadd.f32 %v5429, 1.0
        %v5431 = vmul.f32 %v5430, %v3955
        %v5432 = vand.u32 2147483647, %v3955
        %vm5433 = vcmp.lt.f32.partialorder %v5432, 0.0004427343
        %v5434 = vsel %vm5433, %v5431, %v5428
        %v5435 = vadd.f32 %v3957, 1.0
        %v5436 = vlog2.pop %v5435
        %v5437 = vmul.f32 %v5436, 0.6931472
        %v5438 = vmul.f32 -0.5, %v3957
        %v5439 = vadd.f32 %v5438, 1.0
        %v5440 = vmul.f32 %v5439, %v3957
        %v5441 = vand.u32 2147483647, %v3957
        %vm5442 = vcmp.lt.f32.partialorder %v5441, 0.0004427343
        %v5443 = vsel %vm5442, %v5440, %v5437
        %v5444 = vadd.f32 %v3959, 1.0
        %v5445 = vlog2.pop %v5444
        %v5446 = vmul.f32 %v5445, 0.6931472
        %v5447 = vmul.f32 -0.5, %v3959
        %v5448 = vadd.f32 %v5447, 1.0
        %v5449 = vmul.f32 %v5448, %v3959
        %v5450 = vand.u32 2147483647, %v3959
        %vm5451 = vcmp.lt.f32.partialorder %v5450, 0.0004427343
        %v5452 = vsel %vm5451, %v5449, %v5446
        %v5453 = vadd.f32 %v3961, 1.0
        %v5454 = vlog2.pop %v5453
        %v5455 = vmul.f32 %v5454, 0.6931472
        %v5456 = vmul.f32 -0.5, %v3961
        %v5457 = vadd.f32 %v5456, 1.0
        %v5458 = vmul.f32 %v5457, %v3961
        %v5459 = vand.u32 2147483647, %v3961
        %vm5460 = vcmp.lt.f32.partialorder %v5459, 0.0004427343
        %v5461 = vsel %vm5460, %v5458, %v5455
        %v5462 = vadd.f32 %v3963, 1.0
        %v5463 = vlog2.pop %v5462
        %v5464 = vmul.f32 %v5463, 0.6931472
        %v5465 = vmul.f32 -0.5, %v3963
        %v5466 = vadd.f32 %v5465, 1.0
        %v5467 = vmul.f32 %v5466, %v3963
        %v5468 = vand.u32 2147483647, %v3963
        %vm5469 = vcmp.lt.f32.partialorder %v5468, 0.0004427343
        %v5470 = vsel %vm5469, %v5467, %v5464
        %v5471 = vadd.f32 %v3965, 1.0
        %v5472 = vlog2.pop %v5471
        %v5473 = vmul.f32 %v5472, 0.6931472
        %v5474 = vmul.f32 -0.5, %v3965
        %v5475 = vadd.f32 %v5474, 1.0
        %v5476 = vmul.f32 %v5475, %v3965
        %v5477 = vand.u32 2147483647, %v3965
        %vm5478 = vcmp.lt.f32.partialorder %v5477, 0.0004427343
        %v5479 = vsel %vm5478, %v5476, %v5473
        %v5480 = vadd.f32 %v3967, 1.0
        %v5481 = vlog2.pop %v5480
        %v5482 = vmul.f32 %v5481, 0.6931472
        %v5483 = vmul.f32 -0.5, %v3967
        %v5484 = vadd.f32 %v5483, 1.0
        %v5485 = vmul.f32 %v5484, %v3967
        %v5486 = vand.u32 2147483647, %v3967
        %vm5487 = vcmp.lt.f32.partialorder %v5486, 0.0004427343
        %v5488 = vsel %vm5487, %v5485, %v5482
        %v5489 = vadd.f32 %v3969, 1.0
        %v5490 = vlog2.pop %v5489
        %v5491 = vmul.f32 %v5490, 0.6931472
        %v5492 = vmul.f32 -0.5, %v3969
        %v5493 = vadd.f32 %v5492, 1.0
        %v5494 = vmul.f32 %v5493, %v3969
        %v5495 = vand.u32 2147483647, %v3969
        %vm5496 = vcmp.lt.f32.partialorder %v5495, 0.0004427343
        %v5497 = vsel %vm5496, %v5494, %v5491
        %v5498 = vadd.f32 %v3971, 1.0
        %v5499 = vlog2.pop %v5498
        %v5500 = vmul.f32 %v5499, 0.6931472
        %v5501 = vmul.f32 -0.5, %v3971
        %v5502 = vadd.f32 %v5501, 1.0
        %v5503 = vmul.f32 %v5502, %v3971
        %v5504 = vand.u32 2147483647, %v3971
        %vm5505 = vcmp.lt.f32.partialorder %v5504, 0.0004427343
        %v5506 = vsel %vm5505, %v5503, %v5500
        %v5507 = vadd.f32 %v3973, 1.0
        %v5508 = vlog2.pop %v5507
        %v5509 = vmul.f32 %v5508, 0.6931472
        %v5510 = vmul.f32 -0.5, %v3973
        %v5511 = vadd.f32 %v5510, 1.0
        %v5512 = vmul.f32 %v5511, %v3973
        %v5513 = vand.u32 2147483647, %v3973
        %vm5514 = vcmp.lt.f32.partialorder %v5513, 0.0004427343
        %v5515 = vsel %vm5514, %v5512, %v5509
        %v5516 = vadd.f32 %v3975, 1.0
        %v5517 = vlog2.pop %v5516
        %v5518 = vmul.f32 %v5517, 0.6931472
        %v5519 = vmul.f32 -0.5, %v3975
        %v5520 = vadd.f32 %v5519, 1.0
        %v5521 = vmul.f32 %v5520, %v3975
        %v5522 = vand.u32 2147483647, %v3975
        %vm5523 = vcmp.lt.f32.partialorder %v5522, 0.0004427343
        %v5524 = vsel %vm5523, %v5521, %v5518
        %v5525 = vadd.f32 %v3977, 1.0
        %v5526 = vlog2.pop %v5525
        %v5527 = vmul.f32 %v5526, 0.6931472
        %v5528 = vmul.f32 -0.5, %v3977
        %v5529 = vadd.f32 %v5528, 1.0
        %v5530 = vmul.f32 %v5529, %v3977
        %v5531 = vand.u32 2147483647, %v3977
        %vm5532 = vcmp.lt.f32.partialorder %v5531, 0.0004427343
        %v5533 = vsel %vm5532, %v5530, %v5527
        %v5534 = vadd.f32 %v3979, 1.0
        %v5535 = vlog2.pop %v5534
        %v5536 = vmul.f32 %v5535, 0.6931472
        %v5537 = vmul.f32 -0.5, %v3979
        %v5538 = vadd.f32 %v5537, 1.0
        %v5539 = vmul.f32 %v5538, %v3979
        %v5540 = vand.u32 2147483647, %v3979
        %vm5541 = vcmp.lt.f32.partialorder %v5540, 0.0004427343
        %v5542 = vsel %vm5541, %v5539, %v5536
        %v5543 = vadd.f32 %v3981, 1.0
        %v5544 = vlog2.pop %v5543
        %v5545 = vmul.f32 %v5544, 0.6931472
        %v5546 = vmul.f32 -0.5, %v3981
        %v5547 = vadd.f32 %v5546, 1.0
        %v5548 = vmul.f32 %v5547, %v3981
        %v5549 = vand.u32 2147483647, %v3981
        %vm5550 = vcmp.lt.f32.partialorder %v5549, 0.0004427343
        %v5551 = vsel %vm5550, %v5548, %v5545
        %v5552 = vadd.f32 %v3983, 1.0
        %v5553 = vlog2.pop %v5552
        %v5554 = vmul.f32 %v5553, 0.6931472
        %v5555 = vmul.f32 -0.5, %v3983
        %v5556 = vadd.f32 %v5555, 1.0
        %v5557 = vmul.f32 %v5556, %v3983
        %v5558 = vand.u32 2147483647, %v3983
        %vm5559 = vcmp.lt.f32.partialorder %v5558, 0.0004427343
        %v5560 = vsel %vm5559, %v5557, %v5554
        %v5561 = vadd.f32 %v3985, 1.0
        %v5562 = vlog2.pop %v5561
        %v5563 = vmul.f32 %v5562, 0.6931472
        %v5564 = vmul.f32 -0.5, %v3985
        %v5565 = vadd.f32 %v5564, 1.0
        %v5566 = vmul.f32 %v5565, %v3985
        %v5567 = vand.u32 2147483647, %v3985
        %vm5568 = vcmp.lt.f32.partialorder %v5567, 0.0004427343
        %v5569 = vsel %vm5568, %v5566, %v5563
        %v5570 = vadd.f32 %v3987, 1.0
        %v5571 = vlog2.pop %v5570
        %v5572 = vmul.f32 %v5571, 0.6931472
        %v5573 = vmul.f32 -0.5, %v3987
        %v5574 = vadd.f32 %v5573, 1.0
        %v5575 = vmul.f32 %v5574, %v3987
        %v5576 = vand.u32 2147483647, %v3987
        %vm5577 = vcmp.lt.f32.partialorder %v5576, 0.0004427343
        %v5578 = vsel %vm5577, %v5575, %v5572
        %v5579 = vadd.f32 %v3989, 1.0
        %v5580 = vlog2.pop %v5579
        %v5581 = vmul.f32 %v5580, 0.6931472
        %v5582 = vmul.f32 -0.5, %v3989
        %v5583 = vadd.f32 %v5582, 1.0
        %v5584 = vmul.f32 %v5583, %v3989
        %v5585 = vand.u32 2147483647, %v3989
        %vm5586 = vcmp.lt.f32.partialorder %v5585, 0.0004427343
        %v5587 = vsel %vm5586, %v5584, %v5581
        %v5588 = vadd.f32 %v3991, 1.0
        %v5589 = vlog2.pop %v5588
        %v5590 = vmul.f32 %v5589, 0.6931472
        %v5591 = vmul.f32 -0.5, %v3991
        %v5592 = vadd.f32 %v5591, 1.0
        %v5593 = vmul.f32 %v5592, %v3991
        %v5594 = vand.u32 2147483647, %v3991
        %vm5595 = vcmp.lt.f32.partialorder %v5594, 0.0004427343
        %v5596 = vsel %vm5595, %v5593, %v5590
        %v5597 = vadd.f32 %v3993, 1.0
        %v5598 = vlog2.pop %v5597
        %v5599 = vmul.f32 %v5598, 0.6931472
        %v5600 = vmul.f32 -0.5, %v3993
        %v5601 = vadd.f32 %v5600, 1.0
        %v5602 = vmul.f32 %v5601, %v3993
        %v5603 = vand.u32 2147483647, %v3993
        %vm5604 = vcmp.lt.f32.partialorder %v5603, 0.0004427343
        %v5605 = vsel %vm5604, %v5602, %v5599
        %v5606 = vadd.f32 %v3995, 1.0
        %v5607 = vlog2.pop %v5606
        %v5608 = vmul.f32 %v5607, 0.6931472
        %v5609 = vmul.f32 -0.5, %v3995
        %v5610 = vadd.f32 %v5609, 1.0
        %v5611 = vmul.f32 %v5610, %v3995
        %v5612 = vand.u32 2147483647, %v3995
        %vm5613 = vcmp.lt.f32.partialorder %v5612, 0.0004427343
        %v5614 = vsel %vm5613, %v5611, %v5608
        %v5615 = vadd.f32 %v3997, 1.0
        %v5616 = vlog2.pop %v5615
        %v5617 = vmul.f32 %v5616, 0.6931472
        %v5618 = vmul.f32 -0.5, %v3997
        %v5619 = vadd.f32 %v5618, 1.0
        %v5620 = vmul.f32 %v5619, %v3997
        %v5621 = vand.u32 2147483647, %v3997
        %vm5622 = vcmp.lt.f32.partialorder %v5621, 0.0004427343
        %v5623 = vsel %vm5622, %v5620, %v5617
        %v5624 = vadd.f32 %v3999, 1.0
        %v5625 = vlog2.pop %v5624
        %v5626 = vmul.f32 %v5625, 0.6931472
        %v5627 = vmul.f32 -0.5, %v3999
        %v5628 = vadd.f32 %v5627, 1.0
        %v5629 = vmul.f32 %v5628, %v3999
        %v5630 = vand.u32 2147483647, %v3999
        %vm5631 = vcmp.lt.f32.partialorder %v5630, 0.0004427343
        %v5632 = vsel %vm5631, %v5629, %v5626
        %v5633 = vadd.f32 %v4001, 1.0
        %v5634 = vlog2.pop %v5633
        %v5635 = vmul.f32 %v5634, 0.6931472
        %v5636 = vmul.f32 -0.5, %v4001
        %v5637 = vadd.f32 %v5636, 1.0
        %v5638 = vmul.f32 %v5637, %v4001
        %v5639 = vand.u32 2147483647, %v4001
        %vm5640 = vcmp.lt.f32.partialorder %v5639, 0.0004427343
        %v5641 = vsel %vm5640, %v5638, %v5635
        %v5642 = vadd.f32 %v4003, 1.0
        %v5643 = vlog2.pop %v5642
        %v5644 = vmul.f32 %v5643, 0.6931472
        %v5645 = vmul.f32 -0.5, %v4003
        %v5646 = vadd.f32 %v5645, 1.0
        %v5647 = vmul.f32 %v5646, %v4003
        %v5648 = vand.u32 2147483647, %v4003
        %vm5649 = vcmp.lt.f32.partialorder %v5648, 0.0004427343
        %v5650 = vsel %vm5649, %v5647, %v5644
        %v5651 = vadd.f32 %v4005, 1.0
        %v5652 = vlog2.pop %v5651
        %v5653 = vmul.f32 %v5652, 0.6931472
        %v5654 = vmul.f32 -0.5, %v4005
        %v5655 = vadd.f32 %v5654, 1.0
        %v5656 = vmul.f32 %v5655, %v4005
        %v5657 = vand.u32 2147483647, %v4005
        %vm5658 = vcmp.lt.f32.partialorder %v5657, 0.0004427343
        %v5659 = vsel %vm5658, %v5656, %v5653
        %v5660 = vadd.f32 %v4007, 1.0
        %v5661 = vlog2.pop %v5660
        %v5662 = vmul.f32 %v5661, 0.6931472
        %v5663 = vmul.f32 -0.5, %v4007
        %v5664 = vadd.f32 %v5663, 1.0
        %v5665 = vmul.f32 %v5664, %v4007
        %v5666 = vand.u32 2147483647, %v4007
        %vm5667 = vcmp.lt.f32.partialorder %v5666, 0.0004427343
        %v5668 = vsel %vm5667, %v5665, %v5662
        %v5669 = vadd.f32 %v4009, 1.0
        %v5670 = vlog2.pop %v5669
        %v5671 = vmul.f32 %v5670, 0.6931472
        %v5672 = vmul.f32 -0.5, %v4009
        %v5673 = vadd.f32 %v5672, 1.0
        %v5674 = vmul.f32 %v5673, %v4009
        %v5675 = vand.u32 2147483647, %v4009
        %vm5676 = vcmp.lt.f32.partialorder %v5675, 0.0004427343
        %v5677 = vsel %vm5676, %v5674, %v5671
        %v5678 = vadd.f32 %v4011, 1.0
        %v5679 = vlog2.pop %v5678
        %v5680 = vmul.f32 %v5679, 0.6931472
        %v5681 = vmul.f32 -0.5, %v4011
        %v5682 = vadd.f32 %v5681, 1.0
        %v5683 = vmul.f32 %v5682, %v4011
        %v5684 = vand.u32 2147483647, %v4011
        %vm5685 = vcmp.lt.f32.partialorder %v5684, 0.0004427343
        %v5686 = vsel %vm5685, %v5683, %v5680
        %v5687 = vadd.f32 %v4013, 1.0
        %v5688 = vlog2.pop %v5687
        %v5689 = vmul.f32 %v5688, 0.6931472
        %v5690 = vmul.f32 -0.5, %v4013
        %v5691 = vadd.f32 %v5690, 1.0
        %v5692 = vmul.f32 %v5691, %v4013
        %v5693 = vand.u32 2147483647, %v4013
        %vm5694 = vcmp.lt.f32.partialorder %v5693, 0.0004427343
        %v5695 = vsel %vm5694, %v5692, %v5689
        %v5696 = vadd.f32 %v4015, 1.0
        %v5697 = vlog2.pop %v5696
        %v5698 = vmul.f32 %v5697, 0.6931472
        %v5699 = vmul.f32 -0.5, %v4015
        %v5700 = vadd.f32 %v5699, 1.0
        %v5701 = vmul.f32 %v5700, %v4015
        %v5702 = vand.u32 2147483647, %v4015
        %vm5703 = vcmp.lt.f32.partialorder %v5702, 0.0004427343
        %v5704 = vsel %vm5703, %v5701, %v5698
        %v5705 = vadd.f32 %v4017, 1.0
        %v5706 = vlog2.pop %v5705
        %v5707 = vmul.f32 %v5706, 0.6931472
        %v5708 = vmul.f32 -0.5, %v4017
        %v5709 = vadd.f32 %v5708, 1.0
        %v5710 = vmul.f32 %v5709, %v4017
        %v5711 = vand.u32 2147483647, %v4017
        %vm5712 = vcmp.lt.f32.partialorder %v5711, 0.0004427343
        %v5713 = vsel %vm5712, %v5710, %v5707
        %v5714 = vadd.f32 %v4019, 1.0
        %v5715 = vlog2.pop %v5714
        %v5716 = vmul.f32 %v5715, 0.6931472
        %v5717 = vmul.f32 -0.5, %v4019
        %v5718 = vadd.f32 %v5717, 1.0
        %v5719 = vmul.f32 %v5718, %v4019
        %v5720 = vand.u32 2147483647, %v4019
        %vm5721 = vcmp.lt.f32.partialorder %v5720, 0.0004427343
        %v5722 = vsel %vm5721, %v5719, %v5716
        %v5723 = vadd.f32 %v4021, 1.0
        %v5724 = vlog2.pop %v5723
        %v5725 = vmul.f32 %v5724, 0.6931472
        %v5726 = vmul.f32 -0.5, %v4021
        %v5727 = vadd.f32 %v5726, 1.0
        %v5728 = vmul.f32 %v5727, %v4021
        %v5729 = vand.u32 2147483647, %v4021
        %vm5730 = vcmp.lt.f32.partialorder %v5729, 0.0004427343
        %v5731 = vsel %vm5730, %v5728, %v5725
        %v5732 = vadd.f32 %v4023, 1.0
        %v5733 = vlog2.pop %v5732
        %v5734 = vmul.f32 %v5733, 0.6931472
        %v5735 = vmul.f32 -0.5, %v4023
        %v5736 = vadd.f32 %v5735, 1.0
        %v5737 = vmul.f32 %v5736, %v4023
        %v5738 = vand.u32 2147483647, %v4023
        %vm5739 = vcmp.lt.f32.partialorder %v5738, 0.0004427343
        %v5740 = vsel %vm5739, %v5737, %v5734
        %v5741 = vadd.f32 %v4025, 1.0
        %v5742 = vlog2.pop %v5741
        %v5743 = vmul.f32 %v5742, 0.6931472
        %v5744 = vmul.f32 -0.5, %v4025
        %v5745 = vadd.f32 %v5744, 1.0
        %v5746 = vmul.f32 %v5745, %v4025
        %v5747 = vand.u32 2147483647, %v4025
        %vm5748 = vcmp.lt.f32.partialorder %v5747, 0.0004427343
        %v5749 = vsel %vm5748, %v5746, %v5743
        %v5750 = vadd.f32 %v4027, 1.0
        %v5751 = vlog2.pop %v5750
        %v5752 = vmul.f32 %v5751, 0.6931472
        %v5753 = vmul.f32 -0.5, %v4027
        %v5754 = vadd.f32 %v5753, 1.0
        %v5755 = vmul.f32 %v5754, %v4027
        %v5756 = vand.u32 2147483647, %v4027
        %vm5757 = vcmp.lt.f32.partialorder %v5756, 0.0004427343
        %v5758 = vsel %vm5757, %v5755, %v5752
        %v5759 = vadd.f32 %v4029, 1.0
        %v5760 = vlog2.pop %v5759
        %v5761 = vmul.f32 %v5760, 0.6931472
        %v5762 = vmul.f32 -0.5, %v4029
        %v5763 = vadd.f32 %v5762, 1.0
        %v5764 = vmul.f32 %v5763, %v4029
        %v5765 = vand.u32 2147483647, %v4029
        %vm5766 = vcmp.lt.f32.partialorder %v5765, 0.0004427343
        %v5767 = vsel %vm5766, %v5764, %v5761
        %v5768 = vadd.f32 %v4031, 1.0
        %v5769 = vlog2.pop %v5768
        %v5770 = vmul.f32 %v5769, 0.6931472
        %v5771 = vmul.f32 -0.5, %v4031
        %v5772 = vadd.f32 %v5771, 1.0
        %v5773 = vmul.f32 %v5772, %v4031
        %v5774 = vand.u32 2147483647, %v4031
        %vm5775 = vcmp.lt.f32.partialorder %v5774, 0.0004427343
        %v5776 = vsel %vm5775, %v5773, %v5770
        %v5777 = vadd.f32 %v4033, 1.0
        %v5778 = vlog2.pop %v5777
        %v5779 = vmul.f32 %v5778, 0.6931472
        %v5780 = vmul.f32 -0.5, %v4033
        %v5781 = vadd.f32 %v5780, 1.0
        %v5782 = vmul.f32 %v5781, %v4033
        %v5783 = vand.u32 2147483647, %v4033
        %vm5784 = vcmp.lt.f32.partialorder %v5783, 0.0004427343
        %v5785 = vsel %vm5784, %v5782, %v5779
        %v5786 = vadd.f32 %v4035, 1.0
        %v5787 = vlog2.pop %v5786
        %v5788 = vmul.f32 %v5787, 0.6931472
        %v5789 = vmul.f32 -0.5, %v4035
        %v5790 = vadd.f32 %v5789, 1.0
        %v5791 = vmul.f32 %v5790, %v4035
        %v5792 = vand.u32 2147483647, %v4035
        %vm5793 = vcmp.lt.f32.partialorder %v5792, 0.0004427343
        %v5794 = vsel %vm5793, %v5791, %v5788
        %v5795 = vadd.f32 %v4037, 1.0
        %v5796 = vlog2.pop %v5795
        %v5797 = vmul.f32 %v5796, 0.6931472
        %v5798 = vmul.f32 -0.5, %v4037
        %v5799 = vadd.f32 %v5798, 1.0
        %v5800 = vmul.f32 %v5799, %v4037
        %v5801 = vand.u32 2147483647, %v4037
        %vm5802 = vcmp.lt.f32.partialorder %v5801, 0.0004427343
        %v5803 = vsel %vm5802, %v5800, %v5797
        %v5804 = vadd.f32 %v4039, 1.0
        %v5805 = vlog2.pop %v5804
        %v5806 = vmul.f32 %v5805, 0.6931472
        %v5807 = vmul.f32 -0.5, %v4039
        %v5808 = vadd.f32 %v5807, 1.0
        %v5809 = vmul.f32 %v5808, %v4039
        %v5810 = vand.u32 2147483647, %v4039
        %vm5811 = vcmp.lt.f32.partialorder %v5810, 0.0004427343
        %v5812 = vsel %vm5811, %v5809, %v5806
        %v5813 = vadd.f32 %v4041, 1.0
        %v5814 = vlog2.pop %v5813
        %v5815 = vmul.f32 %v5814, 0.6931472
        %v5816 = vmul.f32 -0.5, %v4041
        %v5817 = vadd.f32 %v5816, 1.0
        %v5818 = vmul.f32 %v5817, %v4041
        %v5819 = vand.u32 2147483647, %v4041
        %vm5820 = vcmp.lt.f32.partialorder %v5819, 0.0004427343
        %v5821 = vsel %vm5820, %v5818, %v5815
        %v5822 = vadd.f32 %v4043, 1.0
        %v5823 = vlog2.pop %v5822
        %v5824 = vmul.f32 %v5823, 0.6931472
        %v5825 = vmul.f32 -0.5, %v4043
        %v5826 = vadd.f32 %v5825, 1.0
        %v5827 = vmul.f32 %v5826, %v4043
        %v5828 = vand.u32 2147483647, %v4043
        %vm5829 = vcmp.lt.f32.partialorder %v5828, 0.0004427343
        %v5830 = vsel %vm5829, %v5827, %v5824
        %v5831 = vadd.f32 %v4045, 1.0
        %v5832 = vlog2.pop %v5831
        %v5833 = vmul.f32 %v5832, 0.6931472
        %v5834 = vmul.f32 -0.5, %v4045
        %v5835 = vadd.f32 %v5834, 1.0
        %v5836 = vmul.f32 %v5835, %v4045
        %v5837 = vand.u32 2147483647, %v4045
        %vm5838 = vcmp.lt.f32.partialorder %v5837, 0.0004427343
        %v5839 = vsel %vm5838, %v5836, %v5833
        %v5840 = vadd.f32 %v4047, 1.0
        %v5841 = vlog2.pop %v5840
        %v5842 = vmul.f32 %v5841, 0.6931472
        %v5843 = vmul.f32 -0.5, %v4047
        %v5844 = vadd.f32 %v5843, 1.0
        %v5845 = vmul.f32 %v5844, %v4047
        %v5846 = vand.u32 2147483647, %v4047
        %vm5847 = vcmp.lt.f32.partialorder %v5846, 0.0004427343
        %v5848 = vsel %vm5847, %v5845, %v5842
        %v5849 = vadd.f32 %v4049, 1.0
        %v5850 = vlog2.pop %v5849
        %v5851 = vmul.f32 %v5850, 0.6931472
        %v5852 = vmul.f32 -0.5, %v4049
        %v5853 = vadd.f32 %v5852, 1.0
        %v5854 = vmul.f32 %v5853, %v4049
        %v5855 = vand.u32 2147483647, %v4049
        %vm5856 = vcmp.lt.f32.partialorder %v5855, 0.0004427343
        %v5857 = vsel %vm5856, %v5854, %v5851
        %v5858 = vadd.f32 %v4051, 1.0
        %v5859 = vlog2.pop %v5858
        %v5860 = vmul.f32 %v5859, 0.6931472
        %v5861 = vmul.f32 -0.5, %v4051
        %v5862 = vadd.f32 %v5861, 1.0
        %v5863 = vmul.f32 %v5862, %v4051
        %v5864 = vand.u32 2147483647, %v4051
        %vm5865 = vcmp.lt.f32.partialorder %v5864, 0.0004427343
        %v5866 = vsel %vm5865, %v5863, %v5860
        %v5867 = vadd.f32 %v4053, 1.0
        %v5868 = vlog2.pop %v5867
        %v5869 = vmul.f32 %v5868, 0.6931472
        %v5870 = vmul.f32 -0.5, %v4053
        %v5871 = vadd.f32 %v5870, 1.0
        %v5872 = vmul.f32 %v5871, %v4053
        %v5873 = vand.u32 2147483647, %v4053
        %vm5874 = vcmp.lt.f32.partialorder %v5873, 0.0004427343
        %v5875 = vsel %vm5874, %v5872, %v5869
        %v5876 = vadd.f32 %v4055, 1.0
        %v5877 = vlog2.pop %v5876
        %v5878 = vmul.f32 %v5877, 0.6931472
        %v5879 = vmul.f32 -0.5, %v4055
        %v5880 = vadd.f32 %v5879, 1.0
        %v5881 = vmul.f32 %v5880, %v4055
        %v5882 = vand.u32 2147483647, %v4055
        %vm5883 = vcmp.lt.f32.partialorder %v5882, 0.0004427343
        %v5884 = vsel %vm5883, %v5881, %v5878
        %v5885 = vadd.f32 %v4057, 1.0
        %v5886 = vlog2.pop %v5885
        %v5887 = vmul.f32 %v5886, 0.6931472
        %v5888 = vmul.f32 -0.5, %v4057
        %v5889 = vadd.f32 %v5888, 1.0
        %v5890 = vmul.f32 %v5889, %v4057
        %v5891 = vand.u32 2147483647, %v4057
        %vm5892 = vcmp.lt.f32.partialorder %v5891, 0.0004427343
        %v5893 = vsel %vm5892, %v5890, %v5887
        %v5894 = vadd.f32 %v4059, 1.0
        %v5895 = vlog2.pop %v5894
        %v5896 = vmul.f32 %v5895, 0.6931472
        %v5897 = vmul.f32 -0.5, %v4059
        %v5898 = vadd.f32 %v5897, 1.0
        %v5899 = vmul.f32 %v5898, %v4059
        %v5900 = vand.u32 2147483647, %v4059
        %vm5901 = vcmp.lt.f32.partialorder %v5900, 0.0004427343
        %v5902 = vsel %vm5901, %v5899, %v5896
        %v5903 = vadd.f32 %v4061, 1.0
        %v5904 = vlog2.pop %v5903
        %v5905 = vmul.f32 %v5904, 0.6931472
        %v5906 = vmul.f32 -0.5, %v4061
        %v5907 = vadd.f32 %v5906, 1.0
        %v5908 = vmul.f32 %v5907, %v4061
        %v5909 = vand.u32 2147483647, %v4061
        %vm5910 = vcmp.lt.f32.partialorder %v5909, 0.0004427343
        %v5911 = vsel %vm5910, %v5908, %v5905
        %v5912 = vadd.f32 %v4063, 1.0
        %v5913 = vlog2.pop %v5912
        %v5914 = vmul.f32 %v5913, 0.6931472
        %v5915 = vmul.f32 -0.5, %v4063
        %v5916 = vadd.f32 %v5915, 1.0
        %v5917 = vmul.f32 %v5916, %v4063
        %v5918 = vand.u32 2147483647, %v4063
        %vm5919 = vcmp.lt.f32.partialorder %v5918, 0.0004427343
        %v5920 = vsel %vm5919, %v5917, %v5914
        %v5921 = vadd.f32 %v4065, 1.0
        %v5922 = vlog2.pop %v5921
        %v5923 = vmul.f32 %v5922, 0.6931472
        %v5924 = vmul.f32 -0.5, %v4065
        %v5925 = vadd.f32 %v5924, 1.0
        %v5926 = vmul.f32 %v5925, %v4065
        %v5927 = vand.u32 2147483647, %v4065
        %vm5928 = vcmp.lt.f32.partialorder %v5927, 0.0004427343
        %v5929 = vsel %vm5928, %v5926, %v5923
        %v5930 = vadd.f32 %v4067, 1.0
        %v5931 = vlog2.pop %v5930
        %v5932 = vmul.f32 %v5931, 0.6931472
        %v5933 = vmul.f32 -0.5, %v4067
        %v5934 = vadd.f32 %v5933, 1.0
        %v5935 = vmul.f32 %v5934, %v4067
        %v5936 = vand.u32 2147483647, %v4067
        %vm5937 = vcmp.lt.f32.partialorder %v5936, 0.0004427343
        %v5938 = vsel %vm5937, %v5935, %v5932
        %v5939 = vadd.f32 %v4069, 1.0
        %v5940 = vlog2.pop %v5939
        %v5941 = vmul.f32 %v5940, 0.6931472
        %v5942 = vmul.f32 -0.5, %v4069
        %v5943 = vadd.f32 %v5942, 1.0
        %v5944 = vmul.f32 %v5943, %v4069
        %v5945 = vand.u32 2147483647, %v4069
        %vm5946 = vcmp.lt.f32.partialorder %v5945, 0.0004427343
        %v5947 = vsel %vm5946, %v5944, %v5941
        %v5948 = vadd.f32 %v4071, 1.0
        %v5949 = vlog2.pop %v5948
        %v5950 = vmul.f32 %v5949, 0.6931472
        %v5951 = vmul.f32 -0.5, %v4071
        %v5952 = vadd.f32 %v5951, 1.0
        %v5953 = vmul.f32 %v5952, %v4071
        %v5954 = vand.u32 2147483647, %v4071
        %vm5955 = vcmp.lt.f32.partialorder %v5954, 0.0004427343
        %v5956 = vsel %vm5955, %v5953, %v5950
        %v5957 = vadd.f32 %v4073, 1.0
        %v5958 = vlog2.pop %v5957
        %v5959 = vmul.f32 %v5958, 0.6931472
        %v5960 = vmul.f32 -0.5, %v4073
        %v5961 = vadd.f32 %v5960, 1.0
        %v5962 = vmul.f32 %v5961, %v4073
        %v5963 = vand.u32 2147483647, %v4073
        %vm5964 = vcmp.lt.f32.partialorder %v5963, 0.0004427343
        %v5965 = vsel %vm5964, %v5962, %v5959
        %v5966 = vadd.f32 %v4075, 1.0
        %v5967 = vlog2.pop %v5966
        %v5968 = vmul.f32 %v5967, 0.6931472
        %v5969 = vmul.f32 -0.5, %v4075
        %v5970 = vadd.f32 %v5969, 1.0
        %v5971 = vmul.f32 %v5970, %v4075
        %v5972 = vand.u32 2147483647, %v4075
        %vm5973 = vcmp.lt.f32.partialorder %v5972, 0.0004427343
        %v5974 = vsel %vm5973, %v5971, %v5968
        %v5975 = vadd.f32 %v4077, 1.0
        %v5976 = vlog2.pop %v5975
        %v5977 = vmul.f32 %v5976, 0.6931472
        %v5978 = vmul.f32 -0.5, %v4077
        %v5979 = vadd.f32 %v5978, 1.0
        %v5980 = vmul.f32 %v5979, %v4077
        %v5981 = vand.u32 2147483647, %v4077
        %vm5982 = vcmp.lt.f32.partialorder %v5981, 0.0004427343
        %v5983 = vsel %vm5982, %v5980, %v5977
        %v5984 = vadd.f32 %v4079, 1.0
        %v5985 = vlog2.pop %v5984
        %v5986 = vmul.f32 %v5985, 0.6931472
        %v5987 = vmul.f32 -0.5, %v4079
        %v5988 = vadd.f32 %v5987, 1.0
        %v5989 = vmul.f32 %v5988, %v4079
        %v5990 = vand.u32 2147483647, %v4079
        %vm5991 = vcmp.lt.f32.partialorder %v5990, 0.0004427343
        %v5992 = vsel %vm5991, %v5989, %v5986
        %v5993 = vadd.f32 %v4081, 1.0
        %v5994 = vlog2.pop %v5993
        %v5995 = vmul.f32 %v5994, 0.6931472
        %v5996 = vmul.f32 -0.5, %v4081
        %v5997 = vadd.f32 %v5996, 1.0
        %v5998 = vmul.f32 %v5997, %v4081
        %v5999 = vand.u32 2147483647, %v4081
        %vm6000 = vcmp.lt.f32.partialorder %v5999, 0.0004427343
        %v6001 = vsel %vm6000, %v5998, %v5995
        %v6002 = vadd.f32 %v4083, 1.0
        %v6003 = vlog2.pop %v6002
        %v6004 = vmul.f32 %v6003, 0.6931472
        %v6005 = vmul.f32 -0.5, %v4083
        %v6006 = vadd.f32 %v6005, 1.0
        %v6007 = vmul.f32 %v6006, %v4083
        %v6008 = vand.u32 2147483647, %v4083
        %vm6009 = vcmp.lt.f32.partialorder %v6008, 0.0004427343
        %v6010 = vsel %vm6009, %v6007, %v6004
        %v6011 = vadd.f32 %v4085, 1.0
        %v6012 = vlog2.pop %v6011
        %v6013 = vmul.f32 %v6012, 0.6931472
        %v6014 = vmul.f32 -0.5, %v4085
        %v6015 = vadd.f32 %v6014, 1.0
        %v6016 = vmul.f32 %v6015, %v4085
        %v6017 = vand.u32 2147483647, %v4085
        %vm6018 = vcmp.lt.f32.partialorder %v6017, 0.0004427343
        %v6019 = vsel %vm6018, %v6016, %v6013
        %v6020 = vadd.f32 %v4087, 1.0
        %v6021 = vlog2.pop %v6020
        %v6022 = vmul.f32 %v6021, 0.6931472
        %v6023 = vmul.f32 -0.5, %v4087
        %v6024 = vadd.f32 %v6023, 1.0
        %v6025 = vmul.f32 %v6024, %v4087
        %v6026 = vand.u32 2147483647, %v4087
        %vm6027 = vcmp.lt.f32.partialorder %v6026, 0.0004427343
        %v6028 = vsel %vm6027, %v6025, %v6022
        %v6029 = vadd.f32 %v4089, 1.0
        %v6030 = vlog2.pop %v6029
        %v6031 = vmul.f32 %v6030, 0.6931472
        %v6032 = vmul.f32 -0.5, %v4089
        %v6033 = vadd.f32 %v6032, 1.0
        %v6034 = vmul.f32 %v6033, %v4089
        %v6035 = vand.u32 2147483647, %v4089
        %vm6036 = vcmp.lt.f32.partialorder %v6035, 0.0004427343
        %v6037 = vsel %vm6036, %v6034, %v6031
        %v6038 = vadd.f32 %v4091, 1.0
        %v6039 = vlog2.pop %v6038
        %v6040 = vmul.f32 %v6039, 0.6931472
        %v6041 = vmul.f32 -0.5, %v4091
        %v6042 = vadd.f32 %v6041, 1.0
        %v6043 = vmul.f32 %v6042, %v4091
        %v6044 = vand.u32 2147483647, %v4091
        %vm6045 = vcmp.lt.f32.partialorder %v6044, 0.0004427343
        %v6046 = vsel %vm6045, %v6043, %v6040
        %v6047 = vadd.f32 %v4093, 1.0
        %v6048 = vlog2.pop %v6047
        %v6049 = vmul.f32 %v6048, 0.6931472
        %v6050 = vmul.f32 -0.5, %v4093
        %v6051 = vadd.f32 %v6050, 1.0
        %v6052 = vmul.f32 %v6051, %v4093
        %v6053 = vand.u32 2147483647, %v4093
        %vm6054 = vcmp.lt.f32.partialorder %v6053, 0.0004427343
        %v6055 = vsel %vm6054, %v6052, %v6049
        %v6056 = vadd.f32 %v4095, 1.0
        %v6057 = vlog2.pop %v6056
        %v6058 = vmul.f32 %v6057, 0.6931472
        %v6059 = vmul.f32 -0.5, %v4095
        %v6060 = vadd.f32 %v6059, 1.0
        %v6061 = vmul.f32 %v6060, %v4095
        %v6062 = vand.u32 2147483647, %v4095
        %vm6063 = vcmp.lt.f32.partialorder %v6062, 0.0004427343
        %v6064 = vsel %vm6063, %v6061, %v6058
        %v6065 = vadd.f32 %v4097, 1.0
        %v6066 = vlog2.pop %v6065
        %v6067 = vmul.f32 %v6066, 0.6931472
        %v6068 = vmul.f32 -0.5, %v4097
        %v6069 = vadd.f32 %v6068, 1.0
        %v6070 = vmul.f32 %v6069, %v4097
        %v6071 = vand.u32 2147483647, %v4097
        %vm6072 = vcmp.lt.f32.partialorder %v6071, 0.0004427343
        %v6073 = vsel %vm6072, %v6070, %v6067
        %v6074 = vadd.f32 %v4099, 1.0
        %v6075 = vlog2.pop %v6074
        %v6076 = vmul.f32 %v6075, 0.6931472
        %v6077 = vmul.f32 -0.5, %v4099
        %v6078 = vadd.f32 %v6077, 1.0
        %v6079 = vmul.f32 %v6078, %v4099
        %v6080 = vand.u32 2147483647, %v4099
        %vm6081 = vcmp.lt.f32.partialorder %v6080, 0.0004427343
        %v6082 = vsel %vm6081, %v6079, %v6076
        %v6083 = vadd.f32 %v4101, 1.0
        %v6084 = vlog2.pop %v6083
        %v6085 = vmul.f32 %v6084, 0.6931472
        %v6086 = vmul.f32 -0.5, %v4101
        %v6087 = vadd.f32 %v6086, 1.0
        %v6088 = vmul.f32 %v6087, %v4101
        %v6089 = vand.u32 2147483647, %v4101
        %vm6090 = vcmp.lt.f32.partialorder %v6089, 0.0004427343
        %v6091 = vsel %vm6090, %v6088, %v6085
        %v6092 = vadd.f32 %v4103, 1.0
        %v6093 = vlog2.pop %v6092
        %v6094 = vmul.f32 %v6093, 0.6931472
        %v6095 = vmul.f32 -0.5, %v4103
        %v6096 = vadd.f32 %v6095, 1.0
        %v6097 = vmul.f32 %v6096, %v4103
        %v6098 = vand.u32 2147483647, %v4103
        %vm6099 = vcmp.lt.f32.partialorder %v6098, 0.0004427343
        %v6100 = vsel %vm6099, %v6097, %v6094
        %v6101 = vadd.f32 %v4105, 1.0
        %v6102 = vlog2.pop %v6101
        %v6103 = vmul.f32 %v6102, 0.6931472
        %v6104 = vmul.f32 -0.5, %v4105
        %v6105 = vadd.f32 %v6104, 1.0
        %v6106 = vmul.f32 %v6105, %v4105
        %v6107 = vand.u32 2147483647, %v4105
        %vm6108 = vcmp.lt.f32.partialorder %v6107, 0.0004427343
        %v6109 = vsel %vm6108, %v6106, %v6103
        %v6110 = vadd.f32 %v4107, 1.0
        %v6111 = vlog2.pop %v6110
        %v6112 = vmul.f32 %v6111, 0.6931472
        %v6113 = vmul.f32 -0.5, %v4107
        %v6114 = vadd.f32 %v6113, 1.0
        %v6115 = vmul.f32 %v6114, %v4107
        %v6116 = vand.u32 2147483647, %v4107
        %vm6117 = vcmp.lt.f32.partialorder %v6116, 0.0004427343
        %v6118 = vsel %vm6117, %v6115, %v6112
        %v6119 = vadd.f32 %v4109, 1.0
        %v6120 = vlog2.pop %v6119
        %v6121 = vmul.f32 %v6120, 0.6931472
        %v6122 = vmul.f32 -0.5, %v4109
        %v6123 = vadd.f32 %v6122, 1.0
        %v6124 = vmul.f32 %v6123, %v4109
        %v6125 = vand.u32 2147483647, %v4109
        %vm6126 = vcmp.lt.f32.partialorder %v6125, 0.0004427343
        %v6127 = vsel %vm6126, %v6124, %v6121
        %v6128 = vadd.f32 %v4111, 1.0
        %v6129 = vlog2.pop %v6128
        %v6130 = vmul.f32 %v6129, 0.6931472
        %v6131 = vmul.f32 -0.5, %v4111
        %v6132 = vadd.f32 %v6131, 1.0
        %v6133 = vmul.f32 %v6132, %v4111
        %v6134 = vand.u32 2147483647, %v4111
        %vm6135 = vcmp.lt.f32.partialorder %v6134, 0.0004427343
        %v6136 = vsel %vm6135, %v6133, %v6130
        %v6137 = vadd.f32 %v4113, 1.0
        %v6138 = vlog2.pop %v6137
        %v6139 = vmul.f32 %v6138, 0.6931472
        %v6140 = vmul.f32 -0.5, %v4113
        %v6141 = vadd.f32 %v6140, 1.0
        %v6142 = vmul.f32 %v6141, %v4113
        %v6143 = vand.u32 2147483647, %v4113
        %vm6144 = vcmp.lt.f32.partialorder %v6143, 0.0004427343
        %v6145 = vsel %vm6144, %v6142, %v6139
        %v6146 = vadd.f32 %v4115, 1.0
        %v6147 = vlog2.pop %v6146
        %v6148 = vmul.f32 %v6147, 0.6931472
        %v6149 = vmul.f32 -0.5, %v4115
        %v6150 = vadd.f32 %v6149, 1.0
        %v6151 = vmul.f32 %v6150, %v4115
        %v6152 = vand.u32 2147483647, %v4115
        %vm6153 = vcmp.lt.f32.partialorder %v6152, 0.0004427343
        %v6154 = vsel %vm6153, %v6151, %v6148
        %v6155 = vadd.f32 %v4117, 1.0
        %v6156 = vlog2.pop %v6155
        %v6157 = vmul.f32 %v6156, 0.6931472
        %v6158 = vmul.f32 -0.5, %v4117
        %v6159 = vadd.f32 %v6158, 1.0
        %v6160 = vmul.f32 %v6159, %v4117
        %v6161 = vand.u32 2147483647, %v4117
        %vm6162 = vcmp.lt.f32.partialorder %v6161, 0.0004427343
        %v6163 = vsel %vm6162, %v6160, %v6157
        %v6164 = vadd.f32 %v4119, 1.0
        %v6165 = vlog2.pop %v6164
        %v6166 = vmul.f32 %v6165, 0.6931472
        %v6167 = vmul.f32 -0.5, %v4119
        %v6168 = vadd.f32 %v6167, 1.0
        %v6169 = vmul.f32 %v6168, %v4119
        %v6170 = vand.u32 2147483647, %v4119
        %vm6171 = vcmp.lt.f32.partialorder %v6170, 0.0004427343
        %v6172 = vsel %vm6171, %v6169, %v6166
        %v6173 = vadd.f32 %v4121, 1.0
        %v6174 = vlog2.pop %v6173
        %v6175 = vmul.f32 %v6174, 0.6931472
        %v6176 = vmul.f32 -0.5, %v4121
        %v6177 = vadd.f32 %v6176, 1.0
        %v6178 = vmul.f32 %v6177, %v4121
        %v6179 = vand.u32 2147483647, %v4121
        %vm6180 = vcmp.lt.f32.partialorder %v6179, 0.0004427343
        %v6181 = vsel %vm6180, %v6178, %v6175
        %v6182 = vadd.f32 %v4123, 1.0
        %v6183 = vlog2.pop %v6182
        %v6184 = vmul.f32 %v6183, 0.6931472
        %v6185 = vmul.f32 -0.5, %v4123
        %v6186 = vadd.f32 %v6185, 1.0
        %v6187 = vmul.f32 %v6186, %v4123
        %v6188 = vand.u32 2147483647, %v4123
        %vm6189 = vcmp.lt.f32.partialorder %v6188, 0.0004427343
        %v6190 = vsel %vm6189, %v6187, %v6184
        %v6191 = vadd.f32 %v4125, 1.0
        %v6192 = vlog2.pop %v6191
        %v6193 = vmul.f32 %v6192, 0.6931472
        %v6194 = vmul.f32 -0.5, %v4125
        %v6195 = vadd.f32 %v6194, 1.0
        %v6196 = vmul.f32 %v6195, %v4125
        %v6197 = vand.u32 2147483647, %v4125
        %vm6198 = vcmp.lt.f32.partialorder %v6197, 0.0004427343
        %v6199 = vsel %vm6198, %v6196, %v6193
        %v6200 = vadd.f32 %v4127, 1.0
        %v6201 = vlog2.pop %v6200
        %v6202 = vmul.f32 %v6201, 0.6931472
        %v6203 = vmul.f32 -0.5, %v4127
        %v6204 = vadd.f32 %v6203, 1.0
        %v6205 = vmul.f32 %v6204, %v4127
        %v6206 = vand.u32 2147483647, %v4127
        %vm6207 = vcmp.lt.f32.partialorder %v6206, 0.0004427343
        %v6208 = vsel %vm6207, %v6205, %v6202
        %v6209 = vadd.f32 %v4129, 1.0
        %v6210 = vlog2.pop %v6209
        %v6211 = vmul.f32 %v6210, 0.6931472
        %v6212 = vmul.f32 -0.5, %v4129
        %v6213 = vadd.f32 %v6212, 1.0
        %v6214 = vmul.f32 %v6213, %v4129
        %v6215 = vand.u32 2147483647, %v4129
        %vm6216 = vcmp.lt.f32.partialorder %v6215, 0.0004427343
        %v6217 = vsel %vm6216, %v6214, %v6211
        %v6218 = vadd.f32 %v4131, 1.0
        %v6219 = vlog2.pop %v6218
        %v6220 = vmul.f32 %v6219, 0.6931472
        %v6221 = vmul.f32 -0.5, %v4131
        %v6222 = vadd.f32 %v6221, 1.0
        %v6223 = vmul.f32 %v6222, %v4131
        %v6224 = vand.u32 2147483647, %v4131
        %vm6225 = vcmp.lt.f32.partialorder %v6224, 0.0004427343
        %v6226 = vsel %vm6225, %v6223, %v6220
        %v6227 = vadd.f32 %v4133, 1.0
        %v6228 = vlog2.pop %v6227
        %v6229 = vmul.f32 %v6228, 0.6931472
        %v6230 = vmul.f32 -0.5, %v4133
        %v6231 = vadd.f32 %v6230, 1.0
        %v6232 = vmul.f32 %v6231, %v4133
        %v6233 = vand.u32 2147483647, %v4133
        %vm6234 = vcmp.lt.f32.partialorder %v6233, 0.0004427343
        %v6235 = vsel %vm6234, %v6232, %v6229
        %v6236 = vadd.f32 %v4135, 1.0
        %v6237 = vlog2.pop %v6236
        %v6238 = vmul.f32 %v6237, 0.6931472
        %v6239 = vmul.f32 -0.5, %v4135
        %v6240 = vadd.f32 %v6239, 1.0
        %v6241 = vmul.f32 %v6240, %v4135
        %v6242 = vand.u32 2147483647, %v4135
        %vm6243 = vcmp.lt.f32.partialorder %v6242, 0.0004427343
        %v6244 = vsel %vm6243, %v6241, %v6238
        %v6245 = vadd.f32 %v4137, 1.0
        %v6246 = vlog2.pop %v6245
        %v6247 = vmul.f32 %v6246, 0.6931472
        %v6248 = vmul.f32 -0.5, %v4137
        %v6249 = vadd.f32 %v6248, 1.0
        %v6250 = vmul.f32 %v6249, %v4137
        %v6251 = vand.u32 2147483647, %v4137
        %vm6252 = vcmp.lt.f32.partialorder %v6251, 0.0004427343
        %v6253 = vsel %vm6252, %v6250, %v6247
        %v6254 = vadd.f32 %v4139, 1.0
        %v6255 = vlog2.pop %v6254
        %v6256 = vmul.f32 %v6255, 0.6931472
        %v6257 = vmul.f32 -0.5, %v4139
        %v6258 = vadd.f32 %v6257, 1.0
        %v6259 = vmul.f32 %v6258, %v4139
        %v6260 = vand.u32 2147483647, %v4139
        %vm6261 = vcmp.lt.f32.partialorder %v6260, 0.0004427343
        %v6262 = vsel %vm6261, %v6259, %v6256
        %v6263 = vadd.f32 %v4141, 1.0
        %v6264 = vlog2.pop %v6263
        %v6265 = vmul.f32 %v6264, 0.6931472
        %v6266 = vmul.f32 -0.5, %v4141
        %v6267 = vadd.f32 %v6266, 1.0
        %v6268 = vmul.f32 %v6267, %v4141
        %v6269 = vand.u32 2147483647, %v4141
        %vm6270 = vcmp.lt.f32.partialorder %v6269, 0.0004427343
        %v6271 = vsel %vm6270, %v6268, %v6265
        %v6272 = vadd.f32 %v4143, 1.0
        %v6273 = vlog2.pop %v6272
        %v6274 = vmul.f32 %v6273, 0.6931472
        %v6275 = vmul.f32 -0.5, %v4143
        %v6276 = vadd.f32 %v6275, 1.0
        %v6277 = vmul.f32 %v6276, %v4143
        %v6278 = vand.u32 2147483647, %v4143
        %vm6279 = vcmp.lt.f32.partialorder %v6278, 0.0004427343
        %v6280 = vsel %vm6279, %v6277, %v6274
        %v6281 = vadd.f32 %v4145, 1.0
        %v6282 = vlog2.pop %v6281
        %v6283 = vmul.f32 %v6282, 0.6931472
        %v6284 = vmul.f32 -0.5, %v4145
        %v6285 = vadd.f32 %v6284, 1.0
        %v6286 = vmul.f32 %v6285, %v4145
        %v6287 = vand.u32 2147483647, %v4145
        %vm6288 = vcmp.lt.f32.partialorder %v6287, 0.0004427343
        %v6289 = vsel %vm6288, %v6286, %v6283
        %v6290 = vadd.f32 %v4147, 1.0
        %v6291 = vlog2.pop %v6290
        %v6292 = vmul.f32 %v6291, 0.6931472
        %v6293 = vmul.f32 -0.5, %v4147
        %v6294 = vadd.f32 %v6293, 1.0
        %v6295 = vmul.f32 %v6294, %v4147
        %v6296 = vand.u32 2147483647, %v4147
        %vm6297 = vcmp.lt.f32.partialorder %v6296, 0.0004427343
        %v6298 = vsel %vm6297, %v6295, %v6292
        %v6299 = vadd.f32 %v4149, 1.0
        %v6300 = vlog2.pop %v6299
        %v6301 = vmul.f32 %v6300, 0.6931472
        %v6302 = vmul.f32 -0.5, %v4149
        %v6303 = vadd.f32 %v6302, 1.0
        %v6304 = vmul.f32 %v6303, %v4149
        %v6305 = vand.u32 2147483647, %v4149
        %vm6306 = vcmp.lt.f32.partialorder %v6305, 0.0004427343
        %v6307 = vsel %vm6306, %v6304, %v6301
        %v6308 = vadd.f32 %v4151, 1.0
        %v6309 = vlog2.pop %v6308
        %v6310 = vmul.f32 %v6309, 0.6931472
        %v6311 = vmul.f32 -0.5, %v4151
        %v6312 = vadd.f32 %v6311, 1.0
        %v6313 = vmul.f32 %v6312, %v4151
        %v6314 = vand.u32 2147483647, %v4151
        %vm6315 = vcmp.lt.f32.partialorder %v6314, 0.0004427343
        %v6316 = vsel %vm6315, %v6313, %v6310
        %v6317 = vadd.f32 %v4153, 1.0
        %v6318 = vlog2.pop %v6317
        %v6319 = vmul.f32 %v6318, 0.6931472
        %v6320 = vmul.f32 -0.5, %v4153
        %v6321 = vadd.f32 %v6320, 1.0
        %v6322 = vmul.f32 %v6321, %v4153
        %v6323 = vand.u32 2147483647, %v4153
        %vm6324 = vcmp.lt.f32.partialorder %v6323, 0.0004427343
        %v6325 = vsel %vm6324, %v6322, %v6319
        %v6326 = vadd.f32 %v4155, 1.0
        %v6327 = vlog2.pop %v6326
        %v6328 = vmul.f32 %v6327, 0.6931472
        %v6329 = vmul.f32 -0.5, %v4155
        %v6330 = vadd.f32 %v6329, 1.0
        %v6331 = vmul.f32 %v6330, %v4155
        %v6332 = vand.u32 2147483647, %v4155
        %vm6333 = vcmp.lt.f32.partialorder %v6332, 0.0004427343
        %v6334 = vsel %vm6333, %v6331, %v6328
        %v6335 = vadd.f32 %v4157, 1.0
        %v6336 = vlog2.pop %v6335
        %v6337 = vmul.f32 %v6336, 0.6931472
        %v6338 = vmul.f32 -0.5, %v4157
        %v6339 = vadd.f32 %v6338, 1.0
        %v6340 = vmul.f32 %v6339, %v4157
        %v6341 = vand.u32 2147483647, %v4157
        %vm6342 = vcmp.lt.f32.partialorder %v6341, 0.0004427343
        %v6343 = vsel %vm6342, %v6340, %v6337
        %v6344 = vadd.f32 %v4159, 1.0
        %v6345 = vlog2.pop %v6344
        %v6346 = vmul.f32 %v6345, 0.6931472
        %v6347 = vmul.f32 -0.5, %v4159
        %v6348 = vadd.f32 %v6347, 1.0
        %v6349 = vmul.f32 %v6348, %v4159
        %v6350 = vand.u32 2147483647, %v4159
        %vm6351 = vcmp.lt.f32.partialorder %v6350, 0.0004427343
        %v6352 = vsel %vm6351, %v6349, %v6346
        %v6353 = vadd.f32 %v4161, 1.0
        %v6354 = vlog2.pop %v6353
        %v6355 = vmul.f32 %v6354, 0.6931472
        %v6356 = vmul.f32 -0.5, %v4161
        %v6357 = vadd.f32 %v6356, 1.0
        %v6358 = vmul.f32 %v6357, %v4161
        %v6359 = vand.u32 2147483647, %v4161
        %vm6360 = vcmp.lt.f32.partialorder %v6359, 0.0004427343
        %v6361 = vsel %vm6360, %v6358, %v6355
        %v6362 = vadd.f32 %v4163, 1.0
        %v6363 = vlog2.pop %v6362
        %v6364 = vmul.f32 %v6363, 0.6931472
        %v6365 = vmul.f32 -0.5, %v4163
        %v6366 = vadd.f32 %v6365, 1.0
        %v6367 = vmul.f32 %v6366, %v4163
        %v6368 = vand.u32 2147483647, %v4163
        %vm6369 = vcmp.lt.f32.partialorder %v6368, 0.0004427343
        %v6370 = vsel %vm6369, %v6367, %v6364
        %v6371 = vadd.f32 %v4165, 1.0
        %v6372 = vlog2.pop %v6371
        %v6373 = vmul.f32 %v6372, 0.6931472
        %v6374 = vmul.f32 -0.5, %v4165
        %v6375 = vadd.f32 %v6374, 1.0
        %v6376 = vmul.f32 %v6375, %v4165
        %v6377 = vand.u32 2147483647, %v4165
        %vm6378 = vcmp.lt.f32.partialorder %v6377, 0.0004427343
        %v6379 = vsel %vm6378, %v6376, %v6373
        %v6380 = vadd.f32 %v4167, 1.0
        %v6381 = vlog2.pop %v6380
        %v6382 = vmul.f32 %v6381, 0.6931472
        %v6383 = vmul.f32 -0.5, %v4167
        %v6384 = vadd.f32 %v6383, 1.0
        %v6385 = vmul.f32 %v6384, %v4167
        %v6386 = vand.u32 2147483647, %v4167
        %vm6387 = vcmp.lt.f32.partialorder %v6386, 0.0004427343
        %v6388 = vsel %vm6387, %v6385, %v6382
        %v6389 = vadd.f32 %v4169, 1.0
        %v6390 = vlog2.pop %v6389
        %v6391 = vmul.f32 %v6390, 0.6931472
        %v6392 = vmul.f32 -0.5, %v4169
        %v6393 = vadd.f32 %v6392, 1.0
        %v6394 = vmul.f32 %v6393, %v4169
        %v6395 = vand.u32 2147483647, %v4169
        %vm6396 = vcmp.lt.f32.partialorder %v6395, 0.0004427343
        %v6397 = vsel %vm6396, %v6394, %v6391
        %v6398 = vadd.f32 %v4171, 1.0
        %v6399 = vlog2.pop %v6398
        %v6400 = vmul.f32 %v6399, 0.6931472
        %v6401 = vmul.f32 -0.5, %v4171
        %v6402 = vadd.f32 %v6401, 1.0
        %v6403 = vmul.f32 %v6402, %v4171
        %v6404 = vand.u32 2147483647, %v4171
        %vm6405 = vcmp.lt.f32.partialorder %v6404, 0.0004427343
        %v6406 = vsel %vm6405, %v6403, %v6400
        %v6407 = vadd.f32 %v4173, 1.0
        %v6408 = vlog2.pop %v6407
        %v6409 = vmul.f32 %v6408, 0.6931472
        %v6410 = vmul.f32 -0.5, %v4173
        %v6411 = vadd.f32 %v6410, 1.0
        %v6412 = vmul.f32 %v6411, %v4173
        %v6413 = vand.u32 2147483647, %v4173
        %vm6414 = vcmp.lt.f32.partialorder %v6413, 0.0004427343
        %v6415 = vsel %vm6414, %v6412, %v6409
        %v6416 = vadd.f32 %v4175, 1.0
        %v6417 = vlog2.pop %v6416
        %v6418 = vmul.f32 %v6417, 0.6931472
        %v6419 = vmul.f32 -0.5, %v4175
        %v6420 = vadd.f32 %v6419, 1.0
        %v6421 = vmul.f32 %v6420, %v4175
        %v6422 = vand.u32 2147483647, %v4175
        %vm6423 = vcmp.lt.f32.partialorder %v6422, 0.0004427343
        %v6424 = vsel %vm6423, %v6421, %v6418
        %v6425 = vadd.f32 %v4177, 1.0
        %v6426 = vlog2.pop %v6425
        %v6427 = vmul.f32 %v6426, 0.6931472
        %v6428 = vmul.f32 -0.5, %v4177
        %v6429 = vadd.f32 %v6428, 1.0
        %v6430 = vmul.f32 %v6429, %v4177
        %v6431 = vand.u32 2147483647, %v4177
        %vm6432 = vcmp.lt.f32.partialorder %v6431, 0.0004427343
        %v6433 = vsel %vm6432, %v6430, %v6427
        %v6434 = vadd.f32 %v4179, 1.0
        %v6435 = vlog2.pop %v6434
        %v6436 = vmul.f32 %v6435, 0.6931472
        %v6437 = vmul.f32 -0.5, %v4179
        %v6438 = vadd.f32 %v6437, 1.0
        %v6439 = vmul.f32 %v6438, %v4179
        %v6440 = vand.u32 2147483647, %v4179
        %vm6441 = vcmp.lt.f32.partialorder %v6440, 0.0004427343
        %v6442 = vsel %vm6441, %v6439, %v6436
        %v6443 = vadd.f32 %v4181, 1.0
        %v6444 = vlog2.pop %v6443
        %v6445 = vmul.f32 %v6444, 0.6931472
        %v6446 = vmul.f32 -0.5, %v4181
        %v6447 = vadd.f32 %v6446, 1.0
        %v6448 = vmul.f32 %v6447, %v4181
        %v6449 = vand.u32 2147483647, %v4181
        %vm6450 = vcmp.lt.f32.partialorder %v6449, 0.0004427343
        %v6451 = vsel %vm6450, %v6448, %v6445
        %v6452 = vadd.f32 %v4183, 1.0
        %v6453 = vlog2.pop %v6452
        %v6454 = vmul.f32 %v6453, 0.6931472
        %v6455 = vmul.f32 -0.5, %v4183
        %v6456 = vadd.f32 %v6455, 1.0
        %v6457 = vmul.f32 %v6456, %v4183
        %v6458 = vand.u32 2147483647, %v4183
        %vm6459 = vcmp.lt.f32.partialorder %v6458, 0.0004427343
        %v6460 = vsel %vm6459, %v6457, %v6454
        %v6461 = vadd.f32 %v4185, 1.0
        %v6462 = vlog2.pop %v6461
        %v6463 = vmul.f32 %v6462, 0.6931472
        %v6464 = vmul.f32 -0.5, %v4185
        %v6465 = vadd.f32 %v6464, 1.0
        %v6466 = vmul.f32 %v6465, %v4185
        %v6467 = vand.u32 2147483647, %v4185
        %vm6468 = vcmp.lt.f32.partialorder %v6467, 0.0004427343
        %v6469 = vsel %vm6468, %v6466, %v6463
        %v6470 = vadd.f32 %v4187, 1.0
        %v6471 = vlog2.pop %v6470
        %v6472 = vmul.f32 %v6471, 0.6931472
        %v6473 = vmul.f32 -0.5, %v4187
        %v6474 = vadd.f32 %v6473, 1.0
        %v6475 = vmul.f32 %v6474, %v4187
        %v6476 = vand.u32 2147483647, %v4187
        %vm6477 = vcmp.lt.f32.partialorder %v6476, 0.0004427343
        %v6478 = vsel %vm6477, %v6475, %v6472
        %v6479 = vadd.f32 %v4189, 1.0
        %v6480 = vlog2.pop %v6479
        %v6481 = vmul.f32 %v6480, 0.6931472
        %v6482 = vmul.f32 -0.5, %v4189
        %v6483 = vadd.f32 %v6482, 1.0
        %v6484 = vmul.f32 %v6483, %v4189
        %v6485 = vand.u32 2147483647, %v4189
        %vm6486 = vcmp.lt.f32.partialorder %v6485, 0.0004427343
        %v6487 = vsel %vm6486, %v6484, %v6481
        %v6488 = vadd.f32 %v4191, 1.0
        %v6489 = vlog2.pop %v6488
        %v6490 = vmul.f32 %v6489, 0.6931472
        %v6491 = vmul.f32 -0.5, %v4191
        %v6492 = vadd.f32 %v6491, 1.0
        %v6493 = vmul.f32 %v6492, %v4191
        %v6494 = vand.u32 2147483647, %v4191
        %vm6495 = vcmp.lt.f32.partialorder %v6494, 0.0004427343
        %v6496 = vsel %vm6495, %v6493, %v6490
        %v6497 = vadd.f32 %v4193, 1.0
        %v6498 = vlog2.pop %v6497
        %v6499 = vmul.f32 %v6498, 0.6931472
        %v6500 = vmul.f32 -0.5, %v4193
        %v6501 = vadd.f32 %v6500, 1.0
        %v6502 = vmul.f32 %v6501, %v4193
        %v6503 = vand.u32 2147483647, %v4193
        %vm6504 = vcmp.lt.f32.partialorder %v6503, 0.0004427343
        %v6505 = vsel %vm6504, %v6502, %v6499
        %v6506 = vadd.f32 %v4195, 1.0
        %v6507 = vlog2.pop %v6506
        %v6508 = vmul.f32 %v6507, 0.6931472
        %v6509 = vmul.f32 -0.5, %v4195
        %v6510 = vadd.f32 %v6509, 1.0
        %v6511 = vmul.f32 %v6510, %v4195
        %v6512 = vand.u32 2147483647, %v4195
        %vm6513 = vcmp.lt.f32.partialorder %v6512, 0.0004427343
        %v6514 = vsel %vm6513, %v6511, %v6508
        %v6515 = vadd.f32 %v4197, 1.0
        %v6516 = vlog2.pop %v6515
        %v6517 = vmul.f32 %v6516, 0.6931472
        %v6518 = vmul.f32 -0.5, %v4197
        %v6519 = vadd.f32 %v6518, 1.0
        %v6520 = vmul.f32 %v6519, %v4197
        %v6521 = vand.u32 2147483647, %v4197
        %vm6522 = vcmp.lt.f32.partialorder %v6521, 0.0004427343
        %v6523 = vsel %vm6522, %v6520, %v6517
        %v6524 = vadd.f32 %v4199, 1.0
        %v6525 = vlog2.pop %v6524
        %v6526 = vmul.f32 %v6525, 0.6931472
        %v6527 = vmul.f32 -0.5, %v4199
        %v6528 = vadd.f32 %v6527, 1.0
        %v6529 = vmul.f32 %v6528, %v4199
        %v6530 = vand.u32 2147483647, %v4199
        %vm6531 = vcmp.lt.f32.partialorder %v6530, 0.0004427343
        %v6532 = vsel %vm6531, %v6529, %v6526
        %v6533 = vadd.f32 %v4201, 1.0
        %v6534 = vlog2.pop %v6533
        %v6535 = vmul.f32 %v6534, 0.6931472
        %v6536 = vmul.f32 -0.5, %v4201
        %v6537 = vadd.f32 %v6536, 1.0
        %v6538 = vmul.f32 %v6537, %v4201
        %v6539 = vand.u32 2147483647, %v4201
        %vm6540 = vcmp.lt.f32.partialorder %v6539, 0.0004427343
        %v6541 = vsel %vm6540, %v6538, %v6535
        %v6542 = vadd.f32 %v4203, 1.0
        %v6543 = vlog2.pop %v6542
        %v6544 = vmul.f32 %v6543, 0.6931472
        %v6545 = vmul.f32 -0.5, %v4203
        %v6546 = vadd.f32 %v6545, 1.0
        %v6547 = vmul.f32 %v6546, %v4203
        %v6548 = vand.u32 2147483647, %v4203
        %vm6549 = vcmp.lt.f32.partialorder %v6548, 0.0004427343
        %v6550 = vsel %vm6549, %v6547, %v6544
        %v6551 = vadd.f32 %v4205, 1.0
        %v6552 = vlog2.pop %v6551
        %v6553 = vmul.f32 %v6552, 0.6931472
        %v6554 = vmul.f32 -0.5, %v4205
        %v6555 = vadd.f32 %v6554, 1.0
        %v6556 = vmul.f32 %v6555, %v4205
        %v6557 = vand.u32 2147483647, %v4205
        %vm6558 = vcmp.lt.f32.partialorder %v6557, 0.0004427343
        %v6559 = vsel %vm6558, %v6556, %v6553
        %v6560 = vadd.f32 %v4207, 1.0
        %v6561 = vlog2.pop %v6560
        %v6562 = vmul.f32 %v6561, 0.6931472
        %v6563 = vmul.f32 -0.5, %v4207
        %v6564 = vadd.f32 %v6563, 1.0
        %v6565 = vmul.f32 %v6564, %v4207
        %v6566 = vand.u32 2147483647, %v4207
        %vm6567 = vcmp.lt.f32.partialorder %v6566, 0.0004427343
        %v6568 = vsel %vm6567, %v6565, %v6562
        %v6569 = vadd.f32 %v4209, 1.0
        %v6570 = vlog2.pop %v6569
        %v6571 = vmul.f32 %v6570, 0.6931472
        %v6572 = vmul.f32 -0.5, %v4209
        %v6573 = vadd.f32 %v6572, 1.0
        %v6574 = vmul.f32 %v6573, %v4209
        %v6575 = vand.u32 2147483647, %v4209
        %vm6576 = vcmp.lt.f32.partialorder %v6575, 0.0004427343
        %v6577 = vsel %vm6576, %v6574, %v6571
        %v6578 = vadd.f32 %v4211, 1.0
        %v6579 = vlog2.pop %v6578
        %v6580 = vmul.f32 %v6579, 0.6931472
        %v6581 = vmul.f32 -0.5, %v4211
        %v6582 = vadd.f32 %v6581, 1.0
        %v6583 = vmul.f32 %v6582, %v4211
        %v6584 = vand.u32 2147483647, %v4211
        %vm6585 = vcmp.lt.f32.partialorder %v6584, 0.0004427343
        %v6586 = vsel %vm6585, %v6583, %v6580
        %v6587 = vadd.f32 %v4213, 1.0
        %v6588 = vlog2.pop %v6587
        %v6589 = vmul.f32 %v6588, 0.6931472
        %v6590 = vmul.f32 -0.5, %v4213
        %v6591 = vadd.f32 %v6590, 1.0
        %v6592 = vmul.f32 %v6591, %v4213
        %v6593 = vand.u32 2147483647, %v4213
        %vm6594 = vcmp.lt.f32.partialorder %v6593, 0.0004427343
        %v6595 = vsel %vm6594, %v6592, %v6589
        %v6596 = vadd.f32 %v4215, 1.0
        %v6597 = vlog2.pop %v6596
        %v6598 = vmul.f32 %v6597, 0.6931472
        %v6599 = vmul.f32 -0.5, %v4215
        %v6600 = vadd.f32 %v6599, 1.0
        %v6601 = vmul.f32 %v6600, %v4215
        %v6602 = vand.u32 2147483647, %v4215
        %vm6603 = vcmp.lt.f32.partialorder %v6602, 0.0004427343
        %v6604 = vsel %vm6603, %v6601, %v6598
        %v6605 = vadd.f32 %v4217, 1.0
        %v6606 = vlog2.pop %v6605
        %v6607 = vmul.f32 %v6606, 0.6931472
        %v6608 = vmul.f32 -0.5, %v4217
        %v6609 = vadd.f32 %v6608, 1.0
        %v6610 = vmul.f32 %v6609, %v4217
        %v6611 = vand.u32 2147483647, %v4217
        %vm6612 = vcmp.lt.f32.partialorder %v6611, 0.0004427343
        %v6613 = vsel %vm6612, %v6610, %v6607
        %v6614 = vadd.f32 %v4219, 1.0
        %v6615 = vlog2.pop %v6614
        %v6616 = vmul.f32 %v6615, 0.6931472
        %v6617 = vmul.f32 -0.5, %v4219
        %v6618 = vadd.f32 %v6617, 1.0
        %v6619 = vmul.f32 %v6618, %v4219
        %v6620 = vand.u32 2147483647, %v4219
        %vm6621 = vcmp.lt.f32.partialorder %v6620, 0.0004427343
        %v6622 = vsel %vm6621, %v6619, %v6616
        %v6623 = vadd.f32 %v4221, 1.0
        %v6624 = vlog2.pop %v6623
        %v6625 = vmul.f32 %v6624, 0.6931472
        %v6626 = vmul.f32 -0.5, %v4221
        %v6627 = vadd.f32 %v6626, 1.0
        %v6628 = vmul.f32 %v6627, %v4221
        %v6629 = vand.u32 2147483647, %v4221
        %vm6630 = vcmp.lt.f32.partialorder %v6629, 0.0004427343
        %v6631 = vsel %vm6630, %v6628, %v6625
        %v6632 = vadd.f32 %v4223, 1.0
        %v6633 = vlog2.pop %v6632
        %v6634 = vmul.f32 %v6633, 0.6931472
        %v6635 = vmul.f32 -0.5, %v4223
        %v6636 = vadd.f32 %v6635, 1.0
        %v6637 = vmul.f32 %v6636, %v4223
        %v6638 = vand.u32 2147483647, %v4223
        %vm6639 = vcmp.lt.f32.partialorder %v6638, 0.0004427343
        %v6640 = vsel %vm6639, %v6637, %v6634
        %v6641 = vadd.f32 %v4225, 1.0
        %v6642 = vlog2.pop %v6641
        %v6643 = vmul.f32 %v6642, 0.6931472
        %v6644 = vmul.f32 -0.5, %v4225
        %v6645 = vadd.f32 %v6644, 1.0
        %v6646 = vmul.f32 %v6645, %v4225
        %v6647 = vand.u32 2147483647, %v4225
        %vm6648 = vcmp.lt.f32.partialorder %v6647, 0.0004427343
        %v6649 = vsel %vm6648, %v6646, %v6643
        %v6650 = vadd.f32 %v4227, 1.0
        %v6651 = vlog2.pop %v6650
        %v6652 = vmul.f32 %v6651, 0.6931472
        %v6653 = vmul.f32 -0.5, %v4227
        %v6654 = vadd.f32 %v6653, 1.0
        %v6655 = vmul.f32 %v6654, %v4227
        %v6656 = vand.u32 2147483647, %v4227
        %vm6657 = vcmp.lt.f32.partialorder %v6656, 0.0004427343
        %v6658 = vsel %vm6657, %v6655, %v6652
        %v6659 = vadd.f32 %v4229, 1.0
        %v6660 = vlog2.pop %v6659
        %v6661 = vmul.f32 %v6660, 0.6931472
        %v6662 = vmul.f32 -0.5, %v4229
        %v6663 = vadd.f32 %v6662, 1.0
        %v6664 = vmul.f32 %v6663, %v4229
        %v6665 = vand.u32 2147483647, %v4229
        %vm6666 = vcmp.lt.f32.partialorder %v6665, 0.0004427343
        %v6667 = vsel %vm6666, %v6664, %v6661
        %v6668 = vadd.f32 %v4231, 1.0
        %v6669 = vlog2.pop %v6668
        %v6670 = vmul.f32 %v6669, 0.6931472
        %v6671 = vmul.f32 -0.5, %v4231
        %v6672 = vadd.f32 %v6671, 1.0
        %v6673 = vmul.f32 %v6672, %v4231
        %v6674 = vand.u32 2147483647, %v4231
        %vm6675 = vcmp.lt.f32.partialorder %v6674, 0.0004427343
        %v6676 = vsel %vm6675, %v6673, %v6670
        %v6677 = vadd.f32 %v4233, 1.0
        %v6678 = vlog2.pop %v6677
        %v6679 = vmul.f32 %v6678, 0.6931472
        %v6680 = vmul.f32 -0.5, %v4233
        %v6681 = vadd.f32 %v6680, 1.0
        %v6682 = vmul.f32 %v6681, %v4233
        %v6683 = vand.u32 2147483647, %v4233
        %vm6684 = vcmp.lt.f32.partialorder %v6683, 0.0004427343
        %v6685 = vsel %vm6684, %v6682, %v6679
        %v6686 = vadd.f32 %v4235, 1.0
        %v6687 = vlog2.pop %v6686
        %v6688 = vmul.f32 %v6687, 0.6931472
        %v6689 = vmul.f32 -0.5, %v4235
        %v6690 = vadd.f32 %v6689, 1.0
        %v6691 = vmul.f32 %v6690, %v4235
        %v6692 = vand.u32 2147483647, %v4235
        %vm6693 = vcmp.lt.f32.partialorder %v6692, 0.0004427343
        %v6694 = vsel %vm6693, %v6691, %v6688
        %v6695 = vadd.f32 %v4237, 1.0
        %v6696 = vlog2.pop %v6695
        %v6697 = vmul.f32 %v6696, 0.6931472
        %v6698 = vmul.f32 -0.5, %v4237
        %v6699 = vadd.f32 %v6698, 1.0
        %v6700 = vmul.f32 %v6699, %v4237
        %v6701 = vand.u32 2147483647, %v4237
        %vm6702 = vcmp.lt.f32.partialorder %v6701, 0.0004427343
        %v6703 = vsel %vm6702, %v6700, %v6697
        %v6704 = vadd.f32 %v4239, 1.0
        %v6705 = vlog2.pop %v6704
        %v6706 = vmul.f32 %v6705, 0.6931472
        %v6707 = vmul.f32 -0.5, %v4239
        %v6708 = vadd.f32 %v6707, 1.0
        %v6709 = vmul.f32 %v6708, %v4239
        %v6710 = vand.u32 2147483647, %v4239
        %vm6711 = vcmp.lt.f32.partialorder %v6710, 0.0004427343
        %v6712 = vsel %vm6711, %v6709, %v6706
        %v6713 = vadd.f32 %v4241, 1.0
        %v6714 = vlog2.pop %v6713
        %v6715 = vmul.f32 %v6714, 0.6931472
        %v6716 = vmul.f32 -0.5, %v4241
        %v6717 = vadd.f32 %v6716, 1.0
        %v6718 = vmul.f32 %v6717, %v4241
        %v6719 = vand.u32 2147483647, %v4241
        %vm6720 = vcmp.lt.f32.partialorder %v6719, 0.0004427343
        %v6721 = vsel %vm6720, %v6718, %v6715
        %v6722 = vadd.f32 %v4243, 1.0
        %v6723 = vlog2.pop %v6722
        %v6724 = vmul.f32 %v6723, 0.6931472
        %v6725 = vmul.f32 -0.5, %v4243
        %v6726 = vadd.f32 %v6725, 1.0
        %v6727 = vmul.f32 %v6726, %v4243
        %v6728 = vand.u32 2147483647, %v4243
        %vm6729 = vcmp.lt.f32.partialorder %v6728, 0.0004427343
        %v6730 = vsel %vm6729, %v6727, %v6724
        %v6731 = vadd.f32 %v4245, 1.0
        %v6732 = vlog2.pop %v6731
        %v6733 = vmul.f32 %v6732, 0.6931472
        %v6734 = vmul.f32 -0.5, %v4245
        %v6735 = vadd.f32 %v6734, 1.0
        %v6736 = vmul.f32 %v6735, %v4245
        %v6737 = vand.u32 2147483647, %v4245
        %vm6738 = vcmp.lt.f32.partialorder %v6737, 0.0004427343
        %v6739 = vsel %vm6738, %v6736, %v6733
        %v6740 = vadd.f32 %v4247, 1.0
        %v6741 = vlog2.pop %v6740
        %v6742 = vmul.f32 %v6741, 0.6931472
        %v6743 = vmul.f32 -0.5, %v4247
        %v6744 = vadd.f32 %v6743, 1.0
        %v6745 = vmul.f32 %v6744, %v4247
        %v6746 = vand.u32 2147483647, %v4247
        %vm6747 = vcmp.lt.f32.partialorder %v6746, 0.0004427343
        %v6748 = vsel %vm6747, %v6745, %v6742
        %v6749 = vadd.f32 %v4249, 1.0
        %v6750 = vlog2.pop %v6749
        %v6751 = vmul.f32 %v6750, 0.6931472
        %v6752 = vmul.f32 -0.5, %v4249
        %v6753 = vadd.f32 %v6752, 1.0
        %v6754 = vmul.f32 %v6753, %v4249
        %v6755 = vand.u32 2147483647, %v4249
        %vm6756 = vcmp.lt.f32.partialorder %v6755, 0.0004427343
        %v6757 = vsel %vm6756, %v6754, %v6751
        %v6758 = vadd.f32 %v4251, 1.0
        %v6759 = vlog2.pop %v6758
        %v6760 = vmul.f32 %v6759, 0.6931472
        %v6761 = vmul.f32 -0.5, %v4251
        %v6762 = vadd.f32 %v6761, 1.0
        %v6763 = vmul.f32 %v6762, %v4251
        %v6764 = vand.u32 2147483647, %v4251
        %vm6765 = vcmp.lt.f32.partialorder %v6764, 0.0004427343
        %v6766 = vsel %vm6765, %v6763, %v6760
        %v6767 = vadd.f32 %v4253, 1.0
        %v6768 = vlog2.pop %v6767
        %v6769 = vmul.f32 %v6768, 0.6931472
        %v6770 = vmul.f32 -0.5, %v4253
        %v6771 = vadd.f32 %v6770, 1.0
        %v6772 = vmul.f32 %v6771, %v4253
        %v6773 = vand.u32 2147483647, %v4253
        %vm6774 = vcmp.lt.f32.partialorder %v6773, 0.0004427343
        %v6775 = vsel %vm6774, %v6772, %v6769
        %v6776 = vadd.f32 %v4255, 1.0
        %v6777 = vlog2.pop %v6776
        %v6778 = vmul.f32 %v6777, 0.6931472
        %v6779 = vmul.f32 -0.5, %v4255
        %v6780 = vadd.f32 %v6779, 1.0
        %v6781 = vmul.f32 %v6780, %v4255
        %v6782 = vand.u32 2147483647, %v4255
        %vm6783 = vcmp.lt.f32.partialorder %v6782, 0.0004427343
        %v6784 = vsel %vm6783, %v6781, %v6778
        %v6785 = vadd.f32 %v4257, 1.0
        %v6786 = vlog2.pop %v6785
        %v6787 = vmul.f32 %v6786, 0.6931472
        %v6788 = vmul.f32 -0.5, %v4257
        %v6789 = vadd.f32 %v6788, 1.0
        %v6790 = vmul.f32 %v6789, %v4257
        %v6791 = vand.u32 2147483647, %v4257
        %vm6792 = vcmp.lt.f32.partialorder %v6791, 0.0004427343
        %v6793 = vsel %vm6792, %v6790, %v6787
        %v6794 = vadd.f32 %v4259, 1.0
        %v6795 = vlog2.pop %v6794
        %v6796 = vmul.f32 %v6795, 0.6931472
        %v6797 = vmul.f32 -0.5, %v4259
        %v6798 = vadd.f32 %v6797, 1.0
        %v6799 = vmul.f32 %v6798, %v4259
        %v6800 = vand.u32 2147483647, %v4259
        %vm6801 = vcmp.lt.f32.partialorder %v6800, 0.0004427343
        %v6802 = vsel %vm6801, %v6799, %v6796
        %v6803 = vadd.f32 %v4261, 1.0
        %v6804 = vlog2.pop %v6803
        %v6805 = vmul.f32 %v6804, 0.6931472
        %v6806 = vmul.f32 -0.5, %v4261
        %v6807 = vadd.f32 %v6806, 1.0
        %v6808 = vmul.f32 %v6807, %v4261
        %v6809 = vand.u32 2147483647, %v4261
        %vm6810 = vcmp.lt.f32.partialorder %v6809, 0.0004427343
        %v6811 = vsel %vm6810, %v6808, %v6805
        %v6812 = vadd.f32 %v4263, 1.0
        %v6813 = vlog2.pop %v6812
        %v6814 = vmul.f32 %v6813, 0.6931472
        %v6815 = vmul.f32 -0.5, %v4263
        %v6816 = vadd.f32 %v6815, 1.0
        %v6817 = vmul.f32 %v6816, %v4263
        %v6818 = vand.u32 2147483647, %v4263
        %vm6819 = vcmp.lt.f32.partialorder %v6818, 0.0004427343
        %v6820 = vsel %vm6819, %v6817, %v6814
        %v6821 = vadd.f32 %v4265, 1.0
        %v6822 = vlog2.pop %v6821
        %v6823 = vmul.f32 %v6822, 0.6931472
        %v6824 = vmul.f32 -0.5, %v4265
        %v6825 = vadd.f32 %v6824, 1.0
        %v6826 = vmul.f32 %v6825, %v4265
        %v6827 = vand.u32 2147483647, %v4265
        %vm6828 = vcmp.lt.f32.partialorder %v6827, 0.0004427343
        %v6829 = vsel %vm6828, %v6826, %v6823
        %v6830 = vadd.f32 %v4267, 1.0
        %v6831 = vlog2.pop %v6830
        %v6832 = vmul.f32 %v6831, 0.6931472
        %v6833 = vmul.f32 -0.5, %v4267
        %v6834 = vadd.f32 %v6833, 1.0
        %v6835 = vmul.f32 %v6834, %v4267
        %v6836 = vand.u32 2147483647, %v4267
        %vm6837 = vcmp.lt.f32.partialorder %v6836, 0.0004427343
        %v6838 = vsel %vm6837, %v6835, %v6832
        %v6839 = vadd.f32 %v4269, 1.0
        %v6840 = vlog2.pop %v6839
        %v6841 = vmul.f32 %v6840, 0.6931472
        %v6842 = vmul.f32 -0.5, %v4269
        %v6843 = vadd.f32 %v6842, 1.0
        %v6844 = vmul.f32 %v6843, %v4269
        %v6845 = vand.u32 2147483647, %v4269
        %vm6846 = vcmp.lt.f32.partialorder %v6845, 0.0004427343
        %v6847 = vsel %vm6846, %v6844, %v6841
        %v6848 = vadd.f32 %v4271, 1.0
        %v6849 = vlog2.pop %v6848
        %v6850 = vmul.f32 %v6849, 0.6931472
        %v6851 = vmul.f32 -0.5, %v4271
        %v6852 = vadd.f32 %v6851, 1.0
        %v6853 = vmul.f32 %v6852, %v4271
        %v6854 = vand.u32 2147483647, %v4271
        %vm6855 = vcmp.lt.f32.partialorder %v6854, 0.0004427343
        %v6856 = vsel %vm6855, %v6853, %v6850
        %v6857 = vadd.f32 %v4273, 1.0
        %v6858 = vlog2.pop %v6857
        %v6859 = vmul.f32 %v6858, 0.6931472
        %v6860 = vmul.f32 -0.5, %v4273
        %v6861 = vadd.f32 %v6860, 1.0
        %v6862 = vmul.f32 %v6861, %v4273
        %v6863 = vand.u32 2147483647, %v4273
        %vm6864 = vcmp.lt.f32.partialorder %v6863, 0.0004427343
        %v6865 = vsel %vm6864, %v6862, %v6859
        %v6866 = vadd.f32 %v4275, 1.0
        %v6867 = vlog2.pop %v6866
        %v6868 = vmul.f32 %v6867, 0.6931472
        %v6869 = vmul.f32 -0.5, %v4275
        %v6870 = vadd.f32 %v6869, 1.0
        %v6871 = vmul.f32 %v6870, %v4275
        %v6872 = vand.u32 2147483647, %v4275
        %vm6873 = vcmp.lt.f32.partialorder %v6872, 0.0004427343
        %v6874 = vsel %vm6873, %v6871, %v6868
        %v6875 = vadd.f32 %v4277, 1.0
        %v6876 = vlog2.pop %v6875
        %v6877 = vmul.f32 %v6876, 0.6931472
        %v6878 = vmul.f32 -0.5, %v4277
        %v6879 = vadd.f32 %v6878, 1.0
        %v6880 = vmul.f32 %v6879, %v4277
        %v6881 = vand.u32 2147483647, %v4277
        %vm6882 = vcmp.lt.f32.partialorder %v6881, 0.0004427343
        %v6883 = vsel %vm6882, %v6880, %v6877
        %v6884 = vadd.f32 %v4279, 1.0
        %v6885 = vlog2.pop %v6884
        %v6886 = vmul.f32 %v6885, 0.6931472
        %v6887 = vmul.f32 -0.5, %v4279
        %v6888 = vadd.f32 %v6887, 1.0
        %v6889 = vmul.f32 %v6888, %v4279
        %v6890 = vand.u32 2147483647, %v4279
        %vm6891 = vcmp.lt.f32.partialorder %v6890, 0.0004427343
        %v6892 = vsel %vm6891, %v6889, %v6886
        %v6893 = vadd.f32 %v4281, 1.0
        %v6894 = vlog2.pop %v6893
        %v6895 = vmul.f32 %v6894, 0.6931472
        %v6896 = vmul.f32 -0.5, %v4281
        %v6897 = vadd.f32 %v6896, 1.0
        %v6898 = vmul.f32 %v6897, %v4281
        %v6899 = vand.u32 2147483647, %v4281
        %vm6900 = vcmp.lt.f32.partialorder %v6899, 0.0004427343
        %v6901 = vsel %vm6900, %v6898, %v6895
        %v6902 = vadd.f32 %v4283, 1.0
        %v6903 = vlog2.pop %v6902
        %v6904 = vmul.f32 %v6903, 0.6931472
        %v6905 = vmul.f32 -0.5, %v4283
        %v6906 = vadd.f32 %v6905, 1.0
        %v6907 = vmul.f32 %v6906, %v4283
        %v6908 = vand.u32 2147483647, %v4283
        %vm6909 = vcmp.lt.f32.partialorder %v6908, 0.0004427343
        %v6910 = vsel %vm6909, %v6907, %v6904
        %v6911 = vadd.f32 %v4285, 1.0
        %v6912 = vlog2.pop %v6911
        %v6913 = vmul.f32 %v6912, 0.6931472
        %v6914 = vmul.f32 -0.5, %v4285
        %v6915 = vadd.f32 %v6914, 1.0
        %v6916 = vmul.f32 %v6915, %v4285
        %v6917 = vand.u32 2147483647, %v4285
        %vm6918 = vcmp.lt.f32.partialorder %v6917, 0.0004427343
        %v6919 = vsel %vm6918, %v6916, %v6913
        %v6920 = vadd.f32 %v4287, 1.0
        %v6921 = vlog2.pop %v6920
        %v6922 = vmul.f32 %v6921, 0.6931472
        %v6923 = vmul.f32 -0.5, %v4287
        %v6924 = vadd.f32 %v6923, 1.0
        %v6925 = vmul.f32 %v6924, %v4287
        %v6926 = vand.u32 2147483647, %v4287
        %vm6927 = vcmp.lt.f32.partialorder %v6926, 0.0004427343
        %v6928 = vsel %vm6927, %v6925, %v6922
        %v6929 = vadd.f32 %v4289, 1.0
        %v6930 = vlog2.pop %v6929
        %v6931 = vmul.f32 %v6930, 0.6931472
        %v6932 = vmul.f32 -0.5, %v4289
        %v6933 = vadd.f32 %v6932, 1.0
        %v6934 = vmul.f32 %v6933, %v4289
        %v6935 = vand.u32 2147483647, %v4289
        %vm6936 = vcmp.lt.f32.partialorder %v6935, 0.0004427343
        %v6937 = vsel %vm6936, %v6934, %v6931
        %v6938 = vadd.f32 %v4291, 1.0
        %v6939 = vlog2.pop %v6938
        %v6940 = vmul.f32 %v6939, 0.6931472
        %v6941 = vmul.f32 -0.5, %v4291
        %v6942 = vadd.f32 %v6941, 1.0
        %v6943 = vmul.f32 %v6942, %v4291
        %v6944 = vand.u32 2147483647, %v4291
        %vm6945 = vcmp.lt.f32.partialorder %v6944, 0.0004427343
        %v6946 = vsel %vm6945, %v6943, %v6940
        %v6947 = vadd.f32 %v4293, 1.0
        %v6948 = vlog2.pop %v6947
        %v6949 = vmul.f32 %v6948, 0.6931472
        %v6950 = vmul.f32 -0.5, %v4293
        %v6951 = vadd.f32 %v6950, 1.0
        %v6952 = vmul.f32 %v6951, %v4293
        %v6953 = vand.u32 2147483647, %v4293
        %vm6954 = vcmp.lt.f32.partialorder %v6953, 0.0004427343
        %v6955 = vsel %vm6954, %v6952, %v6949
        %v6956 = vadd.f32 %v4295, 1.0
        %v6957 = vlog2.pop %v6956
        %v6958 = vmul.f32 %v6957, 0.6931472
        %v6959 = vmul.f32 -0.5, %v4295
        %v6960 = vadd.f32 %v6959, 1.0
        %v6961 = vmul.f32 %v6960, %v4295
        %v6962 = vand.u32 2147483647, %v4295
        %vm6963 = vcmp.lt.f32.partialorder %v6962, 0.0004427343
        %v6964 = vsel %vm6963, %v6961, %v6958
        %v6965 = vadd.f32 %v4297, 1.0
        %v6966 = vlog2.pop %v6965
        %v6967 = vmul.f32 %v6966, 0.6931472
        %v6968 = vmul.f32 -0.5, %v4297
        %v6969 = vadd.f32 %v6968, 1.0
        %v6970 = vmul.f32 %v6969, %v4297
        %v6971 = vand.u32 2147483647, %v4297
        %vm6972 = vcmp.lt.f32.partialorder %v6971, 0.0004427343
        %v6973 = vsel %vm6972, %v6970, %v6967
        %v6974 = vadd.f32 %v4299, 1.0
        %v6975 = vlog2.pop %v6974
        %v6976 = vmul.f32 %v6975, 0.6931472
        %v6977 = vmul.f32 -0.5, %v4299
        %v6978 = vadd.f32 %v6977, 1.0
        %v6979 = vmul.f32 %v6978, %v4299
        %v6980 = vand.u32 2147483647, %v4299
        %vm6981 = vcmp.lt.f32.partialorder %v6980, 0.0004427343
        %v6982 = vsel %vm6981, %v6979, %v6976
        %v6983 = vadd.f32 %v4301, 1.0
        %v6984 = vlog2.pop %v6983
        %v6985 = vmul.f32 %v6984, 0.6931472
        %v6986 = vmul.f32 -0.5, %v4301
        %v6987 = vadd.f32 %v6986, 1.0
        %v6988 = vmul.f32 %v6987, %v4301
        %v6989 = vand.u32 2147483647, %v4301
        %vm6990 = vcmp.lt.f32.partialorder %v6989, 0.0004427343
        %v6991 = vsel %vm6990, %v6988, %v6985
        %v6992 = vadd.f32 %v4303, 1.0
        %v6993 = vlog2.pop %v6992
        %v6994 = vmul.f32 %v6993, 0.6931472
        %v6995 = vmul.f32 -0.5, %v4303
        %v6996 = vadd.f32 %v6995, 1.0
        %v6997 = vmul.f32 %v6996, %v4303
        %v6998 = vand.u32 2147483647, %v4303
        %vm6999 = vcmp.lt.f32.partialorder %v6998, 0.0004427343
        %v7000 = vsel %vm6999, %v6997, %v6994
        %v7001 = vadd.f32 %v4305, 1.0
        %v7002 = vlog2.pop %v7001
        %v7003 = vmul.f32 %v7002, 0.6931472
        %v7004 = vmul.f32 -0.5, %v4305
        %v7005 = vadd.f32 %v7004, 1.0
        %v7006 = vmul.f32 %v7005, %v4305
        %v7007 = vand.u32 2147483647, %v4305
        %vm7008 = vcmp.lt.f32.partialorder %v7007, 0.0004427343
        %v7009 = vsel %vm7008, %v7006, %v7003
        %v7010 = vadd.f32 %v4307, 1.0
        %v7011 = vlog2.pop %v7010
        %v7012 = vmul.f32 %v7011, 0.6931472
        %v7013 = vmul.f32 -0.5, %v4307
        %v7014 = vadd.f32 %v7013, 1.0
        %v7015 = vmul.f32 %v7014, %v4307
        %v7016 = vand.u32 2147483647, %v4307
        %vm7017 = vcmp.lt.f32.partialorder %v7016, 0.0004427343
        %v7018 = vsel %vm7017, %v7015, %v7012
        %v7019 = vadd.f32 %v4309, 1.0
        %v7020 = vlog2.pop %v7019
        %v7021 = vmul.f32 %v7020, 0.6931472
        %v7022 = vmul.f32 -0.5, %v4309
        %v7023 = vadd.f32 %v7022, 1.0
        %v7024 = vmul.f32 %v7023, %v4309
        %v7025 = vand.u32 2147483647, %v4309
        %vm7026 = vcmp.lt.f32.partialorder %v7025, 0.0004427343
        %v7027 = vsel %vm7026, %v7024, %v7021
        %v7028 = vadd.f32 %v4311, 1.0
        %v7029 = vlog2.pop %v7028
        %v7030 = vmul.f32 %v7029, 0.6931472
        %v7031 = vmul.f32 -0.5, %v4311
        %v7032 = vadd.f32 %v7031, 1.0
        %v7033 = vmul.f32 %v7032, %v4311
        %v7034 = vand.u32 2147483647, %v4311
        %vm7035 = vcmp.lt.f32.partialorder %v7034, 0.0004427343
        %v7036 = vsel %vm7035, %v7033, %v7030
        %v7037 = vadd.f32 %v4313, 1.0
        %v7038 = vlog2.pop %v7037
        %v7039 = vmul.f32 %v7038, 0.6931472
        %v7040 = vmul.f32 -0.5, %v4313
        %v7041 = vadd.f32 %v7040, 1.0
        %v7042 = vmul.f32 %v7041, %v4313
        %v7043 = vand.u32 2147483647, %v4313
        %vm7044 = vcmp.lt.f32.partialorder %v7043, 0.0004427343
        %v7045 = vsel %vm7044, %v7042, %v7039
        %v7046 = vadd.f32 %v4315, 1.0
        %v7047 = vlog2.pop %v7046
        %v7048 = vmul.f32 %v7047, 0.6931472
        %v7049 = vmul.f32 -0.5, %v4315
        %v7050 = vadd.f32 %v7049, 1.0
        %v7051 = vmul.f32 %v7050, %v4315
        %v7052 = vand.u32 2147483647, %v4315
        %vm7053 = vcmp.lt.f32.partialorder %v7052, 0.0004427343
        %v7054 = vsel %vm7053, %v7051, %v7048
        %v7055 = vadd.f32 %v4317, 1.0
        %v7056 = vlog2.pop %v7055
        %v7057 = vmul.f32 %v7056, 0.6931472
        %v7058 = vmul.f32 -0.5, %v4317
        %v7059 = vadd.f32 %v7058, 1.0
        %v7060 = vmul.f32 %v7059, %v4317
        %v7061 = vand.u32 2147483647, %v4317
        %vm7062 = vcmp.lt.f32.partialorder %v7061, 0.0004427343
        %v7063 = vsel %vm7062, %v7060, %v7057
        %v7064 = vadd.f32 %v4319, 1.0
        %v7065 = vlog2.pop %v7064
        %v7066 = vmul.f32 %v7065, 0.6931472
        %v7067 = vmul.f32 -0.5, %v4319
        %v7068 = vadd.f32 %v7067, 1.0
        %v7069 = vmul.f32 %v7068, %v4319
        %v7070 = vand.u32 2147483647, %v4319
        %vm7071 = vcmp.lt.f32.partialorder %v7070, 0.0004427343
        %v7072 = vsel %vm7071, %v7069, %v7066
        %v7073 = vadd.f32 %v4321, 1.0
        %v7074 = vlog2.pop %v7073
        %v7075 = vmul.f32 %v7074, 0.6931472
        %v7076 = vmul.f32 -0.5, %v4321
        %v7077 = vadd.f32 %v7076, 1.0
        %v7078 = vmul.f32 %v7077, %v4321
        %v7079 = vand.u32 2147483647, %v4321
        %vm7080 = vcmp.lt.f32.partialorder %v7079, 0.0004427343
        %v7081 = vsel %vm7080, %v7078, %v7075
        %v7082 = vadd.f32 %v4323, 1.0
        %v7083 = vlog2.pop %v7082
        %v7084 = vmul.f32 %v7083, 0.6931472
        %v7085 = vmul.f32 -0.5, %v4323
        %v7086 = vadd.f32 %v7085, 1.0
        %v7087 = vmul.f32 %v7086, %v4323
        %v7088 = vand.u32 2147483647, %v4323
        %vm7089 = vcmp.lt.f32.partialorder %v7088, 0.0004427343
        %v7090 = vsel %vm7089, %v7087, %v7084
        %v7091 = vadd.f32 %v4325, 1.0
        %v7092 = vlog2.pop %v7091
        %v7093 = vmul.f32 %v7092, 0.6931472
        %v7094 = vmul.f32 -0.5, %v4325
        %v7095 = vadd.f32 %v7094, 1.0
        %v7096 = vmul.f32 %v7095, %v4325
        %v7097 = vand.u32 2147483647, %v4325
        %vm7098 = vcmp.lt.f32.partialorder %v7097, 0.0004427343
        %v7099 = vsel %vm7098, %v7096, %v7093
        %v7100 = vadd.f32 %v4327, 1.0
        %v7101 = vlog2.pop %v7100
        %v7102 = vmul.f32 %v7101, 0.6931472
        %v7103 = vmul.f32 -0.5, %v4327
        %v7104 = vadd.f32 %v7103, 1.0
        %v7105 = vmul.f32 %v7104, %v4327
        %v7106 = vand.u32 2147483647, %v4327
        %vm7107 = vcmp.lt.f32.partialorder %v7106, 0.0004427343
        %v7108 = vsel %vm7107, %v7105, %v7102
        %v7109 = vadd.f32 %v4329, 1.0
        %v7110 = vlog2.pop %v7109
        %v7111 = vmul.f32 %v7110, 0.6931472
        %v7112 = vmul.f32 -0.5, %v4329
        %v7113 = vadd.f32 %v7112, 1.0
        %v7114 = vmul.f32 %v7113, %v4329
        %v7115 = vand.u32 2147483647, %v4329
        %vm7116 = vcmp.lt.f32.partialorder %v7115, 0.0004427343
        %v7117 = vsel %vm7116, %v7114, %v7111
        %v7118 = vadd.f32 %v4331, 1.0
        %v7119 = vlog2.pop %v7118
        %v7120 = vmul.f32 %v7119, 0.6931472
        %v7121 = vmul.f32 -0.5, %v4331
        %v7122 = vadd.f32 %v7121, 1.0
        %v7123 = vmul.f32 %v7122, %v4331
        %v7124 = vand.u32 2147483647, %v4331
        %vm7125 = vcmp.lt.f32.partialorder %v7124, 0.0004427343
        %v7126 = vsel %vm7125, %v7123, %v7120
        %v7127 = vadd.f32 %v4333, 1.0
        %v7128 = vlog2.pop %v7127
        %v7129 = vmul.f32 %v7128, 0.6931472
        %v7130 = vmul.f32 -0.5, %v4333
        %v7131 = vadd.f32 %v7130, 1.0
        %v7132 = vmul.f32 %v7131, %v4333
        %v7133 = vand.u32 2147483647, %v4333
        %vm7134 = vcmp.lt.f32.partialorder %v7133, 0.0004427343
        %v7135 = vsel %vm7134, %v7132, %v7129
        %v7136 = vadd.f32 %v4335, 1.0
        %v7137 = vlog2.pop %v7136
        %v7138 = vmul.f32 %v7137, 0.6931472
        %v7139 = vmul.f32 -0.5, %v4335
        %v7140 = vadd.f32 %v7139, 1.0
        %v7141 = vmul.f32 %v7140, %v4335
        %v7142 = vand.u32 2147483647, %v4335
        %vm7143 = vcmp.lt.f32.partialorder %v7142, 0.0004427343
        %v7144 = vsel %vm7143, %v7141, %v7138
        %v7145 = vadd.f32 %v4337, 1.0
        %v7146 = vlog2.pop %v7145
        %v7147 = vmul.f32 %v7146, 0.6931472
        %v7148 = vmul.f32 -0.5, %v4337
        %v7149 = vadd.f32 %v7148, 1.0
        %v7150 = vmul.f32 %v7149, %v4337
        %v7151 = vand.u32 2147483647, %v4337
        %vm7152 = vcmp.lt.f32.partialorder %v7151, 0.0004427343
        %v7153 = vsel %vm7152, %v7150, %v7147
        %v7154 = vadd.f32 %v4339, 1.0
        %v7155 = vlog2.pop %v7154
        %v7156 = vmul.f32 %v7155, 0.6931472
        %v7157 = vmul.f32 -0.5, %v4339
        %v7158 = vadd.f32 %v7157, 1.0
        %v7159 = vmul.f32 %v7158, %v4339
        %v7160 = vand.u32 2147483647, %v4339
        %vm7161 = vcmp.lt.f32.partialorder %v7160, 0.0004427343
        %v7162 = vsel %vm7161, %v7159, %v7156
        %v7163 = vadd.f32 %v4341, 1.0
        %v7164 = vlog2.pop %v7163
        %v7165 = vmul.f32 %v7164, 0.6931472
        %v7166 = vmul.f32 -0.5, %v4341
        %v7167 = vadd.f32 %v7166, 1.0
        %v7168 = vmul.f32 %v7167, %v4341
        %v7169 = vand.u32 2147483647, %v4341
        %vm7170 = vcmp.lt.f32.partialorder %v7169, 0.0004427343
        %v7171 = vsel %vm7170, %v7168, %v7165
        %v7172 = vadd.f32 %v4343, 1.0
        %v7173 = vlog2.pop %v7172
        %v7174 = vmul.f32 %v7173, 0.6931472
        %v7175 = vmul.f32 -0.5, %v4343
        %v7176 = vadd.f32 %v7175, 1.0
        %v7177 = vmul.f32 %v7176, %v4343
        %v7178 = vand.u32 2147483647, %v4343
        %vm7179 = vcmp.lt.f32.partialorder %v7178, 0.0004427343
        %v7180 = vsel %vm7179, %v7177, %v7174
        %v7181 = vadd.f32 %v4345, 1.0
        %v7182 = vlog2.pop %v7181
        %v7183 = vmul.f32 %v7182, 0.6931472
        %v7184 = vmul.f32 -0.5, %v4345
        %v7185 = vadd.f32 %v7184, 1.0
        %v7186 = vmul.f32 %v7185, %v4345
        %v7187 = vand.u32 2147483647, %v4345
        %vm7188 = vcmp.lt.f32.partialorder %v7187, 0.0004427343
        %v7189 = vsel %vm7188, %v7186, %v7183
        %v7190 = vadd.f32 %v4347, 1.0
        %v7191 = vlog2.pop %v7190
        %v7192 = vmul.f32 %v7191, 0.6931472
        %v7193 = vmul.f32 -0.5, %v4347
        %v7194 = vadd.f32 %v7193, 1.0
        %v7195 = vmul.f32 %v7194, %v4347
        %v7196 = vand.u32 2147483647, %v4347
        %vm7197 = vcmp.lt.f32.partialorder %v7196, 0.0004427343
        %v7198 = vsel %vm7197, %v7195, %v7192
        %v7199 = vadd.f32 %v4349, 1.0
        %v7200 = vlog2.pop %v7199
        %v7201 = vmul.f32 %v7200, 0.6931472
        %v7202 = vmul.f32 -0.5, %v4349
        %v7203 = vadd.f32 %v7202, 1.0
        %v7204 = vmul.f32 %v7203, %v4349
        %v7205 = vand.u32 2147483647, %v4349
        %vm7206 = vcmp.lt.f32.partialorder %v7205, 0.0004427343
        %v7207 = vsel %vm7206, %v7204, %v7201
        %v7208 = vadd.f32 %v4351, 1.0
        %v7209 = vlog2.pop %v7208
        %v7210 = vmul.f32 %v7209, 0.6931472
        %v7211 = vmul.f32 -0.5, %v4351
        %v7212 = vadd.f32 %v7211, 1.0
        %v7213 = vmul.f32 %v7212, %v4351
        %v7214 = vand.u32 2147483647, %v4351
        %vm7215 = vcmp.lt.f32.partialorder %v7214, 0.0004427343
        %v7216 = vsel %vm7215, %v7213, %v7210
        %v7217 = vadd.f32 %v4353, 1.0
        %v7218 = vlog2.pop %v7217
        %v7219 = vmul.f32 %v7218, 0.6931472
        %v7220 = vmul.f32 -0.5, %v4353
        %v7221 = vadd.f32 %v7220, 1.0
        %v7222 = vmul.f32 %v7221, %v4353
        %v7223 = vand.u32 2147483647, %v4353
        %vm7224 = vcmp.lt.f32.partialorder %v7223, 0.0004427343
        %v7225 = vsel %vm7224, %v7222, %v7219
        %v7226 = vadd.f32 %v4355, 1.0
        %v7227 = vlog2.pop %v7226
        %v7228 = vmul.f32 %v7227, 0.6931472
        %v7229 = vmul.f32 -0.5, %v4355
        %v7230 = vadd.f32 %v7229, 1.0
        %v7231 = vmul.f32 %v7230, %v4355
        %v7232 = vand.u32 2147483647, %v4355
        %vm7233 = vcmp.lt.f32.partialorder %v7232, 0.0004427343
        %v7234 = vsel %vm7233, %v7231, %v7228
        %v7235 = vadd.f32 %v4357, 1.0
        %v7236 = vlog2.pop %v7235
        %v7237 = vmul.f32 %v7236, 0.6931472
        %v7238 = vmul.f32 -0.5, %v4357
        %v7239 = vadd.f32 %v7238, 1.0
        %v7240 = vmul.f32 %v7239, %v4357
        %v7241 = vand.u32 2147483647, %v4357
        %vm7242 = vcmp.lt.f32.partialorder %v7241, 0.0004427343
        %v7243 = vsel %vm7242, %v7240, %v7237
        %v7244 = vadd.f32 %v4359, 1.0
        %v7245 = vlog2.pop %v7244
        %v7246 = vmul.f32 %v7245, 0.6931472
        %v7247 = vmul.f32 -0.5, %v4359
        %v7248 = vadd.f32 %v7247, 1.0
        %v7249 = vmul.f32 %v7248, %v4359
        %v7250 = vand.u32 2147483647, %v4359
        %vm7251 = vcmp.lt.f32.partialorder %v7250, 0.0004427343
        %v7252 = vsel %vm7251, %v7249, %v7246
        %v7253 = vadd.f32 %v4361, 1.0
        %v7254 = vlog2.pop %v7253
        %v7255 = vmul.f32 %v7254, 0.6931472
        %v7256 = vmul.f32 -0.5, %v4361
        %v7257 = vadd.f32 %v7256, 1.0
        %v7258 = vmul.f32 %v7257, %v4361
        %v7259 = vand.u32 2147483647, %v4361
        %vm7260 = vcmp.lt.f32.partialorder %v7259, 0.0004427343
        %v7261 = vsel %vm7260, %v7258, %v7255
        %v7262 = vadd.f32 %v4363, 1.0
        %v7263 = vlog2.pop %v7262
        %v7264 = vmul.f32 %v7263, 0.6931472
        %v7265 = vmul.f32 -0.5, %v4363
        %v7266 = vadd.f32 %v7265, 1.0
        %v7267 = vmul.f32 %v7266, %v4363
        %v7268 = vand.u32 2147483647, %v4363
        %vm7269 = vcmp.lt.f32.partialorder %v7268, 0.0004427343
        %v7270 = vsel %vm7269, %v7267, %v7264
        %v7271 = vadd.f32 %v4365, 1.0
        %v7272 = vlog2.pop %v7271
        %v7273 = vmul.f32 %v7272, 0.6931472
        %v7274 = vmul.f32 -0.5, %v4365
        %v7275 = vadd.f32 %v7274, 1.0
        %v7276 = vmul.f32 %v7275, %v4365
        %v7277 = vand.u32 2147483647, %v4365
        %vm7278 = vcmp.lt.f32.partialorder %v7277, 0.0004427343
        %v7279 = vsel %vm7278, %v7276, %v7273
        %v7280 = vadd.f32 %v4367, 1.0
        %v7281 = vlog2.pop %v7280
        %v7282 = vmul.f32 %v7281, 0.6931472
        %v7283 = vmul.f32 -0.5, %v4367
        %v7284 = vadd.f32 %v7283, 1.0
        %v7285 = vmul.f32 %v7284, %v4367
        %v7286 = vand.u32 2147483647, %v4367
        %vm7287 = vcmp.lt.f32.partialorder %v7286, 0.0004427343
        %v7288 = vsel %vm7287, %v7285, %v7282
        %v7289 = vadd.f32 %v4369, 1.0
        %v7290 = vlog2.pop %v7289
        %v7291 = vmul.f32 %v7290, 0.6931472
        %v7292 = vmul.f32 -0.5, %v4369
        %v7293 = vadd.f32 %v7292, 1.0
        %v7294 = vmul.f32 %v7293, %v4369
        %v7295 = vand.u32 2147483647, %v4369
        %vm7296 = vcmp.lt.f32.partialorder %v7295, 0.0004427343
        %v7297 = vsel %vm7296, %v7294, %v7291
        %v7298 = vadd.f32 %v4371, 1.0
        %v7299 = vlog2.pop %v7298
        %v7300 = vmul.f32 %v7299, 0.6931472
        %v7301 = vmul.f32 -0.5, %v4371
        %v7302 = vadd.f32 %v7301, 1.0
        %v7303 = vmul.f32 %v7302, %v4371
        %v7304 = vand.u32 2147483647, %v4371
        %vm7305 = vcmp.lt.f32.partialorder %v7304, 0.0004427343
        %v7306 = vsel %vm7305, %v7303, %v7300
        %v7307 = vadd.f32 %v4373, 1.0
        %v7308 = vlog2.pop %v7307
        %v7309 = vmul.f32 %v7308, 0.6931472
        %v7310 = vmul.f32 -0.5, %v4373
        %v7311 = vadd.f32 %v7310, 1.0
        %v7312 = vmul.f32 %v7311, %v4373
        %v7313 = vand.u32 2147483647, %v4373
        %vm7314 = vcmp.lt.f32.partialorder %v7313, 0.0004427343
        %v7315 = vsel %vm7314, %v7312, %v7309
        %v7316 = vadd.f32 %v4375, 1.0
        %v7317 = vlog2.pop %v7316
        %v7318 = vmul.f32 %v7317, 0.6931472
        %v7319 = vmul.f32 -0.5, %v4375
        %v7320 = vadd.f32 %v7319, 1.0
        %v7321 = vmul.f32 %v7320, %v4375
        %v7322 = vand.u32 2147483647, %v4375
        %vm7323 = vcmp.lt.f32.partialorder %v7322, 0.0004427343
        %v7324 = vsel %vm7323, %v7321, %v7318
        %v7325 = vadd.f32 %v4377, 1.0
        %v7326 = vlog2.pop %v7325
        %v7327 = vmul.f32 %v7326, 0.6931472
        %v7328 = vmul.f32 -0.5, %v4377
        %v7329 = vadd.f32 %v7328, 1.0
        %v7330 = vmul.f32 %v7329, %v4377
        %v7331 = vand.u32 2147483647, %v4377
        %vm7332 = vcmp.lt.f32.partialorder %v7331, 0.0004427343
        %v7333 = vsel %vm7332, %v7330, %v7327
        %v7334 = vadd.f32 %v4379, 1.0
        %v7335 = vlog2.pop %v7334
        %v7336 = vmul.f32 %v7335, 0.6931472
        %v7337 = vmul.f32 -0.5, %v4379
        %v7338 = vadd.f32 %v7337, 1.0
        %v7339 = vmul.f32 %v7338, %v4379
        %v7340 = vand.u32 2147483647, %v4379
        %vm7341 = vcmp.lt.f32.partialorder %v7340, 0.0004427343
        %v7342 = vsel %vm7341, %v7339, %v7336
        %v7343 = vadd.f32 %v4381, 1.0
        %v7344 = vlog2.pop %v7343
        %v7345 = vmul.f32 %v7344, 0.6931472
        %v7346 = vmul.f32 -0.5, %v4381
        %v7347 = vadd.f32 %v7346, 1.0
        %v7348 = vmul.f32 %v7347, %v4381
        %v7349 = vand.u32 2147483647, %v4381
        %vm7350 = vcmp.lt.f32.partialorder %v7349, 0.0004427343
        %v7351 = vsel %vm7350, %v7348, %v7345
        %v7352 = vadd.f32 %v4383, 1.0
        %v7353 = vlog2.pop %v7352
        %v7354 = vmul.f32 %v7353, 0.6931472
        %v7355 = vmul.f32 -0.5, %v4383
        %v7356 = vadd.f32 %v7355, 1.0
        %v7357 = vmul.f32 %v7356, %v4383
        %v7358 = vand.u32 2147483647, %v4383
        %vm7359 = vcmp.lt.f32.partialorder %v7358, 0.0004427343
        %v7360 = vsel %vm7359, %v7357, %v7354
        %v7361 = vadd.f32 %v4385, 1.0
        %v7362 = vlog2.pop %v7361
        %v7363 = vmul.f32 %v7362, 0.6931472
        %v7364 = vmul.f32 -0.5, %v4385
        %v7365 = vadd.f32 %v7364, 1.0
        %v7366 = vmul.f32 %v7365, %v4385
        %v7367 = vand.u32 2147483647, %v4385
        %vm7368 = vcmp.lt.f32.partialorder %v7367, 0.0004427343
        %v7369 = vsel %vm7368, %v7366, %v7363
        %v7370 = vadd.f32 %v4387, 1.0
        %v7371 = vlog2.pop %v7370
        %v7372 = vmul.f32 %v7371, 0.6931472
        %v7373 = vmul.f32 -0.5, %v4387
        %v7374 = vadd.f32 %v7373, 1.0
        %v7375 = vmul.f32 %v7374, %v4387
        %v7376 = vand.u32 2147483647, %v4387
        %vm7377 = vcmp.lt.f32.partialorder %v7376, 0.0004427343
        %v7378 = vsel %vm7377, %v7375, %v7372
        %v7379 = vadd.f32 %v4389, 1.0
        %v7380 = vlog2.pop %v7379
        %v7381 = vmul.f32 %v7380, 0.6931472
        %v7382 = vmul.f32 -0.5, %v4389
        %v7383 = vadd.f32 %v7382, 1.0
        %v7384 = vmul.f32 %v7383, %v4389
        %v7385 = vand.u32 2147483647, %v4389
        %vm7386 = vcmp.lt.f32.partialorder %v7385, 0.0004427343
        %v7387 = vsel %vm7386, %v7384, %v7381
        %v7388 = vadd.f32 %v4391, 1.0
        %v7389 = vlog2.pop %v7388
        %v7390 = vmul.f32 %v7389, 0.6931472
        %v7391 = vmul.f32 -0.5, %v4391
        %v7392 = vadd.f32 %v7391, 1.0
        %v7393 = vmul.f32 %v7392, %v4391
        %v7394 = vand.u32 2147483647, %v4391
        %vm7395 = vcmp.lt.f32.partialorder %v7394, 0.0004427343
        %v7396 = vsel %vm7395, %v7393, %v7390
        %v7397 = vadd.f32 %v4393, 1.0
        %v7398 = vlog2.pop %v7397
        %v7399 = vmul.f32 %v7398, 0.6931472
        %v7400 = vmul.f32 -0.5, %v4393
        %v7401 = vadd.f32 %v7400, 1.0
        %v7402 = vmul.f32 %v7401, %v4393
        %v7403 = vand.u32 2147483647, %v4393
        %vm7404 = vcmp.lt.f32.partialorder %v7403, 0.0004427343
        %v7405 = vsel %vm7404, %v7402, %v7399
        %v7406 = vadd.f32 %v4395, 1.0
        %v7407 = vlog2.pop %v7406
        %v7408 = vmul.f32 %v7407, 0.6931472
        %v7409 = vmul.f32 -0.5, %v4395
        %v7410 = vadd.f32 %v7409, 1.0
        %v7411 = vmul.f32 %v7410, %v4395
        %v7412 = vand.u32 2147483647, %v4395
        %vm7413 = vcmp.lt.f32.partialorder %v7412, 0.0004427343
        %v7414 = vsel %vm7413, %v7411, %v7408
        %v7415 = vadd.f32 %v4397, 1.0
        %v7416 = vlog2.pop %v7415
        %v7417 = vmul.f32 %v7416, 0.6931472
        %v7418 = vmul.f32 -0.5, %v4397
        %v7419 = vadd.f32 %v7418, 1.0
        %v7420 = vmul.f32 %v7419, %v4397
        %v7421 = vand.u32 2147483647, %v4397
        %vm7422 = vcmp.lt.f32.partialorder %v7421, 0.0004427343
        %v7423 = vsel %vm7422, %v7420, %v7417
        %v7424 = vadd.f32 %v4399, 1.0
        %v7425 = vlog2.pop %v7424
        %v7426 = vmul.f32 %v7425, 0.6931472
        %v7427 = vmul.f32 -0.5, %v4399
        %v7428 = vadd.f32 %v7427, 1.0
        %v7429 = vmul.f32 %v7428, %v4399
        %v7430 = vand.u32 2147483647, %v4399
        %vm7431 = vcmp.lt.f32.partialorder %v7430, 0.0004427343
        %v7432 = vsel %vm7431, %v7429, %v7426
        %v7433 = vadd.f32 %v4401, 1.0
        %v7434 = vlog2.pop %v7433
        %v7435 = vmul.f32 %v7434, 0.6931472
        %v7436 = vmul.f32 -0.5, %v4401
        %v7437 = vadd.f32 %v7436, 1.0
        %v7438 = vmul.f32 %v7437, %v4401
        %v7439 = vand.u32 2147483647, %v4401
        %vm7440 = vcmp.lt.f32.partialorder %v7439, 0.0004427343
        %v7441 = vsel %vm7440, %v7438, %v7435
        %v7442 = vadd.f32 %v4403, 1.0
        %v7443 = vlog2.pop %v7442
        %v7444 = vmul.f32 %v7443, 0.6931472
        %v7445 = vmul.f32 -0.5, %v4403
        %v7446 = vadd.f32 %v7445, 1.0
        %v7447 = vmul.f32 %v7446, %v4403
        %v7448 = vand.u32 2147483647, %v4403
        %vm7449 = vcmp.lt.f32.partialorder %v7448, 0.0004427343
        %v7450 = vsel %vm7449, %v7447, %v7444
        %v7451 = vadd.f32 %v4405, 1.0
        %v7452 = vlog2.pop %v7451
        %v7453 = vmul.f32 %v7452, 0.6931472
        %v7454 = vmul.f32 -0.5, %v4405
        %v7455 = vadd.f32 %v7454, 1.0
        %v7456 = vmul.f32 %v7455, %v4405
        %v7457 = vand.u32 2147483647, %v4405
        %vm7458 = vcmp.lt.f32.partialorder %v7457, 0.0004427343
        %v7459 = vsel %vm7458, %v7456, %v7453
        %v7460 = vadd.f32 %v4407, 1.0
        %v7461 = vlog2.pop %v7460
        %v7462 = vmul.f32 %v7461, 0.6931472
        %v7463 = vmul.f32 -0.5, %v4407
        %v7464 = vadd.f32 %v7463, 1.0
        %v7465 = vmul.f32 %v7464, %v4407
        %v7466 = vand.u32 2147483647, %v4407
        %vm7467 = vcmp.lt.f32.partialorder %v7466, 0.0004427343
        %v7468 = vsel %vm7467, %v7465, %v7462
        %v7469 = vadd.f32 %v4409, 1.0
        %v7470 = vlog2.pop %v7469
        %v7471 = vmul.f32 %v7470, 0.6931472
        %v7472 = vmul.f32 -0.5, %v4409
        %v7473 = vadd.f32 %v7472, 1.0
        %v7474 = vmul.f32 %v7473, %v4409
        %v7475 = vand.u32 2147483647, %v4409
        %vm7476 = vcmp.lt.f32.partialorder %v7475, 0.0004427343
        %v7477 = vsel %vm7476, %v7474, %v7471
        %v7478 = vadd.f32 %v4411, 1.0
        %v7479 = vlog2.pop %v7478
        %v7480 = vmul.f32 %v7479, 0.6931472
        %v7481 = vmul.f32 -0.5, %v4411
        %v7482 = vadd.f32 %v7481, 1.0
        %v7483 = vmul.f32 %v7482, %v4411
        %v7484 = vand.u32 2147483647, %v4411
        %vm7485 = vcmp.lt.f32.partialorder %v7484, 0.0004427343
        %v7486 = vsel %vm7485, %v7483, %v7480
        %v7487 = vadd.f32 %v4413, 1.0
        %v7488 = vlog2.pop %v7487
        %v7489 = vmul.f32 %v7488, 0.6931472
        %v7490 = vmul.f32 -0.5, %v4413
        %v7491 = vadd.f32 %v7490, 1.0
        %v7492 = vmul.f32 %v7491, %v4413
        %v7493 = vand.u32 2147483647, %v4413
        %vm7494 = vcmp.lt.f32.partialorder %v7493, 0.0004427343
        %v7495 = vsel %vm7494, %v7492, %v7489
        %v7496 = vadd.f32 %v4415, 1.0
        %v7497 = vlog2.pop %v7496
        %v7498 = vmul.f32 %v7497, 0.6931472
        %v7499 = vmul.f32 -0.5, %v4415
        %v7500 = vadd.f32 %v7499, 1.0
        %v7501 = vmul.f32 %v7500, %v4415
        %v7502 = vand.u32 2147483647, %v4415
        %vm7503 = vcmp.lt.f32.partialorder %v7502, 0.0004427343
        %v7504 = vsel %vm7503, %v7501, %v7498
        %v7505 = vadd.f32 %v4417, 1.0
        %v7506 = vlog2.pop %v7505
        %v7507 = vmul.f32 %v7506, 0.6931472
        %v7508 = vmul.f32 -0.5, %v4417
        %v7509 = vadd.f32 %v7508, 1.0
        %v7510 = vmul.f32 %v7509, %v4417
        %v7511 = vand.u32 2147483647, %v4417
        %vm7512 = vcmp.lt.f32.partialorder %v7511, 0.0004427343
        %v7513 = vsel %vm7512, %v7510, %v7507
        %v7514 = vadd.f32 %v4419, 1.0
        %v7515 = vlog2.pop %v7514
        %v7516 = vmul.f32 %v7515, 0.6931472
        %v7517 = vmul.f32 -0.5, %v4419
        %v7518 = vadd.f32 %v7517, 1.0
        %v7519 = vmul.f32 %v7518, %v4419
        %v7520 = vand.u32 2147483647, %v4419
        %vm7521 = vcmp.lt.f32.partialorder %v7520, 0.0004427343
        %v7522 = vsel %vm7521, %v7519, %v7516
        %v7523 = vadd.f32 %v4421, 1.0
        %v7524 = vlog2.pop %v7523
        %v7525 = vmul.f32 %v7524, 0.6931472
        %v7526 = vmul.f32 -0.5, %v4421
        %v7527 = vadd.f32 %v7526, 1.0
        %v7528 = vmul.f32 %v7527, %v4421
        %v7529 = vand.u32 2147483647, %v4421
        %vm7530 = vcmp.lt.f32.partialorder %v7529, 0.0004427343
        %v7531 = vsel %vm7530, %v7528, %v7525
        %v7532 = vadd.f32 %v4423, 1.0
        %v7533 = vlog2.pop %v7532
        %v7534 = vmul.f32 %v7533, 0.6931472
        %v7535 = vmul.f32 -0.5, %v4423
        %v7536 = vadd.f32 %v7535, 1.0
        %v7537 = vmul.f32 %v7536, %v4423
        %v7538 = vand.u32 2147483647, %v4423
        %vm7539 = vcmp.lt.f32.partialorder %v7538, 0.0004427343
        %v7540 = vsel %vm7539, %v7537, %v7534
        %v7541 = vadd.f32 %v4425, 1.0
        %v7542 = vlog2.pop %v7541
        %v7543 = vmul.f32 %v7542, 0.6931472
        %v7544 = vmul.f32 -0.5, %v4425
        %v7545 = vadd.f32 %v7544, 1.0
        %v7546 = vmul.f32 %v7545, %v4425
        %v7547 = vand.u32 2147483647, %v4425
        %vm7548 = vcmp.lt.f32.partialorder %v7547, 0.0004427343
        %v7549 = vsel %vm7548, %v7546, %v7543
        %v7550 = vadd.f32 %v4427, 1.0
        %v7551 = vlog2.pop %v7550
        %v7552 = vmul.f32 %v7551, 0.6931472
        %v7553 = vmul.f32 -0.5, %v4427
        %v7554 = vadd.f32 %v7553, 1.0
        %v7555 = vmul.f32 %v7554, %v4427
        %v7556 = vand.u32 2147483647, %v4427
        %vm7557 = vcmp.lt.f32.partialorder %v7556, 0.0004427343
        %v7558 = vsel %vm7557, %v7555, %v7552
        %v7559 = vadd.f32 %v4429, 1.0
        %v7560 = vlog2.pop %v7559
        %v7561 = vmul.f32 %v7560, 0.6931472
        %v7562 = vmul.f32 -0.5, %v4429
        %v7563 = vadd.f32 %v7562, 1.0
        %v7564 = vmul.f32 %v7563, %v4429
        %v7565 = vand.u32 2147483647, %v4429
        %vm7566 = vcmp.lt.f32.partialorder %v7565, 0.0004427343
        %v7567 = vsel %vm7566, %v7564, %v7561
        %v7568 = vadd.f32 %v4431, 1.0
        %v7569 = vlog2.pop %v7568
        %v7570 = vmul.f32 %v7569, 0.6931472
        %v7571 = vmul.f32 -0.5, %v4431
        %v7572 = vadd.f32 %v7571, 1.0
        %v7573 = vmul.f32 %v7572, %v4431
        %v7574 = vand.u32 2147483647, %v4431
        %vm7575 = vcmp.lt.f32.partialorder %v7574, 0.0004427343
        %v7576 = vsel %vm7575, %v7573, %v7570
        %v7577 = vadd.f32 %v4433, 1.0
        %v7578 = vlog2.pop %v7577
        %v7579 = vmul.f32 %v7578, 0.6931472
        %v7580 = vmul.f32 -0.5, %v4433
        %v7581 = vadd.f32 %v7580, 1.0
        %v7582 = vmul.f32 %v7581, %v4433
        %v7583 = vand.u32 2147483647, %v4433
        %vm7584 = vcmp.lt.f32.partialorder %v7583, 0.0004427343
        %v7585 = vsel %vm7584, %v7582, %v7579
        %v7586 = vadd.f32 %v4435, 1.0
        %v7587 = vlog2.pop %v7586
        %v7588 = vmul.f32 %v7587, 0.6931472
        %v7589 = vmul.f32 -0.5, %v4435
        %v7590 = vadd.f32 %v7589, 1.0
        %v7591 = vmul.f32 %v7590, %v4435
        %v7592 = vand.u32 2147483647, %v4435
        %vm7593 = vcmp.lt.f32.partialorder %v7592, 0.0004427343
        %v7594 = vsel %vm7593, %v7591, %v7588
        %v7595 = vadd.f32 %v4437, 1.0
        %v7596 = vlog2.pop %v7595
        %v7597 = vmul.f32 %v7596, 0.6931472
        %v7598 = vmul.f32 -0.5, %v4437
        %v7599 = vadd.f32 %v7598, 1.0
        %v7600 = vmul.f32 %v7599, %v4437
        %v7601 = vand.u32 2147483647, %v4437
        %vm7602 = vcmp.lt.f32.partialorder %v7601, 0.0004427343
        %v7603 = vsel %vm7602, %v7600, %v7597
        %v7604 = vadd.f32 %v4439, 1.0
        %v7605 = vlog2.pop %v7604
        %v7606 = vmul.f32 %v7605, 0.6931472
        %v7607 = vmul.f32 -0.5, %v4439
        %v7608 = vadd.f32 %v7607, 1.0
        %v7609 = vmul.f32 %v7608, %v4439
        %v7610 = vand.u32 2147483647, %v4439
        %vm7611 = vcmp.lt.f32.partialorder %v7610, 0.0004427343
        %v7612 = vsel %vm7611, %v7609, %v7606
        %v7613 = vadd.f32 %v4441, 1.0
        %v7614 = vlog2.pop %v7613
        %v7615 = vmul.f32 %v7614, 0.6931472
        %v7616 = vmul.f32 -0.5, %v4441
        %v7617 = vadd.f32 %v7616, 1.0
        %v7618 = vmul.f32 %v7617, %v4441
        %v7619 = vand.u32 2147483647, %v4441
        %vm7620 = vcmp.lt.f32.partialorder %v7619, 0.0004427343
        %v7621 = vsel %vm7620, %v7618, %v7615
        %v7622 = vadd.f32 %v4443, 1.0
        %v7623 = vlog2.pop %v7622
        %v7624 = vmul.f32 %v7623, 0.6931472
        %v7625 = vmul.f32 -0.5, %v4443
        %v7626 = vadd.f32 %v7625, 1.0
        %v7627 = vmul.f32 %v7626, %v4443
        %v7628 = vand.u32 2147483647, %v4443
        %vm7629 = vcmp.lt.f32.partialorder %v7628, 0.0004427343
        %v7630 = vsel %vm7629, %v7627, %v7624
        %v7631 = vadd.f32 %v4445, 1.0
        %v7632 = vlog2.pop %v7631
        %v7633 = vmul.f32 %v7632, 0.6931472
        %v7634 = vmul.f32 -0.5, %v4445
        %v7635 = vadd.f32 %v7634, 1.0
        %v7636 = vmul.f32 %v7635, %v4445
        %v7637 = vand.u32 2147483647, %v4445
        %vm7638 = vcmp.lt.f32.partialorder %v7637, 0.0004427343
        %v7639 = vsel %vm7638, %v7636, %v7633
        %v7640 = vadd.f32 %v4447, 1.0
        %v7641 = vlog2.pop %v7640
        %v7642 = vmul.f32 %v7641, 0.6931472
        %v7643 = vmul.f32 -0.5, %v4447
        %v7644 = vadd.f32 %v7643, 1.0
        %v7645 = vmul.f32 %v7644, %v4447
        %v7646 = vand.u32 2147483647, %v4447
        %vm7647 = vcmp.lt.f32.partialorder %v7646, 0.0004427343
        %v7648 = vsel %vm7647, %v7645, %v7642
        %v7649 = vadd.f32 %v4449, 1.0
        %v7650 = vlog2.pop %v7649
        %v7651 = vmul.f32 %v7650, 0.6931472
        %v7652 = vmul.f32 -0.5, %v4449
        %v7653 = vadd.f32 %v7652, 1.0
        %v7654 = vmul.f32 %v7653, %v4449
        %v7655 = vand.u32 2147483647, %v4449
        %vm7656 = vcmp.lt.f32.partialorder %v7655, 0.0004427343
        %v7657 = vsel %vm7656, %v7654, %v7651
        %v7658 = vadd.f32 %v4451, 1.0
        %v7659 = vlog2.pop %v7658
        %v7660 = vmul.f32 %v7659, 0.6931472
        %v7661 = vmul.f32 -0.5, %v4451
        %v7662 = vadd.f32 %v7661, 1.0
        %v7663 = vmul.f32 %v7662, %v4451
        %v7664 = vand.u32 2147483647, %v4451
        %vm7665 = vcmp.lt.f32.partialorder %v7664, 0.0004427343
        %v7666 = vsel %vm7665, %v7663, %v7660
        %v7667 = vadd.f32 %v4453, 1.0
        %v7668 = vlog2.pop %v7667
        %v7669 = vmul.f32 %v7668, 0.6931472
        %v7670 = vmul.f32 -0.5, %v4453
        %v7671 = vadd.f32 %v7670, 1.0
        %v7672 = vmul.f32 %v7671, %v4453
        %v7673 = vand.u32 2147483647, %v4453
        %vm7674 = vcmp.lt.f32.partialorder %v7673, 0.0004427343
        %v7675 = vsel %vm7674, %v7672, %v7669
        %v7676 = vadd.f32 %v4455, 1.0
        %v7677 = vlog2.pop %v7676
        %v7678 = vmul.f32 %v7677, 0.6931472
        %v7679 = vmul.f32 -0.5, %v4455
        %v7680 = vadd.f32 %v7679, 1.0
        %v7681 = vmul.f32 %v7680, %v4455
        %v7682 = vand.u32 2147483647, %v4455
        %vm7683 = vcmp.lt.f32.partialorder %v7682, 0.0004427343
        %v7684 = vsel %vm7683, %v7681, %v7678
        %v7685 = vadd.f32 %v4457, 1.0
        %v7686 = vlog2.pop %v7685
        %v7687 = vmul.f32 %v7686, 0.6931472
        %v7688 = vmul.f32 -0.5, %v4457
        %v7689 = vadd.f32 %v7688, 1.0
        %v7690 = vmul.f32 %v7689, %v4457
        %v7691 = vand.u32 2147483647, %v4457
        %vm7692 = vcmp.lt.f32.partialorder %v7691, 0.0004427343
        %v7693 = vsel %vm7692, %v7690, %v7687
        %v7694 = vadd.f32 %v4459, 1.0
        %v7695 = vlog2.pop %v7694
        %v7696 = vmul.f32 %v7695, 0.6931472
        %v7697 = vmul.f32 -0.5, %v4459
        %v7698 = vadd.f32 %v7697, 1.0
        %v7699 = vmul.f32 %v7698, %v4459
        %v7700 = vand.u32 2147483647, %v4459
        %vm7701 = vcmp.lt.f32.partialorder %v7700, 0.0004427343
        %v7702 = vsel %vm7701, %v7699, %v7696
        %v7703 = vadd.f32 %v4461, 1.0
        %v7704 = vlog2.pop %v7703
        %v7705 = vmul.f32 %v7704, 0.6931472
        %v7706 = vmul.f32 -0.5, %v4461
        %v7707 = vadd.f32 %v7706, 1.0
        %v7708 = vmul.f32 %v7707, %v4461
        %v7709 = vand.u32 2147483647, %v4461
        %vm7710 = vcmp.lt.f32.partialorder %v7709, 0.0004427343
        %v7711 = vsel %vm7710, %v7708, %v7705
        %v7712 = vadd.f32 %v4463, 1.0
        %v7713 = vlog2.pop %v7712
        %v7714 = vmul.f32 %v7713, 0.6931472
        %v7715 = vmul.f32 -0.5, %v4463
        %v7716 = vadd.f32 %v7715, 1.0
        %v7717 = vmul.f32 %v7716, %v4463
        %v7718 = vand.u32 2147483647, %v4463
        %vm7719 = vcmp.lt.f32.partialorder %v7718, 0.0004427343
        %v7720 = vsel %vm7719, %v7717, %v7714
        %v7721 = vadd.f32 %v4465, 1.0
        %v7722 = vlog2.pop %v7721
        %v7723 = vmul.f32 %v7722, 0.6931472
        %v7724 = vmul.f32 -0.5, %v4465
        %v7725 = vadd.f32 %v7724, 1.0
        %v7726 = vmul.f32 %v7725, %v4465
        %v7727 = vand.u32 2147483647, %v4465
        %vm7728 = vcmp.lt.f32.partialorder %v7727, 0.0004427343
        %v7729 = vsel %vm7728, %v7726, %v7723
        %v7730 = vadd.f32 %v4467, 1.0
        %v7731 = vlog2.pop %v7730
        %v7732 = vmul.f32 %v7731, 0.6931472
        %v7733 = vmul.f32 -0.5, %v4467
        %v7734 = vadd.f32 %v7733, 1.0
        %v7735 = vmul.f32 %v7734, %v4467
        %v7736 = vand.u32 2147483647, %v4467
        %vm7737 = vcmp.lt.f32.partialorder %v7736, 0.0004427343
        %v7738 = vsel %vm7737, %v7735, %v7732
        %v7739 = vadd.f32 %v4469, 1.0
        %v7740 = vlog2.pop %v7739
        %v7741 = vmul.f32 %v7740, 0.6931472
        %v7742 = vmul.f32 -0.5, %v4469
        %v7743 = vadd.f32 %v7742, 1.0
        %v7744 = vmul.f32 %v7743, %v4469
        %v7745 = vand.u32 2147483647, %v4469
        %vm7746 = vcmp.lt.f32.partialorder %v7745, 0.0004427343
        %v7747 = vsel %vm7746, %v7744, %v7741
        %v7748 = vadd.f32 %v4471, 1.0
        %v7749 = vlog2.pop %v7748
        %v7750 = vmul.f32 %v7749, 0.6931472
        %v7751 = vmul.f32 -0.5, %v4471
        %v7752 = vadd.f32 %v7751, 1.0
        %v7753 = vmul.f32 %v7752, %v4471
        %v7754 = vand.u32 2147483647, %v4471
        %vm7755 = vcmp.lt.f32.partialorder %v7754, 0.0004427343
        %v7756 = vsel %vm7755, %v7753, %v7750
        %v7757 = vadd.f32 %v4473, 1.0
        %v7758 = vlog2.pop %v7757
        %v7759 = vmul.f32 %v7758, 0.6931472
        %v7760 = vmul.f32 -0.5, %v4473
        %v7761 = vadd.f32 %v7760, 1.0
        %v7762 = vmul.f32 %v7761, %v4473
        %v7763 = vand.u32 2147483647, %v4473
        %vm7764 = vcmp.lt.f32.partialorder %v7763, 0.0004427343
        %v7765 = vsel %vm7764, %v7762, %v7759
        %v7766 = vadd.f32 %v4475, 1.0
        %v7767 = vlog2.pop %v7766
        %v7768 = vmul.f32 %v7767, 0.6931472
        %v7769 = vmul.f32 -0.5, %v4475
        %v7770 = vadd.f32 %v7769, 1.0
        %v7771 = vmul.f32 %v7770, %v4475
        %v7772 = vand.u32 2147483647, %v4475
        %vm7773 = vcmp.lt.f32.partialorder %v7772, 0.0004427343
        %v7774 = vsel %vm7773, %v7771, %v7768
        %v7775 = vadd.f32 %v4477, 1.0
        %v7776 = vlog2.pop %v7775
        %v7777 = vmul.f32 %v7776, 0.6931472
        %v7778 = vmul.f32 -0.5, %v4477
        %v7779 = vadd.f32 %v7778, 1.0
        %v7780 = vmul.f32 %v7779, %v4477
        %v7781 = vand.u32 2147483647, %v4477
        %vm7782 = vcmp.lt.f32.partialorder %v7781, 0.0004427343
        %v7783 = vsel %vm7782, %v7780, %v7777
        %v7784 = vadd.f32 %v4479, 1.0
        %v7785 = vlog2.pop %v7784
        %v7786 = vmul.f32 %v7785, 0.6931472
        %v7787 = vmul.f32 -0.5, %v4479
        %v7788 = vadd.f32 %v7787, 1.0
        %v7789 = vmul.f32 %v7788, %v4479
        %v7790 = vand.u32 2147483647, %v4479
        %vm7791 = vcmp.lt.f32.partialorder %v7790, 0.0004427343
        %v7792 = vsel %vm7791, %v7789, %v7786
        %v7793 = vadd.f32 %v4481, 1.0
        %v7794 = vlog2.pop %v7793
        %v7795 = vmul.f32 %v7794, 0.6931472
        %v7796 = vmul.f32 -0.5, %v4481
        %v7797 = vadd.f32 %v7796, 1.0
        %v7798 = vmul.f32 %v7797, %v4481
        %v7799 = vand.u32 2147483647, %v4481
        %vm7800 = vcmp.lt.f32.partialorder %v7799, 0.0004427343
        %v7801 = vsel %vm7800, %v7798, %v7795
        %v7802 = vadd.f32 %v4483, 1.0
        %v7803 = vlog2.pop %v7802
        %v7804 = vmul.f32 %v7803, 0.6931472
        %v7805 = vmul.f32 -0.5, %v4483
        %v7806 = vadd.f32 %v7805, 1.0
        %v7807 = vmul.f32 %v7806, %v4483
        %v7808 = vand.u32 2147483647, %v4483
        %vm7809 = vcmp.lt.f32.partialorder %v7808, 0.0004427343
        %v7810 = vsel %vm7809, %v7807, %v7804
        %v7811 = vadd.f32 %v4485, 1.0
        %v7812 = vlog2.pop %v7811
        %v7813 = vmul.f32 %v7812, 0.6931472
        %v7814 = vmul.f32 -0.5, %v4485
        %v7815 = vadd.f32 %v7814, 1.0
        %v7816 = vmul.f32 %v7815, %v4485
        %v7817 = vand.u32 2147483647, %v4485
        %vm7818 = vcmp.lt.f32.partialorder %v7817, 0.0004427343
        %v7819 = vsel %vm7818, %v7816, %v7813
        %v7820 = vadd.f32 %v4487, 1.0
        %v7821 = vlog2.pop %v7820
        %v7822 = vmul.f32 %v7821, 0.6931472
        %v7823 = vmul.f32 -0.5, %v4487
        %v7824 = vadd.f32 %v7823, 1.0
        %v7825 = vmul.f32 %v7824, %v4487
        %v7826 = vand.u32 2147483647, %v4487
        %vm7827 = vcmp.lt.f32.partialorder %v7826, 0.0004427343
        %v7828 = vsel %vm7827, %v7825, %v7822
        %v7829 = vadd.f32 %v4489, 1.0
        %v7830 = vlog2.pop %v7829
        %v7831 = vmul.f32 %v7830, 0.6931472
        %v7832 = vmul.f32 -0.5, %v4489
        %v7833 = vadd.f32 %v7832, 1.0
        %v7834 = vmul.f32 %v7833, %v4489
        %v7835 = vand.u32 2147483647, %v4489
        %vm7836 = vcmp.lt.f32.partialorder %v7835, 0.0004427343
        %v7837 = vsel %vm7836, %v7834, %v7831
        %v7838 = vadd.f32 %v4491, 1.0
        %v7839 = vlog2.pop %v7838
        %v7840 = vmul.f32 %v7839, 0.6931472
        %v7841 = vmul.f32 -0.5, %v4491
        %v7842 = vadd.f32 %v7841, 1.0
        %v7843 = vmul.f32 %v7842, %v4491
        %v7844 = vand.u32 2147483647, %v4491
        %vm7845 = vcmp.lt.f32.partialorder %v7844, 0.0004427343
        %v7846 = vsel %vm7845, %v7843, %v7840
        %v7847 = vadd.f32 %v4493, 1.0
        %v7848 = vlog2.pop %v7847
        %v7849 = vmul.f32 %v7848, 0.6931472
        %v7850 = vmul.f32 -0.5, %v4493
        %v7851 = vadd.f32 %v7850, 1.0
        %v7852 = vmul.f32 %v7851, %v4493
        %v7853 = vand.u32 2147483647, %v4493
        %vm7854 = vcmp.lt.f32.partialorder %v7853, 0.0004427343
        %v7855 = vsel %vm7854, %v7852, %v7849
        %v7856 = vadd.f32 %v4495, 1.0
        %v7857 = vlog2.pop %v7856
        %v7858 = vmul.f32 %v7857, 0.6931472
        %v7859 = vmul.f32 -0.5, %v4495
        %v7860 = vadd.f32 %v7859, 1.0
        %v7861 = vmul.f32 %v7860, %v4495
        %v7862 = vand.u32 2147483647, %v4495
        %vm7863 = vcmp.lt.f32.partialorder %v7862, 0.0004427343
        %v7864 = vsel %vm7863, %v7861, %v7858
        %v7865 = vadd.f32 %v4497, 1.0
        %v7866 = vlog2.pop %v7865
        %v7867 = vmul.f32 %v7866, 0.6931472
        %v7868 = vmul.f32 -0.5, %v4497
        %v7869 = vadd.f32 %v7868, 1.0
        %v7870 = vmul.f32 %v7869, %v4497
        %v7871 = vand.u32 2147483647, %v4497
        %vm7872 = vcmp.lt.f32.partialorder %v7871, 0.0004427343
        %v7873 = vsel %vm7872, %v7870, %v7867
        %v7874 = vadd.f32 %v4499, 1.0
        %v7875 = vlog2.pop %v7874
        %v7876 = vmul.f32 %v7875, 0.6931472
        %v7877 = vmul.f32 -0.5, %v4499
        %v7878 = vadd.f32 %v7877, 1.0
        %v7879 = vmul.f32 %v7878, %v4499
        %v7880 = vand.u32 2147483647, %v4499
        %vm7881 = vcmp.lt.f32.partialorder %v7880, 0.0004427343
        %v7882 = vsel %vm7881, %v7879, %v7876
        %v7883 = vadd.f32 %v4501, 1.0
        %v7884 = vlog2.pop %v7883
        %v7885 = vmul.f32 %v7884, 0.6931472
        %v7886 = vmul.f32 -0.5, %v4501
        %v7887 = vadd.f32 %v7886, 1.0
        %v7888 = vmul.f32 %v7887, %v4501
        %v7889 = vand.u32 2147483647, %v4501
        %vm7890 = vcmp.lt.f32.partialorder %v7889, 0.0004427343
        %v7891 = vsel %vm7890, %v7888, %v7885
        %v7892 = vadd.f32 %v4503, 1.0
        %v7893 = vlog2.pop %v7892
        %v7894 = vmul.f32 %v7893, 0.6931472
        %v7895 = vmul.f32 -0.5, %v4503
        %v7896 = vadd.f32 %v7895, 1.0
        %v7897 = vmul.f32 %v7896, %v4503
        %v7898 = vand.u32 2147483647, %v4503
        %vm7899 = vcmp.lt.f32.partialorder %v7898, 0.0004427343
        %v7900 = vsel %vm7899, %v7897, %v7894
        %v7901 = vadd.f32 %v4505, 1.0
        %v7902 = vlog2.pop %v7901
        %v7903 = vmul.f32 %v7902, 0.6931472
        %v7904 = vmul.f32 -0.5, %v4505
        %v7905 = vadd.f32 %v7904, 1.0
        %v7906 = vmul.f32 %v7905, %v4505
        %v7907 = vand.u32 2147483647, %v4505
        %vm7908 = vcmp.lt.f32.partialorder %v7907, 0.0004427343
        %v7909 = vsel %vm7908, %v7906, %v7903
        %v7910 = vadd.f32 %v4507, 1.0
        %v7911 = vlog2.pop %v7910
        %v7912 = vmul.f32 %v7911, 0.6931472
        %v7913 = vmul.f32 -0.5, %v4507
        %v7914 = vadd.f32 %v7913, 1.0
        %v7915 = vmul.f32 %v7914, %v4507
        %v7916 = vand.u32 2147483647, %v4507
        %vm7917 = vcmp.lt.f32.partialorder %v7916, 0.0004427343
        %v7918 = vsel %vm7917, %v7915, %v7912
        %v7919 = vadd.f32 %v4509, 1.0
        %v7920 = vlog2.pop %v7919
        %v7921 = vmul.f32 %v7920, 0.6931472
        %v7922 = vmul.f32 -0.5, %v4509
        %v7923 = vadd.f32 %v7922, 1.0
        %v7924 = vmul.f32 %v7923, %v4509
        %v7925 = vand.u32 2147483647, %v4509
        %vm7926 = vcmp.lt.f32.partialorder %v7925, 0.0004427343
        %v7927 = vsel %vm7926, %v7924, %v7921
        %v7928 = vadd.f32 %v4511, 1.0
        %v7929 = vlog2.pop %v7928
        %v7930 = vmul.f32 %v7929, 0.6931472
        %v7931 = vmul.f32 -0.5, %v4511
        %v7932 = vadd.f32 %v7931, 1.0
        %v7933 = vmul.f32 %v7932, %v4511
        %v7934 = vand.u32 2147483647, %v4511
        %vm7935 = vcmp.lt.f32.partialorder %v7934, 0.0004427343
        %v7936 = vsel %vm7935, %v7933, %v7930
        %v7937 = vadd.f32 %v4513, 1.0
        %v7938 = vlog2.pop %v7937
        %v7939 = vmul.f32 %v7938, 0.6931472
        %v7940 = vmul.f32 -0.5, %v4513
        %v7941 = vadd.f32 %v7940, 1.0
        %v7942 = vmul.f32 %v7941, %v4513
        %v7943 = vand.u32 2147483647, %v4513
        %vm7944 = vcmp.lt.f32.partialorder %v7943, 0.0004427343
        %v7945 = vsel %vm7944, %v7942, %v7939
        %v7946 = vadd.f32 %v4515, 1.0
        %v7947 = vlog2.pop %v7946
        %v7948 = vmul.f32 %v7947, 0.6931472
        %v7949 = vmul.f32 -0.5, %v4515
        %v7950 = vadd.f32 %v7949, 1.0
        %v7951 = vmul.f32 %v7950, %v4515
        %v7952 = vand.u32 2147483647, %v4515
        %vm7953 = vcmp.lt.f32.partialorder %v7952, 0.0004427343
        %v7954 = vsel %vm7953, %v7951, %v7948
        %v7955 = vadd.f32 %v4517, 1.0
        %v7956 = vlog2.pop %v7955
        %v7957 = vmul.f32 %v7956, 0.6931472
        %v7958 = vmul.f32 -0.5, %v4517
        %v7959 = vadd.f32 %v7958, 1.0
        %v7960 = vmul.f32 %v7959, %v4517
        %v7961 = vand.u32 2147483647, %v4517
        %vm7962 = vcmp.lt.f32.partialorder %v7961, 0.0004427343
        %v7963 = vsel %vm7962, %v7960, %v7957
        %v7964 = vadd.f32 %v4519, 1.0
        %v7965 = vlog2.pop %v7964
        %v7966 = vmul.f32 %v7965, 0.6931472
        %v7967 = vmul.f32 -0.5, %v4519
        %v7968 = vadd.f32 %v7967, 1.0
        %v7969 = vmul.f32 %v7968, %v4519
        %v7970 = vand.u32 2147483647, %v4519
        %vm7971 = vcmp.lt.f32.partialorder %v7970, 0.0004427343
        %v7972 = vsel %vm7971, %v7969, %v7966
        %v7973 = vadd.f32 %v4521, 1.0
        %v7974 = vlog2.pop %v7973
        %v7975 = vmul.f32 %v7974, 0.6931472
        %v7976 = vmul.f32 -0.5, %v4521
        %v7977 = vadd.f32 %v7976, 1.0
        %v7978 = vmul.f32 %v7977, %v4521
        %v7979 = vand.u32 2147483647, %v4521
        %vm7980 = vcmp.lt.f32.partialorder %v7979, 0.0004427343
        %v7981 = vsel %vm7980, %v7978, %v7975
        %v7982 = vadd.f32 %v4523, 1.0
        %v7983 = vlog2.pop %v7982
        %v7984 = vmul.f32 %v7983, 0.6931472
        %v7985 = vmul.f32 -0.5, %v4523
        %v7986 = vadd.f32 %v7985, 1.0
        %v7987 = vmul.f32 %v7986, %v4523
        %v7988 = vand.u32 2147483647, %v4523
        %vm7989 = vcmp.lt.f32.partialorder %v7988, 0.0004427343
        %v7990 = vsel %vm7989, %v7987, %v7984
        %v7991 = vadd.f32 %v4525, 1.0
        %v7992 = vlog2.pop %v7991
        %v7993 = vmul.f32 %v7992, 0.6931472
        %v7994 = vmul.f32 -0.5, %v4525
        %v7995 = vadd.f32 %v7994, 1.0
        %v7996 = vmul.f32 %v7995, %v4525
        %v7997 = vand.u32 2147483647, %v4525
        %vm7998 = vcmp.lt.f32.partialorder %v7997, 0.0004427343
        %v7999 = vsel %vm7998, %v7996, %v7993
        %v8000 = vadd.f32 %v4527, 1.0
        %v8001 = vlog2.pop %v8000
        %v8002 = vmul.f32 %v8001, 0.6931472
        %v8003 = vmul.f32 -0.5, %v4527
        %v8004 = vadd.f32 %v8003, 1.0
        %v8005 = vmul.f32 %v8004, %v4527
        %v8006 = vand.u32 2147483647, %v4527
        %vm8007 = vcmp.lt.f32.partialorder %v8006, 0.0004427343
        %v8008 = vsel %vm8007, %v8005, %v8002
        %v8009 = vadd.f32 %v4529, 1.0
        %v8010 = vlog2.pop %v8009
        %v8011 = vmul.f32 %v8010, 0.6931472
        %v8012 = vmul.f32 -0.5, %v4529
        %v8013 = vadd.f32 %v8012, 1.0
        %v8014 = vmul.f32 %v8013, %v4529
        %v8015 = vand.u32 2147483647, %v4529
        %vm8016 = vcmp.lt.f32.partialorder %v8015, 0.0004427343
        %v8017 = vsel %vm8016, %v8014, %v8011
        %v8018 = vadd.f32 %v4531, 1.0
        %v8019 = vlog2.pop %v8018
        %v8020 = vmul.f32 %v8019, 0.6931472
        %v8021 = vmul.f32 -0.5, %v4531
        %v8022 = vadd.f32 %v8021, 1.0
        %v8023 = vmul.f32 %v8022, %v4531
        %v8024 = vand.u32 2147483647, %v4531
        %vm8025 = vcmp.lt.f32.partialorder %v8024, 0.0004427343
        %v8026 = vsel %vm8025, %v8023, %v8020
        %v8027 = vadd.f32 %v4533, 1.0
        %v8028 = vlog2.pop %v8027
        %v8029 = vmul.f32 %v8028, 0.6931472
        %v8030 = vmul.f32 -0.5, %v4533
        %v8031 = vadd.f32 %v8030, 1.0
        %v8032 = vmul.f32 %v8031, %v4533
        %v8033 = vand.u32 2147483647, %v4533
        %vm8034 = vcmp.lt.f32.partialorder %v8033, 0.0004427343
        %v8035 = vsel %vm8034, %v8032, %v8029
        %v8036 = vadd.f32 %v4535, 1.0
        %v8037 = vlog2.pop %v8036
        %v8038 = vmul.f32 %v8037, 0.6931472
        %v8039 = vmul.f32 -0.5, %v4535
        %v8040 = vadd.f32 %v8039, 1.0
        %v8041 = vmul.f32 %v8040, %v4535
        %v8042 = vand.u32 2147483647, %v4535
        %vm8043 = vcmp.lt.f32.partialorder %v8042, 0.0004427343
        %v8044 = vsel %vm8043, %v8041, %v8038
        %v8045 = vadd.f32 %v4537, 1.0
        %v8046 = vlog2.pop %v8045
        %v8047 = vmul.f32 %v8046, 0.6931472
        %v8048 = vmul.f32 -0.5, %v4537
        %v8049 = vadd.f32 %v8048, 1.0
        %v8050 = vmul.f32 %v8049, %v4537
        %v8051 = vand.u32 2147483647, %v4537
        %vm8052 = vcmp.lt.f32.partialorder %v8051, 0.0004427343
        %v8053 = vsel %vm8052, %v8050, %v8047
        %v8054 = vadd.f32 %v4539, 1.0
        %v8055 = vlog2.pop %v8054
        %v8056 = vmul.f32 %v8055, 0.6931472
        %v8057 = vmul.f32 -0.5, %v4539
        %v8058 = vadd.f32 %v8057, 1.0
        %v8059 = vmul.f32 %v8058, %v4539
        %v8060 = vand.u32 2147483647, %v4539
        %vm8061 = vcmp.lt.f32.partialorder %v8060, 0.0004427343
        %v8062 = vsel %vm8061, %v8059, %v8056
        %v8063 = vadd.f32 %v4541, 1.0
        %v8064 = vlog2.pop %v8063
        %v8065 = vmul.f32 %v8064, 0.6931472
        %v8066 = vmul.f32 -0.5, %v4541
        %v8067 = vadd.f32 %v8066, 1.0
        %v8068 = vmul.f32 %v8067, %v4541
        %v8069 = vand.u32 2147483647, %v4541
        %vm8070 = vcmp.lt.f32.partialorder %v8069, 0.0004427343
        %v8071 = vsel %vm8070, %v8068, %v8065
        %v8072 = vadd.f32 %v4543, 1.0
        %v8073 = vlog2.pop %v8072
        %v8074 = vmul.f32 %v8073, 0.6931472
        %v8075 = vmul.f32 -0.5, %v4543
        %v8076 = vadd.f32 %v8075, 1.0
        %v8077 = vmul.f32 %v8076, %v4543
        %v8078 = vand.u32 2147483647, %v4543
        %vm8079 = vcmp.lt.f32.partialorder %v8078, 0.0004427343
        %v8080 = vsel %vm8079, %v8077, %v8074
        %v8081 = vadd.f32 %v4545, 1.0
        %v8082 = vlog2.pop %v8081
        %v8083 = vmul.f32 %v8082, 0.6931472
        %v8084 = vmul.f32 -0.5, %v4545
        %v8085 = vadd.f32 %v8084, 1.0
        %v8086 = vmul.f32 %v8085, %v4545
        %v8087 = vand.u32 2147483647, %v4545
        %vm8088 = vcmp.lt.f32.partialorder %v8087, 0.0004427343
        %v8089 = vsel %vm8088, %v8086, %v8083
        %v8090 = vadd.f32 %v4547, 1.0
        %v8091 = vlog2.pop %v8090
        %v8092 = vmul.f32 %v8091, 0.6931472
        %v8093 = vmul.f32 -0.5, %v4547
        %v8094 = vadd.f32 %v8093, 1.0
        %v8095 = vmul.f32 %v8094, %v4547
        %v8096 = vand.u32 2147483647, %v4547
        %vm8097 = vcmp.lt.f32.partialorder %v8096, 0.0004427343
        %v8098 = vsel %vm8097, %v8095, %v8092
        %v8099 = vadd.f32 %v4549, 1.0
        %v8100 = vlog2.pop %v8099
        %v8101 = vmul.f32 %v8100, 0.6931472
        %v8102 = vmul.f32 -0.5, %v4549
        %v8103 = vadd.f32 %v8102, 1.0
        %v8104 = vmul.f32 %v8103, %v4549
        %v8105 = vand.u32 2147483647, %v4549
        %vm8106 = vcmp.lt.f32.partialorder %v8105, 0.0004427343
        %v8107 = vsel %vm8106, %v8104, %v8101
        %v8108 = vadd.f32 %v4551, 1.0
        %v8109 = vlog2.pop %v8108
        %v8110 = vmul.f32 %v8109, 0.6931472
        %v8111 = vmul.f32 -0.5, %v4551
        %v8112 = vadd.f32 %v8111, 1.0
        %v8113 = vmul.f32 %v8112, %v4551
        %v8114 = vand.u32 2147483647, %v4551
        %vm8115 = vcmp.lt.f32.partialorder %v8114, 0.0004427343
        %v8116 = vsel %vm8115, %v8113, %v8110
        %v8117 = vadd.f32 %v4553, 1.0
        %v8118 = vlog2.pop %v8117
        %v8119 = vmul.f32 %v8118, 0.6931472
        %v8120 = vmul.f32 -0.5, %v4553
        %v8121 = vadd.f32 %v8120, 1.0
        %v8122 = vmul.f32 %v8121, %v4553
        %v8123 = vand.u32 2147483647, %v4553
        %vm8124 = vcmp.lt.f32.partialorder %v8123, 0.0004427343
        %v8125 = vsel %vm8124, %v8122, %v8119
        %v8126 = vadd.f32 %v4555, 1.0
        %v8127 = vlog2.pop %v8126
        %v8128 = vmul.f32 %v8127, 0.6931472
        %v8129 = vmul.f32 -0.5, %v4555
        %v8130 = vadd.f32 %v8129, 1.0
        %v8131 = vmul.f32 %v8130, %v4555
        %v8132 = vand.u32 2147483647, %v4555
        %vm8133 = vcmp.lt.f32.partialorder %v8132, 0.0004427343
        %v8134 = vsel %vm8133, %v8131, %v8128
        %v8135 = vadd.f32 %v4557, 1.0
        %v8136 = vlog2.pop %v8135
        %v8137 = vmul.f32 %v8136, 0.6931472
        %v8138 = vmul.f32 -0.5, %v4557
        %v8139 = vadd.f32 %v8138, 1.0
        %v8140 = vmul.f32 %v8139, %v4557
        %v8141 = vand.u32 2147483647, %v4557
        %vm8142 = vcmp.lt.f32.partialorder %v8141, 0.0004427343
        %v8143 = vsel %vm8142, %v8140, %v8137
        %v8144 = vadd.f32 %v4559, 1.0
        %v8145 = vlog2.pop %v8144
        %v8146 = vmul.f32 %v8145, 0.6931472
        %v8147 = vmul.f32 -0.5, %v4559
        %v8148 = vadd.f32 %v8147, 1.0
        %v8149 = vmul.f32 %v8148, %v4559
        %v8150 = vand.u32 2147483647, %v4559
        %vm8151 = vcmp.lt.f32.partialorder %v8150, 0.0004427343
        %v8152 = vsel %vm8151, %v8149, %v8146
        %v8153 = vadd.f32 %v4561, 1.0
        %v8154 = vlog2.pop %v8153
        %v8155 = vmul.f32 %v8154, 0.6931472
        %v8156 = vmul.f32 -0.5, %v4561
        %v8157 = vadd.f32 %v8156, 1.0
        %v8158 = vmul.f32 %v8157, %v4561
        %v8159 = vand.u32 2147483647, %v4561
        %vm8160 = vcmp.lt.f32.partialorder %v8159, 0.0004427343
        %v8161 = vsel %vm8160, %v8158, %v8155
        %v8162 = vadd.f32 %v4563, 1.0
        %v8163 = vlog2.pop %v8162
        %v8164 = vmul.f32 %v8163, 0.6931472
        %v8165 = vmul.f32 -0.5, %v4563
        %v8166 = vadd.f32 %v8165, 1.0
        %v8167 = vmul.f32 %v8166, %v4563
        %v8168 = vand.u32 2147483647, %v4563
        %vm8169 = vcmp.lt.f32.partialorder %v8168, 0.0004427343
        %v8170 = vsel %vm8169, %v8167, %v8164
        %v8171 = vadd.f32 %v4565, 1.0
        %v8172 = vlog2.pop %v8171
        %v8173 = vmul.f32 %v8172, 0.6931472
        %v8174 = vmul.f32 -0.5, %v4565
        %v8175 = vadd.f32 %v8174, 1.0
        %v8176 = vmul.f32 %v8175, %v4565
        %v8177 = vand.u32 2147483647, %v4565
        %vm8178 = vcmp.lt.f32.partialorder %v8177, 0.0004427343
        %v8179 = vsel %vm8178, %v8176, %v8173
        %v8180 = vadd.f32 %v4567, 1.0
        %v8181 = vlog2.pop %v8180
        %v8182 = vmul.f32 %v8181, 0.6931472
        %v8183 = vmul.f32 -0.5, %v4567
        %v8184 = vadd.f32 %v8183, 1.0
        %v8185 = vmul.f32 %v8184, %v4567
        %v8186 = vand.u32 2147483647, %v4567
        %vm8187 = vcmp.lt.f32.partialorder %v8186, 0.0004427343
        %v8188 = vsel %vm8187, %v8185, %v8182
        %v8189 = vadd.f32 %v4569, 1.0
        %v8190 = vlog2.pop %v8189
        %v8191 = vmul.f32 %v8190, 0.6931472
        %v8192 = vmul.f32 -0.5, %v4569
        %v8193 = vadd.f32 %v8192, 1.0
        %v8194 = vmul.f32 %v8193, %v4569
        %v8195 = vand.u32 2147483647, %v4569
        %vm8196 = vcmp.lt.f32.partialorder %v8195, 0.0004427343
        %v8197 = vsel %vm8196, %v8194, %v8191
        %v8198 = vadd.f32 %v4571, 1.0
        %v8199 = vlog2.pop %v8198
        %v8200 = vmul.f32 %v8199, 0.6931472
        %v8201 = vmul.f32 -0.5, %v4571
        %v8202 = vadd.f32 %v8201, 1.0
        %v8203 = vmul.f32 %v8202, %v4571
        %v8204 = vand.u32 2147483647, %v4571
        %vm8205 = vcmp.lt.f32.partialorder %v8204, 0.0004427343
        %v8206 = vsel %vm8205, %v8203, %v8200
        %v8207 = vadd.f32 %v4573, 1.0
        %v8208 = vlog2.pop %v8207
        %v8209 = vmul.f32 %v8208, 0.6931472
        %v8210 = vmul.f32 -0.5, %v4573
        %v8211 = vadd.f32 %v8210, 1.0
        %v8212 = vmul.f32 %v8211, %v4573
        %v8213 = vand.u32 2147483647, %v4573
        %vm8214 = vcmp.lt.f32.partialorder %v8213, 0.0004427343
        %v8215 = vsel %vm8214, %v8212, %v8209
        %v8216 = vadd.f32 %v4575, 1.0
        %v8217 = vlog2.pop %v8216
        %v8218 = vmul.f32 %v8217, 0.6931472
        %v8219 = vmul.f32 -0.5, %v4575
        %v8220 = vadd.f32 %v8219, 1.0
        %v8221 = vmul.f32 %v8220, %v4575
        %v8222 = vand.u32 2147483647, %v4575
        %vm8223 = vcmp.lt.f32.partialorder %v8222, 0.0004427343
        %v8224 = vsel %vm8223, %v8221, %v8218
        %v8225 = vadd.f32 %v4577, 1.0
        %v8226 = vlog2.pop %v8225
        %v8227 = vmul.f32 %v8226, 0.6931472
        %v8228 = vmul.f32 -0.5, %v4577
        %v8229 = vadd.f32 %v8228, 1.0
        %v8230 = vmul.f32 %v8229, %v4577
        %v8231 = vand.u32 2147483647, %v4577
        %vm8232 = vcmp.lt.f32.partialorder %v8231, 0.0004427343
        %v8233 = vsel %vm8232, %v8230, %v8227
        %v8234 = vadd.f32 %v4579, 1.0
        %v8235 = vlog2.pop %v8234
        %v8236 = vmul.f32 %v8235, 0.6931472
        %v8237 = vmul.f32 -0.5, %v4579
        %v8238 = vadd.f32 %v8237, 1.0
        %v8239 = vmul.f32 %v8238, %v4579
        %v8240 = vand.u32 2147483647, %v4579
        %vm8241 = vcmp.lt.f32.partialorder %v8240, 0.0004427343
        %v8242 = vsel %vm8241, %v8239, %v8236
        %v8243 = vadd.f32 %v4581, 1.0
        %v8244 = vlog2.pop %v8243
        %v8245 = vmul.f32 %v8244, 0.6931472
        %v8246 = vmul.f32 -0.5, %v4581
        %v8247 = vadd.f32 %v8246, 1.0
        %v8248 = vmul.f32 %v8247, %v4581
        %v8249 = vand.u32 2147483647, %v4581
        %vm8250 = vcmp.lt.f32.partialorder %v8249, 0.0004427343
        %v8251 = vsel %vm8250, %v8248, %v8245
        %v8252 = vadd.f32 %v4583, 1.0
        %v8253 = vlog2.pop %v8252
        %v8254 = vmul.f32 %v8253, 0.6931472
        %v8255 = vmul.f32 -0.5, %v4583
        %v8256 = vadd.f32 %v8255, 1.0
        %v8257 = vmul.f32 %v8256, %v4583
        %v8258 = vand.u32 2147483647, %v4583
        %vm8259 = vcmp.lt.f32.partialorder %v8258, 0.0004427343
        %v8260 = vsel %vm8259, %v8257, %v8254
        %v8261 = vadd.f32 %v4585, 1.0
        %v8262 = vlog2.pop %v8261
        %v8263 = vmul.f32 %v8262, 0.6931472
        %v8264 = vmul.f32 -0.5, %v4585
        %v8265 = vadd.f32 %v8264, 1.0
        %v8266 = vmul.f32 %v8265, %v4585
        %v8267 = vand.u32 2147483647, %v4585
        %vm8268 = vcmp.lt.f32.partialorder %v8267, 0.0004427343
        %v8269 = vsel %vm8268, %v8266, %v8263
        %v8270 = vadd.f32 %v4587, 1.0
        %v8271 = vlog2.pop %v8270
        %v8272 = vmul.f32 %v8271, 0.6931472
        %v8273 = vmul.f32 -0.5, %v4587
        %v8274 = vadd.f32 %v8273, 1.0
        %v8275 = vmul.f32 %v8274, %v4587
        %v8276 = vand.u32 2147483647, %v4587
        %vm8277 = vcmp.lt.f32.partialorder %v8276, 0.0004427343
        %v8278 = vsel %vm8277, %v8275, %v8272
        %v8279 = vadd.f32 %v4589, 1.0
        %v8280 = vlog2.pop %v8279
        %v8281 = vmul.f32 %v8280, 0.6931472
        %v8282 = vmul.f32 -0.5, %v4589
        %v8283 = vadd.f32 %v8282, 1.0
        %v8284 = vmul.f32 %v8283, %v4589
        %v8285 = vand.u32 2147483647, %v4589
        %vm8286 = vcmp.lt.f32.partialorder %v8285, 0.0004427343
        %v8287 = vsel %vm8286, %v8284, %v8281
        %v8288 = vadd.f32 %v4591, 1.0
        %v8289 = vlog2.pop %v8288
        %v8290 = vmul.f32 %v8289, 0.6931472
        %v8291 = vmul.f32 -0.5, %v4591
        %v8292 = vadd.f32 %v8291, 1.0
        %v8293 = vmul.f32 %v8292, %v4591
        %v8294 = vand.u32 2147483647, %v4591
        %vm8295 = vcmp.lt.f32.partialorder %v8294, 0.0004427343
        %v8296 = vsel %vm8295, %v8293, %v8290
        %v8297 = vadd.f32 %v4593, 1.0
        %v8298 = vlog2.pop %v8297
        %v8299 = vmul.f32 %v8298, 0.6931472
        %v8300 = vmul.f32 -0.5, %v4593
        %v8301 = vadd.f32 %v8300, 1.0
        %v8302 = vmul.f32 %v8301, %v4593
        %v8303 = vand.u32 2147483647, %v4593
        %vm8304 = vcmp.lt.f32.partialorder %v8303, 0.0004427343
        %v8305 = vsel %vm8304, %v8302, %v8299
        %v8306 = vadd.f32 %v4595, 1.0
        %v8307 = vlog2.pop %v8306
        %v8308 = vmul.f32 %v8307, 0.6931472
        %v8309 = vmul.f32 -0.5, %v4595
        %v8310 = vadd.f32 %v8309, 1.0
        %v8311 = vmul.f32 %v8310, %v4595
        %v8312 = vand.u32 2147483647, %v4595
        %vm8313 = vcmp.lt.f32.partialorder %v8312, 0.0004427343
        %v8314 = vsel %vm8313, %v8311, %v8308
        %v8315 = vadd.f32 %v4597, 1.0
        %v8316 = vlog2.pop %v8315
        %v8317 = vmul.f32 %v8316, 0.6931472
        %v8318 = vmul.f32 -0.5, %v4597
        %v8319 = vadd.f32 %v8318, 1.0
        %v8320 = vmul.f32 %v8319, %v4597
        %v8321 = vand.u32 2147483647, %v4597
        %vm8322 = vcmp.lt.f32.partialorder %v8321, 0.0004427343
        %v8323 = vsel %vm8322, %v8320, %v8317
        %v8324 = vadd.f32 %v4599, 1.0
        %v8325 = vlog2.pop %v8324
        %v8326 = vmul.f32 %v8325, 0.6931472
        %v8327 = vmul.f32 -0.5, %v4599
        %v8328 = vadd.f32 %v8327, 1.0
        %v8329 = vmul.f32 %v8328, %v4599
        %v8330 = vand.u32 2147483647, %v4599
        %vm8331 = vcmp.lt.f32.partialorder %v8330, 0.0004427343
        %v8332 = vsel %vm8331, %v8329, %v8326
        %v8333 = vadd.f32 %v4601, 1.0
        %v8334 = vlog2.pop %v8333
        %v8335 = vmul.f32 %v8334, 0.6931472
        %v8336 = vmul.f32 -0.5, %v4601
        %v8337 = vadd.f32 %v8336, 1.0
        %v8338 = vmul.f32 %v8337, %v4601
        %v8339 = vand.u32 2147483647, %v4601
        %vm8340 = vcmp.lt.f32.partialorder %v8339, 0.0004427343
        %v8341 = vsel %vm8340, %v8338, %v8335
        %v8342 = vadd.f32 %v4603, 1.0
        %v8343 = vlog2.pop %v8342
        %v8344 = vmul.f32 %v8343, 0.6931472
        %v8345 = vmul.f32 -0.5, %v4603
        %v8346 = vadd.f32 %v8345, 1.0
        %v8347 = vmul.f32 %v8346, %v4603
        %v8348 = vand.u32 2147483647, %v4603
        %vm8349 = vcmp.lt.f32.partialorder %v8348, 0.0004427343
        %v8350 = vsel %vm8349, %v8347, %v8344
        %v8351 = vadd.f32 %v4605, 1.0
        %v8352 = vlog2.pop %v8351
        %v8353 = vmul.f32 %v8352, 0.6931472
        %v8354 = vmul.f32 -0.5, %v4605
        %v8355 = vadd.f32 %v8354, 1.0
        %v8356 = vmul.f32 %v8355, %v4605
        %v8357 = vand.u32 2147483647, %v4605
        %vm8358 = vcmp.lt.f32.partialorder %v8357, 0.0004427343
        %v8359 = vsel %vm8358, %v8356, %v8353
        %v8360 = vadd.f32 %v4607, 1.0
        %v8361 = vlog2.pop %v8360
        %v8362 = vmul.f32 %v8361, 0.6931472
        %v8363 = vmul.f32 -0.5, %v4607
        %v8364 = vadd.f32 %v8363, 1.0
        %v8365 = vmul.f32 %v8364, %v4607
        %v8366 = vand.u32 2147483647, %v4607
        %vm8367 = vcmp.lt.f32.partialorder %v8366, 0.0004427343
        %v8368 = vsel %vm8367, %v8365, %v8362
        %v8369 = vadd.f32 %v4609, 1.0
        %v8370 = vlog2.pop %v8369
        %v8371 = vmul.f32 %v8370, 0.6931472
        %v8372 = vmul.f32 -0.5, %v4609
        %v8373 = vadd.f32 %v8372, 1.0
        %v8374 = vmul.f32 %v8373, %v4609
        %v8375 = vand.u32 2147483647, %v4609
        %vm8376 = vcmp.lt.f32.partialorder %v8375, 0.0004427343
        %v8377 = vsel %vm8376, %v8374, %v8371
        %v8378 = vadd.f32 %v4611, 1.0
        %v8379 = vlog2.pop %v8378
        %v8380 = vmul.f32 %v8379, 0.6931472
        %v8381 = vmul.f32 -0.5, %v4611
        %v8382 = vadd.f32 %v8381, 1.0
        %v8383 = vmul.f32 %v8382, %v4611
        %v8384 = vand.u32 2147483647, %v4611
        %vm8385 = vcmp.lt.f32.partialorder %v8384, 0.0004427343
        %v8386 = vsel %vm8385, %v8383, %v8380
        %v8387 = vadd.f32 %v4613, 1.0
        %v8388 = vlog2.pop %v8387
        %v8389 = vmul.f32 %v8388, 0.6931472
        %v8390 = vmul.f32 -0.5, %v4613
        %v8391 = vadd.f32 %v8390, 1.0
        %v8392 = vmul.f32 %v8391, %v4613
        %v8393 = vand.u32 2147483647, %v4613
        %vm8394 = vcmp.lt.f32.partialorder %v8393, 0.0004427343
        %v8395 = vsel %vm8394, %v8392, %v8389
        %v8396 = vadd.f32 %v4615, 1.0
        %v8397 = vlog2.pop %v8396
        %v8398 = vmul.f32 %v8397, 0.6931472
        %v8399 = vmul.f32 -0.5, %v4615
        %v8400 = vadd.f32 %v8399, 1.0
        %v8401 = vmul.f32 %v8400, %v4615
        %v8402 = vand.u32 2147483647, %v4615
        %vm8403 = vcmp.lt.f32.partialorder %v8402, 0.0004427343
        %v8404 = vsel %vm8403, %v8401, %v8398
        %v8405 = vadd.f32 %v4617, 1.0
        %v8406 = vlog2.pop %v8405
        %v8407 = vmul.f32 %v8406, 0.6931472
        %v8408 = vmul.f32 -0.5, %v4617
        %v8409 = vadd.f32 %v8408, 1.0
        %v8410 = vmul.f32 %v8409, %v4617
        %v8411 = vand.u32 2147483647, %v4617
        %vm8412 = vcmp.lt.f32.partialorder %v8411, 0.0004427343
        %v8413 = vsel %vm8412, %v8410, %v8407
        %v8414 = vadd.f32 %v4619, 1.0
        %v8415 = vlog2.pop %v8414
        %v8416 = vmul.f32 %v8415, 0.6931472
        %v8417 = vmul.f32 -0.5, %v4619
        %v8418 = vadd.f32 %v8417, 1.0
        %v8419 = vmul.f32 %v8418, %v4619
        %v8420 = vand.u32 2147483647, %v4619
        %vm8421 = vcmp.lt.f32.partialorder %v8420, 0.0004427343
        %v8422 = vsel %vm8421, %v8419, %v8416
        %v8423 = vadd.f32 %v4621, 1.0
        %v8424 = vlog2.pop %v8423
        %v8425 = vmul.f32 %v8424, 0.6931472
        %v8426 = vmul.f32 -0.5, %v4621
        %v8427 = vadd.f32 %v8426, 1.0
        %v8428 = vmul.f32 %v8427, %v4621
        %v8429 = vand.u32 2147483647, %v4621
        %vm8430 = vcmp.lt.f32.partialorder %v8429, 0.0004427343
        %v8431 = vsel %vm8430, %v8428, %v8425
        %v8432 = vadd.f32 %v4623, 1.0
        %v8433 = vlog2.pop %v8432
        %v8434 = vmul.f32 %v8433, 0.6931472
        %v8435 = vmul.f32 -0.5, %v4623
        %v8436 = vadd.f32 %v8435, 1.0
        %v8437 = vmul.f32 %v8436, %v4623
        %v8438 = vand.u32 2147483647, %v4623
        %vm8439 = vcmp.lt.f32.partialorder %v8438, 0.0004427343
        %v8440 = vsel %vm8439, %v8437, %v8434
        %v8441 = vadd.f32 %v4625, 1.0
        %v8442 = vlog2.pop %v8441
        %v8443 = vmul.f32 %v8442, 0.6931472
        %v8444 = vmul.f32 -0.5, %v4625
        %v8445 = vadd.f32 %v8444, 1.0
        %v8446 = vmul.f32 %v8445, %v4625
        %v8447 = vand.u32 2147483647, %v4625
        %vm8448 = vcmp.lt.f32.partialorder %v8447, 0.0004427343
        %v8449 = vsel %vm8448, %v8446, %v8443
        %v8450 = vadd.f32 %v4627, 1.0
        %v8451 = vlog2.pop %v8450
        %v8452 = vmul.f32 %v8451, 0.6931472
        %v8453 = vmul.f32 -0.5, %v4627
        %v8454 = vadd.f32 %v8453, 1.0
        %v8455 = vmul.f32 %v8454, %v4627
        %v8456 = vand.u32 2147483647, %v4627
        %vm8457 = vcmp.lt.f32.partialorder %v8456, 0.0004427343
        %v8458 = vsel %vm8457, %v8455, %v8452
        %v8459 = vadd.f32 %v4629, 1.0
        %v8460 = vlog2.pop %v8459
        %v8461 = vmul.f32 %v8460, 0.6931472
        %v8462 = vmul.f32 -0.5, %v4629
        %v8463 = vadd.f32 %v8462, 1.0
        %v8464 = vmul.f32 %v8463, %v4629
        %v8465 = vand.u32 2147483647, %v4629
        %vm8466 = vcmp.lt.f32.partialorder %v8465, 0.0004427343
        %v8467 = vsel %vm8466, %v8464, %v8461
        %v8468 = vadd.f32 %v4631, 1.0
        %v8469 = vlog2.pop %v8468
        %v8470 = vmul.f32 %v8469, 0.6931472
        %v8471 = vmul.f32 -0.5, %v4631
        %v8472 = vadd.f32 %v8471, 1.0
        %v8473 = vmul.f32 %v8472, %v4631
        %v8474 = vand.u32 2147483647, %v4631
        %vm8475 = vcmp.lt.f32.partialorder %v8474, 0.0004427343
        %v8476 = vsel %vm8475, %v8473, %v8470
        %v8477 = vadd.f32 %v4633, 1.0
        %v8478 = vlog2.pop %v8477
        %v8479 = vmul.f32 %v8478, 0.6931472
        %v8480 = vmul.f32 -0.5, %v4633
        %v8481 = vadd.f32 %v8480, 1.0
        %v8482 = vmul.f32 %v8481, %v4633
        %v8483 = vand.u32 2147483647, %v4633
        %vm8484 = vcmp.lt.f32.partialorder %v8483, 0.0004427343
        %v8485 = vsel %vm8484, %v8482, %v8479
        %v8486 = vadd.f32 %v4635, 1.0
        %v8487 = vlog2.pop %v8486
        %v8488 = vmul.f32 %v8487, 0.6931472
        %v8489 = vmul.f32 -0.5, %v4635
        %v8490 = vadd.f32 %v8489, 1.0
        %v8491 = vmul.f32 %v8490, %v4635
        %v8492 = vand.u32 2147483647, %v4635
        %vm8493 = vcmp.lt.f32.partialorder %v8492, 0.0004427343
        %v8494 = vsel %vm8493, %v8491, %v8488
        %v8495 = vadd.f32 %v4637, 1.0
        %v8496 = vlog2.pop %v8495
        %v8497 = vmul.f32 %v8496, 0.6931472
        %v8498 = vmul.f32 -0.5, %v4637
        %v8499 = vadd.f32 %v8498, 1.0
        %v8500 = vmul.f32 %v8499, %v4637
        %v8501 = vand.u32 2147483647, %v4637
        %vm8502 = vcmp.lt.f32.partialorder %v8501, 0.0004427343
        %v8503 = vsel %vm8502, %v8500, %v8497
        %v8504 = vadd.f32 %v4639, 1.0
        %v8505 = vlog2.pop %v8504
        %v8506 = vmul.f32 %v8505, 0.6931472
        %v8507 = vmul.f32 -0.5, %v4639
        %v8508 = vadd.f32 %v8507, 1.0
        %v8509 = vmul.f32 %v8508, %v4639
        %v8510 = vand.u32 2147483647, %v4639
        %vm8511 = vcmp.lt.f32.partialorder %v8510, 0.0004427343
        %v8512 = vsel %vm8511, %v8509, %v8506
        %v8513 = vadd.f32 %v4641, 1.0
        %v8514 = vlog2.pop %v8513
        %v8515 = vmul.f32 %v8514, 0.6931472
        %v8516 = vmul.f32 -0.5, %v4641
        %v8517 = vadd.f32 %v8516, 1.0
        %v8518 = vmul.f32 %v8517, %v4641
        %v8519 = vand.u32 2147483647, %v4641
        %vm8520 = vcmp.lt.f32.partialorder %v8519, 0.0004427343
        %v8521 = vsel %vm8520, %v8518, %v8515
        %v8522 = vadd.f32 %v4643, 1.0
        %v8523 = vlog2.pop %v8522
        %v8524 = vmul.f32 %v8523, 0.6931472
        %v8525 = vmul.f32 -0.5, %v4643
        %v8526 = vadd.f32 %v8525, 1.0
        %v8527 = vmul.f32 %v8526, %v4643
        %v8528 = vand.u32 2147483647, %v4643
        %vm8529 = vcmp.lt.f32.partialorder %v8528, 0.0004427343
        %v8530 = vsel %vm8529, %v8527, %v8524
        %v8531 = vadd.f32 %v4645, 1.0
        %v8532 = vlog2.pop %v8531
        %v8533 = vmul.f32 %v8532, 0.6931472
        %v8534 = vmul.f32 -0.5, %v4645
        %v8535 = vadd.f32 %v8534, 1.0
        %v8536 = vmul.f32 %v8535, %v4645
        %v8537 = vand.u32 2147483647, %v4645
        %vm8538 = vcmp.lt.f32.partialorder %v8537, 0.0004427343
        %v8539 = vsel %vm8538, %v8536, %v8533
        %v8540 = vadd.f32 %v4647, 1.0
        %v8541 = vlog2.pop %v8540
        %v8542 = vmul.f32 %v8541, 0.6931472
        %v8543 = vmul.f32 -0.5, %v4647
        %v8544 = vadd.f32 %v8543, 1.0
        %v8545 = vmul.f32 %v8544, %v4647
        %v8546 = vand.u32 2147483647, %v4647
        %vm8547 = vcmp.lt.f32.partialorder %v8546, 0.0004427343
        %v8548 = vsel %vm8547, %v8545, %v8542
        %v8549 = vadd.f32 %v4649, 1.0
        %v8550 = vlog2.pop %v8549
        %v8551 = vmul.f32 %v8550, 0.6931472
        %v8552 = vmul.f32 -0.5, %v4649
        %v8553 = vadd.f32 %v8552, 1.0
        %v8554 = vmul.f32 %v8553, %v4649
        %v8555 = vand.u32 2147483647, %v4649
        %vm8556 = vcmp.lt.f32.partialorder %v8555, 0.0004427343
        %v8557 = vsel %vm8556, %v8554, %v8551
        %v8558 = vadd.f32 %v4651, 1.0
        %v8559 = vlog2.pop %v8558
        %v8560 = vmul.f32 %v8559, 0.6931472
        %v8561 = vmul.f32 -0.5, %v4651
        %v8562 = vadd.f32 %v8561, 1.0
        %v8563 = vmul.f32 %v8562, %v4651
        %v8564 = vand.u32 2147483647, %v4651
        %vm8565 = vcmp.lt.f32.partialorder %v8564, 0.0004427343
        %v8566 = vsel %vm8565, %v8563, %v8560
        %v8567 = vadd.f32 %v4653, 1.0
        %v8568 = vlog2.pop %v8567
        %v8569 = vmul.f32 %v8568, 0.6931472
        %v8570 = vmul.f32 -0.5, %v4653
        %v8571 = vadd.f32 %v8570, 1.0
        %v8572 = vmul.f32 %v8571, %v4653
        %v8573 = vand.u32 2147483647, %v4653
        %vm8574 = vcmp.lt.f32.partialorder %v8573, 0.0004427343
        %v8575 = vsel %vm8574, %v8572, %v8569
        %v8576 = vadd.f32 %v4655, 1.0
        %v8577 = vlog2.pop %v8576
        %v8578 = vmul.f32 %v8577, 0.6931472
        %v8579 = vmul.f32 -0.5, %v4655
        %v8580 = vadd.f32 %v8579, 1.0
        %v8581 = vmul.f32 %v8580, %v4655
        %v8582 = vand.u32 2147483647, %v4655
        %vm8583 = vcmp.lt.f32.partialorder %v8582, 0.0004427343
        %v8584 = vsel %vm8583, %v8581, %v8578
        %v8585 = vadd.f32 %v4657, 1.0
        %v8586 = vlog2.pop %v8585
        %v8587 = vmul.f32 %v8586, 0.6931472
        %v8588 = vmul.f32 -0.5, %v4657
        %v8589 = vadd.f32 %v8588, 1.0
        %v8590 = vmul.f32 %v8589, %v4657
        %v8591 = vand.u32 2147483647, %v4657
        %vm8592 = vcmp.lt.f32.partialorder %v8591, 0.0004427343
        %v8593 = vsel %vm8592, %v8590, %v8587
        %v8594 = vadd.f32 %v4659, 1.0
        %v8595 = vlog2.pop %v8594
        %v8596 = vmul.f32 %v8595, 0.6931472
        %v8597 = vmul.f32 -0.5, %v4659
        %v8598 = vadd.f32 %v8597, 1.0
        %v8599 = vmul.f32 %v8598, %v4659
        %v8600 = vand.u32 2147483647, %v4659
        %vm8601 = vcmp.lt.f32.partialorder %v8600, 0.0004427343
        %v8602 = vsel %vm8601, %v8599, %v8596
        %v8603 = vadd.f32 %v4661, 1.0
        %v8604 = vlog2.pop %v8603
        %v8605 = vmul.f32 %v8604, 0.6931472
        %v8606 = vmul.f32 -0.5, %v4661
        %v8607 = vadd.f32 %v8606, 1.0
        %v8608 = vmul.f32 %v8607, %v4661
        %v8609 = vand.u32 2147483647, %v4661
        %vm8610 = vcmp.lt.f32.partialorder %v8609, 0.0004427343
        %v8611 = vsel %vm8610, %v8608, %v8605
        %v8612 = vadd.f32 %v4663, 1.0
        %v8613 = vlog2.pop %v8612
        %v8614 = vmul.f32 %v8613, 0.6931472
        %v8615 = vmul.f32 -0.5, %v4663
        %v8616 = vadd.f32 %v8615, 1.0
        %v8617 = vmul.f32 %v8616, %v4663
        %v8618 = vand.u32 2147483647, %v4663
        %vm8619 = vcmp.lt.f32.partialorder %v8618, 0.0004427343
        %v8620 = vsel %vm8619, %v8617, %v8614
        %v8621 = vadd.f32 %v4665, 1.0
        %v8622 = vlog2.pop %v8621
        %v8623 = vmul.f32 %v8622, 0.6931472
        %v8624 = vmul.f32 -0.5, %v4665
        %v8625 = vadd.f32 %v8624, 1.0
        %v8626 = vmul.f32 %v8625, %v4665
        %v8627 = vand.u32 2147483647, %v4665
        %vm8628 = vcmp.lt.f32.partialorder %v8627, 0.0004427343
        %v8629 = vsel %vm8628, %v8626, %v8623
        %v8630 = vadd.f32 %v4667, 1.0
        %v8631 = vlog2.pop %v8630
        %v8632 = vmul.f32 %v8631, 0.6931472
        %v8633 = vmul.f32 -0.5, %v4667
        %v8634 = vadd.f32 %v8633, 1.0
        %v8635 = vmul.f32 %v8634, %v4667
        %v8636 = vand.u32 2147483647, %v4667
        %vm8637 = vcmp.lt.f32.partialorder %v8636, 0.0004427343
        %v8638 = vsel %vm8637, %v8635, %v8632
        %v8639 = vadd.f32 %v4669, 1.0
        %v8640 = vlog2.pop %v8639
        %v8641 = vmul.f32 %v8640, 0.6931472
        %v8642 = vmul.f32 -0.5, %v4669
        %v8643 = vadd.f32 %v8642, 1.0
        %v8644 = vmul.f32 %v8643, %v4669
        %v8645 = vand.u32 2147483647, %v4669
        %vm8646 = vcmp.lt.f32.partialorder %v8645, 0.0004427343
        %v8647 = vsel %vm8646, %v8644, %v8641
        %v8648 = vadd.f32 %v4671, 1.0
        %v8649 = vlog2.pop %v8648
        %v8650 = vmul.f32 %v8649, 0.6931472
        %v8651 = vmul.f32 -0.5, %v4671
        %v8652 = vadd.f32 %v8651, 1.0
        %v8653 = vmul.f32 %v8652, %v4671
        %v8654 = vand.u32 2147483647, %v4671
        %vm8655 = vcmp.lt.f32.partialorder %v8654, 0.0004427343
        %v8656 = vsel %vm8655, %v8653, %v8650
        %v8657 = vadd.f32 %v4673, 1.0
        %v8658 = vlog2.pop %v8657
        %v8659 = vmul.f32 %v8658, 0.6931472
        %v8660 = vmul.f32 -0.5, %v4673
        %v8661 = vadd.f32 %v8660, 1.0
        %v8662 = vmul.f32 %v8661, %v4673
        %v8663 = vand.u32 2147483647, %v4673
        %vm8664 = vcmp.lt.f32.partialorder %v8663, 0.0004427343
        %v8665 = vsel %vm8664, %v8662, %v8659
        %v8666 = vadd.f32 %v4675, 1.0
        %v8667 = vlog2.pop %v8666
        %v8668 = vmul.f32 %v8667, 0.6931472
        %v8669 = vmul.f32 -0.5, %v4675
        %v8670 = vadd.f32 %v8669, 1.0
        %v8671 = vmul.f32 %v8670, %v4675
        %v8672 = vand.u32 2147483647, %v4675
        %vm8673 = vcmp.lt.f32.partialorder %v8672, 0.0004427343
        %v8674 = vsel %vm8673, %v8671, %v8668
        %v8675 = vadd.f32 %v4677, 1.0
        %v8676 = vlog2.pop %v8675
        %v8677 = vmul.f32 %v8676, 0.6931472
        %v8678 = vmul.f32 -0.5, %v4677
        %v8679 = vadd.f32 %v8678, 1.0
        %v8680 = vmul.f32 %v8679, %v4677
        %v8681 = vand.u32 2147483647, %v4677
        %vm8682 = vcmp.lt.f32.partialorder %v8681, 0.0004427343
        %v8683 = vsel %vm8682, %v8680, %v8677
        %v8684 = vadd.f32 %v4679, 1.0
        %v8685 = vlog2.pop %v8684
        %v8686 = vmul.f32 %v8685, 0.6931472
        %v8687 = vmul.f32 -0.5, %v4679
        %v8688 = vadd.f32 %v8687, 1.0
        %v8689 = vmul.f32 %v8688, %v4679
        %v8690 = vand.u32 2147483647, %v4679
        %vm8691 = vcmp.lt.f32.partialorder %v8690, 0.0004427343
        %v8692 = vsel %vm8691, %v8689, %v8686
        %v8693 = vadd.f32 %v4681, 1.0
        %v8694 = vlog2.pop %v8693
        %v8695 = vmul.f32 %v8694, 0.6931472
        %v8696 = vmul.f32 -0.5, %v4681
        %v8697 = vadd.f32 %v8696, 1.0
        %v8698 = vmul.f32 %v8697, %v4681
        %v8699 = vand.u32 2147483647, %v4681
        %vm8700 = vcmp.lt.f32.partialorder %v8699, 0.0004427343
        %v8701 = vsel %vm8700, %v8698, %v8695
        %v8702 = vadd.f32 %v4683, 1.0
        %v8703 = vlog2.pop %v8702
        %v8704 = vmul.f32 %v8703, 0.6931472
        %v8705 = vmul.f32 -0.5, %v4683
        %v8706 = vadd.f32 %v8705, 1.0
        %v8707 = vmul.f32 %v8706, %v4683
        %v8708 = vand.u32 2147483647, %v4683
        %vm8709 = vcmp.lt.f32.partialorder %v8708, 0.0004427343
        %v8710 = vsel %vm8709, %v8707, %v8704
        %v8711 = vadd.f32 %v4685, 1.0
        %v8712 = vlog2.pop %v8711
        %v8713 = vmul.f32 %v8712, 0.6931472
        %v8714 = vmul.f32 -0.5, %v4685
        %v8715 = vadd.f32 %v8714, 1.0
        %v8716 = vmul.f32 %v8715, %v4685
        %v8717 = vand.u32 2147483647, %v4685
        %vm8718 = vcmp.lt.f32.partialorder %v8717, 0.0004427343
        %v8719 = vsel %vm8718, %v8716, %v8713
        %v8720 = vadd.f32 %v4687, 1.0
        %v8721 = vlog2.pop %v8720
        %v8722 = vmul.f32 %v8721, 0.6931472
        %v8723 = vmul.f32 -0.5, %v4687
        %v8724 = vadd.f32 %v8723, 1.0
        %v8725 = vmul.f32 %v8724, %v4687
        %v8726 = vand.u32 2147483647, %v4687
        %vm8727 = vcmp.lt.f32.partialorder %v8726, 0.0004427343
        %v8728 = vsel %vm8727, %v8725, %v8722
        %v8729 = vadd.f32 %v4689, 1.0
        %v8730 = vlog2.pop %v8729
        %v8731 = vmul.f32 %v8730, 0.6931472
        %v8732 = vmul.f32 -0.5, %v4689
        %v8733 = vadd.f32 %v8732, 1.0
        %v8734 = vmul.f32 %v8733, %v4689
        %v8735 = vand.u32 2147483647, %v4689
        %vm8736 = vcmp.lt.f32.partialorder %v8735, 0.0004427343
        %v8737 = vsel %vm8736, %v8734, %v8731
        %v8738 = vadd.f32 %v4691, 1.0
        %v8739 = vlog2.pop %v8738
        %v8740 = vmul.f32 %v8739, 0.6931472
        %v8741 = vmul.f32 -0.5, %v4691
        %v8742 = vadd.f32 %v8741, 1.0
        %v8743 = vmul.f32 %v8742, %v4691
        %v8744 = vand.u32 2147483647, %v4691
        %vm8745 = vcmp.lt.f32.partialorder %v8744, 0.0004427343
        %v8746 = vsel %vm8745, %v8743, %v8740
        %v8747 = vadd.f32 %v4693, 1.0
        %v8748 = vlog2.pop %v8747
        %v8749 = vmul.f32 %v8748, 0.6931472
        %v8750 = vmul.f32 -0.5, %v4693
        %v8751 = vadd.f32 %v8750, 1.0
        %v8752 = vmul.f32 %v8751, %v4693
        %v8753 = vand.u32 2147483647, %v4693
        %vm8754 = vcmp.lt.f32.partialorder %v8753, 0.0004427343
        %v8755 = vsel %vm8754, %v8752, %v8749
        %v8756 = vadd.f32 %v4695, 1.0
        %v8757 = vlog2.pop %v8756
        %v8758 = vmul.f32 %v8757, 0.6931472
        %v8759 = vmul.f32 -0.5, %v4695
        %v8760 = vadd.f32 %v8759, 1.0
        %v8761 = vmul.f32 %v8760, %v4695
        %v8762 = vand.u32 2147483647, %v4695
        %vm8763 = vcmp.lt.f32.partialorder %v8762, 0.0004427343
        %v8764 = vsel %vm8763, %v8761, %v8758
        %v8765 = vadd.f32 %v4697, 1.0
        %v8766 = vlog2.pop %v8765
        %v8767 = vmul.f32 %v8766, 0.6931472
        %v8768 = vmul.f32 -0.5, %v4697
        %v8769 = vadd.f32 %v8768, 1.0
        %v8770 = vmul.f32 %v8769, %v4697
        %v8771 = vand.u32 2147483647, %v4697
        %vm8772 = vcmp.lt.f32.partialorder %v8771, 0.0004427343
        %v8773 = vsel %vm8772, %v8770, %v8767
        %v8774 = vadd.f32 %v4699, 1.0
        %v8775 = vlog2.pop %v8774
        %v8776 = vmul.f32 %v8775, 0.6931472
        %v8777 = vmul.f32 -0.5, %v4699
        %v8778 = vadd.f32 %v8777, 1.0
        %v8779 = vmul.f32 %v8778, %v4699
        %v8780 = vand.u32 2147483647, %v4699
        %vm8781 = vcmp.lt.f32.partialorder %v8780, 0.0004427343
        %v8782 = vsel %vm8781, %v8779, %v8776
        %v8783 = vadd.f32 %v4701, 1.0
        %v8784 = vlog2.pop %v8783
        %v8785 = vmul.f32 %v8784, 0.6931472
        %v8786 = vmul.f32 -0.5, %v4701
        %v8787 = vadd.f32 %v8786, 1.0
        %v8788 = vmul.f32 %v8787, %v4701
        %v8789 = vand.u32 2147483647, %v4701
        %vm8790 = vcmp.lt.f32.partialorder %v8789, 0.0004427343
        %v8791 = vsel %vm8790, %v8788, %v8785
        %v8792 = vadd.f32 %v4703, 1.0
        %v8793 = vlog2.pop %v8792
        %v8794 = vmul.f32 %v8793, 0.6931472
        %v8795 = vmul.f32 -0.5, %v4703
        %v8796 = vadd.f32 %v8795, 1.0
        %v8797 = vmul.f32 %v8796, %v4703
        %v8798 = vand.u32 2147483647, %v4703
        %vm8799 = vcmp.lt.f32.partialorder %v8798, 0.0004427343
        %v8800 = vsel %vm8799, %v8797, %v8794
        %v8801 = vadd.f32 %v4705, 1.0
        %v8802 = vlog2.pop %v8801
        %v8803 = vmul.f32 %v8802, 0.6931472
        %v8804 = vmul.f32 -0.5, %v4705
        %v8805 = vadd.f32 %v8804, 1.0
        %v8806 = vmul.f32 %v8805, %v4705
        %v8807 = vand.u32 2147483647, %v4705
        %vm8808 = vcmp.lt.f32.partialorder %v8807, 0.0004427343
        %v8809 = vsel %vm8808, %v8806, %v8803
        %v8810 = vadd.f32 %v4707, 1.0
        %v8811 = vlog2.pop %v8810
        %v8812 = vmul.f32 %v8811, 0.6931472
        %v8813 = vmul.f32 -0.5, %v4707
        %v8814 = vadd.f32 %v8813, 1.0
        %v8815 = vmul.f32 %v8814, %v4707
        %v8816 = vand.u32 2147483647, %v4707
        %vm8817 = vcmp.lt.f32.partialorder %v8816, 0.0004427343
        %v8818 = vsel %vm8817, %v8815, %v8812
        %v8819 = vadd.f32 %v4709, 1.0
        %v8820 = vlog2.pop %v8819
        %v8821 = vmul.f32 %v8820, 0.6931472
        %v8822 = vmul.f32 -0.5, %v4709
        %v8823 = vadd.f32 %v8822, 1.0
        %v8824 = vmul.f32 %v8823, %v4709
        %v8825 = vand.u32 2147483647, %v4709
        %vm8826 = vcmp.lt.f32.partialorder %v8825, 0.0004427343
        %v8827 = vsel %vm8826, %v8824, %v8821
        %v8828 = vadd.f32 %v4711, 1.0
        %v8829 = vlog2.pop %v8828
        %v8830 = vmul.f32 %v8829, 0.6931472
        %v8831 = vmul.f32 -0.5, %v4711
        %v8832 = vadd.f32 %v8831, 1.0
        %v8833 = vmul.f32 %v8832, %v4711
        %v8834 = vand.u32 2147483647, %v4711
        %vm8835 = vcmp.lt.f32.partialorder %v8834, 0.0004427343
        %v8836 = vsel %vm8835, %v8833, %v8830
        %v8837 = vadd.f32 %v4713, 1.0
        %v8838 = vlog2.pop %v8837
        %v8839 = vmul.f32 %v8838, 0.6931472
        %v8840 = vmul.f32 -0.5, %v4713
        %v8841 = vadd.f32 %v8840, 1.0
        %v8842 = vmul.f32 %v8841, %v4713
        %v8843 = vand.u32 2147483647, %v4713
        %vm8844 = vcmp.lt.f32.partialorder %v8843, 0.0004427343
        %v8845 = vsel %vm8844, %v8842, %v8839
        %v8846 = vadd.f32 %v4715, 1.0
        %v8847 = vlog2.pop %v8846
        %v8848 = vmul.f32 %v8847, 0.6931472
        %v8849 = vmul.f32 -0.5, %v4715
        %v8850 = vadd.f32 %v8849, 1.0
        %v8851 = vmul.f32 %v8850, %v4715
        %v8852 = vand.u32 2147483647, %v4715
        %vm8853 = vcmp.lt.f32.partialorder %v8852, 0.0004427343
        %v8854 = vsel %vm8853, %v8851, %v8848
        %v8855 = vadd.f32 %v4717, 1.0
        %v8856 = vlog2.pop %v8855
        %v8857 = vmul.f32 %v8856, 0.6931472
        %v8858 = vmul.f32 -0.5, %v4717
        %v8859 = vadd.f32 %v8858, 1.0
        %v8860 = vmul.f32 %v8859, %v4717
        %v8861 = vand.u32 2147483647, %v4717
        %vm8862 = vcmp.lt.f32.partialorder %v8861, 0.0004427343
        %v8863 = vsel %vm8862, %v8860, %v8857
        %v8864 = vadd.f32 %v4719, 1.0
        %v8865 = vlog2.pop %v8864
        %v8866 = vmul.f32 %v8865, 0.6931472
        %v8867 = vmul.f32 -0.5, %v4719
        %v8868 = vadd.f32 %v8867, 1.0
        %v8869 = vmul.f32 %v8868, %v4719
        %v8870 = vand.u32 2147483647, %v4719
        %vm8871 = vcmp.lt.f32.partialorder %v8870, 0.0004427343
        %v8872 = vsel %vm8871, %v8869, %v8866
        %v8873 = vadd.f32 %v4721, 1.0
        %v8874 = vlog2.pop %v8873
        %v8875 = vmul.f32 %v8874, 0.6931472
        %v8876 = vmul.f32 -0.5, %v4721
        %v8877 = vadd.f32 %v8876, 1.0
        %v8878 = vmul.f32 %v8877, %v4721
        %v8879 = vand.u32 2147483647, %v4721
        %vm8880 = vcmp.lt.f32.partialorder %v8879, 0.0004427343
        %v8881 = vsel %vm8880, %v8878, %v8875
        %v8882 = vadd.f32 %v4723, 1.0
        %v8883 = vlog2.pop %v8882
        %v8884 = vmul.f32 %v8883, 0.6931472
        %v8885 = vmul.f32 -0.5, %v4723
        %v8886 = vadd.f32 %v8885, 1.0
        %v8887 = vmul.f32 %v8886, %v4723
        %v8888 = vand.u32 2147483647, %v4723
        %vm8889 = vcmp.lt.f32.partialorder %v8888, 0.0004427343
        %v8890 = vsel %vm8889, %v8887, %v8884
        %v8891 = vadd.f32 %v4725, 1.0
        %v8892 = vlog2.pop %v8891
        %v8893 = vmul.f32 %v8892, 0.6931472
        %v8894 = vmul.f32 -0.5, %v4725
        %v8895 = vadd.f32 %v8894, 1.0
        %v8896 = vmul.f32 %v8895, %v4725
        %v8897 = vand.u32 2147483647, %v4725
        %vm8898 = vcmp.lt.f32.partialorder %v8897, 0.0004427343
        %v8899 = vsel %vm8898, %v8896, %v8893
        %v8900 = vadd.f32 %v4727, 1.0
        %v8901 = vlog2.pop %v8900
        %v8902 = vmul.f32 %v8901, 0.6931472
        %v8903 = vmul.f32 -0.5, %v4727
        %v8904 = vadd.f32 %v8903, 1.0
        %v8905 = vmul.f32 %v8904, %v4727
        %v8906 = vand.u32 2147483647, %v4727
        %vm8907 = vcmp.lt.f32.partialorder %v8906, 0.0004427343
        %v8908 = vsel %vm8907, %v8905, %v8902
        %v8909 = vadd.f32 %v4729, 1.0
        %v8910 = vlog2.pop %v8909
        %v8911 = vmul.f32 %v8910, 0.6931472
        %v8912 = vmul.f32 -0.5, %v4729
        %v8913 = vadd.f32 %v8912, 1.0
        %v8914 = vmul.f32 %v8913, %v4729
        %v8915 = vand.u32 2147483647, %v4729
        %vm8916 = vcmp.lt.f32.partialorder %v8915, 0.0004427343
        %v8917 = vsel %vm8916, %v8914, %v8911
        %v8918 = vadd.f32 %v4731, 1.0
        %v8919 = vlog2.pop %v8918
        %v8920 = vmul.f32 %v8919, 0.6931472
        %v8921 = vmul.f32 -0.5, %v4731
        %v8922 = vadd.f32 %v8921, 1.0
        %v8923 = vmul.f32 %v8922, %v4731
        %v8924 = vand.u32 2147483647, %v4731
        %vm8925 = vcmp.lt.f32.partialorder %v8924, 0.0004427343
        %v8926 = vsel %vm8925, %v8923, %v8920
        %v8927 = vadd.f32 %v4733, 1.0
        %v8928 = vlog2.pop %v8927
        %v8929 = vmul.f32 %v8928, 0.6931472
        %v8930 = vmul.f32 -0.5, %v4733
        %v8931 = vadd.f32 %v8930, 1.0
        %v8932 = vmul.f32 %v8931, %v4733
        %v8933 = vand.u32 2147483647, %v4733
        %vm8934 = vcmp.lt.f32.partialorder %v8933, 0.0004427343
        %v8935 = vsel %vm8934, %v8932, %v8929
        %v8936 = vadd.f32 %v4735, 1.0
        %v8937 = vlog2.pop %v8936
        %v8938 = vmul.f32 %v8937, 0.6931472
        %v8939 = vmul.f32 -0.5, %v4735
        %v8940 = vadd.f32 %v8939, 1.0
        %v8941 = vmul.f32 %v8940, %v4735
        %v8942 = vand.u32 2147483647, %v4735
        %vm8943 = vcmp.lt.f32.partialorder %v8942, 0.0004427343
        %v8944 = vsel %vm8943, %v8941, %v8938
        %v8945 = vadd.f32 %v4737, 1.0
        %v8946 = vlog2.pop %v8945
        %v8947 = vmul.f32 %v8946, 0.6931472
        %v8948 = vmul.f32 -0.5, %v4737
        %v8949 = vadd.f32 %v8948, 1.0
        %v8950 = vmul.f32 %v8949, %v4737
        %v8951 = vand.u32 2147483647, %v4737
        %vm8952 = vcmp.lt.f32.partialorder %v8951, 0.0004427343
        %v8953 = vsel %vm8952, %v8950, %v8947
        %v8954 = vadd.f32 %v4739, 1.0
        %v8955 = vlog2.pop %v8954
        %v8956 = vmul.f32 %v8955, 0.6931472
        %v8957 = vmul.f32 -0.5, %v4739
        %v8958 = vadd.f32 %v8957, 1.0
        %v8959 = vmul.f32 %v8958, %v4739
        %v8960 = vand.u32 2147483647, %v4739
        %vm8961 = vcmp.lt.f32.partialorder %v8960, 0.0004427343
        %v8962 = vsel %vm8961, %v8959, %v8956
        %v8963 = vadd.f32 %v4741, 1.0
        %v8964 = vlog2.pop %v8963
        %v8965 = vmul.f32 %v8964, 0.6931472
        %v8966 = vmul.f32 -0.5, %v4741
        %v8967 = vadd.f32 %v8966, 1.0
        %v8968 = vmul.f32 %v8967, %v4741
        %v8969 = vand.u32 2147483647, %v4741
        %vm8970 = vcmp.lt.f32.partialorder %v8969, 0.0004427343
        %v8971 = vsel %vm8970, %v8968, %v8965
        %v8972 = vadd.f32 %v4743, 1.0
        %v8973 = vlog2.pop %v8972
        %v8974 = vmul.f32 %v8973, 0.6931472
        %v8975 = vmul.f32 -0.5, %v4743
        %v8976 = vadd.f32 %v8975, 1.0
        %v8977 = vmul.f32 %v8976, %v4743
        %v8978 = vand.u32 2147483647, %v4743
        %vm8979 = vcmp.lt.f32.partialorder %v8978, 0.0004427343
        %v8980 = vsel %vm8979, %v8977, %v8974
        %v8981 = vadd.f32 %v4745, 1.0
        %v8982 = vlog2.pop %v8981
        %v8983 = vmul.f32 %v8982, 0.6931472
        %v8984 = vmul.f32 -0.5, %v4745
        %v8985 = vadd.f32 %v8984, 1.0
        %v8986 = vmul.f32 %v8985, %v4745
        %v8987 = vand.u32 2147483647, %v4745
        %vm8988 = vcmp.lt.f32.partialorder %v8987, 0.0004427343
        %v8989 = vsel %vm8988, %v8986, %v8983
        %v8990 = vadd.f32 %v4747, 1.0
        %v8991 = vlog2.pop %v8990
        %v8992 = vmul.f32 %v8991, 0.6931472
        %v8993 = vmul.f32 -0.5, %v4747
        %v8994 = vadd.f32 %v8993, 1.0
        %v8995 = vmul.f32 %v8994, %v4747
        %v8996 = vand.u32 2147483647, %v4747
        %vm8997 = vcmp.lt.f32.partialorder %v8996, 0.0004427343
        %v8998 = vsel %vm8997, %v8995, %v8992
        %v8999 = vadd.f32 %v4749, 1.0
        %v9000 = vlog2.pop %v8999
        %v9001 = vmul.f32 %v9000, 0.6931472
        %v9002 = vmul.f32 -0.5, %v4749
        %v9003 = vadd.f32 %v9002, 1.0
        %v9004 = vmul.f32 %v9003, %v4749
        %v9005 = vand.u32 2147483647, %v4749
        %vm9006 = vcmp.lt.f32.partialorder %v9005, 0.0004427343
        %v9007 = vsel %vm9006, %v9004, %v9001
        %v9008 = vadd.f32 %v4751, 1.0
        %v9009 = vlog2.pop %v9008
        %v9010 = vmul.f32 %v9009, 0.6931472
        %v9011 = vmul.f32 -0.5, %v4751
        %v9012 = vadd.f32 %v9011, 1.0
        %v9013 = vmul.f32 %v9012, %v4751
        %v9014 = vand.u32 2147483647, %v4751
        %vm9015 = vcmp.lt.f32.partialorder %v9014, 0.0004427343
        %v9016 = vsel %vm9015, %v9013, %v9010
        %v9017 = vadd.f32 %v4753, 1.0
        %v9018 = vlog2.pop %v9017
        %v9019 = vmul.f32 %v9018, 0.6931472
        %v9020 = vmul.f32 -0.5, %v4753
        %v9021 = vadd.f32 %v9020, 1.0
        %v9022 = vmul.f32 %v9021, %v4753
        %v9023 = vand.u32 2147483647, %v4753
        %vm9024 = vcmp.lt.f32.partialorder %v9023, 0.0004427343
        %v9025 = vsel %vm9024, %v9022, %v9019
        %v9026 = vadd.f32 %v4755, 1.0
        %v9027 = vlog2.pop %v9026
        %v9028 = vmul.f32 %v9027, 0.6931472
        %v9029 = vmul.f32 -0.5, %v4755
        %v9030 = vadd.f32 %v9029, 1.0
        %v9031 = vmul.f32 %v9030, %v4755
        %v9032 = vand.u32 2147483647, %v4755
        %vm9033 = vcmp.lt.f32.partialorder %v9032, 0.0004427343
        %v9034 = vsel %vm9033, %v9031, %v9028
        %v9035 = vadd.f32 %v4757, 1.0
        %v9036 = vlog2.pop %v9035
        %v9037 = vmul.f32 %v9036, 0.6931472
        %v9038 = vmul.f32 -0.5, %v4757
        %v9039 = vadd.f32 %v9038, 1.0
        %v9040 = vmul.f32 %v9039, %v4757
        %v9041 = vand.u32 2147483647, %v4757
        %vm9042 = vcmp.lt.f32.partialorder %v9041, 0.0004427343
        %v9043 = vsel %vm9042, %v9040, %v9037
        %v9044 = vadd.f32 %v4759, 1.0
        %v9045 = vlog2.pop %v9044
        %v9046 = vmul.f32 %v9045, 0.6931472
        %v9047 = vmul.f32 -0.5, %v4759
        %v9048 = vadd.f32 %v9047, 1.0
        %v9049 = vmul.f32 %v9048, %v4759
        %v9050 = vand.u32 2147483647, %v4759
        %vm9051 = vcmp.lt.f32.partialorder %v9050, 0.0004427343
        %v9052 = vsel %vm9051, %v9049, %v9046
        %v9053 = vadd.f32 %v4761, 1.0
        %v9054 = vlog2.pop %v9053
        %v9055 = vmul.f32 %v9054, 0.6931472
        %v9056 = vmul.f32 -0.5, %v4761
        %v9057 = vadd.f32 %v9056, 1.0
        %v9058 = vmul.f32 %v9057, %v4761
        %v9059 = vand.u32 2147483647, %v4761
        %vm9060 = vcmp.lt.f32.partialorder %v9059, 0.0004427343
        %v9061 = vsel %vm9060, %v9058, %v9055
        %v9062 = vadd.f32 %v4763, 1.0
        %v9063 = vlog2.pop %v9062
        %v9064 = vmul.f32 %v9063, 0.6931472
        %v9065 = vmul.f32 -0.5, %v4763
        %v9066 = vadd.f32 %v9065, 1.0
        %v9067 = vmul.f32 %v9066, %v4763
        %v9068 = vand.u32 2147483647, %v4763
        %vm9069 = vcmp.lt.f32.partialorder %v9068, 0.0004427343
        %v9070 = vsel %vm9069, %v9067, %v9064
        %v9071 = vadd.f32 %v4765, 1.0
        %v9072 = vlog2.pop %v9071
        %v9073 = vmul.f32 %v9072, 0.6931472
        %v9074 = vmul.f32 -0.5, %v4765
        %v9075 = vadd.f32 %v9074, 1.0
        %v9076 = vmul.f32 %v9075, %v4765
        %v9077 = vand.u32 2147483647, %v4765
        %vm9078 = vcmp.lt.f32.partialorder %v9077, 0.0004427343
        %v9079 = vsel %vm9078, %v9076, %v9073
        %v9080 = vadd.f32 %v4767, 1.0
        %v9081 = vlog2.pop %v9080
        %v9082 = vmul.f32 %v9081, 0.6931472
        %v9083 = vmul.f32 -0.5, %v4767
        %v9084 = vadd.f32 %v9083, 1.0
        %v9085 = vmul.f32 %v9084, %v4767
        %v9086 = vand.u32 2147483647, %v4767
        %vm9087 = vcmp.lt.f32.partialorder %v9086, 0.0004427343
        %v9088 = vsel %vm9087, %v9085, %v9082
        %v9089 = vadd.f32 %v4769, 1.0
        %v9090 = vlog2.pop %v9089
        %v9091 = vmul.f32 %v9090, 0.6931472
        %v9092 = vmul.f32 -0.5, %v4769
        %v9093 = vadd.f32 %v9092, 1.0
        %v9094 = vmul.f32 %v9093, %v4769
        %v9095 = vand.u32 2147483647, %v4769
        %vm9096 = vcmp.lt.f32.partialorder %v9095, 0.0004427343
        %v9097 = vsel %vm9096, %v9094, %v9091
        %v9098 = vadd.f32 %v4771, 1.0
        %v9099 = vlog2.pop %v9098
        %v9100 = vmul.f32 %v9099, 0.6931472
        %v9101 = vmul.f32 -0.5, %v4771
        %v9102 = vadd.f32 %v9101, 1.0
        %v9103 = vmul.f32 %v9102, %v4771
        %v9104 = vand.u32 2147483647, %v4771
        %vm9105 = vcmp.lt.f32.partialorder %v9104, 0.0004427343
        %v9106 = vsel %vm9105, %v9103, %v9100
        %v9107 = vadd.f32 %v4773, 1.0
        %v9108 = vlog2.pop %v9107
        %v9109 = vmul.f32 %v9108, 0.6931472
        %v9110 = vmul.f32 -0.5, %v4773
        %v9111 = vadd.f32 %v9110, 1.0
        %v9112 = vmul.f32 %v9111, %v4773
        %v9113 = vand.u32 2147483647, %v4773
        %vm9114 = vcmp.lt.f32.partialorder %v9113, 0.0004427343
        %v9115 = vsel %vm9114, %v9112, %v9109
        %v9116 = vadd.f32 %v4775, 1.0
        %v9117 = vlog2.pop %v9116
        %v9118 = vmul.f32 %v9117, 0.6931472
        %v9119 = vmul.f32 -0.5, %v4775
        %v9120 = vadd.f32 %v9119, 1.0
        %v9121 = vmul.f32 %v9120, %v4775
        %v9122 = vand.u32 2147483647, %v4775
        %vm9123 = vcmp.lt.f32.partialorder %v9122, 0.0004427343
        %v9124 = vsel %vm9123, %v9121, %v9118
        %v9125 = vadd.f32 %v4777, 1.0
        %v9126 = vlog2.pop %v9125
        %v9127 = vmul.f32 %v9126, 0.6931472
        %v9128 = vmul.f32 -0.5, %v4777
        %v9129 = vadd.f32 %v9128, 1.0
        %v9130 = vmul.f32 %v9129, %v4777
        %v9131 = vand.u32 2147483647, %v4777
        %vm9132 = vcmp.lt.f32.partialorder %v9131, 0.0004427343
        %v9133 = vsel %vm9132, %v9130, %v9127
        %v9134 = vadd.f32 %v4779, 1.0
        %v9135 = vlog2.pop %v9134
        %v9136 = vmul.f32 %v9135, 0.6931472
        %v9137 = vmul.f32 -0.5, %v4779
        %v9138 = vadd.f32 %v9137, 1.0
        %v9139 = vmul.f32 %v9138, %v4779
        %v9140 = vand.u32 2147483647, %v4779
        %vm9141 = vcmp.lt.f32.partialorder %v9140, 0.0004427343
        %v9142 = vsel %vm9141, %v9139, %v9136
        %v9143 = vadd.f32 %v4781, 1.0
        %v9144 = vlog2.pop %v9143
        %v9145 = vmul.f32 %v9144, 0.6931472
        %v9146 = vmul.f32 -0.5, %v4781
        %v9147 = vadd.f32 %v9146, 1.0
        %v9148 = vmul.f32 %v9147, %v4781
        %v9149 = vand.u32 2147483647, %v4781
        %vm9150 = vcmp.lt.f32.partialorder %v9149, 0.0004427343
        %v9151 = vsel %vm9150, %v9148, %v9145
        %v9152 = vadd.f32 %v4783, 1.0
        %v9153 = vlog2.pop %v9152
        %v9154 = vmul.f32 %v9153, 0.6931472
        %v9155 = vmul.f32 -0.5, %v4783
        %v9156 = vadd.f32 %v9155, 1.0
        %v9157 = vmul.f32 %v9156, %v4783
        %v9158 = vand.u32 2147483647, %v4783
        %vm9159 = vcmp.lt.f32.partialorder %v9158, 0.0004427343
        %v9160 = vsel %vm9159, %v9157, %v9154
        %v9161 = vadd.f32 %v4785, 1.0
        %v9162 = vlog2.pop %v9161
        %v9163 = vmul.f32 %v9162, 0.6931472
        %v9164 = vmul.f32 -0.5, %v4785
        %v9165 = vadd.f32 %v9164, 1.0
        %v9166 = vmul.f32 %v9165, %v4785
        %v9167 = vand.u32 2147483647, %v4785
        %vm9168 = vcmp.lt.f32.partialorder %v9167, 0.0004427343
        %v9169 = vsel %vm9168, %v9166, %v9163
        %v9170 = vadd.f32 %v4787, 1.0
        %v9171 = vlog2.pop %v9170
        %v9172 = vmul.f32 %v9171, 0.6931472
        %v9173 = vmul.f32 -0.5, %v4787
        %v9174 = vadd.f32 %v9173, 1.0
        %v9175 = vmul.f32 %v9174, %v4787
        %v9176 = vand.u32 2147483647, %v4787
        %vm9177 = vcmp.lt.f32.partialorder %v9176, 0.0004427343
        %v9178 = vsel %vm9177, %v9175, %v9172
        %v9179 = vadd.f32 %v4789, 1.0
        %v9180 = vlog2.pop %v9179
        %v9181 = vmul.f32 %v9180, 0.6931472
        %v9182 = vmul.f32 -0.5, %v4789
        %v9183 = vadd.f32 %v9182, 1.0
        %v9184 = vmul.f32 %v9183, %v4789
        %v9185 = vand.u32 2147483647, %v4789
        %vm9186 = vcmp.lt.f32.partialorder %v9185, 0.0004427343
        %v9187 = vsel %vm9186, %v9184, %v9181
        %v9188 = vadd.f32 %v4791, 1.0
        %v9189 = vlog2.pop %v9188
        %v9190 = vmul.f32 %v9189, 0.6931472
        %v9191 = vmul.f32 -0.5, %v4791
        %v9192 = vadd.f32 %v9191, 1.0
        %v9193 = vmul.f32 %v9192, %v4791
        %v9194 = vand.u32 2147483647, %v4791
        %vm9195 = vcmp.lt.f32.partialorder %v9194, 0.0004427343
        %v9196 = vsel %vm9195, %v9193, %v9190
        %v9197 = vadd.f32 %v4793, 1.0
        %v9198 = vlog2.pop %v9197
        %v9199 = vmul.f32 %v9198, 0.6931472
        %v9200 = vmul.f32 -0.5, %v4793
        %v9201 = vadd.f32 %v9200, 1.0
        %v9202 = vmul.f32 %v9201, %v4793
        %v9203 = vand.u32 2147483647, %v4793
        %vm9204 = vcmp.lt.f32.partialorder %v9203, 0.0004427343
        %v9205 = vsel %vm9204, %v9202, %v9199
        %v9206 = vadd.f32 %v4795, 1.0
        %v9207 = vlog2.pop %v9206
        %v9208 = vmul.f32 %v9207, 0.6931472
        %v9209 = vmul.f32 -0.5, %v4795
        %v9210 = vadd.f32 %v9209, 1.0
        %v9211 = vmul.f32 %v9210, %v4795
        %v9212 = vand.u32 2147483647, %v4795
        %vm9213 = vcmp.lt.f32.partialorder %v9212, 0.0004427343
        %v9214 = vsel %vm9213, %v9211, %v9208
        %v9215 = vadd.f32 %v4797, 1.0
        %v9216 = vlog2.pop %v9215
        %v9217 = vmul.f32 %v9216, 0.6931472
        %v9218 = vmul.f32 -0.5, %v4797
        %v9219 = vadd.f32 %v9218, 1.0
        %v9220 = vmul.f32 %v9219, %v4797
        %v9221 = vand.u32 2147483647, %v4797
        %vm9222 = vcmp.lt.f32.partialorder %v9221, 0.0004427343
        %v9223 = vsel %vm9222, %v9220, %v9217
        %v9224 = vadd.f32 %v4799, 1.0
        %v9225 = vlog2.pop %v9224
        %v9226 = vmul.f32 %v9225, 0.6931472
        %v9227 = vmul.f32 -0.5, %v4799
        %v9228 = vadd.f32 %v9227, 1.0
        %v9229 = vmul.f32 %v9228, %v4799
        %v9230 = vand.u32 2147483647, %v4799
        %vm9231 = vcmp.lt.f32.partialorder %v9230, 0.0004427343
        %v9232 = vsel %vm9231, %v9229, %v9226
        %v9233 = vadd.f32 %v4801, 1.0
        %v9234 = vlog2.pop %v9233
        %v9235 = vmul.f32 %v9234, 0.6931472
        %v9236 = vmul.f32 -0.5, %v4801
        %v9237 = vadd.f32 %v9236, 1.0
        %v9238 = vmul.f32 %v9237, %v4801
        %v9239 = vand.u32 2147483647, %v4801
        %vm9240 = vcmp.lt.f32.partialorder %v9239, 0.0004427343
        %v9241 = vsel %vm9240, %v9238, %v9235
        %v9242 = vadd.f32 %v4803, 1.0
        %v9243 = vlog2.pop %v9242
        %v9244 = vmul.f32 %v9243, 0.6931472
        %v9245 = vmul.f32 -0.5, %v4803
        %v9246 = vadd.f32 %v9245, 1.0
        %v9247 = vmul.f32 %v9246, %v4803
        %v9248 = vand.u32 2147483647, %v4803
        %vm9249 = vcmp.lt.f32.partialorder %v9248, 0.0004427343
        %v9250 = vsel %vm9249, %v9247, %v9244
        %v9251 = vadd.f32 %v4805, 1.0
        %v9252 = vlog2.pop %v9251
        %v9253 = vmul.f32 %v9252, 0.6931472
        %v9254 = vmul.f32 -0.5, %v4805
        %v9255 = vadd.f32 %v9254, 1.0
        %v9256 = vmul.f32 %v9255, %v4805
        %v9257 = vand.u32 2147483647, %v4805
        %vm9258 = vcmp.lt.f32.partialorder %v9257, 0.0004427343
        %v9259 = vsel %vm9258, %v9256, %v9253
        %v9260 = vadd.f32 %v4807, 1.0
        %v9261 = vlog2.pop %v9260
        %v9262 = vmul.f32 %v9261, 0.6931472
        %v9263 = vmul.f32 -0.5, %v4807
        %v9264 = vadd.f32 %v9263, 1.0
        %v9265 = vmul.f32 %v9264, %v4807
        %v9266 = vand.u32 2147483647, %v4807
        %vm9267 = vcmp.lt.f32.partialorder %v9266, 0.0004427343
        %v9268 = vsel %vm9267, %v9265, %v9262
        %v9269 = vadd.f32 %v4809, 1.0
        %v9270 = vlog2.pop %v9269
        %v9271 = vmul.f32 %v9270, 0.6931472
        %v9272 = vmul.f32 -0.5, %v4809
        %v9273 = vadd.f32 %v9272, 1.0
        %v9274 = vmul.f32 %v9273, %v4809
        %v9275 = vand.u32 2147483647, %v4809
        %vm9276 = vcmp.lt.f32.partialorder %v9275, 0.0004427343
        %v9277 = vsel %vm9276, %v9274, %v9271
        %v9278 = vadd.f32 %v4811, 1.0
        %v9279 = vlog2.pop %v9278
        %v9280 = vmul.f32 %v9279, 0.6931472
        %v9281 = vmul.f32 -0.5, %v4811
        %v9282 = vadd.f32 %v9281, 1.0
        %v9283 = vmul.f32 %v9282, %v4811
        %v9284 = vand.u32 2147483647, %v4811
        %vm9285 = vcmp.lt.f32.partialorder %v9284, 0.0004427343
        %v9286 = vsel %vm9285, %v9283, %v9280
        %v9287 = vadd.f32 %v4813, 1.0
        %v9288 = vlog2.pop %v9287
        %v9289 = vmul.f32 %v9288, 0.6931472
        %v9290 = vmul.f32 -0.5, %v4813
        %v9291 = vadd.f32 %v9290, 1.0
        %v9292 = vmul.f32 %v9291, %v4813
        %v9293 = vand.u32 2147483647, %v4813
        %vm9294 = vcmp.lt.f32.partialorder %v9293, 0.0004427343
        %v9295 = vsel %vm9294, %v9292, %v9289
        %v9296 = vadd.f32 %v4815, 1.0
        %v9297 = vlog2.pop %v9296
        %v9298 = vmul.f32 %v9297, 0.6931472
        %v9299 = vmul.f32 -0.5, %v4815
        %v9300 = vadd.f32 %v9299, 1.0
        %v9301 = vmul.f32 %v9300, %v4815
        %v9302 = vand.u32 2147483647, %v4815
        %vm9303 = vcmp.lt.f32.partialorder %v9302, 0.0004427343
        %v9304 = vsel %vm9303, %v9301, %v9298
        %v9305 = vadd.f32 %v4817, 1.0
        %v9306 = vlog2.pop %v9305
        %v9307 = vmul.f32 %v9306, 0.6931472
        %v9308 = vmul.f32 -0.5, %v4817
        %v9309 = vadd.f32 %v9308, 1.0
        %v9310 = vmul.f32 %v9309, %v4817
        %v9311 = vand.u32 2147483647, %v4817
        %vm9312 = vcmp.lt.f32.partialorder %v9311, 0.0004427343
        %v9313 = vsel %vm9312, %v9310, %v9307
        %v9314 = vadd.f32 %v4819, 1.0
        %v9315 = vlog2.pop %v9314
        %v9316 = vmul.f32 %v9315, 0.6931472
        %v9317 = vmul.f32 -0.5, %v4819
        %v9318 = vadd.f32 %v9317, 1.0
        %v9319 = vmul.f32 %v9318, %v4819
        %v9320 = vand.u32 2147483647, %v4819
        %vm9321 = vcmp.lt.f32.partialorder %v9320, 0.0004427343
        %v9322 = vsel %vm9321, %v9319, %v9316
        %v9323 = vadd.f32 %v4821, 1.0
        %v9324 = vlog2.pop %v9323
        %v9325 = vmul.f32 %v9324, 0.6931472
        %v9326 = vmul.f32 -0.5, %v4821
        %v9327 = vadd.f32 %v9326, 1.0
        %v9328 = vmul.f32 %v9327, %v4821
        %v9329 = vand.u32 2147483647, %v4821
        %vm9330 = vcmp.lt.f32.partialorder %v9329, 0.0004427343
        %v9331 = vsel %vm9330, %v9328, %v9325
        %v9332 = vadd.f32 %v4823, 1.0
        %v9333 = vlog2.pop %v9332
        %v9334 = vmul.f32 %v9333, 0.6931472
        %v9335 = vmul.f32 -0.5, %v4823
        %v9336 = vadd.f32 %v9335, 1.0
        %v9337 = vmul.f32 %v9336, %v4823
        %v9338 = vand.u32 2147483647, %v4823
        %vm9339 = vcmp.lt.f32.partialorder %v9338, 0.0004427343
        %v9340 = vsel %vm9339, %v9337, %v9334
        %v9341 = vadd.f32 %v4825, 1.0
        %v9342 = vlog2.pop %v9341
        %v9343 = vmul.f32 %v9342, 0.6931472
        %v9344 = vmul.f32 -0.5, %v4825
        %v9345 = vadd.f32 %v9344, 1.0
        %v9346 = vmul.f32 %v9345, %v4825
        %v9347 = vand.u32 2147483647, %v4825
        %vm9348 = vcmp.lt.f32.partialorder %v9347, 0.0004427343
        %v9349 = vsel %vm9348, %v9346, %v9343
        %v9350 = vadd.f32 %v4827, 1.0
        %v9351 = vlog2.pop %v9350
        %v9352 = vmul.f32 %v9351, 0.6931472
        %v9353 = vmul.f32 -0.5, %v4827
        %v9354 = vadd.f32 %v9353, 1.0
        %v9355 = vmul.f32 %v9354, %v4827
        %v9356 = vand.u32 2147483647, %v4827
        %vm9357 = vcmp.lt.f32.partialorder %v9356, 0.0004427343
        %v9358 = vsel %vm9357, %v9355, %v9352
        %v9359 = vadd.f32 %v4829, 1.0
        %v9360 = vlog2.pop %v9359
        %v9361 = vmul.f32 %v9360, 0.6931472
        %v9362 = vmul.f32 -0.5, %v4829
        %v9363 = vadd.f32 %v9362, 1.0
        %v9364 = vmul.f32 %v9363, %v4829
        %v9365 = vand.u32 2147483647, %v4829
        %vm9366 = vcmp.lt.f32.partialorder %v9365, 0.0004427343
        %v9367 = vsel %vm9366, %v9364, %v9361
        %v9368 = vadd.f32 %v4831, 1.0
        %v9369 = vlog2.pop %v9368
        %v9370 = vmul.f32 %v9369, 0.6931472
        %v9371 = vmul.f32 -0.5, %v4831
        %v9372 = vadd.f32 %v9371, 1.0
        %v9373 = vmul.f32 %v9372, %v4831
        %v9374 = vand.u32 2147483647, %v4831
        %vm9375 = vcmp.lt.f32.partialorder %v9374, 0.0004427343
        %v9376 = vsel %vm9375, %v9373, %v9370
        %v9377 = vadd.f32 %v4833, 1.0
        %v9378 = vlog2.pop %v9377
        %v9379 = vmul.f32 %v9378, 0.6931472
        %v9380 = vmul.f32 -0.5, %v4833
        %v9381 = vadd.f32 %v9380, 1.0
        %v9382 = vmul.f32 %v9381, %v4833
        %v9383 = vand.u32 2147483647, %v4833
        %vm9384 = vcmp.lt.f32.partialorder %v9383, 0.0004427343
        %v9385 = vsel %vm9384, %v9382, %v9379
        %v9386 = vadd.f32 %v4835, 1.0
        %v9387 = vlog2.pop %v9386
        %v9388 = vmul.f32 %v9387, 0.6931472
        %v9389 = vmul.f32 -0.5, %v4835
        %v9390 = vadd.f32 %v9389, 1.0
        %v9391 = vmul.f32 %v9390, %v4835
        %v9392 = vand.u32 2147483647, %v4835
        %vm9393 = vcmp.lt.f32.partialorder %v9392, 0.0004427343
        %v9394 = vsel %vm9393, %v9391, %v9388
        %v9395 = vadd.f32 %v4837, 1.0
        %v9396 = vlog2.pop %v9395
        %v9397 = vmul.f32 %v9396, 0.6931472
        %v9398 = vmul.f32 -0.5, %v4837
        %v9399 = vadd.f32 %v9398, 1.0
        %v9400 = vmul.f32 %v9399, %v4837
        %v9401 = vand.u32 2147483647, %v4837
        %vm9402 = vcmp.lt.f32.partialorder %v9401, 0.0004427343
        %v9403 = vsel %vm9402, %v9400, %v9397
        %v9404 = vadd.f32 %v4839, 1.0
        %v9405 = vlog2.pop %v9404
        %v9406 = vmul.f32 %v9405, 0.6931472
        %v9407 = vmul.f32 -0.5, %v4839
        %v9408 = vadd.f32 %v9407, 1.0
        %v9409 = vmul.f32 %v9408, %v4839
        %v9410 = vand.u32 2147483647, %v4839
        %vm9411 = vcmp.lt.f32.partialorder %v9410, 0.0004427343
        %v9412 = vsel %vm9411, %v9409, %v9406
        %v9413 = vadd.f32 %v4841, 1.0
        %v9414 = vlog2.pop %v9413
        %v9415 = vmul.f32 %v9414, 0.6931472
        %v9416 = vmul.f32 -0.5, %v4841
        %v9417 = vadd.f32 %v9416, 1.0
        %v9418 = vmul.f32 %v9417, %v4841
        %v9419 = vand.u32 2147483647, %v4841
        %vm9420 = vcmp.lt.f32.partialorder %v9419, 0.0004427343
        %v9421 = vsel %vm9420, %v9418, %v9415
        %v9422 = vadd.f32 %v4843, 1.0
        %v9423 = vlog2.pop %v9422
        %v9424 = vmul.f32 %v9423, 0.6931472
        %v9425 = vmul.f32 -0.5, %v4843
        %v9426 = vadd.f32 %v9425, 1.0
        %v9427 = vmul.f32 %v9426, %v4843
        %v9428 = vand.u32 2147483647, %v4843
        %vm9429 = vcmp.lt.f32.partialorder %v9428, 0.0004427343
        %v9430 = vsel %vm9429, %v9427, %v9424
        %v9431 = vadd.f32 %v4845, 1.0
        %v9432 = vlog2.pop %v9431
        %v9433 = vmul.f32 %v9432, 0.6931472
        %v9434 = vmul.f32 -0.5, %v4845
        %v9435 = vadd.f32 %v9434, 1.0
        %v9436 = vmul.f32 %v9435, %v4845
        %v9437 = vand.u32 2147483647, %v4845
        %vm9438 = vcmp.lt.f32.partialorder %v9437, 0.0004427343
        %v9439 = vsel %vm9438, %v9436, %v9433
        %v9440 = vadd.f32 %v4847, 1.0
        %v9441 = vlog2.pop %v9440
        %v9442 = vmul.f32 %v9441, 0.6931472
        %v9443 = vmul.f32 -0.5, %v4847
        %v9444 = vadd.f32 %v9443, 1.0
        %v9445 = vmul.f32 %v9444, %v4847
        %v9446 = vand.u32 2147483647, %v4847
        %vm9447 = vcmp.lt.f32.partialorder %v9446, 0.0004427343
        %v9448 = vsel %vm9447, %v9445, %v9442
        %v9449 = vadd.f32 %v4849, 1.0
        %v9450 = vlog2.pop %v9449
        %v9451 = vmul.f32 %v9450, 0.6931472
        %v9452 = vmul.f32 -0.5, %v4849
        %v9453 = vadd.f32 %v9452, 1.0
        %v9454 = vmul.f32 %v9453, %v4849
        %v9455 = vand.u32 2147483647, %v4849
        %vm9456 = vcmp.lt.f32.partialorder %v9455, 0.0004427343
        %v9457 = vsel %vm9456, %v9454, %v9451
        %v9458 = vadd.f32 %v2290, %v4858
        %v9459 = vadd.f32 %v2291, %v4867
        %v9460 = vadd.f32 %v2292, %v4876
        %v9461 = vadd.f32 %v2293, %v4885
        %v9462 = vadd.f32 %v2294, %v4894
        %v9463 = vadd.f32 %v2295, %v4903
        %v9464 = vadd.f32 %v2296, %v4912
        %v9465 = vadd.f32 %v2297, %v4921
        %v9466 = vadd.f32 %v2298, %v4930
        %v9467 = vadd.f32 %v2299, %v4939
        %v9468 = vadd.f32 %v2300, %v4948
        %v9469 = vadd.f32 %v2301, %v4957
        %v9470 = vadd.f32 %v2302, %v4966
        %v9471 = vadd.f32 %v2303, %v4975
        %v9472 = vadd.f32 %v2304, %v4984
        %v9473 = vadd.f32 %v2305, %v4993
        %v9474 = vadd.f32 %v2306, %v5002
        %v9475 = vadd.f32 %v2307, %v5011
        %v9476 = vadd.f32 %v2308, %v5020
        %v9477 = vadd.f32 %v2309, %v5029
        %v9478 = vadd.f32 %v2310, %v5038
        %v9479 = vadd.f32 %v2311, %v5047
        %v9480 = vadd.f32 %v2312, %v5056
        %v9481 = vadd.f32 %v2313, %v5065
        %v9482 = vadd.f32 %v2314, %v5074
        %v9483 = vadd.f32 %v2315, %v5083
        %v9484 = vadd.f32 %v2316, %v5092
        %v9485 = vadd.f32 %v2317, %v5101
        %v9486 = vadd.f32 %v2318, %v5110
        %v9487 = vadd.f32 %v2319, %v5119
        %v9488 = vadd.f32 %v2320, %v5128
        %v9489 = vadd.f32 %v2321, %v5137
        %v9490 = vadd.f32 %v2322, %v5146
        %v9491 = vadd.f32 %v2323, %v5155
        %v9492 = vadd.f32 %v2324, %v5164
        %v9493 = vadd.f32 %v2325, %v5173
        %v9494 = vadd.f32 %v2326, %v5182
        %v9495 = vadd.f32 %v2327, %v5191
        %v9496 = vadd.f32 %v2328, %v5200
        %v9497 = vadd.f32 %v2329, %v5209
        %v9498 = vadd.f32 %v2330, %v5218
        %v9499 = vadd.f32 %v2331, %v5227
        %v9500 = vadd.f32 %v2332, %v5236
        %v9501 = vadd.f32 %v2333, %v5245
        %v9502 = vadd.f32 %v2334, %v5254
        %v9503 = vadd.f32 %v2335, %v5263
        %v9504 = vadd.f32 %v2336, %v5272
        %v9505 = vadd.f32 %v2337, %v5281
        %v9506 = vadd.f32 %v2338, %v5290
        %v9507 = vadd.f32 %v2339, %v5299
        %v9508 = vadd.f32 %v2340, %v5308
        %v9509 = vadd.f32 %v2341, %v5317
        %v9510 = vadd.f32 %v2342, %v5326
        %v9511 = vadd.f32 %v2343, %v5335
        %v9512 = vadd.f32 %v2344, %v5344
        %v9513 = vadd.f32 %v2345, %v5353
        %v9514 = vadd.f32 %v2346, %v5362
        %v9515 = vadd.f32 %v2347, %v5371
        %v9516 = vadd.f32 %v2348, %v5380
        %v9517 = vadd.f32 %v2349, %v5389
        %v9518 = vadd.f32 %v2350, %v5398
        %v9519 = vadd.f32 %v2351, %v5407
        %v9520 = vadd.f32 %v2352, %v5416
        %v9521 = vadd.f32 %v2353, %v5425
        %v9522 = vadd.f32 %v2354, %v5434
        %v9523 = vadd.f32 %v2355, %v5443
        %v9524 = vadd.f32 %v2356, %v5452
        %v9525 = vadd.f32 %v2357, %v5461
        %v9526 = vadd.f32 %v2358, %v5470
        %v9527 = vadd.f32 %v2359, %v5479
        %v9528 = vadd.f32 %v2360, %v5488
        %v9529 = vadd.f32 %v2361, %v5497
        %v9530 = vadd.f32 %v2362, %v5506
        %v9531 = vadd.f32 %v2363, %v5515
        %v9532 = vadd.f32 %v2364, %v5524
        %v9533 = vadd.f32 %v2365, %v5533
        %v9534 = vadd.f32 %v2366, %v5542
        %v9535 = vadd.f32 %v2367, %v5551
        %v9536 = vadd.f32 %v2368, %v5560
        %v9537 = vadd.f32 %v2369, %v5569
        %v9538 = vadd.f32 %v2370, %v5578
        %v9539 = vadd.f32 %v2371, %v5587
        %v9540 = vadd.f32 %v2372, %v5596
        %v9541 = vadd.f32 %v2373, %v5605
        %v9542 = vadd.f32 %v2374, %v5614
        %v9543 = vadd.f32 %v2375, %v5623
        %v9544 = vadd.f32 %v2376, %v5632
        %v9545 = vadd.f32 %v2377, %v5641
        %v9546 = vadd.f32 %v2378, %v5650
        %v9547 = vadd.f32 %v2379, %v5659
        %v9548 = vadd.f32 %v2380, %v5668
        %v9549 = vadd.f32 %v2381, %v5677
        %v9550 = vadd.f32 %v2382, %v5686
        %v9551 = vadd.f32 %v2383, %v5695
        %v9552 = vadd.f32 %v2384, %v5704
        %v9553 = vadd.f32 %v2385, %v5713
        %v9554 = vadd.f32 %v2386, %v5722
        %v9555 = vadd.f32 %v2387, %v5731
        %v9556 = vadd.f32 %v2388, %v5740
        %v9557 = vadd.f32 %v2389, %v5749
        %v9558 = vadd.f32 %v2390, %v5758
        %v9559 = vadd.f32 %v2391, %v5767
        %v9560 = vadd.f32 %v2392, %v5776
        %v9561 = vadd.f32 %v2393, %v5785
        %v9562 = vadd.f32 %v2394, %v5794
        %v9563 = vadd.f32 %v2395, %v5803
        %v9564 = vadd.f32 %v2396, %v5812
        %v9565 = vadd.f32 %v2397, %v5821
        %v9566 = vadd.f32 %v2398, %v5830
        %v9567 = vadd.f32 %v2399, %v5839
        %v9568 = vadd.f32 %v2400, %v5848
        %v9569 = vadd.f32 %v2401, %v5857
        %v9570 = vadd.f32 %v2402, %v5866
        %v9571 = vadd.f32 %v2403, %v5875
        %v9572 = vadd.f32 %v2404, %v5884
        %v9573 = vadd.f32 %v2405, %v5893
        %v9574 = vadd.f32 %v2406, %v5902
        %v9575 = vadd.f32 %v2407, %v5911
        %v9576 = vadd.f32 %v2408, %v5920
        %v9577 = vadd.f32 %v2409, %v5929
        %v9578 = vadd.f32 %v2410, %v5938
        %v9579 = vadd.f32 %v2411, %v5947
        %v9580 = vadd.f32 %v2412, %v5956
        %v9581 = vadd.f32 %v2413, %v5965
        %v9582 = vadd.f32 %v2414, %v5974
        %v9583 = vadd.f32 %v2415, %v5983
        %v9584 = vadd.f32 %v2416, %v5992
        %v9585 = vadd.f32 %v2417, %v6001
        %v9586 = vadd.f32 %v2418, %v6010
        %v9587 = vadd.f32 %v2419, %v6019
        %v9588 = vadd.f32 %v2420, %v6028
        %v9589 = vadd.f32 %v2421, %v6037
        %v9590 = vadd.f32 %v2422, %v6046
        %v9591 = vadd.f32 %v2423, %v6055
        %v9592 = vadd.f32 %v2424, %v6064
        %v9593 = vadd.f32 %v2425, %v6073
        %v9594 = vadd.f32 %v2426, %v6082
        %v9595 = vadd.f32 %v2427, %v6091
        %v9596 = vadd.f32 %v2428, %v6100
        %v9597 = vadd.f32 %v2429, %v6109
        %v9598 = vadd.f32 %v2430, %v6118
        %v9599 = vadd.f32 %v2431, %v6127
        %v9600 = vadd.f32 %v2432, %v6136
        %v9601 = vadd.f32 %v2433, %v6145
        %v9602 = vadd.f32 %v2434, %v6154
        %v9603 = vadd.f32 %v2435, %v6163
        %v9604 = vadd.f32 %v2436, %v6172
        %v9605 = vadd.f32 %v2437, %v6181
        %v9606 = vadd.f32 %v2438, %v6190
        %v9607 = vadd.f32 %v2439, %v6199
        %v9608 = vadd.f32 %v2440, %v6208
        %v9609 = vadd.f32 %v2441, %v6217
        %v9610 = vadd.f32 %v2442, %v6226
        %v9611 = vadd.f32 %v2443, %v6235
        %v9612 = vadd.f32 %v2444, %v6244
        %v9613 = vadd.f32 %v2445, %v6253
        %v9614 = vadd.f32 %v2446, %v6262
        %v9615 = vadd.f32 %v2447, %v6271
        %v9616 = vadd.f32 %v2448, %v6280
        %v9617 = vadd.f32 %v2449, %v6289
        %v9618 = vadd.f32 %v2450, %v6298
        %v9619 = vadd.f32 %v2451, %v6307
        %v9620 = vadd.f32 %v2452, %v6316
        %v9621 = vadd.f32 %v2453, %v6325
        %v9622 = vadd.f32 %v2454, %v6334
        %v9623 = vadd.f32 %v2455, %v6343
        %v9624 = vadd.f32 %v2456, %v6352
        %v9625 = vadd.f32 %v2457, %v6361
        %v9626 = vadd.f32 %v2458, %v6370
        %v9627 = vadd.f32 %v2459, %v6379
        %v9628 = vadd.f32 %v2460, %v6388
        %v9629 = vadd.f32 %v2461, %v6397
        %v9630 = vadd.f32 %v2462, %v6406
        %v9631 = vadd.f32 %v2463, %v6415
        %v9632 = vadd.f32 %v2464, %v6424
        %v9633 = vadd.f32 %v2465, %v6433
        %v9634 = vadd.f32 %v2466, %v6442
        %v9635 = vadd.f32 %v2467, %v6451
        %v9636 = vadd.f32 %v2468, %v6460
        %v9637 = vadd.f32 %v2469, %v6469
        %v9638 = vadd.f32 %v2470, %v6478
        %v9639 = vadd.f32 %v2471, %v6487
        %v9640 = vadd.f32 %v2472, %v6496
        %v9641 = vadd.f32 %v2473, %v6505
        %v9642 = vadd.f32 %v2474, %v6514
        %v9643 = vadd.f32 %v2475, %v6523
        %v9644 = vadd.f32 %v2476, %v6532
        %v9645 = vadd.f32 %v2477, %v6541
        %v9646 = vadd.f32 %v2478, %v6550
        %v9647 = vadd.f32 %v2479, %v6559
        %v9648 = vadd.f32 %v2480, %v6568
        %v9649 = vadd.f32 %v2481, %v6577
        %v9650 = vadd.f32 %v2482, %v6586
        %v9651 = vadd.f32 %v2483, %v6595
        %v9652 = vadd.f32 %v2484, %v6604
        %v9653 = vadd.f32 %v2485, %v6613
        %v9654 = vadd.f32 %v2486, %v6622
        %v9655 = vadd.f32 %v2487, %v6631
        %v9656 = vadd.f32 %v2488, %v6640
        %v9657 = vadd.f32 %v2489, %v6649
        %v9658 = vadd.f32 %v2490, %v6658
        %v9659 = vadd.f32 %v2491, %v6667
        %v9660 = vadd.f32 %v2492, %v6676
        %v9661 = vadd.f32 %v2493, %v6685
        %v9662 = vadd.f32 %v2494, %v6694
        %v9663 = vadd.f32 %v2495, %v6703
        %v9664 = vadd.f32 %v2496, %v6712
        %v9665 = vadd.f32 %v2497, %v6721
        %v9666 = vadd.f32 %v2498, %v6730
        %v9667 = vadd.f32 %v2499, %v6739
        %v9668 = vadd.f32 %v2500, %v6748
        %v9669 = vadd.f32 %v2501, %v6757
        %v9670 = vadd.f32 %v2502, %v6766
        %v9671 = vadd.f32 %v2503, %v6775
        %v9672 = vadd.f32 %v2504, %v6784
        %v9673 = vadd.f32 %v2505, %v6793
        %v9674 = vadd.f32 %v2506, %v6802
        %v9675 = vadd.f32 %v2507, %v6811
        %v9676 = vadd.f32 %v2508, %v6820
        %v9677 = vadd.f32 %v2509, %v6829
        %v9678 = vadd.f32 %v2510, %v6838
        %v9679 = vadd.f32 %v2511, %v6847
        %v9680 = vadd.f32 %v2512, %v6856
        %v9681 = vadd.f32 %v2513, %v6865
        %v9682 = vadd.f32 %v2514, %v6874
        %v9683 = vadd.f32 %v2515, %v6883
        %v9684 = vadd.f32 %v2516, %v6892
        %v9685 = vadd.f32 %v2517, %v6901
        %v9686 = vadd.f32 %v2518, %v6910
        %v9687 = vadd.f32 %v2519, %v6919
        %v9688 = vadd.f32 %v2520, %v6928
        %v9689 = vadd.f32 %v2521, %v6937
        %v9690 = vadd.f32 %v2522, %v6946
        %v9691 = vadd.f32 %v2523, %v6955
        %v9692 = vadd.f32 %v2524, %v6964
        %v9693 = vadd.f32 %v2525, %v6973
        %v9694 = vadd.f32 %v2526, %v6982
        %v9695 = vadd.f32 %v2527, %v6991
        %v9696 = vadd.f32 %v2528, %v7000
        %v9697 = vadd.f32 %v2529, %v7009
        %v9698 = vadd.f32 %v2530, %v7018
        %v9699 = vadd.f32 %v2531, %v7027
        %v9700 = vadd.f32 %v2532, %v7036
        %v9701 = vadd.f32 %v2533, %v7045
        %v9702 = vadd.f32 %v2534, %v7054
        %v9703 = vadd.f32 %v2535, %v7063
        %v9704 = vadd.f32 %v2536, %v7072
        %v9705 = vadd.f32 %v2537, %v7081
        %v9706 = vadd.f32 %v2538, %v7090
        %v9707 = vadd.f32 %v2539, %v7099
        %v9708 = vadd.f32 %v2540, %v7108
        %v9709 = vadd.f32 %v2541, %v7117
        %v9710 = vadd.f32 %v2542, %v7126
        %v9711 = vadd.f32 %v2543, %v7135
        %v9712 = vadd.f32 %v2544, %v7144
        %v9713 = vadd.f32 %v2545, %v7153
        %v9714 = vadd.f32 %v2546, %v7162
        %v9715 = vadd.f32 %v2547, %v7171
        %v9716 = vadd.f32 %v2548, %v7180
        %v9717 = vadd.f32 %v2549, %v7189
        %v9718 = vadd.f32 %v2550, %v7198
        %v9719 = vadd.f32 %v2551, %v7207
        %v9720 = vadd.f32 %v2552, %v7216
        %v9721 = vadd.f32 %v2553, %v7225
        %v9722 = vadd.f32 %v2554, %v7234
        %v9723 = vadd.f32 %v2555, %v7243
        %v9724 = vadd.f32 %v2556, %v7252
        %v9725 = vadd.f32 %v2557, %v7261
        %v9726 = vadd.f32 %v2558, %v7270
        %v9727 = vadd.f32 %v2559, %v7279
        %v9728 = vadd.f32 %v2560, %v7288
        %v9729 = vadd.f32 %v2561, %v7297
        %v9730 = vadd.f32 %v2562, %v7306
        %v9731 = vadd.f32 %v2563, %v7315
        %v9732 = vadd.f32 %v2564, %v7324
        %v9733 = vadd.f32 %v2565, %v7333
        %v9734 = vadd.f32 %v2566, %v7342
        %v9735 = vadd.f32 %v2567, %v7351
        %v9736 = vadd.f32 %v2568, %v7360
        %v9737 = vadd.f32 %v2569, %v7369
        %v9738 = vadd.f32 %v2570, %v7378
        %v9739 = vadd.f32 %v2571, %v7387
        %v9740 = vadd.f32 %v2572, %v7396
        %v9741 = vadd.f32 %v2573, %v7405
        %v9742 = vadd.f32 %v2574, %v7414
        %v9743 = vadd.f32 %v2575, %v7423
        %v9744 = vadd.f32 %v2576, %v7432
        %v9745 = vadd.f32 %v2577, %v7441
        %v9746 = vadd.f32 %v2578, %v7450
        %v9747 = vadd.f32 %v2579, %v7459
        %v9748 = vadd.f32 %v2580, %v7468
        %v9749 = vadd.f32 %v2581, %v7477
        %v9750 = vadd.f32 %v2582, %v7486
        %v9751 = vadd.f32 %v2583, %v7495
        %v9752 = vadd.f32 %v2584, %v7504
        %v9753 = vadd.f32 %v2585, %v7513
        %v9754 = vadd.f32 %v2586, %v7522
        %v9755 = vadd.f32 %v2587, %v7531
        %v9756 = vadd.f32 %v2588, %v7540
        %v9757 = vadd.f32 %v2589, %v7549
        %v9758 = vadd.f32 %v2590, %v7558
        %v9759 = vadd.f32 %v2591, %v7567
        %v9760 = vadd.f32 %v2592, %v7576
        %v9761 = vadd.f32 %v2593, %v7585
        %v9762 = vadd.f32 %v2594, %v7594
        %v9763 = vadd.f32 %v2595, %v7603
        %v9764 = vadd.f32 %v2596, %v7612
        %v9765 = vadd.f32 %v2597, %v7621
        %v9766 = vadd.f32 %v2598, %v7630
        %v9767 = vadd.f32 %v2599, %v7639
        %v9768 = vadd.f32 %v2600, %v7648
        %v9769 = vadd.f32 %v2601, %v7657
        %v9770 = vadd.f32 %v2602, %v7666
        %v9771 = vadd.f32 %v2603, %v7675
        %v9772 = vadd.f32 %v2604, %v7684
        %v9773 = vadd.f32 %v2605, %v7693
        %v9774 = vadd.f32 %v2606, %v7702
        %v9775 = vadd.f32 %v2607, %v7711
        %v9776 = vadd.f32 %v2608, %v7720
        %v9777 = vadd.f32 %v2609, %v7729
        %v9778 = vadd.f32 %v2610, %v7738
        %v9779 = vadd.f32 %v2611, %v7747
        %v9780 = vadd.f32 %v2612, %v7756
        %v9781 = vadd.f32 %v2613, %v7765
        %v9782 = vadd.f32 %v2614, %v7774
        %v9783 = vadd.f32 %v2615, %v7783
        %v9784 = vadd.f32 %v2616, %v7792
        %v9785 = vadd.f32 %v2617, %v7801
        %v9786 = vadd.f32 %v2618, %v7810
        %v9787 = vadd.f32 %v2619, %v7819
        %v9788 = vadd.f32 %v2620, %v7828
        %v9789 = vadd.f32 %v2621, %v7837
        %v9790 = vadd.f32 %v2622, %v7846
        %v9791 = vadd.f32 %v2623, %v7855
        %v9792 = vadd.f32 %v2624, %v7864
        %v9793 = vadd.f32 %v2625, %v7873
        %v9794 = vadd.f32 %v2626, %v7882
        %v9795 = vadd.f32 %v2627, %v7891
        %v9796 = vadd.f32 %v2628, %v7900
        %v9797 = vadd.f32 %v2629, %v7909
        %v9798 = vadd.f32 %v2630, %v7918
        %v9799 = vadd.f32 %v2631, %v7927
        %v9800 = vadd.f32 %v2632, %v7936
        %v9801 = vadd.f32 %v2633, %v7945
        %v9802 = vadd.f32 %v2634, %v7954
        %v9803 = vadd.f32 %v2635, %v7963
        %v9804 = vadd.f32 %v2636, %v7972
        %v9805 = vadd.f32 %v2637, %v7981
        %v9806 = vadd.f32 %v2638, %v7990
        %v9807 = vadd.f32 %v2639, %v7999
        %v9808 = vadd.f32 %v2640, %v8008
        %v9809 = vadd.f32 %v2641, %v8017
        %v9810 = vadd.f32 %v2642, %v8026
        %v9811 = vadd.f32 %v2643, %v8035
        %v9812 = vadd.f32 %v2644, %v8044
        %v9813 = vadd.f32 %v2645, %v8053
        %v9814 = vadd.f32 %v2646, %v8062
        %v9815 = vadd.f32 %v2647, %v8071
        %v9816 = vadd.f32 %v2648, %v8080
        %v9817 = vadd.f32 %v2649, %v8089
        %v9818 = vadd.f32 %v2650, %v8098
        %v9819 = vadd.f32 %v2651, %v8107
        %v9820 = vadd.f32 %v2652, %v8116
        %v9821 = vadd.f32 %v2653, %v8125
        %v9822 = vadd.f32 %v2654, %v8134
        %v9823 = vadd.f32 %v2655, %v8143
        %v9824 = vadd.f32 %v2656, %v8152
        %v9825 = vadd.f32 %v2657, %v8161
        %v9826 = vadd.f32 %v2658, %v8170
        %v9827 = vadd.f32 %v2659, %v8179
        %v9828 = vadd.f32 %v2660, %v8188
        %v9829 = vadd.f32 %v2661, %v8197
        %v9830 = vadd.f32 %v2662, %v8206
        %v9831 = vadd.f32 %v2663, %v8215
        %v9832 = vadd.f32 %v2664, %v8224
        %v9833 = vadd.f32 %v2665, %v8233
        %v9834 = vadd.f32 %v2666, %v8242
        %v9835 = vadd.f32 %v2667, %v8251
        %v9836 = vadd.f32 %v2668, %v8260
        %v9837 = vadd.f32 %v2669, %v8269
        %v9838 = vadd.f32 %v2670, %v8278
        %v9839 = vadd.f32 %v2671, %v8287
        %v9840 = vadd.f32 %v2672, %v8296
        %v9841 = vadd.f32 %v2673, %v8305
        %v9842 = vadd.f32 %v2674, %v8314
        %v9843 = vadd.f32 %v2675, %v8323
        %v9844 = vadd.f32 %v2676, %v8332
        %v9845 = vadd.f32 %v2677, %v8341
        %v9846 = vadd.f32 %v2678, %v8350
        %v9847 = vadd.f32 %v2679, %v8359
        %v9848 = vadd.f32 %v2680, %v8368
        %v9849 = vadd.f32 %v2681, %v8377
        %v9850 = vadd.f32 %v2682, %v8386
        %v9851 = vadd.f32 %v2683, %v8395
        %v9852 = vadd.f32 %v2684, %v8404
        %v9853 = vadd.f32 %v2685, %v8413
        %v9854 = vadd.f32 %v2686, %v8422
        %v9855 = vadd.f32 %v2687, %v8431
        %v9856 = vadd.f32 %v2688, %v8440
        %v9857 = vadd.f32 %v2689, %v8449
        %v9858 = vadd.f32 %v2690, %v8458
        %v9859 = vadd.f32 %v2691, %v8467
        %v9860 = vadd.f32 %v2692, %v8476
        %v9861 = vadd.f32 %v2693, %v8485
        %v9862 = vadd.f32 %v2694, %v8494
        %v9863 = vadd.f32 %v2695, %v8503
        %v9864 = vadd.f32 %v2696, %v8512
        %v9865 = vadd.f32 %v2697, %v8521
        %v9866 = vadd.f32 %v2698, %v8530
        %v9867 = vadd.f32 %v2699, %v8539
        %v9868 = vadd.f32 %v2700, %v8548
        %v9869 = vadd.f32 %v2701, %v8557
        %v9870 = vadd.f32 %v2702, %v8566
        %v9871 = vadd.f32 %v2703, %v8575
        %v9872 = vadd.f32 %v2704, %v8584
        %v9873 = vadd.f32 %v2705, %v8593
        %v9874 = vadd.f32 %v2706, %v8602
        %v9875 = vadd.f32 %v2707, %v8611
        %v9876 = vadd.f32 %v2708, %v8620
        %v9877 = vadd.f32 %v2709, %v8629
        %v9878 = vadd.f32 %v2710, %v8638
        %v9879 = vadd.f32 %v2711, %v8647
        %v9880 = vadd.f32 %v2712, %v8656
        %v9881 = vadd.f32 %v2713, %v8665
        %v9882 = vadd.f32 %v2714, %v8674
        %v9883 = vadd.f32 %v2715, %v8683
        %v9884 = vadd.f32 %v2716, %v8692
        %v9885 = vadd.f32 %v2717, %v8701
        %v9886 = vadd.f32 %v2718, %v8710
        %v9887 = vadd.f32 %v2719, %v8719
        %v9888 = vadd.f32 %v2720, %v8728
        %v9889 = vadd.f32 %v2721, %v8737
        %v9890 = vadd.f32 %v2722, %v8746
        %v9891 = vadd.f32 %v2723, %v8755
        %v9892 = vadd.f32 %v2724, %v8764
        %v9893 = vadd.f32 %v2725, %v8773
        %v9894 = vadd.f32 %v2726, %v8782
        %v9895 = vadd.f32 %v2727, %v8791
        %v9896 = vadd.f32 %v2728, %v8800
        %v9897 = vadd.f32 %v2729, %v8809
        %v9898 = vadd.f32 %v2730, %v8818
        %v9899 = vadd.f32 %v2731, %v8827
        %v9900 = vadd.f32 %v2732, %v8836
        %v9901 = vadd.f32 %v2733, %v8845
        %v9902 = vadd.f32 %v2734, %v8854
        %v9903 = vadd.f32 %v2735, %v8863
        %v9904 = vadd.f32 %v2736, %v8872
        %v9905 = vadd.f32 %v2737, %v8881
        %v9906 = vadd.f32 %v2738, %v8890
        %v9907 = vadd.f32 %v2739, %v8899
        %v9908 = vadd.f32 %v2740, %v8908
        %v9909 = vadd.f32 %v2741, %v8917
        %v9910 = vadd.f32 %v2742, %v8926
        %v9911 = vadd.f32 %v2743, %v8935
        %v9912 = vadd.f32 %v2744, %v8944
        %v9913 = vadd.f32 %v2745, %v8953
        %v9914 = vadd.f32 %v2746, %v8962
        %v9915 = vadd.f32 %v2747, %v8971
        %v9916 = vadd.f32 %v2748, %v8980
        %v9917 = vadd.f32 %v2749, %v8989
        %v9918 = vadd.f32 %v2750, %v8998
        %v9919 = vadd.f32 %v2751, %v9007
        %v9920 = vadd.f32 %v2752, %v9016
        %v9921 = vadd.f32 %v2753, %v9025
        %v9922 = vadd.f32 %v2754, %v9034
        %v9923 = vadd.f32 %v2755, %v9043
        %v9924 = vadd.f32 %v2756, %v9052
        %v9925 = vadd.f32 %v2757, %v9061
        %v9926 = vadd.f32 %v2758, %v9070
        %v9927 = vadd.f32 %v2759, %v9079
        %v9928 = vadd.f32 %v2760, %v9088
        %v9929 = vadd.f32 %v2761, %v9097
        %v9930 = vadd.f32 %v2762, %v9106
        %v9931 = vadd.f32 %v2763, %v9115
        %v9932 = vadd.f32 %v2764, %v9124
        %v9933 = vadd.f32 %v2765, %v9133
        %v9934 = vadd.f32 %v2766, %v9142
        %v9935 = vadd.f32 %v2767, %v9151
        %v9936 = vadd.f32 %v2768, %v9160
        %v9937 = vadd.f32 %v2769, %v9169
        %v9938 = vadd.f32 %v2770, %v9178
        %v9939 = vadd.f32 %v2771, %v9187
        %v9940 = vadd.f32 %v2772, %v9196
        %v9941 = vadd.f32 %v2773, %v9205
        %v9942 = vadd.f32 %v2774, %v9214
        %v9943 = vadd.f32 %v2775, %v9223
        %v9944 = vadd.f32 %v2776, %v9232
        %v9945 = vadd.f32 %v2777, %v9241
        %v9946 = vadd.f32 %v2778, %v9250
        %v9947 = vadd.f32 %v2779, %v9259
        %v9948 = vadd.f32 %v2780, %v9268
        %v9949 = vadd.f32 %v2781, %v9277
        %v9950 = vadd.f32 %v2782, %v9286
        %v9951 = vadd.f32 %v2783, %v9295
        %v9952 = vadd.f32 %v2784, %v9304
        %v9953 = vadd.f32 %v2785, %v9313
        %v9954 = vadd.f32 %v2786, %v9322
        %v9955 = vadd.f32 %v2787, %v9331
        %v9956 = vadd.f32 %v2788, %v9340
        %v9957 = vadd.f32 %v2789, %v9349
        %v9958 = vadd.f32 %v2790, %v9358
        %v9959 = vadd.f32 %v2791, %v9367
        %v9960 = vadd.f32 %v2792, %v9376
        %v9961 = vadd.f32 %v2793, %v9385
        %v9962 = vadd.f32 %v2794, %v9394
        %v9963 = vadd.f32 %v2795, %v9403
        %v9964 = vadd.f32 %v2796, %v9412
        %v9965 = vadd.f32 %v2797, %v9421
        %v9966 = vadd.f32 %v2798, %v9430
        %v9967 = vadd.f32 %v2799, %v9439
        %v9968 = vadd.f32 %v2800, %v9448
        %v9969 = vadd.f32 %v2801, %v9457
        %9970 = vst [vmem:[%s223] sm:$0xff] %v9458
        %9971 = vst [vmem:[%s223 + $0x8] sm:$0xff] %v9459
        %9972 = vst [vmem:[%s223 + $0x10] sm:$0xff] %v9460
        %9973 = vst [vmem:[%s223 + $0x18] sm:$0xff] %v9461
        %9974 = vst [vmem:[%s223 + $0x20] sm:$0xff] %v9462
        %9975 = vst [vmem:[%s223 + $0x28] sm:$0xff] %v9463
        %9976 = vst [vmem:[%s223 + $0x30] sm:$0xff] %v9464
        %9977 = vst [vmem:[%s223 + $0x38] sm:$0xff] %v9465
        %9978 = vst [vmem:[%s223 + $0x40] sm:$0xff] %v9466
        %9979 = vst [vmem:[%s223 + $0x48] sm:$0xff] %v9467
        %9980 = vst [vmem:[%s223 + $0x50] sm:$0xff] %v9468
        %9981 = vst [vmem:[%s223 + $0x58] sm:$0xff] %v9469
        %9982 = vst [vmem:[%s223 + $0x60] sm:$0xff] %v9470
        %9983 = vst [vmem:[%s223 + $0x68] sm:$0xff] %v9471
        %9984 = vst [vmem:[%s223 + $0x70] sm:$0xff] %v9472
        %9985 = vst [vmem:[%s223 + $0x78] sm:$0xff] %v9473
        %9986 = vst [vmem:[%s223 + $0x80] sm:$0xff] %v9474
        %9987 = vst [vmem:[%s223 + $0x88] sm:$0xff] %v9475
        %9988 = vst [vmem:[%s223 + $0x90] sm:$0xff] %v9476
        %9989 = vst [vmem:[%s223 + $0x98] sm:$0xff] %v9477
        %9990 = vst [vmem:[%s223 + $0xa0] sm:$0xff] %v9478
        %9991 = vst [vmem:[%s223 + $0xa8] sm:$0xff] %v9479
        %9992 = vst [vmem:[%s223 + $0xb0] sm:$0xff] %v9480
        %9993 = vst [vmem:[%s223 + $0xb8] sm:$0xff] %v9481
        %9994 = vst [vmem:[%s223 + $0xc0] sm:$0xff] %v9482
        %9995 = vst [vmem:[%s223 + $0xc8] sm:$0xff] %v9483
        %9996 = vst [vmem:[%s223 + $0xd0] sm:$0xff] %v9484
        %9997 = vst [vmem:[%s223 + $0xd8] sm:$0xff] %v9485
        %9998 = vst [vmem:[%s223 + $0xe0] sm:$0xff] %v9486
        %9999 = vst [vmem:[%s223 + $0xe8] sm:$0xff] %v9487
        %10000 = vst [vmem:[%s223 + $0xf0] sm:$0xff] %v9488
        %10001 = vst [vmem:[%s223 + $0xf8] sm:$0xff] %v9489
        %10002 = vst [vmem:[%s223 + $0x100] sm:$0xff] %v9490
        %10003 = vst [vmem:[%s223 + $0x108] sm:$0xff] %v9491
        %10004 = vst [vmem:[%s223 + $0x110] sm:$0xff] %v9492
        %10005 = vst [vmem:[%s223 + $0x118] sm:$0xff] %v9493
        %10006 = vst [vmem:[%s223 + $0x120] sm:$0xff] %v9494
        %10007 = vst [vmem:[%s223 + $0x128] sm:$0xff] %v9495
        %10008 = vst [vmem:[%s223 + $0x130] sm:$0xff] %v9496
        %10009 = vst [vmem:[%s223 + $0x138] sm:$0xff] %v9497
        %10010 = vst [vmem:[%s223 + $0x140] sm:$0xff] %v9498
        %10011 = vst [vmem:[%s223 + $0x148] sm:$0xff] %v9499
        %10012 = vst [vmem:[%s223 + $0x150] sm:$0xff] %v9500
        %10013 = vst [vmem:[%s223 + $0x158] sm:$0xff] %v9501
        %10014 = vst [vmem:[%s223 + $0x160] sm:$0xff] %v9502
        %10015 = vst [vmem:[%s223 + $0x168] sm:$0xff] %v9503
        %10016 = vst [vmem:[%s223 + $0x170] sm:$0xff] %v9504
        %10017 = vst [vmem:[%s223 + $0x178] sm:$0xff] %v9505
        %10018 = vst [vmem:[%s223 + $0x180] sm:$0xff] %v9506
        %10019 = vst [vmem:[%s223 + $0x188] sm:$0xff] %v9507
        %10020 = vst [vmem:[%s223 + $0x190] sm:$0xff] %v9508
        %10021 = vst [vmem:[%s223 + $0x198] sm:$0xff] %v9509
        %10022 = vst [vmem:[%s223 + $0x1a0] sm:$0xff] %v9510
        %10023 = vst [vmem:[%s223 + $0x1a8] sm:$0xff] %v9511
        %10024 = vst [vmem:[%s223 + $0x1b0] sm:$0xff] %v9512
        %10025 = vst [vmem:[%s223 + $0x1b8] sm:$0xff] %v9513
        %10026 = vst [vmem:[%s223 + $0x1c0] sm:$0xff] %v9514
        %10027 = vst [vmem:[%s223 + $0x1c8] sm:$0xff] %v9515
        %10028 = vst [vmem:[%s223 + $0x1d0] sm:$0xff] %v9516
        %10029 = vst [vmem:[%s223 + $0x1d8] sm:$0xff] %v9517
        %10030 = vst [vmem:[%s223 + $0x1e0] sm:$0xff] %v9518
        %10031 = vst [vmem:[%s223 + $0x1e8] sm:$0xff] %v9519
        %10032 = vst [vmem:[%s223 + $0x1f0] sm:$0xff] %v9520
        %10033 = vst [vmem:[%s223 + $0x1f8] sm:$0xff] %v9521
        %10034 = vst [vmem:[%s223 + $0x200] sm:$0xff] %v9522
        %10035 = vst [vmem:[%s223 + $0x208] sm:$0xff] %v9523
        %10036 = vst [vmem:[%s223 + $0x210] sm:$0xff] %v9524
        %10037 = vst [vmem:[%s223 + $0x218] sm:$0xff] %v9525
        %10038 = vst [vmem:[%s223 + $0x220] sm:$0xff] %v9526
        %10039 = vst [vmem:[%s223 + $0x228] sm:$0xff] %v9527
        %10040 = vst [vmem:[%s223 + $0x230] sm:$0xff] %v9528
        %10041 = vst [vmem:[%s223 + $0x238] sm:$0xff] %v9529
        %10042 = vst [vmem:[%s223 + $0x240] sm:$0xff] %v9530
        %10043 = vst [vmem:[%s223 + $0x248] sm:$0xff] %v9531
        %10044 = vst [vmem:[%s223 + $0x250] sm:$0xff] %v9532
        %10045 = vst [vmem:[%s223 + $0x258] sm:$0xff] %v9533
        %10046 = vst [vmem:[%s223 + $0x260] sm:$0xff] %v9534
        %10047 = vst [vmem:[%s223 + $0x268] sm:$0xff] %v9535
        %10048 = vst [vmem:[%s223 + $0x270] sm:$0xff] %v9536
        %10049 = vst [vmem:[%s223 + $0x278] sm:$0xff] %v9537
        %10050 = vst [vmem:[%s223 + $0x280] sm:$0xff] %v9538
        %10051 = vst [vmem:[%s223 + $0x288] sm:$0xff] %v9539
        %10052 = vst [vmem:[%s223 + $0x290] sm:$0xff] %v9540
        %10053 = vst [vmem:[%s223 + $0x298] sm:$0xff] %v9541
        %10054 = vst [vmem:[%s223 + $0x2a0] sm:$0xff] %v9542
        %10055 = vst [vmem:[%s223 + $0x2a8] sm:$0xff] %v9543
        %10056 = vst [vmem:[%s223 + $0x2b0] sm:$0xff] %v9544
        %10057 = vst [vmem:[%s223 + $0x2b8] sm:$0xff] %v9545
        %10058 = vst [vmem:[%s223 + $0x2c0] sm:$0xff] %v9546
        %10059 = vst [vmem:[%s223 + $0x2c8] sm:$0xff] %v9547
        %10060 = vst [vmem:[%s223 + $0x2d0] sm:$0xff] %v9548
        %10061 = vst [vmem:[%s223 + $0x2d8] sm:$0xff] %v9549
        %10062 = vst [vmem:[%s223 + $0x2e0] sm:$0xff] %v9550
        %10063 = vst [vmem:[%s223 + $0x2e8] sm:$0xff] %v9551
        %10064 = vst [vmem:[%s223 + $0x2f0] sm:$0xff] %v9552
        %10065 = vst [vmem:[%s223 + $0x2f8] sm:$0xff] %v9553
        %10066 = vst [vmem:[%s223 + $0x300] sm:$0xff] %v9554
        %10067 = vst [vmem:[%s223 + $0x308] sm:$0xff] %v9555
        %10068 = vst [vmem:[%s223 + $0x310] sm:$0xff] %v9556
        %10069 = vst [vmem:[%s223 + $0x318] sm:$0xff] %v9557
        %10070 = vst [vmem:[%s223 + $0x320] sm:$0xff] %v9558
        %10071 = vst [vmem:[%s223 + $0x328] sm:$0xff] %v9559
        %10072 = vst [vmem:[%s223 + $0x330] sm:$0xff] %v9560
        %10073 = vst [vmem:[%s223 + $0x338] sm:$0xff] %v9561
        %10074 = vst [vmem:[%s223 + $0x340] sm:$0xff] %v9562
        %10075 = vst [vmem:[%s223 + $0x348] sm:$0xff] %v9563
        %10076 = vst [vmem:[%s223 + $0x350] sm:$0xff] %v9564
        %10077 = vst [vmem:[%s223 + $0x358] sm:$0xff] %v9565
        %10078 = vst [vmem:[%s223 + $0x360] sm:$0xff] %v9566
        %10079 = vst [vmem:[%s223 + $0x368] sm:$0xff] %v9567
        %10080 = vst [vmem:[%s223 + $0x370] sm:$0xff] %v9568
        %10081 = vst [vmem:[%s223 + $0x378] sm:$0xff] %v9569
        %10082 = vst [vmem:[%s223 + $0x380] sm:$0xff] %v9570
        %10083 = vst [vmem:[%s223 + $0x388] sm:$0xff] %v9571
        %10084 = vst [vmem:[%s223 + $0x390] sm:$0xff] %v9572
        %10085 = vst [vmem:[%s223 + $0x398] sm:$0xff] %v9573
        %10086 = vst [vmem:[%s223 + $0x3a0] sm:$0xff] %v9574
        %10087 = vst [vmem:[%s223 + $0x3a8] sm:$0xff] %v9575
        %10088 = vst [vmem:[%s223 + $0x3b0] sm:$0xff] %v9576
        %10089 = vst [vmem:[%s223 + $0x3b8] sm:$0xff] %v9577
        %10090 = vst [vmem:[%s223 + $0x3c0] sm:$0xff] %v9578
        %10091 = vst [vmem:[%s223 + $0x3c8] sm:$0xff] %v9579
        %10092 = vst [vmem:[%s223 + $0x3d0] sm:$0xff] %v9580
        %10093 = vst [vmem:[%s223 + $0x3d8] sm:$0xff] %v9581
        %10094 = vst [vmem:[%s223 + $0x3e0] sm:$0xff] %v9582
        %10095 = vst [vmem:[%s223 + $0x3e8] sm:$0xff] %v9583
        %10096 = vst [vmem:[%s223 + $0x3f0] sm:$0xff] %v9584
        %10097 = vst [vmem:[%s223 + $0x3f8] sm:$0xff] %v9585
        %10098 = vst [vmem:[%s223 + $0x400] sm:$0xff] %v9586
        %10099 = vst [vmem:[%s223 + $0x408] sm:$0xff] %v9587
        %10100 = vst [vmem:[%s223 + $0x410] sm:$0xff] %v9588
        %10101 = vst [vmem:[%s223 + $0x418] sm:$0xff] %v9589
        %10102 = vst [vmem:[%s223 + $0x420] sm:$0xff] %v9590
        %10103 = vst [vmem:[%s223 + $0x428] sm:$0xff] %v9591
        %10104 = vst [vmem:[%s223 + $0x430] sm:$0xff] %v9592
        %10105 = vst [vmem:[%s223 + $0x438] sm:$0xff] %v9593
        %10106 = vst [vmem:[%s223 + $0x440] sm:$0xff] %v9594
        %10107 = vst [vmem:[%s223 + $0x448] sm:$0xff] %v9595
        %10108 = vst [vmem:[%s223 + $0x450] sm:$0xff] %v9596
        %10109 = vst [vmem:[%s223 + $0x458] sm:$0xff] %v9597
        %10110 = vst [vmem:[%s223 + $0x460] sm:$0xff] %v9598
        %10111 = vst [vmem:[%s223 + $0x468] sm:$0xff] %v9599
        %10112 = vst [vmem:[%s223 + $0x470] sm:$0xff] %v9600
        %10113 = vst [vmem:[%s223 + $0x478] sm:$0xff] %v9601
        %10114 = vst [vmem:[%s223 + $0x480] sm:$0xff] %v9602
        %10115 = vst [vmem:[%s223 + $0x488] sm:$0xff] %v9603
        %10116 = vst [vmem:[%s223 + $0x490] sm:$0xff] %v9604
        %10117 = vst [vmem:[%s223 + $0x498] sm:$0xff] %v9605
        %10118 = vst [vmem:[%s223 + $0x4a0] sm:$0xff] %v9606
        %10119 = vst [vmem:[%s223 + $0x4a8] sm:$0xff] %v9607
        %10120 = vst [vmem:[%s223 + $0x4b0] sm:$0xff] %v9608
        %10121 = vst [vmem:[%s223 + $0x4b8] sm:$0xff] %v9609
        %10122 = vst [vmem:[%s223 + $0x4c0] sm:$0xff] %v9610
        %10123 = vst [vmem:[%s223 + $0x4c8] sm:$0xff] %v9611
        %10124 = vst [vmem:[%s223 + $0x4d0] sm:$0xff] %v9612
        %10125 = vst [vmem:[%s223 + $0x4d8] sm:$0xff] %v9613
        %10126 = vst [vmem:[%s223 + $0x4e0] sm:$0xff] %v9614
        %10127 = vst [vmem:[%s223 + $0x4e8] sm:$0xff] %v9615
        %10128 = vst [vmem:[%s223 + $0x4f0] sm:$0xff] %v9616
        %10129 = vst [vmem:[%s223 + $0x4f8] sm:$0xff] %v9617
        %10130 = vst [vmem:[%s223 + $0x500] sm:$0xff] %v9618
        %10131 = vst [vmem:[%s223 + $0x508] sm:$0xff] %v9619
        %10132 = vst [vmem:[%s223 + $0x510] sm:$0xff] %v9620
        %10133 = vst [vmem:[%s223 + $0x518] sm:$0xff] %v9621
        %10134 = vst [vmem:[%s223 + $0x520] sm:$0xff] %v9622
        %10135 = vst [vmem:[%s223 + $0x528] sm:$0xff] %v9623
        %10136 = vst [vmem:[%s223 + $0x530] sm:$0xff] %v9624
        %10137 = vst [vmem:[%s223 + $0x538] sm:$0xff] %v9625
        %10138 = vst [vmem:[%s223 + $0x540] sm:$0xff] %v9626
        %10139 = vst [vmem:[%s223 + $0x548] sm:$0xff] %v9627
        %10140 = vst [vmem:[%s223 + $0x550] sm:$0xff] %v9628
        %10141 = vst [vmem:[%s223 + $0x558] sm:$0xff] %v9629
        %10142 = vst [vmem:[%s223 + $0x560] sm:$0xff] %v9630
        %10143 = vst [vmem:[%s223 + $0x568] sm:$0xff] %v9631
        %10144 = vst [vmem:[%s223 + $0x570] sm:$0xff] %v9632
        %10145 = vst [vmem:[%s223 + $0x578] sm:$0xff] %v9633
        %10146 = vst [vmem:[%s223 + $0x580] sm:$0xff] %v9634
        %10147 = vst [vmem:[%s223 + $0x588] sm:$0xff] %v9635
        %10148 = vst [vmem:[%s223 + $0x590] sm:$0xff] %v9636
        %10149 = vst [vmem:[%s223 + $0x598] sm:$0xff] %v9637
        %10150 = vst [vmem:[%s223 + $0x5a0] sm:$0xff] %v9638
        %10151 = vst [vmem:[%s223 + $0x5a8] sm:$0xff] %v9639
        %10152 = vst [vmem:[%s223 + $0x5b0] sm:$0xff] %v9640
        %10153 = vst [vmem:[%s223 + $0x5b8] sm:$0xff] %v9641
        %10154 = vst [vmem:[%s223 + $0x5c0] sm:$0xff] %v9642
        %10155 = vst [vmem:[%s223 + $0x5c8] sm:$0xff] %v9643
        %10156 = vst [vmem:[%s223 + $0x5d0] sm:$0xff] %v9644
        %10157 = vst [vmem:[%s223 + $0x5d8] sm:$0xff] %v9645
        %10158 = vst [vmem:[%s223 + $0x5e0] sm:$0xff] %v9646
        %10159 = vst [vmem:[%s223 + $0x5e8] sm:$0xff] %v9647
        %10160 = vst [vmem:[%s223 + $0x5f0] sm:$0xff] %v9648
        %10161 = vst [vmem:[%s223 + $0x5f8] sm:$0xff] %v9649
        %10162 = vst [vmem:[%s223 + $0x600] sm:$0xff] %v9650
        %10163 = vst [vmem:[%s223 + $0x608] sm:$0xff] %v9651
        %10164 = vst [vmem:[%s223 + $0x610] sm:$0xff] %v9652
        %10165 = vst [vmem:[%s223 + $0x618] sm:$0xff] %v9653
        %10166 = vst [vmem:[%s223 + $0x620] sm:$0xff] %v9654
        %10167 = vst [vmem:[%s223 + $0x628] sm:$0xff] %v9655
        %10168 = vst [vmem:[%s223 + $0x630] sm:$0xff] %v9656
        %10169 = vst [vmem:[%s223 + $0x638] sm:$0xff] %v9657
        %10170 = vst [vmem:[%s223 + $0x640] sm:$0xff] %v9658
        %10171 = vst [vmem:[%s223 + $0x648] sm:$0xff] %v9659
        %10172 = vst [vmem:[%s223 + $0x650] sm:$0xff] %v9660
        %10173 = vst [vmem:[%s223 + $0x658] sm:$0xff] %v9661
        %10174 = vst [vmem:[%s223 + $0x660] sm:$0xff] %v9662
        %10175 = vst [vmem:[%s223 + $0x668] sm:$0xff] %v9663
        %10176 = vst [vmem:[%s223 + $0x670] sm:$0xff] %v9664
        %10177 = vst [vmem:[%s223 + $0x678] sm:$0xff] %v9665
        %10178 = vst [vmem:[%s223 + $0x680] sm:$0xff] %v9666
        %10179 = vst [vmem:[%s223 + $0x688] sm:$0xff] %v9667
        %10180 = vst [vmem:[%s223 + $0x690] sm:$0xff] %v9668
        %10181 = vst [vmem:[%s223 + $0x698] sm:$0xff] %v9669
        %10182 = vst [vmem:[%s223 + $0x6a0] sm:$0xff] %v9670
        %10183 = vst [vmem:[%s223 + $0x6a8] sm:$0xff] %v9671
        %10184 = vst [vmem:[%s223 + $0x6b0] sm:$0xff] %v9672
        %10185 = vst [vmem:[%s223 + $0x6b8] sm:$0xff] %v9673
        %10186 = vst [vmem:[%s223 + $0x6c0] sm:$0xff] %v9674
        %10187 = vst [vmem:[%s223 + $0x6c8] sm:$0xff] %v9675
        %10188 = vst [vmem:[%s223 + $0x6d0] sm:$0xff] %v9676
        %10189 = vst [vmem:[%s223 + $0x6d8] sm:$0xff] %v9677
        %10190 = vst [vmem:[%s223 + $0x6e0] sm:$0xff] %v9678
        %10191 = vst [vmem:[%s223 + $0x6e8] sm:$0xff] %v9679
        %10192 = vst [vmem:[%s223 + $0x6f0] sm:$0xff] %v9680
        %10193 = vst [vmem:[%s223 + $0x6f8] sm:$0xff] %v9681
        %10194 = vst [vmem:[%s223 + $0x700] sm:$0xff] %v9682
        %10195 = vst [vmem:[%s223 + $0x708] sm:$0xff] %v9683
        %10196 = vst [vmem:[%s223 + $0x710] sm:$0xff] %v9684
        %10197 = vst [vmem:[%s223 + $0x718] sm:$0xff] %v9685
        %10198 = vst [vmem:[%s223 + $0x720] sm:$0xff] %v9686
        %10199 = vst [vmem:[%s223 + $0x728] sm:$0xff] %v9687
        %10200 = vst [vmem:[%s223 + $0x730] sm:$0xff] %v9688
        %10201 = vst [vmem:[%s223 + $0x738] sm:$0xff] %v9689
        %10202 = vst [vmem:[%s223 + $0x740] sm:$0xff] %v9690
        %10203 = vst [vmem:[%s223 + $0x748] sm:$0xff] %v9691
        %10204 = vst [vmem:[%s223 + $0x750] sm:$0xff] %v9692
        %10205 = vst [vmem:[%s223 + $0x758] sm:$0xff] %v9693
        %10206 = vst [vmem:[%s223 + $0x760] sm:$0xff] %v9694
        %10207 = vst [vmem:[%s223 + $0x768] sm:$0xff] %v9695
        %10208 = vst [vmem:[%s223 + $0x770] sm:$0xff] %v9696
        %10209 = vst [vmem:[%s223 + $0x778] sm:$0xff] %v9697
        %10210 = vst [vmem:[%s223 + $0x780] sm:$0xff] %v9698
        %10211 = vst [vmem:[%s223 + $0x788] sm:$0xff] %v9699
        %10212 = vst [vmem:[%s223 + $0x790] sm:$0xff] %v9700
        %10213 = vst [vmem:[%s223 + $0x798] sm:$0xff] %v9701
        %10214 = vst [vmem:[%s223 + $0x7a0] sm:$0xff] %v9702
        %10215 = vst [vmem:[%s223 + $0x7a8] sm:$0xff] %v9703
        %10216 = vst [vmem:[%s223 + $0x7b0] sm:$0xff] %v9704
        %10217 = vst [vmem:[%s223 + $0x7b8] sm:$0xff] %v9705
        %10218 = vst [vmem:[%s223 + $0x7c0] sm:$0xff] %v9706
        %10219 = vst [vmem:[%s223 + $0x7c8] sm:$0xff] %v9707
        %10220 = vst [vmem:[%s223 + $0x7d0] sm:$0xff] %v9708
        %10221 = vst [vmem:[%s223 + $0x7d8] sm:$0xff] %v9709
        %10222 = vst [vmem:[%s223 + $0x7e0] sm:$0xff] %v9710
        %10223 = vst [vmem:[%s223 + $0x7e8] sm:$0xff] %v9711
        %10224 = vst [vmem:[%s223 + $0x7f0] sm:$0xff] %v9712
        %10225 = vst [vmem:[%s223 + $0x7f8] sm:$0xff] %v9713
        %10226 = vst [vmem:[%s223 + $0x800] sm:$0xff] %v9714
        %10227 = vst [vmem:[%s223 + $0x808] sm:$0xff] %v9715
        %10228 = vst [vmem:[%s223 + $0x810] sm:$0xff] %v9716
        %10229 = vst [vmem:[%s223 + $0x818] sm:$0xff] %v9717
        %10230 = vst [vmem:[%s223 + $0x820] sm:$0xff] %v9718
        %10231 = vst [vmem:[%s223 + $0x828] sm:$0xff] %v9719
        %10232 = vst [vmem:[%s223 + $0x830] sm:$0xff] %v9720
        %10233 = vst [vmem:[%s223 + $0x838] sm:$0xff] %v9721
        %10234 = vst [vmem:[%s223 + $0x840] sm:$0xff] %v9722
        %10235 = vst [vmem:[%s223 + $0x848] sm:$0xff] %v9723
        %10236 = vst [vmem:[%s223 + $0x850] sm:$0xff] %v9724
        %10237 = vst [vmem:[%s223 + $0x858] sm:$0xff] %v9725
        %10238 = vst [vmem:[%s223 + $0x860] sm:$0xff] %v9726
        %10239 = vst [vmem:[%s223 + $0x868] sm:$0xff] %v9727
        %10240 = vst [vmem:[%s223 + $0x870] sm:$0xff] %v9728
        %10241 = vst [vmem:[%s223 + $0x878] sm:$0xff] %v9729
        %10242 = vst [vmem:[%s223 + $0x880] sm:$0xff] %v9730
        %10243 = vst [vmem:[%s223 + $0x888] sm:$0xff] %v9731
        %10244 = vst [vmem:[%s223 + $0x890] sm:$0xff] %v9732
        %10245 = vst [vmem:[%s223 + $0x898] sm:$0xff] %v9733
        %10246 = vst [vmem:[%s223 + $0x8a0] sm:$0xff] %v9734
        %10247 = vst [vmem:[%s223 + $0x8a8] sm:$0xff] %v9735
        %10248 = vst [vmem:[%s223 + $0x8b0] sm:$0xff] %v9736
        %10249 = vst [vmem:[%s223 + $0x8b8] sm:$0xff] %v9737
        %10250 = vst [vmem:[%s223 + $0x8c0] sm:$0xff] %v9738
        %10251 = vst [vmem:[%s223 + $0x8c8] sm:$0xff] %v9739
        %10252 = vst [vmem:[%s223 + $0x8d0] sm:$0xff] %v9740
        %10253 = vst [vmem:[%s223 + $0x8d8] sm:$0xff] %v9741
        %10254 = vst [vmem:[%s223 + $0x8e0] sm:$0xff] %v9742
        %10255 = vst [vmem:[%s223 + $0x8e8] sm:$0xff] %v9743
        %10256 = vst [vmem:[%s223 + $0x8f0] sm:$0xff] %v9744
        %10257 = vst [vmem:[%s223 + $0x8f8] sm:$0xff] %v9745
        %10258 = vst [vmem:[%s223 + $0x900] sm:$0xff] %v9746
        %10259 = vst [vmem:[%s223 + $0x908] sm:$0xff] %v9747
        %10260 = vst [vmem:[%s223 + $0x910] sm:$0xff] %v9748
        %10261 = vst [vmem:[%s223 + $0x918] sm:$0xff] %v9749
        %10262 = vst [vmem:[%s223 + $0x920] sm:$0xff] %v9750
        %10263 = vst [vmem:[%s223 + $0x928] sm:$0xff] %v9751
        %10264 = vst [vmem:[%s223 + $0x930] sm:$0xff] %v9752
        %10265 = vst [vmem:[%s223 + $0x938] sm:$0xff] %v9753
        %10266 = vst [vmem:[%s223 + $0x940] sm:$0xff] %v9754
        %10267 = vst [vmem:[%s223 + $0x948] sm:$0xff] %v9755
        %10268 = vst [vmem:[%s223 + $0x950] sm:$0xff] %v9756
        %10269 = vst [vmem:[%s223 + $0x958] sm:$0xff] %v9757
        %10270 = vst [vmem:[%s223 + $0x960] sm:$0xff] %v9758
        %10271 = vst [vmem:[%s223 + $0x968] sm:$0xff] %v9759
        %10272 = vst [vmem:[%s223 + $0x970] sm:$0xff] %v9760
        %10273 = vst [vmem:[%s223 + $0x978] sm:$0xff] %v9761
        %10274 = vst [vmem:[%s223 + $0x980] sm:$0xff] %v9762
        %10275 = vst [vmem:[%s223 + $0x988] sm:$0xff] %v9763
        %10276 = vst [vmem:[%s223 + $0x990] sm:$0xff] %v9764
        %10277 = vst [vmem:[%s223 + $0x998] sm:$0xff] %v9765
        %10278 = vst [vmem:[%s223 + $0x9a0] sm:$0xff] %v9766
        %10279 = vst [vmem:[%s223 + $0x9a8] sm:$0xff] %v9767
        %10280 = vst [vmem:[%s223 + $0x9b0] sm:$0xff] %v9768
        %10281 = vst [vmem:[%s223 + $0x9b8] sm:$0xff] %v9769
        %10282 = vst [vmem:[%s223 + $0x9c0] sm:$0xff] %v9770
        %10283 = vst [vmem:[%s223 + $0x9c8] sm:$0xff] %v9771
        %10284 = vst [vmem:[%s223 + $0x9d0] sm:$0xff] %v9772
        %10285 = vst [vmem:[%s223 + $0x9d8] sm:$0xff] %v9773
        %10286 = vst [vmem:[%s223 + $0x9e0] sm:$0xff] %v9774
        %10287 = vst [vmem:[%s223 + $0x9e8] sm:$0xff] %v9775
        %10288 = vst [vmem:[%s223 + $0x9f0] sm:$0xff] %v9776
        %10289 = vst [vmem:[%s223 + $0x9f8] sm:$0xff] %v9777
        %10290 = vst [vmem:[%s223 + $0xa00] sm:$0xff] %v9778
        %10291 = vst [vmem:[%s223 + $0xa08] sm:$0xff] %v9779
        %10292 = vst [vmem:[%s223 + $0xa10] sm:$0xff] %v9780
        %10293 = vst [vmem:[%s223 + $0xa18] sm:$0xff] %v9781
        %10294 = vst [vmem:[%s223 + $0xa20] sm:$0xff] %v9782
        %10295 = vst [vmem:[%s223 + $0xa28] sm:$0xff] %v9783
        %10296 = vst [vmem:[%s223 + $0xa30] sm:$0xff] %v9784
        %10297 = vst [vmem:[%s223 + $0xa38] sm:$0xff] %v9785
        %10298 = vst [vmem:[%s223 + $0xa40] sm:$0xff] %v9786
        %10299 = vst [vmem:[%s223 + $0xa48] sm:$0xff] %v9787
        %10300 = vst [vmem:[%s223 + $0xa50] sm:$0xff] %v9788
        %10301 = vst [vmem:[%s223 + $0xa58] sm:$0xff] %v9789
        %10302 = vst [vmem:[%s223 + $0xa60] sm:$0xff] %v9790
        %10303 = vst [vmem:[%s223 + $0xa68] sm:$0xff] %v9791
        %10304 = vst [vmem:[%s223 + $0xa70] sm:$0xff] %v9792
        %10305 = vst [vmem:[%s223 + $0xa78] sm:$0xff] %v9793
        %10306 = vst [vmem:[%s223 + $0xa80] sm:$0xff] %v9794
        %10307 = vst [vmem:[%s223 + $0xa88] sm:$0xff] %v9795
        %10308 = vst [vmem:[%s223 + $0xa90] sm:$0xff] %v9796
        %10309 = vst [vmem:[%s223 + $0xa98] sm:$0xff] %v9797
        %10310 = vst [vmem:[%s223 + $0xaa0] sm:$0xff] %v9798
        %10311 = vst [vmem:[%s223 + $0xaa8] sm:$0xff] %v9799
        %10312 = vst [vmem:[%s223 + $0xab0] sm:$0xff] %v9800
        %10313 = vst [vmem:[%s223 + $0xab8] sm:$0xff] %v9801
        %10314 = vst [vmem:[%s223 + $0xac0] sm:$0xff] %v9802
        %10315 = vst [vmem:[%s223 + $0xac8] sm:$0xff] %v9803
        %10316 = vst [vmem:[%s223 + $0xad0] sm:$0xff] %v9804
        %10317 = vst [vmem:[%s223 + $0xad8] sm:$0xff] %v9805
        %10318 = vst [vmem:[%s223 + $0xae0] sm:$0xff] %v9806
        %10319 = vst [vmem:[%s223 + $0xae8] sm:$0xff] %v9807
        %10320 = vst [vmem:[%s223 + $0xaf0] sm:$0xff] %v9808
        %10321 = vst [vmem:[%s223 + $0xaf8] sm:$0xff] %v9809
        %10322 = vst [vmem:[%s223 + $0xb00] sm:$0xff] %v9810
        %10323 = vst [vmem:[%s223 + $0xb08] sm:$0xff] %v9811
        %10324 = vst [vmem:[%s223 + $0xb10] sm:$0xff] %v9812
        %10325 = vst [vmem:[%s223 + $0xb18] sm:$0xff] %v9813
        %10326 = vst [vmem:[%s223 + $0xb20] sm:$0xff] %v9814
        %10327 = vst [vmem:[%s223 + $0xb28] sm:$0xff] %v9815
        %10328 = vst [vmem:[%s223 + $0xb30] sm:$0xff] %v9816
        %10329 = vst [vmem:[%s223 + $0xb38] sm:$0xff] %v9817
        %10330 = vst [vmem:[%s223 + $0xb40] sm:$0xff] %v9818
        %10331 = vst [vmem:[%s223 + $0xb48] sm:$0xff] %v9819
        %10332 = vst [vmem:[%s223 + $0xb50] sm:$0xff] %v9820
        %10333 = vst [vmem:[%s223 + $0xb58] sm:$0xff] %v9821
        %10334 = vst [vmem:[%s223 + $0xb60] sm:$0xff] %v9822
        %10335 = vst [vmem:[%s223 + $0xb68] sm:$0xff] %v9823
        %10336 = vst [vmem:[%s223 + $0xb70] sm:$0xff] %v9824
        %10337 = vst [vmem:[%s223 + $0xb78] sm:$0xff] %v9825
        %10338 = vst [vmem:[%s223 + $0xb80] sm:$0xff] %v9826
        %10339 = vst [vmem:[%s223 + $0xb88] sm:$0xff] %v9827
        %10340 = vst [vmem:[%s223 + $0xb90] sm:$0xff] %v9828
        %10341 = vst [vmem:[%s223 + $0xb98] sm:$0xff] %v9829
        %10342 = vst [vmem:[%s223 + $0xba0] sm:$0xff] %v9830
        %10343 = vst [vmem:[%s223 + $0xba8] sm:$0xff] %v9831
        %10344 = vst [vmem:[%s223 + $0xbb0] sm:$0xff] %v9832
        %10345 = vst [vmem:[%s223 + $0xbb8] sm:$0xff] %v9833
        %10346 = vst [vmem:[%s223 + $0xbc0] sm:$0xff] %v9834
        %10347 = vst [vmem:[%s223 + $0xbc8] sm:$0xff] %v9835
        %10348 = vst [vmem:[%s223 + $0xbd0] sm:$0xff] %v9836
        %10349 = vst [vmem:[%s223 + $0xbd8] sm:$0xff] %v9837
        %10350 = vst [vmem:[%s223 + $0xbe0] sm:$0xff] %v9838
        %10351 = vst [vmem:[%s223 + $0xbe8] sm:$0xff] %v9839
        %10352 = vst [vmem:[%s223 + $0xbf0] sm:$0xff] %v9840
        %10353 = vst [vmem:[%s223 + $0xbf8] sm:$0xff] %v9841
        %10354 = vst [vmem:[%s223 + $0xc00] sm:$0xff] %v9842
        %10355 = vst [vmem:[%s223 + $0xc08] sm:$0xff] %v9843
        %10356 = vst [vmem:[%s223 + $0xc10] sm:$0xff] %v9844
        %10357 = vst [vmem:[%s223 + $0xc18] sm:$0xff] %v9845
        %10358 = vst [vmem:[%s223 + $0xc20] sm:$0xff] %v9846
        %10359 = vst [vmem:[%s223 + $0xc28] sm:$0xff] %v9847
        %10360 = vst [vmem:[%s223 + $0xc30] sm:$0xff] %v9848
        %10361 = vst [vmem:[%s223 + $0xc38] sm:$0xff] %v9849
        %10362 = vst [vmem:[%s223 + $0xc40] sm:$0xff] %v9850
        %10363 = vst [vmem:[%s223 + $0xc48] sm:$0xff] %v9851
        %10364 = vst [vmem:[%s223 + $0xc50] sm:$0xff] %v9852
        %10365 = vst [vmem:[%s223 + $0xc58] sm:$0xff] %v9853
        %10366 = vst [vmem:[%s223 + $0xc60] sm:$0xff] %v9854
        %10367 = vst [vmem:[%s223 + $0xc68] sm:$0xff] %v9855
        %10368 = vst [vmem:[%s223 + $0xc70] sm:$0xff] %v9856
        %10369 = vst [vmem:[%s223 + $0xc78] sm:$0xff] %v9857
        %10370 = vst [vmem:[%s223 + $0xc80] sm:$0xff] %v9858
        %10371 = vst [vmem:[%s223 + $0xc88] sm:$0xff] %v9859
        %10372 = vst [vmem:[%s223 + $0xc90] sm:$0xff] %v9860
        %10373 = vst [vmem:[%s223 + $0xc98] sm:$0xff] %v9861
        %10374 = vst [vmem:[%s223 + $0xca0] sm:$0xff] %v9862
        %10375 = vst [vmem:[%s223 + $0xca8] sm:$0xff] %v9863
        %10376 = vst [vmem:[%s223 + $0xcb0] sm:$0xff] %v9864
        %10377 = vst [vmem:[%s223 + $0xcb8] sm:$0xff] %v9865
        %10378 = vst [vmem:[%s223 + $0xcc0] sm:$0xff] %v9866
        %10379 = vst [vmem:[%s223 + $0xcc8] sm:$0xff] %v9867
        %10380 = vst [vmem:[%s223 + $0xcd0] sm:$0xff] %v9868
        %10381 = vst [vmem:[%s223 + $0xcd8] sm:$0xff] %v9869
        %10382 = vst [vmem:[%s223 + $0xce0] sm:$0xff] %v9870
        %10383 = vst [vmem:[%s223 + $0xce8] sm:$0xff] %v9871
        %10384 = vst [vmem:[%s223 + $0xcf0] sm:$0xff] %v9872
        %10385 = vst [vmem:[%s223 + $0xcf8] sm:$0xff] %v9873
        %10386 = vst [vmem:[%s223 + $0xd00] sm:$0xff] %v9874
        %10387 = vst [vmem:[%s223 + $0xd08] sm:$0xff] %v9875
        %10388 = vst [vmem:[%s223 + $0xd10] sm:$0xff] %v9876
        %10389 = vst [vmem:[%s223 + $0xd18] sm:$0xff] %v9877
        %10390 = vst [vmem:[%s223 + $0xd20] sm:$0xff] %v9878
        %10391 = vst [vmem:[%s223 + $0xd28] sm:$0xff] %v9879
        %10392 = vst [vmem:[%s223 + $0xd30] sm:$0xff] %v9880
        %10393 = vst [vmem:[%s223 + $0xd38] sm:$0xff] %v9881
        %10394 = vst [vmem:[%s223 + $0xd40] sm:$0xff] %v9882
        %10395 = vst [vmem:[%s223 + $0xd48] sm:$0xff] %v9883
        %10396 = vst [vmem:[%s223 + $0xd50] sm:$0xff] %v9884
        %10397 = vst [vmem:[%s223 + $0xd58] sm:$0xff] %v9885
        %10398 = vst [vmem:[%s223 + $0xd60] sm:$0xff] %v9886
        %10399 = vst [vmem:[%s223 + $0xd68] sm:$0xff] %v9887
        %10400 = vst [vmem:[%s223 + $0xd70] sm:$0xff] %v9888
        %10401 = vst [vmem:[%s223 + $0xd78] sm:$0xff] %v9889
        %10402 = vst [vmem:[%s223 + $0xd80] sm:$0xff] %v9890
        %10403 = vst [vmem:[%s223 + $0xd88] sm:$0xff] %v9891
        %10404 = vst [vmem:[%s223 + $0xd90] sm:$0xff] %v9892
        %10405 = vst [vmem:[%s223 + $0xd98] sm:$0xff] %v9893
        %10406 = vst [vmem:[%s223 + $0xda0] sm:$0xff] %v9894
        %10407 = vst [vmem:[%s223 + $0xda8] sm:$0xff] %v9895
        %10408 = vst [vmem:[%s223 + $0xdb0] sm:$0xff] %v9896
        %10409 = vst [vmem:[%s223 + $0xdb8] sm:$0xff] %v9897
        %10410 = vst [vmem:[%s223 + $0xdc0] sm:$0xff] %v9898
        %10411 = vst [vmem:[%s223 + $0xdc8] sm:$0xff] %v9899
        %10412 = vst [vmem:[%s223 + $0xdd0] sm:$0xff] %v9900
        %10413 = vst [vmem:[%s223 + $0xdd8] sm:$0xff] %v9901
        %10414 = vst [vmem:[%s223 + $0xde0] sm:$0xff] %v9902
        %10415 = vst [vmem:[%s223 + $0xde8] sm:$0xff] %v9903
        %10416 = vst [vmem:[%s223 + $0xdf0] sm:$0xff] %v9904
        %10417 = vst [vmem:[%s223 + $0xdf8] sm:$0xff] %v9905
        %10418 = vst [vmem:[%s223 + $0xe00] sm:$0xff] %v9906
        %10419 = vst [vmem:[%s223 + $0xe08] sm:$0xff] %v9907
        %10420 = vst [vmem:[%s223 + $0xe10] sm:$0xff] %v9908
        %10421 = vst [vmem:[%s223 + $0xe18] sm:$0xff] %v9909
        %10422 = vst [vmem:[%s223 + $0xe20] sm:$0xff] %v9910
        %10423 = vst [vmem:[%s223 + $0xe28] sm:$0xff] %v9911
        %10424 = vst [vmem:[%s223 + $0xe30] sm:$0xff] %v9912
        %10425 = vst [vmem:[%s223 + $0xe38] sm:$0xff] %v9913
        %10426 = vst [vmem:[%s223 + $0xe40] sm:$0xff] %v9914
        %10427 = vst [vmem:[%s223 + $0xe48] sm:$0xff] %v9915
        %10428 = vst [vmem:[%s223 + $0xe50] sm:$0xff] %v9916
        %10429 = vst [vmem:[%s223 + $0xe58] sm:$0xff] %v9917
        %10430 = vst [vmem:[%s223 + $0xe60] sm:$0xff] %v9918
        %10431 = vst [vmem:[%s223 + $0xe68] sm:$0xff] %v9919
        %10432 = vst [vmem:[%s223 + $0xe70] sm:$0xff] %v9920
        %10433 = vst [vmem:[%s223 + $0xe78] sm:$0xff] %v9921
        %10434 = vst [vmem:[%s223 + $0xe80] sm:$0xff] %v9922
        %10435 = vst [vmem:[%s223 + $0xe88] sm:$0xff] %v9923
        %10436 = vst [vmem:[%s223 + $0xe90] sm:$0xff] %v9924
        %10437 = vst [vmem:[%s223 + $0xe98] sm:$0xff] %v9925
        %10438 = vst [vmem:[%s223 + $0xea0] sm:$0xff] %v9926
        %10439 = vst [vmem:[%s223 + $0xea8] sm:$0xff] %v9927
        %10440 = vst [vmem:[%s223 + $0xeb0] sm:$0xff] %v9928
        %10441 = vst [vmem:[%s223 + $0xeb8] sm:$0xff] %v9929
        %10442 = vst [vmem:[%s223 + $0xec0] sm:$0xff] %v9930
        %10443 = vst [vmem:[%s223 + $0xec8] sm:$0xff] %v9931
        %10444 = vst [vmem:[%s223 + $0xed0] sm:$0xff] %v9932
        %10445 = vst [vmem:[%s223 + $0xed8] sm:$0xff] %v9933
        %10446 = vst [vmem:[%s223 + $0xee0] sm:$0xff] %v9934
        %10447 = vst [vmem:[%s223 + $0xee8] sm:$0xff] %v9935
        %10448 = vst [vmem:[%s223 + $0xef0] sm:$0xff] %v9936
        %10449 = vst [vmem:[%s223 + $0xef8] sm:$0xff] %v9937
        %10450 = vst [vmem:[%s223 + $0xf00] sm:$0xff] %v9938
        %10451 = vst [vmem:[%s223 + $0xf08] sm:$0xff] %v9939
        %10452 = vst [vmem:[%s223 + $0xf10] sm:$0xff] %v9940
        %10453 = vst [vmem:[%s223 + $0xf18] sm:$0xff] %v9941
        %10454 = vst [vmem:[%s223 + $0xf20] sm:$0xff] %v9942
        %10455 = vst [vmem:[%s223 + $0xf28] sm:$0xff] %v9943
        %10456 = vst [vmem:[%s223 + $0xf30] sm:$0xff] %v9944
        %10457 = vst [vmem:[%s223 + $0xf38] sm:$0xff] %v9945
        %10458 = vst [vmem:[%s223 + $0xf40] sm:$0xff] %v9946
        %10459 = vst [vmem:[%s223 + $0xf48] sm:$0xff] %v9947
        %10460 = vst [vmem:[%s223 + $0xf50] sm:$0xff] %v9948
        %10461 = vst [vmem:[%s223 + $0xf58] sm:$0xff] %v9949
        %10462 = vst [vmem:[%s223 + $0xf60] sm:$0xff] %v9950
        %10463 = vst [vmem:[%s223 + $0xf68] sm:$0xff] %v9951
        %10464 = vst [vmem:[%s223 + $0xf70] sm:$0xff] %v9952
        %10465 = vst [vmem:[%s223 + $0xf78] sm:$0xff] %v9953
        %10466 = vst [vmem:[%s223 + $0xf80] sm:$0xff] %v9954
        %10467 = vst [vmem:[%s223 + $0xf88] sm:$0xff] %v9955
        %10468 = vst [vmem:[%s223 + $0xf90] sm:$0xff] %v9956
        %10469 = vst [vmem:[%s223 + $0xf98] sm:$0xff] %v9957
        %10470 = vst [vmem:[%s223 + $0xfa0] sm:$0xff] %v9958
        %10471 = vst [vmem:[%s223 + $0xfa8] sm:$0xff] %v9959
        %10472 = vst [vmem:[%s223 + $0xfb0] sm:$0xff] %v9960
        %10473 = vst [vmem:[%s223 + $0xfb8] sm:$0xff] %v9961
        %10474 = vst [vmem:[%s223 + $0xfc0] sm:$0xff] %v9962
        %10475 = vst [vmem:[%s223 + $0xfc8] sm:$0xff] %v9963
        %10476 = vst [vmem:[%s223 + $0xfd0] sm:$0xff] %v9964
        %10477 = vst [vmem:[%s223 + $0xfd8] sm:$0xff] %v9965
        %10478 = vst [vmem:[%s223 + $0xfe0] sm:$0xff] %v9966
        %10479 = vst [vmem:[%s223 + $0xfe8] sm:$0xff] %v9967
        %10480 = vst [vmem:[%s223 + $0xff0] sm:$0xff] %v9968
        %10481 = vst [vmem:[%s223 + $0xff8] sm:$0xff] %v9969
        %s10482 = sand.u32 %s82, 1
        %s10483 = scalar_lea.sflag [#allocation4], %s10482
        %s10484 = sand.u32 %s82, 1
        %s10485 = smul.addr %s10484, 4096
        %s10486 = scalar_lea.vmem [#allocation7], %s10485
        // Predicated region
        $region37: #{tpu_custom_call.1} parent=27 // pred_check
          %p10487 = pneg %p92
        $region38: #{tpu_custom_call.1} parent=27 // pred_check_branch
          %10489 = sbr.rel (%p10487) target = $region40
        $region39: #{tpu_custom_call.1} parent=27 // pred_region
          %s10490 = smul.u32 128, %s22
          %s10491 = ssub.s32 263, %s10490
          %p10492 = scmp.lt.s32.totalorder %s10491, 128
          %s10493 = scalar_select %p10492, %s10491, 128
          %s10494 = smul.u32 8, %s10493
          %s10495 = smul.u32 %s10494, 4
          %s10496 = ssub.s32 4096, %s10495
          %s10497 = sshll.u32 %s10496, 4
          %10498 = vsyncadd %s10483, %s10497
          %p10499 = scmp.ne.s32.totalorder 0, %s10495
          %s10500 = smul.addr %s10490, 4
          %s10501 = smul.addr %s10500, 8
          %s10502 = scalar_lea.hbm %s2, %s10501
          %s10503 = smul.u32 32, %s10493
          %s10504 = sshll.u32 %s10486, 4
          %s10505 = int_to_ptr.vmem [resolvable:$true] %s10504
          %s10506 = sshll.u32 %s10502, 4
          %s10507 = int_to_ptr.hbm [resolvable:$true] %s10506
          %s10508 = sshll.u32 %s10503, 4
          %10512 = dma.vmem_to_hbm [thread:$0]  (%p10499), %s10505, %s10508, %s10507, %s10483, 512, 512, 32
        $region40: #{tpu_custom_call.1} parent=27 // pred_fallthru
          _
      $region28: #{tpu_custom_call.1} parent=5 // pred_fallthru
        _
      %p10513 = scmp.le.s32.totalorder 2, %s17
      // Predicated region
      $region41: #{tpu_custom_call.1} parent=5 // pred_check
        %p10514 = pneg %p10513
      $region42: #{tpu_custom_call.1} parent=5 // pred_check_branch
        %10516 = sbr.rel (%p10514) target = $region44
      $region43: #{tpu_custom_call.1} parent=5 // pred_region
        %s10517 = ssub.s32 %s17, 2
        // Predicated region
        $region45: #{tpu_custom_call.1} parent=43 // pred_check
          %p10518 = pneg %p98
        $region46: #{tpu_custom_call.1} parent=43 // pred_check_branch
          %10520 = sbr.rel (%p10518) target = $region48
        $region47: #{tpu_custom_call.1} parent=43 // pred_region
          %s10521 = sand.u32 %s83, 1
          %s10522 = scalar_lea.sflag [#allocation4], %s10521
          %s10523 = sand.u32 %s83, 1
          %s10524 = smul.addr %s10523, 4096
          %s10525 = scalar_lea.vmem [#allocation7], %s10524
          %10527 = dma.done %s10522, 65536
        $region48: #{tpu_custom_call.1} parent=43 // pred_fallthru
          _
      $region44: #{tpu_custom_call.1} parent=5 // pred_fallthru
        _
    $region6: #{tpu_custom_call.1} parent=1 // loop_footer
      %s21 = sadd.s32 1, %s17
    $region7: #{tpu_custom_call.1} parent=1 // loop_footer_branch
      %16 = sbr.rel target = $region3
    $region8: #{tpu_custom_call.1} parent=1 // loop_exit
      _
    %10528 = vsyncpa [#allocation3], 1
    %s10529 = scalar_lea.sflag [#allocation3], 1
    %10530 = vsyncpa %s10529, 1
    %10531 = vsyncpa [#allocation6], 1
    %s10532 = scalar_lea.sflag [#allocation6], 1
    %10533 = vsyncpa %s10532, 1
    %10534 = vsyncpa [#allocation4], 1
    %s10535 = scalar_lea.sflag [#allocation4], 1
    %10536 = vsyncpa %s10535, 1

</llo_original>
